<compile_context>
chip_gen: v6e
topology: v6e:2x2x1
jax: 0.10.0
libtpu: 0.0.40
codegen_flags: <defaults>
</compile_context>

<pallas_src>
import functools

import jax
import jax.numpy as jnp
from jax.experimental import pallas as pl
from jax.experimental.pallas import tpu as pltpu


# --------------------------------------------------------------------------- #
# Fused LGP kernel
# --------------------------------------------------------------------------- #
def _lgp_fused_kernel(xk_ref, xyz_ref, xyzf_ref,
                      w1_ref, w1s_ref, b1_ref,
                      w2_ref, b2_ref,
                      wqkv_ref, wpe_ref, bpe_ref,
                      hsum_ref, wproj_ref, bproj_ref,
                      o_ref, *, num_heads, scale):
    f32 = jnp.float32
    bf16 = jnp.bfloat16
    nb, K, dim = xk_ref.shape
    H = num_heads
    d = dim // H
    inv_sqrt_h = 1.0 / (H ** 0.5)

    xk_flat = xk_ref[...].reshape(nb * K, dim)            # bf16 (nb*K, dim)
    xyz = xyz_ref[...]                                     # f32  (nb, K, 3)
    xyzf = xyzf_ref[...]                                   # f32  (nb, K*3)

    # ---- posi_{q,k,v} first linear (+ folded eval-BN) + ReLU, without ever
    # materializing pos (N,K,K*3):
    #   pos[n,i,:] = concat_j(xyz[n,j]-xyz[n,i])
    #   pos @ W1   = rep_i(xyzf[n] @ W1)  -  sum_c xyz[n,i,c] * W1s[c,:]
    # The (K*3)-deep term is one small MXU matmul over nb rows only; the rank-3
    # term stays on the VPU as three broadcast FMAs.
    yg = jnp.dot(xyzf.astype(bf16), w1_ref[...],
                 preferred_element_type=f32)               # (nb, 3*dim)
    w1s = w1s_ref[...]                                     # (3, 3*dim)
    bterm = (xyz[:, :, 0:1] * w1s[0:1, :]
             + xyz[:, :, 1:2] * w1s[1:2, :]
             + xyz[:, :, 2:3] * w1s[2:3, :])               # (nb, K, 3*dim) VPU
    h = jnp.maximum(yg[:, None, :] - bterm + b1_ref[...], 0.0)

    # ---- three posi second linears as ONE block-permuted matmul; output lanes
    # are packed [pos_k | pos_q | pos_v] so they add lane-aligned onto [q|k|v].
    pqkv = (jnp.dot(h.reshape(nb * K, 3 * dim).astype(bf16), w2_ref[...],
                    preferred_element_type=f32)
            + b2_ref[...]).reshape(nb, K, 3 * dim)

    # ---- qkv projection in one matmul (qkv_bias=False)
    qkv = jnp.dot(xk_flat, wqkv_ref[...],
                  preferred_element_type=f32).reshape(nb, K, 3 * dim)
    q0 = qkv[:, 0, 0:dim]                                  # centre-point query
    k0 = qkv[:, 0, dim:2 * dim]                            # centre-point key
    spack = qkv + pqkv                                     # [q+pos_k | k+pos_q | v+pos_v]
    kpq = spack[:, :, dim:2 * dim]                         # k + pos_q
    vpv = spack[:, :, 2 * dim:3 * dim]                     # v + pos_v
    posk = pqkv[:, :, 0:dim]                               # pos_k

    # ---- fused position_proj∘posi_p pairwise embedding, n=0 row only
    # (depth-3 contraction -> VPU broadcast FMAs, not the MXU)
    wpe = wpe_ref[...]                                     # (3, dim)
    diff = xyz - xyz[:, 0:1, :]                            # (nb, K, 3)
    pemb = (diff[:, :, 0:1] * wpe[0:1, :]
            + diff[:, :, 1:2] * wpe[1:2, :]
            + diff[:, :, 2:3] * wpe[2:3, :]) + bpe_ref[...]  # (nb, K, dim)

    # ---- dots(n=0) and scores_p pooled per head with ONE block-diag matmul
    q0b = q0[:, None, :]
    k0b = k0[:, None, :]
    dterm = q0b * kpq + k0b * posk                         # (nb, K, dim)
    pterm = q0b * pemb                                     # (nb, K, dim)
    pooled = jnp.dot(
        jnp.concatenate([dterm, pterm], axis=-1).astype(bf16).reshape(nb * K, 2 * dim),
        hsum_ref[...], preferred_element_type=f32).reshape(nb, K, 2 * H)
    dots = pooled[:, :, 0:H] * scale                       # (nb, K, H)
    scores_p = pooled[:, :, H:2 * H]

    # ---- softmax over neighbours (attn_drop p=0 -> identity); divide on EUP
    mx = jnp.max(dots, axis=1, keepdims=True)
    e = jnp.exp(dots - mx)
    attn = e * pl.reciprocal(jnp.sum(e, axis=1, keepdims=True), approx=True)
    scores = (attn + scores_p) * inv_sqrt_h                # (nb, K, H)

    # ---- out(n=0) = sum_m head->channel broadcast(scores) * (v + pos_v)
    # head broadcast done on the VPU (lane broadcast + concat), not a 4-deep MXU op
    scores_c = jnp.concatenate(
        [jnp.broadcast_to(scores[:, :, hh:hh + 1], (nb, K, d)) for hh in range(H)],
        axis=-1)                                           # (nb, K, dim)
    out = jnp.sum(scores_c * vpv, axis=1)                  # (nb, dim)

    # ---- final projection (proj_drop p=0 -> identity)
    # TODO(synk): lane-dense (., 4*dim) output view for production N (needs a
    # sublane->lane reshape; skipped to stay on the safe lowering path).
    o_ref[...] = (jnp.dot(out.astype(bf16), wproj_ref[...],
                          preferred_element_type=f32) + bproj_ref[...])


# --------------------------------------------------------------------------- #
# Parameter init (deterministic, synthetic)
# --------------------------------------------------------------------------- #
def _dense(key, cin, cout, scale=0.02):
    kw, kb = jax.random.split(key)
    return {
        "w": scale * jax.random.normal(kw, (cin, cout), jnp.float32),
        "b": scale * jax.random.normal(kb, (cout,), jnp.float32),
    }


def init_lgp_params(key, dim, num_heads, nsample):
    keys = jax.random.split(key, 12)
    return {
        "qkv_w": 0.02 * jax.random.normal(keys[0], (dim, 3 * dim), jnp.float32),
        "proj": _dense(keys[1], dim, dim),
        "position_proj": _dense(keys[2], 3, dim),
        "posi_q": {"l1": _dense(keys[3], nsample * 3, dim), "l2": _dense(keys[4], dim, dim)},
        "posi_k": {"l1": _dense(keys[5], nsample * 3, dim), "l2": _dense(keys[6], dim, dim)},
        "posi_v": {"l1": _dense(keys[7], nsample * 3, dim), "l2": _dense(keys[8], dim, dim)},
        "posi_p": _dense(keys[9], dim, dim),
        "posi_g": _dense(keys[10], dim, dim),  # feeds pos_states, dead code in forward
    }


# --------------------------------------------------------------------------- #
# Block / grid policy
# --------------------------------------------------------------------------- #
def _pick_block_n(N, K, dim):
    """Per-grid-step point count.

    Small N: a single step (per-step overhead and weight re-fetch dominate any
    pipelining win, and the 'parallel' tag is a no-op on 1-TC chips anyway).
    Large N: cap the per-step footprint (lane-padded, double-buffered inputs +
    live f32 temporaries) well under v7x's 64 MiB VMEM and prefer an even step
    count so both v7x TensorCores get work; on v5e/v6e the extra steps simply
    deepen the DMA/compute pipeline.
    """
    lane = 128
    per_row = (2 * (K * lane * 2 + K * lane * 4 + lane * 4)   # dbl-buffered inputs
               + 2 * lane * 4                                 # output
               + 8 * K * max(3 * dim, lane) * 4)              # live f32 temporaries
    budget = 40 * 1024 * 1024
    cap = max(8, min(512, (budget // per_row) // 8 * 8))
    if N <= cap or N % 8 != 0:
        return N
    best = None
    bn = cap
    while bn >= 8:
        if N % bn == 0:
            if (N // bn) % 2 == 0:
                return bn
            if best is None:
                best = bn
        bn -= 8
    return best if best is not None else N


# --------------------------------------------------------------------------- #
# LGP forward
# --------------------------------------------------------------------------- #
def lgp_forward(params, p, x, o, *, dim, num_heads, nsample, block_n=None):
    del o  # single batch: offsets not needed for the brute-force knn below
    N = p.shape[0]
    K = nsample
    H = num_heads
    d = dim // H
    scale = d ** (-0.5)
    f32, bf16 = jnp.float32, jnp.bfloat16

    if block_n is None:
        block_n = _pick_block_n(N, K, dim)
    assert N % block_n == 0 and (block_n == N or block_n % 8 == 0), (N, block_n)
    grid_steps = N // block_n

    # ---- pointops.knnquery equivalent (brute force, single batch) ----------
    d2 = jnp.sum((p[:, None, :] - p[None, :, :]) ** 2, axis=-1)          # (N, N)
    _, idx = jax.lax.top_k(-d2, K)                                        # (N, K)

    # ---- QueryGroup(local=True): only knn_xyz is shipped; the (N,K,K*3)
    # pairwise tensor is reconstructed algebraically inside the kernel.
    knn_xyz = p[idx.reshape(-1)].reshape(N, K, 3)                         # f32
    knn_xyz_flat = knn_xyz.reshape(N, K * 3)                              # f32 (free)
    x_knn = x[idx.reshape(-1)].reshape(N, K, dim).astype(bf16)            # bf16 MXU operand
    # TODO(synk): the scatter_softmax/scatter_sum residual branch uses modules
    # (self.linear_p / self.linear / self.linear_x / self.share_planes) never
    # defined in __init__; skipped.

    # ---- weight folding / fusion (cheap; once per call) --------------------
    bn_scale = (1.0 + 1e-5) ** -0.5  # eval-mode BN, default gamma/beta/stats
    # TODO(synk): fold real trained BN gamma/beta/running stats here when available.
    w1 = jnp.concatenate([params["posi_q"]["l1"]["w"],
                          params["posi_k"]["l1"]["w"],
                          params["posi_v"]["l1"]["w"]], axis=1) * bn_scale   # (K*3, 3*dim)
    b1 = jnp.concatenate([params["posi_q"]["l1"]["b"],
                          params["posi_k"]["l1"]["b"],
                          params["posi_v"]["l1"]["b"]], axis=0) * bn_scale   # (3*dim,)
    w1s = w1.reshape(K, 3, 3 * dim).sum(axis=0)                              # (3, 3*dim)

    # second linears as one block-permuted (3*dim, 3*dim) matrix; output lane
    # order [pos_k | pos_q | pos_v] adds lane-aligned onto the packed [q|k|v].
    Z = jnp.zeros((dim, dim), f32)
    w2q, w2k, w2v = (params["posi_q"]["l2"]["w"],
                     params["posi_k"]["l2"]["w"],
                     params["posi_v"]["l2"]["w"])
    w2blk = jnp.concatenate([
        jnp.concatenate([Z,   w2q, Z  ], axis=1),   # rows fed by h_q lanes
        jnp.concatenate([w2k, Z,   Z  ], axis=1),   # rows fed by h_k lanes
        jnp.concatenate([Z,   Z,   w2v], axis=1),   # rows fed by h_v lanes
    ], axis=0)
    b2pack = jnp.concatenate([params["posi_k"]["l2"]["b"],
                              params["posi_q"]["l2"]["b"],
                              params["posi_v"]["l2"]["b"]], axis=0)          # (3*dim,)

    # TODO(synk): reference feeds `pos` (last dim nsample*3) into posi_p/posi_g
    # = Linear(dim, dim), which is shape-inconsistent with 'b n m (h c)'; as
    # before we use position_proj to build the pairwise embedding posi_p expects
    # and fuse the two linears algebraically (no nonlinearity between them).
    wpe = params["position_proj"]["w"] @ params["posi_p"]["w"]               # (3, dim)
    bpe = params["position_proj"]["b"] @ params["posi_p"]["w"] + params["posi_p"]["b"]
    # pos_states (via posi_g) is computed but never used in the reference; omitted.

    # per-head channel-pooling constant, block-diagonal so dots and scores_p
    # are pooled by a single matmul.
    ch = jnp.arange(dim) // d
    hsum = (ch[:, None] == jnp.arange(H)[None, :]).astype(f32)               # (dim, H)
    zh = jnp.zeros((dim, H), f32)
    hsum_blk = jnp.concatenate([jnp.concatenate([hsum, zh], axis=1),
                                jnp.concatenate([zh, hsum], axis=1)], axis=0)  # (2*dim, 2*H)

    weight_args = [
        w1.astype(bf16), w1s, b1.reshape(1, 3 * dim),
        w2blk.astype(bf16), b2pack.reshape(1, 3 * dim),
        params["qkv_w"].astype(bf16),
        wpe, bpe.reshape(1, dim),
        hsum_blk.astype(bf16),
        params["proj"]["w"].astype(bf16), params["proj"]["b"].reshape(1, dim),
    ]

    in_specs = [
        pl.BlockSpec((block_n, K, dim), lambda i: (i, 0, 0)),
        pl.BlockSpec((block_n, K, 3), lambda i: (i, 0, 0)),
        pl.BlockSpec((block_n, K * 3), lambda i: (i, 0)),
    ] + [pl.BlockSpec(w.shape, lambda i: (0, 0)) for w in weight_args]

    flops = int(
        2 * N * (K * 3) * (3 * dim)              # posi first linear (nb rows only)
        + 2 * N * K * 3 * (3 * dim)              # rank-3 VPU term
        + 2 * N * K * (3 * dim) * (3 * dim)      # block second linear
        + 2 * N * K * dim * (3 * dim)            # qkv
        + 2 * N * K * 3 * dim                    # fused position_proj∘posi_p (VPU)
        + 2 * N * K * (2 * dim) * (2 * H)        # fused per-head pooling
        + 10 * N * K * dim                       # misc elementwise
        + 2 * N * dim * dim                      # final proj
    )
    bytes_accessed = int(
        2 * x_knn.size + 4 * (knn_xyz.size + knn_xyz_flat.size) + 4 * N * dim
        + grid_steps * sum(int(w.size) * w.dtype.itemsize for w in weight_args))
    cost = pl.CostEstimate(flops=flops, transcendentals=int(N * K * H + N * H),
                           bytes_accessed=bytes_accessed)

    out = pl.pallas_call(
        functools.partial(_lgp_fused_kernel, num_heads=H, scale=scale),
        out_shape=jax.ShapeDtypeStruct((N, dim), f32),
        grid=(grid_steps,),
        in_specs=in_specs,
        out_specs=pl.BlockSpec((block_n, dim), lambda i: (i, 0)),
        compiler_params=pltpu.CompilerParams(
            dimension_semantics=("parallel",),
            vmem_limit_bytes=48 * 1024 * 1024),   # headroom under v7x's 64 MiB
        cost_estimate=cost,
    )(x_knn, knn_xyz, knn_xyz_flat, *weight_args)

    # TODO(synk): local_polar_representation / f_gc uses undefined helpers
    # (self.gather_neighbour, self.relative_pos_transforming) and yields a
    # shape-incompatible (n, 1, dim+1) tensor; the `out + f_gc` step is skipped.
    return out


# --------------------------------------------------------------------------- #
if __name__ == "__main__":
    dim, num_heads, nsample = 32, 4, 8
    N = 64

    key = jax.random.PRNGKey(0)
    kp, kx, kw = jax.random.split(key, 3)
    p = jax.random.normal(kp, (N, 3), jnp.float32)
    x = jax.random.normal(kx, (N, dim), jnp.float32)
    o = jnp.array([N], jnp.int32)  # single-batch offsets, pointops style

    params = init_lgp_params(kw, dim, num_heads, nsample)

    fwd = jax.jit(
        functools.partial(lgp_forward, dim=dim, num_heads=num_heads, nsample=nsample)
    )
    out = fwd(params, p, x, o)
    jax.block_until_ready(out)
    assert out.shape == (N, dim) and out.dtype == jnp.float32
    print("KERNEL_OK")
</pallas_src>

<mosaic_0001>
module attributes {stable_mosaic.version = 11 : i64} {
  func.func @_lgp_fused_kernel(%arg0: i32, %arg1: memref<64x8x32xbf16, #tpu.memory_space<vmem>>, %arg2: memref<64x8x3xf32, #tpu.memory_space<vmem>>, %arg3: memref<64x24xf32, #tpu.memory_space<vmem>>, %arg4: memref<24x96xbf16, #tpu.memory_space<vmem>>, %arg5: memref<3x96xf32, #tpu.memory_space<vmem>>, %arg6: memref<1x96xf32, #tpu.memory_space<vmem>>, %arg7: memref<96x96xbf16, #tpu.memory_space<vmem>>, %arg8: memref<1x96xf32, #tpu.memory_space<vmem>>, %arg9: memref<32x96xbf16, #tpu.memory_space<vmem>>, %arg10: memref<3x32xf32, #tpu.memory_space<vmem>>, %arg11: memref<1x32xf32, #tpu.memory_space<vmem>>, %arg12: memref<64x8xbf16, #tpu.memory_space<vmem>>, %arg13: memref<32x32xbf16, #tpu.memory_space<vmem>>, %arg14: memref<1x32xf32, #tpu.memory_space<vmem>>, %arg15: memref<64x32xf32, #tpu.memory_space<vmem>>) attributes {dimension_semantics = [#tpu.dimension_semantics<parallel>], iteration_bounds = array<i64: 1>, scalar_prefetch = 0 : i64, scratch_operands = 0 : i64, tpu.core_type = #tpu.core_type<tc>, window_params = [{transform_indices = @transform_0, window_bounds = array<i64: 64, 8, 32>}, {transform_indices = @transform_1, window_bounds = array<i64: 64, 8, 3>}, {transform_indices = @transform_2, window_bounds = array<i64: 64, 24>}, {pipeline_mode = #tpu.pipeline_mode<synchronous>, transform_indices = @transform_3, window_bounds = array<i64: 24, 96>}, {pipeline_mode = #tpu.pipeline_mode<synchronous>, transform_indices = @transform_4, window_bounds = array<i64: 3, 96>}, {pipeline_mode = #tpu.pipeline_mode<synchronous>, transform_indices = @transform_5, window_bounds = array<i64: 1, 96>}, {pipeline_mode = #tpu.pipeline_mode<synchronous>, transform_indices = @transform_6, window_bounds = array<i64: 96, 96>}, {pipeline_mode = #tpu.pipeline_mode<synchronous>, transform_indices = @transform_7, window_bounds = array<i64: 1, 96>}, {pipeline_mode = #tpu.pipeline_mode<synchronous>, transform_indices = @transform_8, window_bounds = array<i64: 32, 96>}, {pipeline_mode = #tpu.pipeline_mode<synchronous>, transform_indices = @transform_9, window_bounds = array<i64: 3, 32>}, {pipeline_mode = #tpu.pipeline_mode<synchronous>, transform_indices = @transform_10, window_bounds = array<i64: 1, 32>}, {pipeline_mode = #tpu.pipeline_mode<synchronous>, transform_indices = @transform_11, window_bounds = array<i64: 64, 8>}, {pipeline_mode = #tpu.pipeline_mode<synchronous>, transform_indices = @transform_12, window_bounds = array<i64: 32, 32>}, {pipeline_mode = #tpu.pipeline_mode<synchronous>, transform_indices = @transform_13, window_bounds = array<i64: 1, 32>}, {transform_indices = @transform_14, window_bounds = array<i64: 64, 32>}]} {
    %c0 = arith.constant 0 : index
    %c0_0 = arith.constant 0 : index
    %c0_1 = arith.constant 0 : index
    %0 = vector.load %arg1[%c0, %c0_0, %c0_1] : memref<64x8x32xbf16, #tpu.memory_space<vmem>>, vector<64x8x32xbf16>
    %1 = vector.shape_cast %0 : vector<64x8x32xbf16> to vector<512x32xbf16>
    %c0_2 = arith.constant 0 : index
    %c0_3 = arith.constant 0 : index
    %c0_4 = arith.constant 0 : index
    %2 = vector.load %arg2[%c0_2, %c0_3, %c0_4] : memref<64x8x3xf32, #tpu.memory_space<vmem>>, vector<64x8x3xf32>
    %c0_5 = arith.constant 0 : index
    %c0_6 = arith.constant 0 : index
    %3 = vector.load %arg3[%c0_5, %c0_6] : memref<64x24xf32, #tpu.memory_space<vmem>>, vector<64x24xf32>
    %4 = arith.truncf %3 : vector<64x24xf32> to vector<64x24xbf16>
    %c0_7 = arith.constant 0 : index
    %c0_8 = arith.constant 0 : index
    %5 = vector.load %arg4[%c0_7, %c0_8] : memref<24x96xbf16, #tpu.memory_space<vmem>>, vector<24x96xbf16>
    %cst = arith.constant dense<0.000000e+00> : vector<64x96xf32>
    %6 = tpu.matmul %4, %5, %cst {dimension_numbers = #tpu.dot_dimension_numbers<[1], [0], [0], [1], [0, 0, 1, 1], [], []>} : vector<64x24xbf16>, vector<24x96xbf16>, vector<64x96xf32> -> vector<64x96xf32>
    %c0_9 = arith.constant 0 : index
    %c0_10 = arith.constant 0 : index
    %7 = vector.load %arg5[%c0_9, %c0_10] : memref<3x96xf32, #tpu.memory_space<vmem>>, vector<3x96xf32>
    %8 = vector.extract_strided_slice %2 {offsets = [0, 0, 0], sizes = [64, 8, 1], strides = [1, 1, 1]} : vector<64x8x3xf32> to vector<64x8x1xf32>
    %9 = vector.extract_strided_slice %7 {offsets = [0, 0], sizes = [1, 96], strides = [1, 1]} : vector<3x96xf32> to vector<1x96xf32>
    %10 = vector.shape_cast %9 : vector<1x96xf32> to vector<1x1x96xf32>
    %11 = vector.broadcast %8 : vector<64x8x1xf32> to vector<64x8x96xf32>
    %12 = vector.broadcast %10 : vector<1x1x96xf32> to vector<64x8x96xf32>
    %13 = arith.mulf %11, %12 : vector<64x8x96xf32>
    %14 = vector.extract_strided_slice %2 {offsets = [0, 0, 1], sizes = [64, 8, 1], strides = [1, 1, 1]} : vector<64x8x3xf32> to vector<64x8x1xf32>
    %15 = vector.extract_strided_slice %7 {offsets = [1, 0], sizes = [1, 96], strides = [1, 1]} : vector<3x96xf32> to vector<1x96xf32>
    %16 = vector.shape_cast %15 : vector<1x96xf32> to vector<1x1x96xf32>
    %17 = vector.broadcast %14 : vector<64x8x1xf32> to vector<64x8x96xf32>
    %18 = vector.broadcast %16 : vector<1x1x96xf32> to vector<64x8x96xf32>
    %19 = arith.mulf %17, %18 : vector<64x8x96xf32>
    %20 = arith.addf %13, %19 : vector<64x8x96xf32>
    %21 = vector.extract_strided_slice %2 {offsets = [0, 0, 2], sizes = [64, 8, 1], strides = [1, 1, 1]} : vector<64x8x3xf32> to vector<64x8x1xf32>
    %22 = vector.extract_strided_slice %7 {offsets = [2, 0], sizes = [1, 96], strides = [1, 1]} : vector<3x96xf32> to vector<1x96xf32>
    %23 = vector.shape_cast %22 : vector<1x96xf32> to vector<1x1x96xf32>
    %24 = vector.broadcast %21 : vector<64x8x1xf32> to vector<64x8x96xf32>
    %25 = vector.broadcast %23 : vector<1x1x96xf32> to vector<64x8x96xf32>
    %26 = arith.mulf %24, %25 : vector<64x8x96xf32>
    %27 = arith.addf %20, %26 : vector<64x8x96xf32>
    %28 = vector.shape_cast %6 : vector<64x96xf32> to vector<64x1x96xf32>
    %29 = vector.broadcast %28 : vector<64x1x96xf32> to vector<64x8x96xf32>
    %30 = arith.subf %29, %27 : vector<64x8x96xf32>
    %c0_11 = arith.constant 0 : index
    %c0_12 = arith.constant 0 : index
    %31 = vector.load %arg6[%c0_11, %c0_12] : memref<1x96xf32, #tpu.memory_space<vmem>>, vector<1x96xf32>
    %32 = vector.shape_cast %31 : vector<1x96xf32> to vector<1x1x96xf32>
    %33 = vector.broadcast %32 : vector<1x1x96xf32> to vector<64x8x96xf32>
    %34 = arith.addf %30, %33 : vector<64x8x96xf32>
    %cst_13 = arith.constant 0.000000e+00 : f32
    %35 = vector.broadcast %cst_13 : f32 to vector<64x8x96xf32>
    %36 = arith.maximumf %34, %35 : vector<64x8x96xf32>
    %37 = vector.shape_cast %36 : vector<64x8x96xf32> to vector<512x96xf32>
    %38 = arith.truncf %37 : vector<512x96xf32> to vector<512x96xbf16>
    %c0_14 = arith.constant 0 : index
    %c0_15 = arith.constant 0 : index
    %39 = vector.load %arg7[%c0_14, %c0_15] : memref<96x96xbf16, #tpu.memory_space<vmem>>, vector<96x96xbf16>
    %cst_16 = arith.constant dense<0.000000e+00> : vector<512x96xf32>
    %40 = tpu.matmul %38, %39, %cst_16 {dimension_numbers = #tpu.dot_dimension_numbers<[1], [0], [0], [1], [0, 0, 1, 1], [], []>} : vector<512x96xbf16>, vector<96x96xbf16>, vector<512x96xf32> -> vector<512x96xf32>
    %c0_17 = arith.constant 0 : index
    %c0_18 = arith.constant 0 : index
    %41 = vector.load %arg8[%c0_17, %c0_18] : memref<1x96xf32, #tpu.memory_space<vmem>>, vector<1x96xf32>
    %42 = vector.broadcast %41 : vector<1x96xf32> to vector<512x96xf32>
    %43 = arith.addf %40, %42 : vector<512x96xf32>
    %44 = vector.shape_cast %43 : vector<512x96xf32> to vector<64x8x96xf32>
    %c0_19 = arith.constant 0 : index
    %c0_20 = arith.constant 0 : index
    %45 = vector.load %arg9[%c0_19, %c0_20] : memref<32x96xbf16, #tpu.memory_space<vmem>>, vector<32x96xbf16>
    %cst_21 = arith.constant dense<0.000000e+00> : vector<512x96xf32>
    %46 = tpu.matmul %1, %45, %cst_21 {dimension_numbers = #tpu.dot_dimension_numbers<[1], [0], [0], [1], [0, 0, 1, 1], [], []>} : vector<512x32xbf16>, vector<32x96xbf16>, vector<512x96xf32> -> vector<512x96xf32>
    %47 = vector.shape_cast %46 : vector<512x96xf32> to vector<64x8x96xf32>
    %48 = vector.extract_strided_slice %47 {offsets = [0, 0, 0], sizes = [64, 1, 32], strides = [1, 1, 1]} : vector<64x8x96xf32> to vector<64x1x32xf32>
    %49 = vector.shape_cast %48 : vector<64x1x32xf32> to vector<64x32xf32>
    %50 = vector.extract_strided_slice %47 {offsets = [0, 0, 32], sizes = [64, 1, 32], strides = [1, 1, 1]} : vector<64x8x96xf32> to vector<64x1x32xf32>
    %51 = vector.shape_cast %50 : vector<64x1x32xf32> to vector<64x32xf32>
    %52 = arith.addf %47, %44 : vector<64x8x96xf32>
    %53 = vector.extract_strided_slice %52 {offsets = [0, 0, 32], sizes = [64, 8, 32], strides = [1, 1, 1]} : vector<64x8x96xf32> to vector<64x8x32xf32>
    %54 = vector.extract_strided_slice %52 {offsets = [0, 0, 64], sizes = [64, 8, 32], strides = [1, 1, 1]} : vector<64x8x96xf32> to vector<64x8x32xf32>
    %55 = vector.extract_strided_slice %44 {offsets = [0, 0, 0], sizes = [64, 8, 32], strides = [1, 1, 1]} : vector<64x8x96xf32> to vector<64x8x32xf32>
    %c0_22 = arith.constant 0 : index
    %c0_23 = arith.constant 0 : index
    %56 = vector.load %arg10[%c0_22, %c0_23] : memref<3x32xf32, #tpu.memory_space<vmem>>, vector<3x32xf32>
    %57 = vector.extract_strided_slice %2 {offsets = [0, 0, 0], sizes = [64, 1, 3], strides = [1, 1, 1]} : vector<64x8x3xf32> to vector<64x1x3xf32>
    %58 = vector.broadcast %57 : vector<64x1x3xf32> to vector<64x8x3xf32>
    %59 = arith.subf %2, %58 : vector<64x8x3xf32>
    %60 = vector.extract_strided_slice %59 {offsets = [0, 0, 0], sizes = [64, 8, 1], strides = [1, 1, 1]} : vector<64x8x3xf32> to vector<64x8x1xf32>
    %61 = vector.extract_strided_slice %56 {offsets = [0, 0], sizes = [1, 32], strides = [1, 1]} : vector<3x32xf32> to vector<1x32xf32>
    %62 = vector.shape_cast %61 : vector<1x32xf32> to vector<1x1x32xf32>
    %63 = vector.broadcast %60 : vector<64x8x1xf32> to vector<64x8x32xf32>
    %64 = vector.broadcast %62 : vector<1x1x32xf32> to vector<64x8x32xf32>
    %65 = arith.mulf %63, %64 : vector<64x8x32xf32>
    %66 = vector.extract_strided_slice %59 {offsets = [0, 0, 1], sizes = [64, 8, 1], strides = [1, 1, 1]} : vector<64x8x3xf32> to vector<64x8x1xf32>
    %67 = vector.extract_strided_slice %56 {offsets = [1, 0], sizes = [1, 32], strides = [1, 1]} : vector<3x32xf32> to vector<1x32xf32>
    %68 = vector.shape_cast %67 : vector<1x32xf32> to vector<1x1x32xf32>
    %69 = vector.broadcast %66 : vector<64x8x1xf32> to vector<64x8x32xf32>
    %70 = vector.broadcast %68 : vector<1x1x32xf32> to vector<64x8x32xf32>
    %71 = arith.mulf %69, %70 : vector<64x8x32xf32>
    %72 = arith.addf %65, %71 : vector<64x8x32xf32>
    %73 = vector.extract_strided_slice %59 {offsets = [0, 0, 2], sizes = [64, 8, 1], strides = [1, 1, 1]} : vector<64x8x3xf32> to vector<64x8x1xf32>
    %74 = vector.extract_strided_slice %56 {offsets = [2, 0], sizes = [1, 32], strides = [1, 1]} : vector<3x32xf32> to vector<1x32xf32>
    %75 = vector.shape_cast %74 : vector<1x32xf32> to vector<1x1x32xf32>
    %76 = vector.broadcast %73 : vector<64x8x1xf32> to vector<64x8x32xf32>
    %77 = vector.broadcast %75 : vector<1x1x32xf32> to vector<64x8x32xf32>
    %78 = arith.mulf %76, %77 : vector<64x8x32xf32>
    %79 = arith.addf %72, %78 : vector<64x8x32xf32>
    %c0_24 = arith.constant 0 : index
    %c0_25 = arith.constant 0 : index
    %80 = vector.load %arg11[%c0_24, %c0_25] : memref<1x32xf32, #tpu.memory_space<vmem>>, vector<1x32xf32>
    %81 = vector.shape_cast %80 : vector<1x32xf32> to vector<1x1x32xf32>
    %82 = vector.broadcast %81 : vector<1x1x32xf32> to vector<64x8x32xf32>
    %83 = arith.addf %79, %82 : vector<64x8x32xf32>
    %84 = vector.shape_cast %49 : vector<64x32xf32> to vector<64x1x32xf32>
    %85 = vector.shape_cast %51 : vector<64x32xf32> to vector<64x1x32xf32>
    %86 = vector.broadcast %84 : vector<64x1x32xf32> to vector<64x8x32xf32>
    %87 = arith.mulf %86, %53 : vector<64x8x32xf32>
    %88 = vector.broadcast %85 : vector<64x1x32xf32> to vector<64x8x32xf32>
    %89 = arith.mulf %88, %55 : vector<64x8x32xf32>
    %90 = arith.addf %87, %89 : vector<64x8x32xf32>
    %91 = vector.broadcast %84 : vector<64x1x32xf32> to vector<64x8x32xf32>
    %92 = arith.mulf %91, %83 : vector<64x8x32xf32>
    %93 = tpu.concatenate %90, %92 in 2 : vector<64x8x32xf32>, vector<64x8x32xf32> -> vector<64x8x64xf32>
    %94 = arith.truncf %93 : vector<64x8x64xf32> to vector<64x8x64xbf16>
    %95 = vector.shape_cast %94 : vector<64x8x64xbf16> to vector<512x64xbf16>
    %c0_26 = arith.constant 0 : index
    %c0_27 = arith.constant 0 : index
    %96 = vector.load %arg12[%c0_26, %c0_27] : memref<64x8xbf16, #tpu.memory_space<vmem>>, vector<64x8xbf16>
    %cst_28 = arith.constant dense<0.000000e+00> : vector<512x8xf32>
    %97 = tpu.matmul %95, %96, %cst_28 {dimension_numbers = #tpu.dot_dimension_numbers<[1], [0], [0], [1], [0, 0, 1, 1], [], []>} : vector<512x64xbf16>, vector<64x8xbf16>, vector<512x8xf32> -> vector<512x8xf32>
    %98 = vector.shape_cast %97 : vector<512x8xf32> to vector<64x8x8xf32>
    %99 = vector.extract_strided_slice %98 {offsets = [0, 0, 0], sizes = [64, 8, 4], strides = [1, 1, 1]} : vector<64x8x8xf32> to vector<64x8x4xf32>
    %cst_29 = arith.constant 0.353553385 : f32
    %100 = vector.broadcast %cst_29 : f32 to vector<64x8x4xf32>
    %101 = arith.mulf %99, %100 : vector<64x8x4xf32>
    %102 = vector.extract_strided_slice %98 {offsets = [0, 0, 4], sizes = [64, 8, 4], strides = [1, 1, 1]} : vector<64x8x8xf32> to vector<64x8x4xf32>
    %cst_30 = arith.constant dense<0xFF800000> : vector<64x4xf32>
    %103 = vector.multi_reduction <maximumf>, %101, %cst_30 [1] : vector<64x8x4xf32> to vector<64x4xf32>
    %104 = vector.shape_cast %103 : vector<64x4xf32> to vector<64x1x4xf32>
    %105 = vector.broadcast %104 : vector<64x1x4xf32> to vector<64x8x4xf32>
    %106 = arith.subf %101, %105 : vector<64x8x4xf32>
    %107 = math.exp %106 : vector<64x8x4xf32>
    %cst_31 = arith.constant dense<0.000000e+00> : vector<64x4xf32>
    %108 = vector.multi_reduction <add>, %107, %cst_31 [1] : vector<64x8x4xf32> to vector<64x4xf32>
    %109 = vector.shape_cast %108 : vector<64x4xf32> to vector<64x1x4xf32>
    %110 = tpu.reciprocal %109 {approx = true} : vector<64x1x4xf32> -> vector<64x1x4xf32>
    %111 = vector.broadcast %110 : vector<64x1x4xf32> to vector<64x8x4xf32>
    %112 = arith.mulf %107, %111 : vector<64x8x4xf32>
    %113 = arith.addf %112, %102 : vector<64x8x4xf32>
    %cst_32 = arith.constant 5.000000e-01 : f32
    %114 = vector.broadcast %cst_32 : f32 to vector<64x8x4xf32>
    %115 = arith.mulf %113, %114 : vector<64x8x4xf32>
    %116 = vector.extract_strided_slice %115 {offsets = [0, 0, 0], sizes = [64, 8, 1], strides = [1, 1, 1]} : vector<64x8x4xf32> to vector<64x8x1xf32>
    %117 = vector.shape_cast %116 : vector<64x8x1xf32> to vector<64x8x1xf32>
    %118 = vector.broadcast %117 : vector<64x8x1xf32> to vector<64x8x8xf32>
    %119 = vector.extract_strided_slice %115 {offsets = [0, 0, 1], sizes = [64, 8, 1], strides = [1, 1, 1]} : vector<64x8x4xf32> to vector<64x8x1xf32>
    %120 = vector.shape_cast %119 : vector<64x8x1xf32> to vector<64x8x1xf32>
    %121 = vector.broadcast %120 : vector<64x8x1xf32> to vector<64x8x8xf32>
    %122 = vector.extract_strided_slice %115 {offsets = [0, 0, 2], sizes = [64, 8, 1], strides = [1, 1, 1]} : vector<64x8x4xf32> to vector<64x8x1xf32>
    %123 = vector.shape_cast %122 : vector<64x8x1xf32> to vector<64x8x1xf32>
    %124 = vector.broadcast %123 : vector<64x8x1xf32> to vector<64x8x8xf32>
    %125 = vector.extract_strided_slice %115 {offsets = [0, 0, 3], sizes = [64, 8, 1], strides = [1, 1, 1]} : vector<64x8x4xf32> to vector<64x8x1xf32>
    %126 = vector.shape_cast %125 : vector<64x8x1xf32> to vector<64x8x1xf32>
    %127 = vector.broadcast %126 : vector<64x8x1xf32> to vector<64x8x8xf32>
    %128 = tpu.concatenate %118, %121, %124, %127 in 2 : vector<64x8x8xf32>, vector<64x8x8xf32>, vector<64x8x8xf32>, vector<64x8x8xf32> -> vector<64x8x32xf32>
    %129 = arith.mulf %128, %54 : vector<64x8x32xf32>
    %cst_33 = arith.constant dense<0.000000e+00> : vector<64x32xf32>
    %130 = vector.multi_reduction <add>, %129, %cst_33 [1] : vector<64x8x32xf32> to vector<64x32xf32>
    %131 = arith.truncf %130 : vector<64x32xf32> to vector<64x32xbf16>
    %c0_34 = arith.constant 0 : index
    %c0_35 = arith.constant 0 : index
    %132 = vector.load %arg13[%c0_34, %c0_35] : memref<32x32xbf16, #tpu.memory_space<vmem>>, vector<32x32xbf16>
    %cst_36 = arith.constant dense<0.000000e+00> : vector<64x32xf32>
    %133 = tpu.matmul %131, %132, %cst_36 {dimension_numbers = #tpu.dot_dimension_numbers<[1], [0], [0], [1], [0, 0, 1, 1], [], []>} : vector<64x32xbf16>, vector<32x32xbf16>, vector<64x32xf32> -> vector<64x32xf32>
    %c0_37 = arith.constant 0 : index
    %c0_38 = arith.constant 0 : index
    %134 = vector.load %arg14[%c0_37, %c0_38] : memref<1x32xf32, #tpu.memory_space<vmem>>, vector<1x32xf32>
    %135 = vector.broadcast %134 : vector<1x32xf32> to vector<64x32xf32>
    %136 = arith.addf %133, %135 : vector<64x32xf32>
    %c0_39 = arith.constant 0 : index
    %c0_40 = arith.constant 0 : index
    %137 = vector.load %arg15[%c0_39, %c0_40] : memref<64x32xf32, #tpu.memory_space<vmem>>, vector<64x32xf32>
    tpu.vector_store %arg15[%c0_39, %c0_40], %136 {strides = array<i32>} : memref<64x32xf32, #tpu.memory_space<vmem>>, vector<64x32xf32>,
    return
  }
  func.func @transform_0(%arg0: i32) -> (i32, i32, i32) {
    %c0_i32 = arith.constant 0 : i32
    %c0_i32_0 = arith.constant 0 : i32
    %c0_i32_1 = arith.constant 0 : i32
    return %arg0, %c0_i32, %c0_i32_0 : i32, i32, i32
  }
  func.func @transform_1(%arg0: i32) -> (i32, i32, i32) {
    %c0_i32 = arith.constant 0 : i32
    %c0_i32_0 = arith.constant 0 : i32
    %c0_i32_1 = arith.constant 0 : i32
    return %arg0, %c0_i32, %c0_i32_0 : i32, i32, i32
  }
  func.func @transform_2(%arg0: i32) -> (i32, i32) {
    %c0_i32 = arith.constant 0 : i32
    %c0_i32_0 = arith.constant 0 : i32
    return %arg0, %c0_i32 : i32, i32
  }
  func.func @transform_3(%arg0: i32) -> (i32, i32) {
    %c0_i32 = arith.constant 0 : i32
    %c0_i32_0 = arith.constant 0 : i32
    %c0_i32_1 = arith.constant 0 : i32
    return %c0_i32, %c0_i32_0 : i32, i32
  }
  func.func @transform_4(%arg0: i32) -> (i32, i32) {
    %c0_i32 = arith.constant 0 : i32
    %c0_i32_0 = arith.constant 0 : i32
    %c0_i32_1 = arith.constant 0 : i32
    return %c0_i32, %c0_i32_0 : i32, i32
  }
  func.func @transform_5(%arg0: i32) -> (i32, i32) {
    %c0_i32 = arith.constant 0 : i32
    %c0_i32_0 = arith.constant 0 : i32
    %c0_i32_1 = arith.constant 0 : i32
    return %c0_i32, %c0_i32_0 : i32, i32
  }
  func.func @transform_6(%arg0: i32) -> (i32, i32) {
    %c0_i32 = arith.constant 0 : i32
    %c0_i32_0 = arith.constant 0 : i32
    %c0_i32_1 = arith.constant 0 : i32
    return %c0_i32, %c0_i32_0 : i32, i32
  }
  func.func @transform_7(%arg0: i32) -> (i32, i32) {
    %c0_i32 = arith.constant 0 : i32
    %c0_i32_0 = arith.constant 0 : i32
    %c0_i32_1 = arith.constant 0 : i32
    return %c0_i32, %c0_i32_0 : i32, i32
  }
  func.func @transform_8(%arg0: i32) -> (i32, i32) {
    %c0_i32 = arith.constant 0 : i32
    %c0_i32_0 = arith.constant 0 : i32
    %c0_i32_1 = arith.constant 0 : i32
    return %c0_i32, %c0_i32_0 : i32, i32
  }
  func.func @transform_9(%arg0: i32) -> (i32, i32) {
    %c0_i32 = arith.constant 0 : i32
    %c0_i32_0 = arith.constant 0 : i32
    %c0_i32_1 = arith.constant 0 : i32
    return %c0_i32, %c0_i32_0 : i32, i32
  }
  func.func @transform_10(%arg0: i32) -> (i32, i32) {
    %c0_i32 = arith.constant 0 : i32
    %c0_i32_0 = arith.constant 0 : i32
    %c0_i32_1 = arith.constant 0 : i32
    return %c0_i32, %c0_i32_0 : i32, i32
  }
  func.func @transform_11(%arg0: i32) -> (i32, i32) {
    %c0_i32 = arith.constant 0 : i32
    %c0_i32_0 = arith.constant 0 : i32
    %c0_i32_1 = arith.constant 0 : i32
    return %c0_i32, %c0_i32_0 : i32, i32
  }
  func.func @transform_12(%arg0: i32) -> (i32, i32) {
    %c0_i32 = arith.constant 0 : i32
    %c0_i32_0 = arith.constant 0 : i32
    %c0_i32_1 = arith.constant 0 : i32
    return %c0_i32, %c0_i32_0 : i32, i32
  }
  func.func @transform_13(%arg0: i32) -> (i32, i32) {
    %c0_i32 = arith.constant 0 : i32
    %c0_i32_0 = arith.constant 0 : i32
    %c0_i32_1 = arith.constant 0 : i32
    return %c0_i32, %c0_i32_0 : i32, i32
  }
  func.func @transform_14(%arg0: i32) -> (i32, i32) {
    %c0_i32 = arith.constant 0 : i32
    %c0_i32_0 = arith.constant 0 : i32
    return %arg0, %c0_i32 : i32, i32
  }
}

</mosaic_0001>

<llo_original>
// kernel: neg.1
$region0: #{neg.1}
  #allocation0 [shape = 's32[1]{0}', space=sflag, size = 0x4, scoped, tag = 'scoped memory for neg.1']
  %s0 = inlined_call_operand.vmem [shape: f32[64,64], index: 0, kind: input, shape index: {}]
  %s1 = inlined_call_operand.vmem [shape: f32[64,64], index: 1, kind: output, shape index: {}]
  %v2 = vld [vmem:[%s0] sm:$0xff]
  %3 = xla_tuple %v2
  %4 = xla_tuple %3
  %v5 = vxor.u32 %v2, 2147483648
  %6 = xla_tuple %v5
  %7 = vst [vmem:[%s1] sm:$0xff] %v5
  %s8 = scalar_lea.vmem %s0, 8
  %v9 = vld [vmem:[%s8] sm:$0xff]
  %10 = xla_tuple %v9
  %11 = xla_tuple %10
  %v12 = vxor.u32 %v9, 2147483648
  %13 = xla_tuple %v12
  %s14 = scalar_lea.vmem %s1, 8
  %15 = vst [vmem:[%s14] sm:$0xff] %v12
  %s16 = scalar_lea.vmem %s0, 16
  %v17 = vld [vmem:[%s16] sm:$0xff]
  %18 = xla_tuple %v17
  %19 = xla_tuple %18
  %v20 = vxor.u32 %v17, 2147483648
  %21 = xla_tuple %v20
  %s22 = scalar_lea.vmem %s1, 16
  %23 = vst [vmem:[%s22] sm:$0xff] %v20
  %s24 = scalar_lea.vmem %s0, 24
  %v25 = vld [vmem:[%s24] sm:$0xff]
  %26 = xla_tuple %v25
  %27 = xla_tuple %26
  %v28 = vxor.u32 %v25, 2147483648
  %29 = xla_tuple %v28
  %s30 = scalar_lea.vmem %s1, 24
  %31 = vst [vmem:[%s30] sm:$0xff] %v28
  %s32 = scalar_lea.vmem %s0, 32
  %v33 = vld [vmem:[%s32] sm:$0xff]
  %34 = xla_tuple %v33
  %35 = xla_tuple %34
  %v36 = vxor.u32 %v33, 2147483648
  %37 = xla_tuple %v36
  %s38 = scalar_lea.vmem %s1, 32
  %39 = vst [vmem:[%s38] sm:$0xff] %v36
  %s40 = scalar_lea.vmem %s0, 40
  %v41 = vld [vmem:[%s40] sm:$0xff]
  %42 = xla_tuple %v41
  %43 = xla_tuple %42
  %v44 = vxor.u32 %v41, 2147483648
  %45 = xla_tuple %v44
  %s46 = scalar_lea.vmem %s1, 40
  %47 = vst [vmem:[%s46] sm:$0xff] %v44
  %s48 = scalar_lea.vmem %s0, 48
  %v49 = vld [vmem:[%s48] sm:$0xff]
  %50 = xla_tuple %v49
  %51 = xla_tuple %50
  %v52 = vxor.u32 %v49, 2147483648
  %53 = xla_tuple %v52
  %s54 = scalar_lea.vmem %s1, 48
  %55 = vst [vmem:[%s54] sm:$0xff] %v52
  %s56 = scalar_lea.vmem %s0, 56
  %v57 = vld [vmem:[%s56] sm:$0xff]
  %58 = xla_tuple %v57
  %59 = xla_tuple %58
  %v60 = vxor.u32 %v57, 2147483648
  %61 = xla_tuple %v60
  %s62 = scalar_lea.vmem %s1, 56
  %63 = vst [vmem:[%s62] sm:$0xff] %v60

// kernel: lgp_forward.1
$region0: #{lgp_forward.1}
  #allocation0 [shape = 'u32[]', space=smem, size = 0x4, offset = 0x4, fixed_abs, tag = 'smem constant byte address 0x4 - core index']
  #allocation1 [shape = 'u32[144,128]{1,0:T(1,128)}', space=vmem, size = 0x12000, scoped, tag = 'internal scratch']
  %s0 = inlined_call_operand.vmem [shape: bf16[64,8,32], index: 0, kind: input, shape index: {}]
  %s1 = inlined_call_operand.vmem [shape: f32[64,8,3], index: 1, kind: input, shape index: {}]
  %s2 = inlined_call_operand.vmem [shape: f32[64,24], index: 2, kind: input, shape index: {}]
  %s3 = inlined_call_operand.vmem [shape: bf16[24,96], index: 3, kind: input, shape index: {}]
  %s4 = inlined_call_operand.vmem [shape: f32[3,96], index: 4, kind: input, shape index: {}]
  %s5 = inlined_call_operand.vmem [shape: f32[1,96], index: 5, kind: input, shape index: {}]
  %s6 = inlined_call_operand.vmem [shape: bf16[96,96], index: 6, kind: input, shape index: {}]
  %s7 = inlined_call_operand.vmem [shape: f32[1,96], index: 7, kind: input, shape index: {}]
  %s8 = inlined_call_operand.vmem [shape: bf16[32,96], index: 8, kind: input, shape index: {}]
  %s9 = inlined_call_operand.vmem [shape: f32[3,32], index: 9, kind: input, shape index: {}]
  %s10 = inlined_call_operand.vmem [shape: f32[1,32], index: 10, kind: input, shape index: {}]
  %s11 = inlined_call_operand.vmem [shape: bf16[64,8], index: 11, kind: input, shape index: {}]
  %s12 = inlined_call_operand.vmem [shape: bf16[32,32], index: 12, kind: input, shape index: {}]
  %s13 = inlined_call_operand.vmem [shape: f32[1,32], index: 13, kind: input, shape index: {}]
  %s14 = inlined_call_operand.vmem [shape: f32[64,32], index: 14, kind: output, shape index: {}]
  %s15 = sld [smem:[#allocation0]]
  $region66: #{lgp_forward.1} parent=0
    _
  %s17 = ssub.s32 1, %s15
  %s18 = scalar_select 0, %s17, %s15
  // Predicated region
  $region2: #{lgp_forward.1} parent=0 // pred_check
    _
  $region3: #{lgp_forward.1} parent=0 // pred_check_branch
    %20 = sbr.rel (0) target = $region5
  $region4: #{lgp_forward.1} parent=0 // pred_region
    _
  $region5: #{lgp_forward.1} parent=0 // pred_fallthru
    _
  // Predicated region
  $region6: #{lgp_forward.1} parent=0 // pred_check
    _
  $region7: #{lgp_forward.1} parent=0 // pred_check_branch
    %22 = sbr.rel (0) target = $region9
  $region8: #{lgp_forward.1} parent=0 // pred_region
    _
  $region9: #{lgp_forward.1} parent=0 // pred_fallthru
    _
  // Predicated region
  $region10: #{lgp_forward.1} parent=0 // pred_check
    _
  $region11: #{lgp_forward.1} parent=0 // pred_check_branch
    %24 = sbr.rel (0) target = $region13
  $region12: #{lgp_forward.1} parent=0 // pred_region
    _
  $region13: #{lgp_forward.1} parent=0 // pred_fallthru
    _
  // Predicated region
  $region14: #{lgp_forward.1} parent=0 // pred_check
    _
  $region15: #{lgp_forward.1} parent=0 // pred_check_branch
    %26 = sbr.rel (0) target = $region17
  $region16: #{lgp_forward.1} parent=0 // pred_region
    _
  $region17: #{lgp_forward.1} parent=0 // pred_fallthru
    _
  // Predicated region
  $region18: #{lgp_forward.1} parent=0 // pred_check
    _
  $region19: #{lgp_forward.1} parent=0 // pred_check_branch
    %28 = sbr.rel (0) target = $region21
  $region20: #{lgp_forward.1} parent=0 // pred_region
    _
  $region21: #{lgp_forward.1} parent=0 // pred_fallthru
    _
  // Predicated region
  $region22: #{lgp_forward.1} parent=0 // pred_check
    _
  $region23: #{lgp_forward.1} parent=0 // pred_check_branch
    %30 = sbr.rel (0) target = $region25
  $region24: #{lgp_forward.1} parent=0 // pred_region
    _
  $region25: #{lgp_forward.1} parent=0 // pred_fallthru
    _
  // Predicated region
  $region26: #{lgp_forward.1} parent=0 // pred_check
    _
  $region27: #{lgp_forward.1} parent=0 // pred_check_branch
    %32 = sbr.rel (0) target = $region29
  $region28: #{lgp_forward.1} parent=0 // pred_region
    _
  $region29: #{lgp_forward.1} parent=0 // pred_fallthru
    _
  // Predicated region
  $region30: #{lgp_forward.1} parent=0 // pred_check
    _
  $region31: #{lgp_forward.1} parent=0 // pred_check_branch
    %34 = sbr.rel (0) target = $region33
  $region32: #{lgp_forward.1} parent=0 // pred_region
    _
  $region33: #{lgp_forward.1} parent=0 // pred_fallthru
    _
  // Predicated region
  $region34: #{lgp_forward.1} parent=0 // pred_check
    _
  $region35: #{lgp_forward.1} parent=0 // pred_check_branch
    %36 = sbr.rel (0) target = $region37
  $region36: #{lgp_forward.1} parent=0 // pred_region
    _
  $region37: #{lgp_forward.1} parent=0 // pred_fallthru
    _
  // Predicated region
  $region38: #{lgp_forward.1} parent=0 // pred_check
    _
  $region39: #{lgp_forward.1} parent=0 // pred_check_branch
    %38 = sbr.rel (0) target = $region41
  $region40: #{lgp_forward.1} parent=0 // pred_region
    _
  $region41: #{lgp_forward.1} parent=0 // pred_fallthru
    _
  // Predicated region
  $region42: #{lgp_forward.1} parent=0 // pred_check
    _
  $region43: #{lgp_forward.1} parent=0 // pred_check_branch
    %40 = sbr.rel (0) target = $region45
  $region44: #{lgp_forward.1} parent=0 // pred_region
    _
  $region45: #{lgp_forward.1} parent=0 // pred_fallthru
    _
  // Predicated region
  $region46: #{lgp_forward.1} parent=0 // pred_check
    _
  $region47: #{lgp_forward.1} parent=0 // pred_check_branch
    %42 = sbr.rel (0) target = $region49
  $region48: #{lgp_forward.1} parent=0 // pred_region
    _
  $region49: #{lgp_forward.1} parent=0 // pred_fallthru
    _
  // Predicated region
  $region50: #{lgp_forward.1} parent=0 // pred_check
    _
  $region51: #{lgp_forward.1} parent=0 // pred_check_branch
    %44 = sbr.rel (0) target = $region53
  $region52: #{lgp_forward.1} parent=0 // pred_region
    _
  $region53: #{lgp_forward.1} parent=0 // pred_fallthru
    _
  // Predicated region
  $region54: #{lgp_forward.1} parent=0 // pred_check
    _
  $region55: #{lgp_forward.1} parent=0 // pred_check_branch
    %46 = sbr.rel (0) target = $region57
  $region56: #{lgp_forward.1} parent=0 // pred_region
    _
  $region57: #{lgp_forward.1} parent=0 // pred_fallthru
    _
  %v48 = vld [vmem:[%s0] sm:$0xf]
  %v49 = vld [vmem:[%s0 + $0x4] sm:$0xf]
  %v50 = vld [vmem:[%s0 + $0x8] sm:$0xf]
  %v51 = vld [vmem:[%s0 + $0xc] sm:$0xf]
  %v52 = vld [vmem:[%s0 + $0x10] sm:$0xf]
  %v53 = vld [vmem:[%s0 + $0x14] sm:$0xf]
  %v54 = vld [vmem:[%s0 + $0x18] sm:$0xf]
  %v55 = vld [vmem:[%s0 + $0x1c] sm:$0xf]
  %v56 = vld [vmem:[%s0 + $0x20] sm:$0xf]
  %v57 = vld [vmem:[%s0 + $0x24] sm:$0xf]
  %v58 = vld [vmem:[%s0 + $0x28] sm:$0xf]
  %v59 = vld [vmem:[%s0 + $0x2c] sm:$0xf]
  %v60 = vld [vmem:[%s0 + $0x30] sm:$0xf]
  %v61 = vld [vmem:[%s0 + $0x34] sm:$0xf]
  %v62 = vld [vmem:[%s0 + $0x38] sm:$0xf]
  %v63 = vld [vmem:[%s0 + $0x3c] sm:$0xf]
  %v64 = vld [vmem:[%s0 + $0x40] sm:$0xf]
  %v65 = vld [vmem:[%s0 + $0x44] sm:$0xf]
  %v66 = vld [vmem:[%s0 + $0x48] sm:$0xf]
  %v67 = vld [vmem:[%s0 + $0x4c] sm:$0xf]
  %v68 = vld [vmem:[%s0 + $0x50] sm:$0xf]
  %v69 = vld [vmem:[%s0 + $0x54] sm:$0xf]
  %v70 = vld [vmem:[%s0 + $0x58] sm:$0xf]
  %v71 = vld [vmem:[%s0 + $0x5c] sm:$0xf]
  %v72 = vld [vmem:[%s0 + $0x60] sm:$0xf]
  %v73 = vld [vmem:[%s0 + $0x64] sm:$0xf]
  %v74 = vld [vmem:[%s0 + $0x68] sm:$0xf]
  %v75 = vld [vmem:[%s0 + $0x6c] sm:$0xf]
  %v76 = vld [vmem:[%s0 + $0x70] sm:$0xf]
  %v77 = vld [vmem:[%s0 + $0x74] sm:$0xf]
  %v78 = vld [vmem:[%s0 + $0x78] sm:$0xf]
  %v79 = vld [vmem:[%s0 + $0x7c] sm:$0xf]
  %v80 = vld [vmem:[%s0 + $0x80] sm:$0xf]
  %v81 = vld [vmem:[%s0 + $0x84] sm:$0xf]
  %v82 = vld [vmem:[%s0 + $0x88] sm:$0xf]
  %v83 = vld [vmem:[%s0 + $0x8c] sm:$0xf]
  %v84 = vld [vmem:[%s0 + $0x90] sm:$0xf]
  %v85 = vld [vmem:[%s0 + $0x94] sm:$0xf]
  %v86 = vld [vmem:[%s0 + $0x98] sm:$0xf]
  %v87 = vld [vmem:[%s0 + $0x9c] sm:$0xf]
  %v88 = vld [vmem:[%s0 + $0xa0] sm:$0xf]
  %v89 = vld [vmem:[%s0 + $0xa4] sm:$0xf]
  %v90 = vld [vmem:[%s0 + $0xa8] sm:$0xf]
  %v91 = vld [vmem:[%s0 + $0xac] sm:$0xf]
  %v92 = vld [vmem:[%s0 + $0xb0] sm:$0xf]
  %v93 = vld [vmem:[%s0 + $0xb4] sm:$0xf]
  %v94 = vld [vmem:[%s0 + $0xb8] sm:$0xf]
  %v95 = vld [vmem:[%s0 + $0xbc] sm:$0xf]
  %v96 = vld [vmem:[%s0 + $0xc0] sm:$0xf]
  %v97 = vld [vmem:[%s0 + $0xc4] sm:$0xf]
  %v98 = vld [vmem:[%s0 + $0xc8] sm:$0xf]
  %v99 = vld [vmem:[%s0 + $0xcc] sm:$0xf]
  %v100 = vld [vmem:[%s0 + $0xd0] sm:$0xf]
  %v101 = vld [vmem:[%s0 + $0xd4] sm:$0xf]
  %v102 = vld [vmem:[%s0 + $0xd8] sm:$0xf]
  %v103 = vld [vmem:[%s0 + $0xdc] sm:$0xf]
  %v104 = vld [vmem:[%s0 + $0xe0] sm:$0xf]
  %v105 = vld [vmem:[%s0 + $0xe4] sm:$0xf]
  %v106 = vld [vmem:[%s0 + $0xe8] sm:$0xf]
  %v107 = vld [vmem:[%s0 + $0xec] sm:$0xf]
  %v108 = vld [vmem:[%s0 + $0xf0] sm:$0xf]
  %v109 = vld [vmem:[%s0 + $0xf4] sm:$0xf]
  %v110 = vld [vmem:[%s0 + $0xf8] sm:$0xf]
  %v111 = vld [vmem:[%s0 + $0xfc] sm:$0xf]
  %v112 = vld [vmem:[%s1] sm:$0xff]
  %v113 = vld [vmem:[%s1 + $0x8] sm:$0xff]
  %v114 = vld [vmem:[%s1 + $0x10] sm:$0xff]
  %v115 = vld [vmem:[%s1 + $0x18] sm:$0xff]
  %v116 = vld [vmem:[%s1 + $0x20] sm:$0xff]
  %v117 = vld [vmem:[%s1 + $0x28] sm:$0xff]
  %v118 = vld [vmem:[%s1 + $0x30] sm:$0xff]
  %v119 = vld [vmem:[%s1 + $0x38] sm:$0xff]
  %v120 = vld [vmem:[%s1 + $0x40] sm:$0xff]
  %v121 = vld [vmem:[%s1 + $0x48] sm:$0xff]
  %v122 = vld [vmem:[%s1 + $0x50] sm:$0xff]
  %v123 = vld [vmem:[%s1 + $0x58] sm:$0xff]
  %v124 = vld [vmem:[%s1 + $0x60] sm:$0xff]
  %v125 = vld [vmem:[%s1 + $0x68] sm:$0xff]
  %v126 = vld [vmem:[%s1 + $0x70] sm:$0xff]
  %v127 = vld [vmem:[%s1 + $0x78] sm:$0xff]
  %v128 = vld [vmem:[%s1 + $0x80] sm:$0xff]
  %v129 = vld [vmem:[%s1 + $0x88] sm:$0xff]
  %v130 = vld [vmem:[%s1 + $0x90] sm:$0xff]
  %v131 = vld [vmem:[%s1 + $0x98] sm:$0xff]
  %v132 = vld [vmem:[%s1 + $0xa0] sm:$0xff]
  %v133 = vld [vmem:[%s1 + $0xa8] sm:$0xff]
  %v134 = vld [vmem:[%s1 + $0xb0] sm:$0xff]
  %v135 = vld [vmem:[%s1 + $0xb8] sm:$0xff]
  %v136 = vld [vmem:[%s1 + $0xc0] sm:$0xff]
  %v137 = vld [vmem:[%s1 + $0xc8] sm:$0xff]
  %v138 = vld [vmem:[%s1 + $0xd0] sm:$0xff]
  %v139 = vld [vmem:[%s1 + $0xd8] sm:$0xff]
  %v140 = vld [vmem:[%s1 + $0xe0] sm:$0xff]
  %v141 = vld [vmem:[%s1 + $0xe8] sm:$0xff]
  %v142 = vld [vmem:[%s1 + $0xf0] sm:$0xff]
  %v143 = vld [vmem:[%s1 + $0xf8] sm:$0xff]
  %v144 = vld [vmem:[%s1 + $0x100] sm:$0xff]
  %v145 = vld [vmem:[%s1 + $0x108] sm:$0xff]
  %v146 = vld [vmem:[%s1 + $0x110] sm:$0xff]
  %v147 = vld [vmem:[%s1 + $0x118] sm:$0xff]
  %v148 = vld [vmem:[%s1 + $0x120] sm:$0xff]
  %v149 = vld [vmem:[%s1 + $0x128] sm:$0xff]
  %v150 = vld [vmem:[%s1 + $0x130] sm:$0xff]
  %v151 = vld [vmem:[%s1 + $0x138] sm:$0xff]
  %v152 = vld [vmem:[%s1 + $0x140] sm:$0xff]
  %v153 = vld [vmem:[%s1 + $0x148] sm:$0xff]
  %v154 = vld [vmem:[%s1 + $0x150] sm:$0xff]
  %v155 = vld [vmem:[%s1 + $0x158] sm:$0xff]
  %v156 = vld [vmem:[%s1 + $0x160] sm:$0xff]
  %v157 = vld [vmem:[%s1 + $0x168] sm:$0xff]
  %v158 = vld [vmem:[%s1 + $0x170] sm:$0xff]
  %v159 = vld [vmem:[%s1 + $0x178] sm:$0xff]
  %v160 = vld [vmem:[%s1 + $0x180] sm:$0xff]
  %v161 = vld [vmem:[%s1 + $0x188] sm:$0xff]
  %v162 = vld [vmem:[%s1 + $0x190] sm:$0xff]
  %v163 = vld [vmem:[%s1 + $0x198] sm:$0xff]
  %v164 = vld [vmem:[%s1 + $0x1a0] sm:$0xff]
  %v165 = vld [vmem:[%s1 + $0x1a8] sm:$0xff]
  %v166 = vld [vmem:[%s1 + $0x1b0] sm:$0xff]
  %v167 = vld [vmem:[%s1 + $0x1b8] sm:$0xff]
  %v168 = vld [vmem:[%s1 + $0x1c0] sm:$0xff]
  %v169 = vld [vmem:[%s1 + $0x1c8] sm:$0xff]
  %v170 = vld [vmem:[%s1 + $0x1d0] sm:$0xff]
  %v171 = vld [vmem:[%s1 + $0x1d8] sm:$0xff]
  %v172 = vld [vmem:[%s1 + $0x1e0] sm:$0xff]
  %v173 = vld [vmem:[%s1 + $0x1e8] sm:$0xff]
  %v174 = vld [vmem:[%s1 + $0x1f0] sm:$0xff]
  %v175 = vld [vmem:[%s1 + $0x1f8] sm:$0xff]
  %v176 = vld [vmem:[%s2] sm:$0xff]
  %v177 = vld [vmem:[%s2 + $0x8] sm:$0xff]
  %v178 = vld [vmem:[%s2 + $0x10] sm:$0xff]
  %v179 = vld [vmem:[%s2 + $0x18] sm:$0xff]
  %v180 = vld [vmem:[%s2 + $0x20] sm:$0xff]
  %v181 = vld [vmem:[%s2 + $0x28] sm:$0xff]
  %v182 = vld [vmem:[%s2 + $0x30] sm:$0xff]
  %v183 = vld [vmem:[%s2 + $0x38] sm:$0xff]
  %v184 = vpack.c.bf16 %v177, %v176
  %v185 = vpack.c.bf16 %v179, %v178
  %v186 = vpack.c.bf16 %v181, %v180
  %v187 = vpack.c.bf16 %v183, %v182
  %v188 = vld [vmem:[%s3] sm:$0xf]
  %v189 = vld [vmem:[%s3 + $0x4] sm:$0xf]
  %v190 = vld [vmem:[%s3 + $0x8] sm:$0xf]
  %v194 = vunpack.c.l.b16 %v188
  %v195 = vunpack.c.l.b16 %v189
  %v196 = vunpack.c.l.b16 %v190
  %v197 = vpack.c.b16 %v195, %v194
  %v198 = vpack.c.b16 %v196, %v196
  %vm200 = vcmask 195584
  %v202 = vsel %vm200, %v184, 0
  %v205 = vsel %vm200, %v185, 0
  %v208 = vsel %vm200, %v186, 0
  %v211 = vsel %vm200, %v187, 0
  %vm213 = vcmask 1043456
  %v215 = vsel %vm213, %v198, 0
  %217 = vmatprep.subr.bf16.mxu0 0
  %218 = vmatpush1.bf16.msra.mxu0 0
  %219 = vmatprep.subr.bf16.mxu0 0
  %220 = vmatpush1.bf16.msra.mxu0 0
  %221 = vmatprep.subr.bf16.mxu0 0
  %222 = vmatpush1.bf16.msra.mxu0 0
  %223 = vmatprep.subr.bf16.mxu0 0
  %224 = vmatpush1.bf16.msra.mxu0 0
  %225 = vmatprep.subr.bf16.mxu0 0
  %226 = vmatpush1.bf16.msra.mxu0 0
  %227 = vmatprep.subr.bf16.mxu0 0
  %228 = vmatpush1.bf16.msra.mxu0 0
  %229 = vmatprep.subr.bf16.mxu0 0
  %230 = vmatpush1.bf16.msra.mxu0 %v215
  %231 = vmatprep.subr.bf16.mxu0 0
  %232 = vmatpush1.bf16.msra.mxu0 %v197
  %233 = vmatprep.subr.bf16.mxu0 0
  %234 = vmatpush2.bf16.msra.mxu0 0
  %235 = vmatprep.subr.bf16.mxu0 0
  %236 = vmatpush2.bf16.msra.mxu0 0
  %237 = vmatprep.subr.bf16.mxu0 0
  %238 = vmatpush2.bf16.msra.mxu0 0
  %239 = vmatprep.subr.bf16.mxu0 0
  %240 = vmatpush2.bf16.msra.mxu0 0
  %241 = vmatprep.subr.bf16.mxu0 0
  %242 = vmatpush2.bf16.msra.mxu0 0
  %243 = vmatprep.subr.bf16.mxu0 0
  %244 = vmatpush2.bf16.msra.mxu0 0
  %245 = vmatprep.subr.bf16.mxu0 0
  %246 = vmatpush2.bf16.msra.mxu0 0
  %247 = vmatprep.subr.bf16.mxu0 0
  %248 = vmatpush2.bf16.msra.mxu0 0
  %249 = vmatprep.mubr.bf16.mxu0 0
  %250 = vmatmul.mubr.bf16.gmra.mxu0 %v202
  %v251 = vpop.f32.mrf.mxu0
  %v252 = vadd.f32 0.0, %v251
  %v253 = vpop.f32.mrf.mxu0
  %v254 = vpop.f32.mrf.mxu0
  %v255 = vadd.f32 0.0, %v254
  %v256 = vpop.f32.mrf.mxu0
  %257 = vmatprep.mubr.bf16.mxu0 0
  %258 = vmatmul.mubr.bf16.gmra.mxu0 %v205
  %v259 = vpop.f32.mrf.mxu0
  %v260 = vadd.f32 0.0, %v259
  %v261 = vpop.f32.mrf.mxu0
  %v262 = vpop.f32.mrf.mxu0
  %v263 = vadd.f32 0.0, %v262
  %v264 = vpop.f32.mrf.mxu0
  %265 = vmatprep.mubr.bf16.mxu0 0
  %266 = vmatmul.mubr.bf16.gmra.mxu0 %v208
  %v267 = vpop.f32.mrf.mxu0
  %v268 = vadd.f32 0.0, %v267
  %v269 = vpop.f32.mrf.mxu0
  %v270 = vpop.f32.mrf.mxu0
  %v271 = vadd.f32 0.0, %v270
  %v272 = vpop.f32.mrf.mxu0
  %273 = vmatprep.mubr.bf16.mxu0 0
  %274 = vmatmul.mubr.bf16.gmra.mxu0 %v211
  %v275 = vpop.f32.mrf.mxu0
  %v276 = vadd.f32 0.0, %v275
  %v277 = vpop.f32.mrf.mxu0
  %v278 = vpop.f32.mrf.mxu0
  %v279 = vadd.f32 0.0, %v278
  %v280 = vpop.f32.mrf.mxu0
  %281 = vdwg.mxu0
  %v282 = vld [vmem:[%s4] sm:$0x7]
  %284 = vset.pattern.permute.xlu0 0
  %285 = vperm.xlu0 %284, %v112
  %v286 = vpop.permute.xlu0 %285
  %289 = vset.pattern.permute.xlu0 0
  %290 = vperm.xlu0 %289, %v113
  %v291 = vpop.permute.xlu0 %290
  %294 = vset.pattern.permute.xlu0 0
  %295 = vperm.xlu0 %294, %v114
  %v296 = vpop.permute.xlu0 %295
  %299 = vset.pattern.permute.xlu0 0
  %300 = vperm.xlu0 %299, %v115
  %v301 = vpop.permute.xlu0 %300
  %304 = vset.pattern.permute.xlu0 0
  %305 = vperm.xlu0 %304, %v116
  %v306 = vpop.permute.xlu0 %305
  %309 = vset.pattern.permute.xlu0 0
  %310 = vperm.xlu0 %309, %v117
  %v311 = vpop.permute.xlu0 %310
  %314 = vset.pattern.permute.xlu0 0
  %315 = vperm.xlu0 %314, %v118
  %v316 = vpop.permute.xlu0 %315
  %319 = vset.pattern.permute.xlu0 0
  %320 = vperm.xlu0 %319, %v119
  %v321 = vpop.permute.xlu0 %320
  %324 = vset.pattern.permute.xlu0 0
  %325 = vperm.xlu0 %324, %v120
  %v326 = vpop.permute.xlu0 %325
  %329 = vset.pattern.permute.xlu0 0
  %330 = vperm.xlu0 %329, %v121
  %v331 = vpop.permute.xlu0 %330
  %334 = vset.pattern.permute.xlu0 0
  %335 = vperm.xlu0 %334, %v122
  %v336 = vpop.permute.xlu0 %335
  %339 = vset.pattern.permute.xlu0 0
  %340 = vperm.xlu0 %339, %v123
  %v341 = vpop.permute.xlu0 %340
  %344 = vset.pattern.permute.xlu0 0
  %345 = vperm.xlu0 %344, %v124
  %v346 = vpop.permute.xlu0 %345
  %349 = vset.pattern.permute.xlu0 0
  %350 = vperm.xlu0 %349, %v125
  %v351 = vpop.permute.xlu0 %350
  %354 = vset.pattern.permute.xlu0 0
  %355 = vperm.xlu0 %354, %v126
  %v356 = vpop.permute.xlu0 %355
  %359 = vset.pattern.permute.xlu0 0
  %360 = vperm.xlu0 %359, %v127
  %v361 = vpop.permute.xlu0 %360
  %364 = vset.pattern.permute.xlu0 0
  %365 = vperm.xlu0 %364, %v128
  %v366 = vpop.permute.xlu0 %365
  %369 = vset.pattern.permute.xlu0 0
  %370 = vperm.xlu0 %369, %v129
  %v371 = vpop.permute.xlu0 %370
  %374 = vset.pattern.permute.xlu0 0
  %375 = vperm.xlu0 %374, %v130
  %v376 = vpop.permute.xlu0 %375
  %379 = vset.pattern.permute.xlu0 0
  %380 = vperm.xlu0 %379, %v131
  %v381 = vpop.permute.xlu0 %380
  %384 = vset.pattern.permute.xlu0 0
  %385 = vperm.xlu0 %384, %v132
  %v386 = vpop.permute.xlu0 %385
  %389 = vset.pattern.permute.xlu0 0
  %390 = vperm.xlu0 %389, %v133
  %v391 = vpop.permute.xlu0 %390
  %394 = vset.pattern.permute.xlu0 0
  %395 = vperm.xlu0 %394, %v134
  %v396 = vpop.permute.xlu0 %395
  %399 = vset.pattern.permute.xlu0 0
  %400 = vperm.xlu0 %399, %v135
  %v401 = vpop.permute.xlu0 %400
  %404 = vset.pattern.permute.xlu0 0
  %405 = vperm.xlu0 %404, %v136
  %v406 = vpop.permute.xlu0 %405
  %409 = vset.pattern.permute.xlu0 0
  %410 = vperm.xlu0 %409, %v137
  %v411 = vpop.permute.xlu0 %410
  %414 = vset.pattern.permute.xlu0 0
  %415 = vperm.xlu0 %414, %v138
  %v416 = vpop.permute.xlu0 %415
  %419 = vset.pattern.permute.xlu0 0
  %420 = vperm.xlu0 %419, %v139
  %v421 = vpop.permute.xlu0 %420
  %424 = vset.pattern.permute.xlu0 0
  %425 = vperm.xlu0 %424, %v140
  %v426 = vpop.permute.xlu0 %425
  %429 = vset.pattern.permute.xlu0 0
  %430 = vperm.xlu0 %429, %v141
  %v431 = vpop.permute.xlu0 %430
  %434 = vset.pattern.permute.xlu0 0
  %435 = vperm.xlu0 %434, %v142
  %v436 = vpop.permute.xlu0 %435
  %439 = vset.pattern.permute.xlu0 0
  %440 = vperm.xlu0 %439, %v143
  %v441 = vpop.permute.xlu0 %440
  %444 = vset.pattern.permute.xlu0 0
  %445 = vperm.xlu0 %444, %v144
  %v446 = vpop.permute.xlu0 %445
  %449 = vset.pattern.permute.xlu0 0
  %450 = vperm.xlu0 %449, %v145
  %v451 = vpop.permute.xlu0 %450
  %454 = vset.pattern.permute.xlu0 0
  %455 = vperm.xlu0 %454, %v146
  %v456 = vpop.permute.xlu0 %455
  %459 = vset.pattern.permute.xlu0 0
  %460 = vperm.xlu0 %459, %v147
  %v461 = vpop.permute.xlu0 %460
  %464 = vset.pattern.permute.xlu0 0
  %465 = vperm.xlu0 %464, %v148
  %v466 = vpop.permute.xlu0 %465
  %469 = vset.pattern.permute.xlu0 0
  %470 = vperm.xlu0 %469, %v149
  %v471 = vpop.permute.xlu0 %470
  %474 = vset.pattern.permute.xlu0 0
  %475 = vperm.xlu0 %474, %v150
  %v476 = vpop.permute.xlu0 %475
  %479 = vset.pattern.permute.xlu0 0
  %480 = vperm.xlu0 %479, %v151
  %v481 = vpop.permute.xlu0 %480
  %484 = vset.pattern.permute.xlu0 0
  %485 = vperm.xlu0 %484, %v152
  %v486 = vpop.permute.xlu0 %485
  %489 = vset.pattern.permute.xlu0 0
  %490 = vperm.xlu0 %489, %v153
  %v491 = vpop.permute.xlu0 %490
  %494 = vset.pattern.permute.xlu0 0
  %495 = vperm.xlu0 %494, %v154
  %v496 = vpop.permute.xlu0 %495
  %499 = vset.pattern.permute.xlu0 0
  %500 = vperm.xlu0 %499, %v155
  %v501 = vpop.permute.xlu0 %500
  %504 = vset.pattern.permute.xlu0 0
  %505 = vperm.xlu0 %504, %v156
  %v506 = vpop.permute.xlu0 %505
  %509 = vset.pattern.permute.xlu0 0
  %510 = vperm.xlu0 %509, %v157
  %v511 = vpop.permute.xlu0 %510
  %514 = vset.pattern.permute.xlu0 0
  %515 = vperm.xlu0 %514, %v158
  %v516 = vpop.permute.xlu0 %515
  %519 = vset.pattern.permute.xlu0 0
  %520 = vperm.xlu0 %519, %v159
  %v521 = vpop.permute.xlu0 %520
  %524 = vset.pattern.permute.xlu0 0
  %525 = vperm.xlu0 %524, %v160
  %v526 = vpop.permute.xlu0 %525
  %529 = vset.pattern.permute.xlu0 0
  %530 = vperm.xlu0 %529, %v161
  %v531 = vpop.permute.xlu0 %530
  %534 = vset.pattern.permute.xlu0 0
  %535 = vperm.xlu0 %534, %v162
  %v536 = vpop.permute.xlu0 %535
  %539 = vset.pattern.permute.xlu0 0
  %540 = vperm.xlu0 %539, %v163
  %v541 = vpop.permute.xlu0 %540
  %544 = vset.pattern.permute.xlu0 0
  %545 = vperm.xlu0 %544, %v164
  %v546 = vpop.permute.xlu0 %545
  %549 = vset.pattern.permute.xlu0 0
  %550 = vperm.xlu0 %549, %v165
  %v551 = vpop.permute.xlu0 %550
  %554 = vset.pattern.permute.xlu0 0
  %555 = vperm.xlu0 %554, %v166
  %v556 = vpop.permute.xlu0 %555
  %559 = vset.pattern.permute.xlu0 0
  %560 = vperm.xlu0 %559, %v167
  %v561 = vpop.permute.xlu0 %560
  %564 = vset.pattern.permute.xlu0 0
  %565 = vperm.xlu0 %564, %v168
  %v566 = vpop.permute.xlu0 %565
  %569 = vset.pattern.permute.xlu0 0
  %570 = vperm.xlu0 %569, %v169
  %v571 = vpop.permute.xlu0 %570
  %574 = vset.pattern.permute.xlu0 0
  %575 = vperm.xlu0 %574, %v170
  %v576 = vpop.permute.xlu0 %575
  %579 = vset.pattern.permute.xlu0 0
  %580 = vperm.xlu0 %579, %v171
  %v581 = vpop.permute.xlu0 %580
  %584 = vset.pattern.permute.xlu0 0
  %585 = vperm.xlu0 %584, %v172
  %v586 = vpop.permute.xlu0 %585
  %589 = vset.pattern.permute.xlu0 0
  %590 = vperm.xlu0 %589, %v173
  %v591 = vpop.permute.xlu0 %590
  %594 = vset.pattern.permute.xlu0 0
  %595 = vperm.xlu0 %594, %v174
  %v596 = vpop.permute.xlu0 %595
  %599 = vset.pattern.permute.xlu0 0
  %600 = vperm.xlu0 %599, %v175
  %v601 = vpop.permute.xlu0 %600
  %v603 = vlaneseq
  %v604 = vshrl.u32 %v603, 7
  %v605 = vsub.s32 0, %v604
  %v606 = vrot.slane %v282, %v605
  %v607 = vmul.f32 %v286, %v606
  %v608 = vmul.f32 %v291, %v606
  %v609 = vmul.f32 %v296, %v606
  %v610 = vmul.f32 %v301, %v606
  %v611 = vmul.f32 %v306, %v606
  %v612 = vmul.f32 %v311, %v606
  %v613 = vmul.f32 %v316, %v606
  %v614 = vmul.f32 %v321, %v606
  %v615 = vmul.f32 %v326, %v606
  %v616 = vmul.f32 %v331, %v606
  %v617 = vmul.f32 %v336, %v606
  %v618 = vmul.f32 %v341, %v606
  %v619 = vmul.f32 %v346, %v606
  %v620 = vmul.f32 %v351, %v606
  %v621 = vmul.f32 %v356, %v606
  %v622 = vmul.f32 %v361, %v606
  %v623 = vmul.f32 %v366, %v606
  %v624 = vmul.f32 %v371, %v606
  %v625 = vmul.f32 %v376, %v606
  %v626 = vmul.f32 %v381, %v606
  %v627 = vmul.f32 %v386, %v606
  %v628 = vmul.f32 %v391, %v606
  %v629 = vmul.f32 %v396, %v606
  %v630 = vmul.f32 %v401, %v606
  %v631 = vmul.f32 %v406, %v606
  %v632 = vmul.f32 %v411, %v606
  %v633 = vmul.f32 %v416, %v606
  %v634 = vmul.f32 %v421, %v606
  %v635 = vmul.f32 %v426, %v606
  %v636 = vmul.f32 %v431, %v606
  %v637 = vmul.f32 %v436, %v606
  %v638 = vmul.f32 %v441, %v606
  %v639 = vmul.f32 %v446, %v606
  %v640 = vmul.f32 %v451, %v606
  %v641 = vmul.f32 %v456, %v606
  %v642 = vmul.f32 %v461, %v606
  %v643 = vmul.f32 %v466, %v606
  %v644 = vmul.f32 %v471, %v606
  %v645 = vmul.f32 %v476, %v606
  %v646 = vmul.f32 %v481, %v606
  %v647 = vmul.f32 %v486, %v606
  %v648 = vmul.f32 %v491, %v606
  %v649 = vmul.f32 %v496, %v606
  %v650 = vmul.f32 %v501, %v606
  %v651 = vmul.f32 %v506, %v606
  %v652 = vmul.f32 %v511, %v606
  %v653 = vmul.f32 %v516, %v606
  %v654 = vmul.f32 %v521, %v606
  %v655 = vmul.f32 %v526, %v606
  %v656 = vmul.f32 %v531, %v606
  %v657 = vmul.f32 %v536, %v606
  %v658 = vmul.f32 %v541, %v606
  %v659 = vmul.f32 %v546, %v606
  %v660 = vmul.f32 %v551, %v606
  %v661 = vmul.f32 %v556, %v606
  %v662 = vmul.f32 %v561, %v606
  %v663 = vmul.f32 %v566, %v606
  %v664 = vmul.f32 %v571, %v606
  %v665 = vmul.f32 %v576, %v606
  %v666 = vmul.f32 %v581, %v606
  %v667 = vmul.f32 %v586, %v606
  %v668 = vmul.f32 %v591, %v606
  %v669 = vmul.f32 %v596, %v606
  %v670 = vmul.f32 %v601, %v606
  %671 = vset.pattern.permute.xlu0 1
  %672 = vperm.xlu0 %671, %v112
  %v673 = vpop.permute.xlu0 %672
  %675 = vset.pattern.permute.xlu0 1
  %676 = vperm.xlu0 %675, %v113
  %v677 = vpop.permute.xlu0 %676
  %679 = vset.pattern.permute.xlu0 1
  %680 = vperm.xlu0 %679, %v114
  %v681 = vpop.permute.xlu0 %680
  %683 = vset.pattern.permute.xlu0 1
  %684 = vperm.xlu0 %683, %v115
  %v685 = vpop.permute.xlu0 %684
  %687 = vset.pattern.permute.xlu0 1
  %688 = vperm.xlu0 %687, %v116
  %v689 = vpop.permute.xlu0 %688
  %691 = vset.pattern.permute.xlu0 1
  %692 = vperm.xlu0 %691, %v117
  %v693 = vpop.permute.xlu0 %692
  %695 = vset.pattern.permute.xlu0 1
  %696 = vperm.xlu0 %695, %v118
  %v697 = vpop.permute.xlu0 %696
  %699 = vset.pattern.permute.xlu0 1
  %700 = vperm.xlu0 %699, %v119
  %v701 = vpop.permute.xlu0 %700
  %703 = vset.pattern.permute.xlu0 1
  %704 = vperm.xlu0 %703, %v120
  %v705 = vpop.permute.xlu0 %704
  %707 = vset.pattern.permute.xlu0 1
  %708 = vperm.xlu0 %707, %v121
  %v709 = vpop.permute.xlu0 %708
  %711 = vset.pattern.permute.xlu0 1
  %712 = vperm.xlu0 %711, %v122
  %v713 = vpop.permute.xlu0 %712
  %715 = vset.pattern.permute.xlu0 1
  %716 = vperm.xlu0 %715, %v123
  %v717 = vpop.permute.xlu0 %716
  %719 = vset.pattern.permute.xlu0 1
  %720 = vperm.xlu0 %719, %v124
  %v721 = vpop.permute.xlu0 %720
  %723 = vset.pattern.permute.xlu0 1
  %724 = vperm.xlu0 %723, %v125
  %v725 = vpop.permute.xlu0 %724
  %727 = vset.pattern.permute.xlu0 1
  %728 = vperm.xlu0 %727, %v126
  %v729 = vpop.permute.xlu0 %728
  %731 = vset.pattern.permute.xlu0 1
  %732 = vperm.xlu0 %731, %v127
  %v733 = vpop.permute.xlu0 %732
  %735 = vset.pattern.permute.xlu0 1
  %736 = vperm.xlu0 %735, %v128
  %v737 = vpop.permute.xlu0 %736
  %739 = vset.pattern.permute.xlu0 1
  %740 = vperm.xlu0 %739, %v129
  %v741 = vpop.permute.xlu0 %740
  %743 = vset.pattern.permute.xlu0 1
  %744 = vperm.xlu0 %743, %v130
  %v745 = vpop.permute.xlu0 %744
  %747 = vset.pattern.permute.xlu0 1
  %748 = vperm.xlu0 %747, %v131
  %v749 = vpop.permute.xlu0 %748
  %751 = vset.pattern.permute.xlu0 1
  %752 = vperm.xlu0 %751, %v132
  %v753 = vpop.permute.xlu0 %752
  %755 = vset.pattern.permute.xlu0 1
  %756 = vperm.xlu0 %755, %v133
  %v757 = vpop.permute.xlu0 %756
  %759 = vset.pattern.permute.xlu0 1
  %760 = vperm.xlu0 %759, %v134
  %v761 = vpop.permute.xlu0 %760
  %763 = vset.pattern.permute.xlu0 1
  %764 = vperm.xlu0 %763, %v135
  %v765 = vpop.permute.xlu0 %764
  %767 = vset.pattern.permute.xlu0 1
  %768 = vperm.xlu0 %767, %v136
  %v769 = vpop.permute.xlu0 %768
  %771 = vset.pattern.permute.xlu0 1
  %772 = vperm.xlu0 %771, %v137
  %v773 = vpop.permute.xlu0 %772
  %775 = vset.pattern.permute.xlu0 1
  %776 = vperm.xlu0 %775, %v138
  %v777 = vpop.permute.xlu0 %776
  %779 = vset.pattern.permute.xlu0 1
  %780 = vperm.xlu0 %779, %v139
  %v781 = vpop.permute.xlu0 %780
  %783 = vset.pattern.permute.xlu0 1
  %784 = vperm.xlu0 %783, %v140
  %v785 = vpop.permute.xlu0 %784
  %787 = vset.pattern.permute.xlu0 1
  %788 = vperm.xlu0 %787, %v141
  %v789 = vpop.permute.xlu0 %788
  %791 = vset.pattern.permute.xlu0 1
  %792 = vperm.xlu0 %791, %v142
  %v793 = vpop.permute.xlu0 %792
  %795 = vset.pattern.permute.xlu0 1
  %796 = vperm.xlu0 %795, %v143
  %v797 = vpop.permute.xlu0 %796
  %799 = vset.pattern.permute.xlu0 1
  %800 = vperm.xlu0 %799, %v144
  %v801 = vpop.permute.xlu0 %800
  %803 = vset.pattern.permute.xlu0 1
  %804 = vperm.xlu0 %803, %v145
  %v805 = vpop.permute.xlu0 %804
  %807 = vset.pattern.permute.xlu0 1
  %808 = vperm.xlu0 %807, %v146
  %v809 = vpop.permute.xlu0 %808
  %811 = vset.pattern.permute.xlu0 1
  %812 = vperm.xlu0 %811, %v147
  %v813 = vpop.permute.xlu0 %812
  %815 = vset.pattern.permute.xlu0 1
  %816 = vperm.xlu0 %815, %v148
  %v817 = vpop.permute.xlu0 %816
  %819 = vset.pattern.permute.xlu0 1
  %820 = vperm.xlu0 %819, %v149
  %v821 = vpop.permute.xlu0 %820
  %823 = vset.pattern.permute.xlu0 1
  %824 = vperm.xlu0 %823, %v150
  %v825 = vpop.permute.xlu0 %824
  %827 = vset.pattern.permute.xlu0 1
  %828 = vperm.xlu0 %827, %v151
  %v829 = vpop.permute.xlu0 %828
  %831 = vset.pattern.permute.xlu0 1
  %832 = vperm.xlu0 %831, %v152
  %v833 = vpop.permute.xlu0 %832
  %835 = vset.pattern.permute.xlu0 1
  %836 = vperm.xlu0 %835, %v153
  %v837 = vpop.permute.xlu0 %836
  %839 = vset.pattern.permute.xlu0 1
  %840 = vperm.xlu0 %839, %v154
  %v841 = vpop.permute.xlu0 %840
  %843 = vset.pattern.permute.xlu0 1
  %844 = vperm.xlu0 %843, %v155
  %v845 = vpop.permute.xlu0 %844
  %847 = vset.pattern.permute.xlu0 1
  %848 = vperm.xlu0 %847, %v156
  %v849 = vpop.permute.xlu0 %848
  %851 = vset.pattern.permute.xlu0 1
  %852 = vperm.xlu0 %851, %v157
  %v853 = vpop.permute.xlu0 %852
  %855 = vset.pattern.permute.xlu0 1
  %856 = vperm.xlu0 %855, %v158
  %v857 = vpop.permute.xlu0 %856
  %859 = vset.pattern.permute.xlu0 1
  %860 = vperm.xlu0 %859, %v159
  %v861 = vpop.permute.xlu0 %860
  %863 = vset.pattern.permute.xlu0 1
  %864 = vperm.xlu0 %863, %v160
  %v865 = vpop.permute.xlu0 %864
  %867 = vset.pattern.permute.xlu0 1
  %868 = vperm.xlu0 %867, %v161
  %v869 = vpop.permute.xlu0 %868
  %871 = vset.pattern.permute.xlu0 1
  %872 = vperm.xlu0 %871, %v162
  %v873 = vpop.permute.xlu0 %872
  %875 = vset.pattern.permute.xlu0 1
  %876 = vperm.xlu0 %875, %v163
  %v877 = vpop.permute.xlu0 %876
  %879 = vset.pattern.permute.xlu0 1
  %880 = vperm.xlu0 %879, %v164
  %v881 = vpop.permute.xlu0 %880
  %883 = vset.pattern.permute.xlu0 1
  %884 = vperm.xlu0 %883, %v165
  %v885 = vpop.permute.xlu0 %884
  %887 = vset.pattern.permute.xlu0 1
  %888 = vperm.xlu0 %887, %v166
  %v889 = vpop.permute.xlu0 %888
  %891 = vset.pattern.permute.xlu0 1
  %892 = vperm.xlu0 %891, %v167
  %v893 = vpop.permute.xlu0 %892
  %895 = vset.pattern.permute.xlu0 1
  %896 = vperm.xlu0 %895, %v168
  %v897 = vpop.permute.xlu0 %896
  %899 = vset.pattern.permute.xlu0 1
  %900 = vperm.xlu0 %899, %v169
  %v901 = vpop.permute.xlu0 %900
  %903 = vset.pattern.permute.xlu0 1
  %904 = vperm.xlu0 %903, %v170
  %v905 = vpop.permute.xlu0 %904
  %907 = vset.pattern.permute.xlu0 1
  %908 = vperm.xlu0 %907, %v171
  %v909 = vpop.permute.xlu0 %908
  %911 = vset.pattern.permute.xlu0 1
  %912 = vperm.xlu0 %911, %v172
  %v913 = vpop.permute.xlu0 %912
  %915 = vset.pattern.permute.xlu0 1
  %916 = vperm.xlu0 %915, %v173
  %v917 = vpop.permute.xlu0 %916
  %919 = vset.pattern.permute.xlu0 1
  %920 = vperm.xlu0 %919, %v174
  %v921 = vpop.permute.xlu0 %920
  %923 = vset.pattern.permute.xlu0 1
  %924 = vperm.xlu0 %923, %v175
  %v925 = vpop.permute.xlu0 %924
  %v927 = vlaneseq
  %v928 = vshrl.u32 %v927, 7
  %v929 = vsub.s32 1, %v928
  %v930 = vrot.slane %v282, %v929
  %v931 = vmul.f32 %v673, %v930
  %v932 = vmul.f32 %v677, %v930
  %v933 = vmul.f32 %v681, %v930
  %v934 = vmul.f32 %v685, %v930
  %v935 = vmul.f32 %v689, %v930
  %v936 = vmul.f32 %v693, %v930
  %v937 = vmul.f32 %v697, %v930
  %v938 = vmul.f32 %v701, %v930
  %v939 = vmul.f32 %v705, %v930
  %v940 = vmul.f32 %v709, %v930
  %v941 = vmul.f32 %v713, %v930
  %v942 = vmul.f32 %v717, %v930
  %v943 = vmul.f32 %v721, %v930
  %v944 = vmul.f32 %v725, %v930
  %v945 = vmul.f32 %v729, %v930
  %v946 = vmul.f32 %v733, %v930
  %v947 = vmul.f32 %v737, %v930
  %v948 = vmul.f32 %v741, %v930
  %v949 = vmul.f32 %v745, %v930
  %v950 = vmul.f32 %v749, %v930
  %v951 = vmul.f32 %v753, %v930
  %v952 = vmul.f32 %v757, %v930
  %v953 = vmul.f32 %v761, %v930
  %v954 = vmul.f32 %v765, %v930
  %v955 = vmul.f32 %v769, %v930
  %v956 = vmul.f32 %v773, %v930
  %v957 = vmul.f32 %v777, %v930
  %v958 = vmul.f32 %v781, %v930
  %v959 = vmul.f32 %v785, %v930
  %v960 = vmul.f32 %v789, %v930
  %v961 = vmul.f32 %v793, %v930
  %v962 = vmul.f32 %v797, %v930
  %v963 = vmul.f32 %v801, %v930
  %v964 = vmul.f32 %v805, %v930
  %v965 = vmul.f32 %v809, %v930
  %v966 = vmul.f32 %v813, %v930
  %v967 = vmul.f32 %v817, %v930
  %v968 = vmul.f32 %v821, %v930
  %v969 = vmul.f32 %v825, %v930
  %v970 = vmul.f32 %v829, %v930
  %v971 = vmul.f32 %v833, %v930
  %v972 = vmul.f32 %v837, %v930
  %v973 = vmul.f32 %v841, %v930
  %v974 = vmul.f32 %v845, %v930
  %v975 = vmul.f32 %v849, %v930
  %v976 = vmul.f32 %v853, %v930
  %v977 = vmul.f32 %v857, %v930
  %v978 = vmul.f32 %v861, %v930
  %v979 = vmul.f32 %v865, %v930
  %v980 = vmul.f32 %v869, %v930
  %v981 = vmul.f32 %v873, %v930
  %v982 = vmul.f32 %v877, %v930
  %v983 = vmul.f32 %v881, %v930
  %v984 = vmul.f32 %v885, %v930
  %v985 = vmul.f32 %v889, %v930
  %v986 = vmul.f32 %v893, %v930
  %v987 = vmul.f32 %v897, %v930
  %v988 = vmul.f32 %v901, %v930
  %v989 = vmul.f32 %v905, %v930
  %v990 = vmul.f32 %v909, %v930
  %v991 = vmul.f32 %v913, %v930
  %v992 = vmul.f32 %v917, %v930
  %v993 = vmul.f32 %v921, %v930
  %v994 = vmul.f32 %v925, %v930
  %v995 = vadd.f32 %v607, %v931
  %v996 = vadd.f32 %v608, %v932
  %v997 = vadd.f32 %v609, %v933
  %v998 = vadd.f32 %v610, %v934
  %v999 = vadd.f32 %v611, %v935
  %v1000 = vadd.f32 %v612, %v936
  %v1001 = vadd.f32 %v613, %v937
  %v1002 = vadd.f32 %v614, %v938
  %v1003 = vadd.f32 %v615, %v939
  %v1004 = vadd.f32 %v616, %v940
  %v1005 = vadd.f32 %v617, %v941
  %v1006 = vadd.f32 %v618, %v942
  %v1007 = vadd.f32 %v619, %v943
  %v1008 = vadd.f32 %v620, %v944
  %v1009 = vadd.f32 %v621, %v945
  %v1010 = vadd.f32 %v622, %v946
  %v1011 = vadd.f32 %v623, %v947
  %v1012 = vadd.f32 %v624, %v948
  %v1013 = vadd.f32 %v625, %v949
  %v1014 = vadd.f32 %v626, %v950
  %v1015 = vadd.f32 %v627, %v951
  %v1016 = vadd.f32 %v628, %v952
  %v1017 = vadd.f32 %v629, %v953
  %v1018 = vadd.f32 %v630, %v954
  %v1019 = vadd.f32 %v631, %v955
  %v1020 = vadd.f32 %v632, %v956
  %v1021 = vadd.f32 %v633, %v957
  %v1022 = vadd.f32 %v634, %v958
  %v1023 = vadd.f32 %v635, %v959
  %v1024 = vadd.f32 %v636, %v960
  %v1025 = vadd.f32 %v637, %v961
  %v1026 = vadd.f32 %v638, %v962
  %v1027 = vadd.f32 %v639, %v963
  %v1028 = vadd.f32 %v640, %v964
  %v1029 = vadd.f32 %v641, %v965
  %v1030 = vadd.f32 %v642, %v966
  %v1031 = vadd.f32 %v643, %v967
  %v1032 = vadd.f32 %v644, %v968
  %v1033 = vadd.f32 %v645, %v969
  %v1034 = vadd.f32 %v646, %v970
  %v1035 = vadd.f32 %v647, %v971
  %v1036 = vadd.f32 %v648, %v972
  %v1037 = vadd.f32 %v649, %v973
  %v1038 = vadd.f32 %v650, %v974
  %v1039 = vadd.f32 %v651, %v975
  %v1040 = vadd.f32 %v652, %v976
  %v1041 = vadd.f32 %v653, %v977
  %v1042 = vadd.f32 %v654, %v978
  %v1043 = vadd.f32 %v655, %v979
  %v1044 = vadd.f32 %v656, %v980
  %v1045 = vadd.f32 %v657, %v981
  %v1046 = vadd.f32 %v658, %v982
  %v1047 = vadd.f32 %v659, %v983
  %v1048 = vadd.f32 %v660, %v984
  %v1049 = vadd.f32 %v661, %v985
  %v1050 = vadd.f32 %v662, %v986
  %v1051 = vadd.f32 %v663, %v987
  %v1052 = vadd.f32 %v664, %v988
  %v1053 = vadd.f32 %v665, %v989
  %v1054 = vadd.f32 %v666, %v990
  %v1055 = vadd.f32 %v667, %v991
  %v1056 = vadd.f32 %v668, %v992
  %v1057 = vadd.f32 %v669, %v993
  %v1058 = vadd.f32 %v670, %v994
  %1059 = vset.pattern.permute.xlu0 2
  %1060 = vperm.xlu0 %1059, %v112
  %v1061 = vpop.permute.xlu0 %1060
  %1063 = vset.pattern.permute.xlu0 2
  %1064 = vperm.xlu0 %1063, %v113
  %v1065 = vpop.permute.xlu0 %1064
  %1067 = vset.pattern.permute.xlu0 2
  %1068 = vperm.xlu0 %1067, %v114
  %v1069 = vpop.permute.xlu0 %1068
  %1071 = vset.pattern.permute.xlu0 2
  %1072 = vperm.xlu0 %1071, %v115
  %v1073 = vpop.permute.xlu0 %1072
  %1075 = vset.pattern.permute.xlu0 2
  %1076 = vperm.xlu0 %1075, %v116
  %v1077 = vpop.permute.xlu0 %1076
  %1079 = vset.pattern.permute.xlu0 2
  %1080 = vperm.xlu0 %1079, %v117
  %v1081 = vpop.permute.xlu0 %1080
  %1083 = vset.pattern.permute.xlu0 2
  %1084 = vperm.xlu0 %1083, %v118
  %v1085 = vpop.permute.xlu0 %1084
  %1087 = vset.pattern.permute.xlu0 2
  %1088 = vperm.xlu0 %1087, %v119
  %v1089 = vpop.permute.xlu0 %1088
  %1091 = vset.pattern.permute.xlu0 2
  %1092 = vperm.xlu0 %1091, %v120
  %v1093 = vpop.permute.xlu0 %1092
  %1095 = vset.pattern.permute.xlu0 2
  %1096 = vperm.xlu0 %1095, %v121
  %v1097 = vpop.permute.xlu0 %1096
  %1099 = vset.pattern.permute.xlu0 2
  %1100 = vperm.xlu0 %1099, %v122
  %v1101 = vpop.permute.xlu0 %1100
  %1103 = vset.pattern.permute.xlu0 2
  %1104 = vperm.xlu0 %1103, %v123
  %v1105 = vpop.permute.xlu0 %1104
  %1107 = vset.pattern.permute.xlu0 2
  %1108 = vperm.xlu0 %1107, %v124
  %v1109 = vpop.permute.xlu0 %1108
  %1111 = vset.pattern.permute.xlu0 2
  %1112 = vperm.xlu0 %1111, %v125
  %v1113 = vpop.permute.xlu0 %1112
  %1115 = vset.pattern.permute.xlu0 2
  %1116 = vperm.xlu0 %1115, %v126
  %v1117 = vpop.permute.xlu0 %1116
  %1119 = vset.pattern.permute.xlu0 2
  %1120 = vperm.xlu0 %1119, %v127
  %v1121 = vpop.permute.xlu0 %1120
  %1123 = vset.pattern.permute.xlu0 2
  %1124 = vperm.xlu0 %1123, %v128
  %v1125 = vpop.permute.xlu0 %1124
  %1127 = vset.pattern.permute.xlu0 2
  %1128 = vperm.xlu0 %1127, %v129
  %v1129 = vpop.permute.xlu0 %1128
  %1131 = vset.pattern.permute.xlu0 2
  %1132 = vperm.xlu0 %1131, %v130
  %v1133 = vpop.permute.xlu0 %1132
  %1135 = vset.pattern.permute.xlu0 2
  %1136 = vperm.xlu0 %1135, %v131
  %v1137 = vpop.permute.xlu0 %1136
  %1139 = vset.pattern.permute.xlu0 2
  %1140 = vperm.xlu0 %1139, %v132
  %v1141 = vpop.permute.xlu0 %1140
  %1143 = vset.pattern.permute.xlu0 2
  %1144 = vperm.xlu0 %1143, %v133
  %v1145 = vpop.permute.xlu0 %1144
  %1147 = vset.pattern.permute.xlu0 2
  %1148 = vperm.xlu0 %1147, %v134
  %v1149 = vpop.permute.xlu0 %1148
  %1151 = vset.pattern.permute.xlu0 2
  %1152 = vperm.xlu0 %1151, %v135
  %v1153 = vpop.permute.xlu0 %1152
  %1155 = vset.pattern.permute.xlu0 2
  %1156 = vperm.xlu0 %1155, %v136
  %v1157 = vpop.permute.xlu0 %1156
  %1159 = vset.pattern.permute.xlu0 2
  %1160 = vperm.xlu0 %1159, %v137
  %v1161 = vpop.permute.xlu0 %1160
  %1163 = vset.pattern.permute.xlu0 2
  %1164 = vperm.xlu0 %1163, %v138
  %v1165 = vpop.permute.xlu0 %1164
  %1167 = vset.pattern.permute.xlu0 2
  %1168 = vperm.xlu0 %1167, %v139
  %v1169 = vpop.permute.xlu0 %1168
  %1171 = vset.pattern.permute.xlu0 2
  %1172 = vperm.xlu0 %1171, %v140
  %v1173 = vpop.permute.xlu0 %1172
  %1175 = vset.pattern.permute.xlu0 2
  %1176 = vperm.xlu0 %1175, %v141
  %v1177 = vpop.permute.xlu0 %1176
  %1179 = vset.pattern.permute.xlu0 2
  %1180 = vperm.xlu0 %1179, %v142
  %v1181 = vpop.permute.xlu0 %1180
  %1183 = vset.pattern.permute.xlu0 2
  %1184 = vperm.xlu0 %1183, %v143
  %v1185 = vpop.permute.xlu0 %1184
  %1187 = vset.pattern.permute.xlu0 2
  %1188 = vperm.xlu0 %1187, %v144
  %v1189 = vpop.permute.xlu0 %1188
  %1191 = vset.pattern.permute.xlu0 2
  %1192 = vperm.xlu0 %1191, %v145
  %v1193 = vpop.permute.xlu0 %1192
  %1195 = vset.pattern.permute.xlu0 2
  %1196 = vperm.xlu0 %1195, %v146
  %v1197 = vpop.permute.xlu0 %1196
  %1199 = vset.pattern.permute.xlu0 2
  %1200 = vperm.xlu0 %1199, %v147
  %v1201 = vpop.permute.xlu0 %1200
  %1203 = vset.pattern.permute.xlu0 2
  %1204 = vperm.xlu0 %1203, %v148
  %v1205 = vpop.permute.xlu0 %1204
  %1207 = vset.pattern.permute.xlu0 2
  %1208 = vperm.xlu0 %1207, %v149
  %v1209 = vpop.permute.xlu0 %1208
  %1211 = vset.pattern.permute.xlu0 2
  %1212 = vperm.xlu0 %1211, %v150
  %v1213 = vpop.permute.xlu0 %1212
  %1215 = vset.pattern.permute.xlu0 2
  %1216 = vperm.xlu0 %1215, %v151
  %v1217 = vpop.permute.xlu0 %1216
  %1219 = vset.pattern.permute.xlu0 2
  %1220 = vperm.xlu0 %1219, %v152
  %v1221 = vpop.permute.xlu0 %1220
  %1223 = vset.pattern.permute.xlu0 2
  %1224 = vperm.xlu0 %1223, %v153
  %v1225 = vpop.permute.xlu0 %1224
  %1227 = vset.pattern.permute.xlu0 2
  %1228 = vperm.xlu0 %1227, %v154
  %v1229 = vpop.permute.xlu0 %1228
  %1231 = vset.pattern.permute.xlu0 2
  %1232 = vperm.xlu0 %1231, %v155
  %v1233 = vpop.permute.xlu0 %1232
  %1235 = vset.pattern.permute.xlu0 2
  %1236 = vperm.xlu0 %1235, %v156
  %v1237 = vpop.permute.xlu0 %1236
  %1239 = vset.pattern.permute.xlu0 2
  %1240 = vperm.xlu0 %1239, %v157
  %v1241 = vpop.permute.xlu0 %1240
  %1243 = vset.pattern.permute.xlu0 2
  %1244 = vperm.xlu0 %1243, %v158
  %v1245 = vpop.permute.xlu0 %1244
  %1247 = vset.pattern.permute.xlu0 2
  %1248 = vperm.xlu0 %1247, %v159
  %v1249 = vpop.permute.xlu0 %1248
  %1251 = vset.pattern.permute.xlu0 2
  %1252 = vperm.xlu0 %1251, %v160
  %v1253 = vpop.permute.xlu0 %1252
  %1255 = vset.pattern.permute.xlu0 2
  %1256 = vperm.xlu0 %1255, %v161
  %v1257 = vpop.permute.xlu0 %1256
  %1259 = vset.pattern.permute.xlu0 2
  %1260 = vperm.xlu0 %1259, %v162
  %v1261 = vpop.permute.xlu0 %1260
  %1263 = vset.pattern.permute.xlu0 2
  %1264 = vperm.xlu0 %1263, %v163
  %v1265 = vpop.permute.xlu0 %1264
  %1267 = vset.pattern.permute.xlu0 2
  %1268 = vperm.xlu0 %1267, %v164
  %v1269 = vpop.permute.xlu0 %1268
  %1271 = vset.pattern.permute.xlu0 2
  %1272 = vperm.xlu0 %1271, %v165
  %v1273 = vpop.permute.xlu0 %1272
  %1275 = vset.pattern.permute.xlu0 2
  %1276 = vperm.xlu0 %1275, %v166
  %v1277 = vpop.permute.xlu0 %1276
  %1279 = vset.pattern.permute.xlu0 2
  %1280 = vperm.xlu0 %1279, %v167
  %v1281 = vpop.permute.xlu0 %1280
  %1283 = vset.pattern.permute.xlu0 2
  %1284 = vperm.xlu0 %1283, %v168
  %v1285 = vpop.permute.xlu0 %1284
  %1287 = vset.pattern.permute.xlu0 2
  %1288 = vperm.xlu0 %1287, %v169
  %v1289 = vpop.permute.xlu0 %1288
  %1291 = vset.pattern.permute.xlu0 2
  %1292 = vperm.xlu0 %1291, %v170
  %v1293 = vpop.permute.xlu0 %1292
  %1295 = vset.pattern.permute.xlu0 2
  %1296 = vperm.xlu0 %1295, %v171
  %v1297 = vpop.permute.xlu0 %1296
  %1299 = vset.pattern.permute.xlu0 2
  %1300 = vperm.xlu0 %1299, %v172
  %v1301 = vpop.permute.xlu0 %1300
  %1303 = vset.pattern.permute.xlu0 2
  %1304 = vperm.xlu0 %1303, %v173
  %v1305 = vpop.permute.xlu0 %1304
  %1307 = vset.pattern.permute.xlu0 2
  %1308 = vperm.xlu0 %1307, %v174
  %v1309 = vpop.permute.xlu0 %1308
  %1311 = vset.pattern.permute.xlu0 2
  %1312 = vperm.xlu0 %1311, %v175
  %v1313 = vpop.permute.xlu0 %1312
  %v1315 = vlaneseq
  %v1316 = vshrl.u32 %v1315, 7
  %v1317 = vsub.s32 2, %v1316
  %v1318 = vrot.slane %v282, %v1317
  %v1319 = vmul.f32 %v1061, %v1318
  %v1320 = vmul.f32 %v1065, %v1318
  %v1321 = vmul.f32 %v1069, %v1318
  %v1322 = vmul.f32 %v1073, %v1318
  %v1323 = vmul.f32 %v1077, %v1318
  %v1324 = vmul.f32 %v1081, %v1318
  %v1325 = vmul.f32 %v1085, %v1318
  %v1326 = vmul.f32 %v1089, %v1318
  %v1327 = vmul.f32 %v1093, %v1318
  %v1328 = vmul.f32 %v1097, %v1318
  %v1329 = vmul.f32 %v1101, %v1318
  %v1330 = vmul.f32 %v1105, %v1318
  %v1331 = vmul.f32 %v1109, %v1318
  %v1332 = vmul.f32 %v1113, %v1318
  %v1333 = vmul.f32 %v1117, %v1318
  %v1334 = vmul.f32 %v1121, %v1318
  %v1335 = vmul.f32 %v1125, %v1318
  %v1336 = vmul.f32 %v1129, %v1318
  %v1337 = vmul.f32 %v1133, %v1318
  %v1338 = vmul.f32 %v1137, %v1318
  %v1339 = vmul.f32 %v1141, %v1318
  %v1340 = vmul.f32 %v1145, %v1318
  %v1341 = vmul.f32 %v1149, %v1318
  %v1342 = vmul.f32 %v1153, %v1318
  %v1343 = vmul.f32 %v1157, %v1318
  %v1344 = vmul.f32 %v1161, %v1318
  %v1345 = vmul.f32 %v1165, %v1318
  %v1346 = vmul.f32 %v1169, %v1318
  %v1347 = vmul.f32 %v1173, %v1318
  %v1348 = vmul.f32 %v1177, %v1318
  %v1349 = vmul.f32 %v1181, %v1318
  %v1350 = vmul.f32 %v1185, %v1318
  %v1351 = vmul.f32 %v1189, %v1318
  %v1352 = vmul.f32 %v1193, %v1318
  %v1353 = vmul.f32 %v1197, %v1318
  %v1354 = vmul.f32 %v1201, %v1318
  %v1355 = vmul.f32 %v1205, %v1318
  %v1356 = vmul.f32 %v1209, %v1318
  %v1357 = vmul.f32 %v1213, %v1318
  %v1358 = vmul.f32 %v1217, %v1318
  %v1359 = vmul.f32 %v1221, %v1318
  %v1360 = vmul.f32 %v1225, %v1318
  %v1361 = vmul.f32 %v1229, %v1318
  %v1362 = vmul.f32 %v1233, %v1318
  %v1363 = vmul.f32 %v1237, %v1318
  %v1364 = vmul.f32 %v1241, %v1318
  %v1365 = vmul.f32 %v1245, %v1318
  %v1366 = vmul.f32 %v1249, %v1318
  %v1367 = vmul.f32 %v1253, %v1318
  %v1368 = vmul.f32 %v1257, %v1318
  %v1369 = vmul.f32 %v1261, %v1318
  %v1370 = vmul.f32 %v1265, %v1318
  %v1371 = vmul.f32 %v1269, %v1318
  %v1372 = vmul.f32 %v1273, %v1318
  %v1373 = vmul.f32 %v1277, %v1318
  %v1374 = vmul.f32 %v1281, %v1318
  %v1375 = vmul.f32 %v1285, %v1318
  %v1376 = vmul.f32 %v1289, %v1318
  %v1377 = vmul.f32 %v1293, %v1318
  %v1378 = vmul.f32 %v1297, %v1318
  %v1379 = vmul.f32 %v1301, %v1318
  %v1380 = vmul.f32 %v1305, %v1318
  %v1381 = vmul.f32 %v1309, %v1318
  %v1382 = vmul.f32 %v1313, %v1318
  %v1383 = vadd.f32 %v995, %v1319
  %v1384 = vadd.f32 %v996, %v1320
  %v1385 = vadd.f32 %v997, %v1321
  %v1386 = vadd.f32 %v998, %v1322
  %v1387 = vadd.f32 %v999, %v1323
  %v1388 = vadd.f32 %v1000, %v1324
  %v1389 = vadd.f32 %v1001, %v1325
  %v1390 = vadd.f32 %v1002, %v1326
  %v1391 = vadd.f32 %v1003, %v1327
  %v1392 = vadd.f32 %v1004, %v1328
  %v1393 = vadd.f32 %v1005, %v1329
  %v1394 = vadd.f32 %v1006, %v1330
  %v1395 = vadd.f32 %v1007, %v1331
  %v1396 = vadd.f32 %v1008, %v1332
  %v1397 = vadd.f32 %v1009, %v1333
  %v1398 = vadd.f32 %v1010, %v1334
  %v1399 = vadd.f32 %v1011, %v1335
  %v1400 = vadd.f32 %v1012, %v1336
  %v1401 = vadd.f32 %v1013, %v1337
  %v1402 = vadd.f32 %v1014, %v1338
  %v1403 = vadd.f32 %v1015, %v1339
  %v1404 = vadd.f32 %v1016, %v1340
  %v1405 = vadd.f32 %v1017, %v1341
  %v1406 = vadd.f32 %v1018, %v1342
  %v1407 = vadd.f32 %v1019, %v1343
  %v1408 = vadd.f32 %v1020, %v1344
  %v1409 = vadd.f32 %v1021, %v1345
  %v1410 = vadd.f32 %v1022, %v1346
  %v1411 = vadd.f32 %v1023, %v1347
  %v1412 = vadd.f32 %v1024, %v1348
  %v1413 = vadd.f32 %v1025, %v1349
  %v1414 = vadd.f32 %v1026, %v1350
  %v1415 = vadd.f32 %v1027, %v1351
  %v1416 = vadd.f32 %v1028, %v1352
  %v1417 = vadd.f32 %v1029, %v1353
  %v1418 = vadd.f32 %v1030, %v1354
  %v1419 = vadd.f32 %v1031, %v1355
  %v1420 = vadd.f32 %v1032, %v1356
  %v1421 = vadd.f32 %v1033, %v1357
  %v1422 = vadd.f32 %v1034, %v1358
  %v1423 = vadd.f32 %v1035, %v1359
  %v1424 = vadd.f32 %v1036, %v1360
  %v1425 = vadd.f32 %v1037, %v1361
  %v1426 = vadd.f32 %v1038, %v1362
  %v1427 = vadd.f32 %v1039, %v1363
  %v1428 = vadd.f32 %v1040, %v1364
  %v1429 = vadd.f32 %v1041, %v1365
  %v1430 = vadd.f32 %v1042, %v1366
  %v1431 = vadd.f32 %v1043, %v1367
  %v1432 = vadd.f32 %v1044, %v1368
  %v1433 = vadd.f32 %v1045, %v1369
  %v1434 = vadd.f32 %v1046, %v1370
  %v1435 = vadd.f32 %v1047, %v1371
  %v1436 = vadd.f32 %v1048, %v1372
  %v1437 = vadd.f32 %v1049, %v1373
  %v1438 = vadd.f32 %v1050, %v1374
  %v1439 = vadd.f32 %v1051, %v1375
  %v1440 = vadd.f32 %v1052, %v1376
  %v1441 = vadd.f32 %v1053, %v1377
  %v1442 = vadd.f32 %v1054, %v1378
  %v1443 = vadd.f32 %v1055, %v1379
  %v1444 = vadd.f32 %v1056, %v1380
  %v1445 = vadd.f32 %v1057, %v1381
  %v1446 = vadd.f32 %v1058, %v1382
  %v1455 = vcombine.high %v252, %v252
  %v1457 = vunpack.c.l.s4 1966171168
  %v1458 = vunpack.c.0.s8 %v1457
  %v1459 = vlaneseq
  %v1460 = vshrl.u32 %v1459, 7
  %v1461 = vsub.s32 %v1458, %v1460
  %v1462 = vrot.slane %v252, %v1461
  %v1464 = vunpack.c.l.s4 1966171168
  %v1465 = vunpack.c.0.s8 %v1464
  %v1466 = vlaneseq
  %v1467 = vshrl.u32 %v1466, 7
  %v1468 = vsub.s32 %v1465, %v1467
  %v1469 = vrot.slane %v1455, %v1468
  %v1470 = vcombine.high %v1462, %v1462
  %v1471 = vcombine.high %v1469, %v1469
  %v1473 = vunpack.c.l.s4 1966171168
  %v1474 = vunpack.c.0.s8 %v1473
  %v1475 = vlaneseq
  %v1476 = vshrl.u32 %v1475, 7
  %v1477 = vsub.s32 %v1474, %v1476
  %v1478 = vrot.slane %v1462, %v1477
  %v1480 = vunpack.c.l.s4 1966171168
  %v1481 = vunpack.c.0.s8 %v1480
  %v1482 = vlaneseq
  %v1483 = vshrl.u32 %v1482, 7
  %v1484 = vsub.s32 %v1481, %v1483
  %v1485 = vrot.slane %v1469, %v1484
  %v1487 = vunpack.c.l.s4 1966171168
  %v1488 = vunpack.c.0.s8 %v1487
  %v1489 = vlaneseq
  %v1490 = vshrl.u32 %v1489, 7
  %v1491 = vsub.s32 %v1488, %v1490
  %v1492 = vrot.slane %v1470, %v1491
  %v1494 = vunpack.c.l.s4 1966171168
  %v1495 = vunpack.c.0.s8 %v1494
  %v1496 = vlaneseq
  %v1497 = vshrl.u32 %v1496, 7
  %v1498 = vsub.s32 %v1495, %v1497
  %v1499 = vrot.slane %v1471, %v1498
  %v1500 = vcombine.high %v1478, %v1478
  %v1501 = vcombine.high %v1485, %v1485
  %v1502 = vcombine.high %v1492, %v1492
  %v1503 = vcombine.high %v1499, %v1499
  %v1504 = vcombine.high %v255, %v255
  %v1506 = vunpack.c.l.s4 1966171168
  %v1507 = vunpack.c.0.s8 %v1506
  %v1508 = vlaneseq
  %v1509 = vshrl.u32 %v1508, 7
  %v1510 = vsub.s32 %v1507, %v1509
  %v1511 = vrot.slane %v255, %v1510
  %v1513 = vunpack.c.l.s4 1966171168
  %v1514 = vunpack.c.0.s8 %v1513
  %v1515 = vlaneseq
  %v1516 = vshrl.u32 %v1515, 7
  %v1517 = vsub.s32 %v1514, %v1516
  %v1518 = vrot.slane %v1504, %v1517
  %v1519 = vcombine.high %v1511, %v1511
  %v1520 = vcombine.high %v1518, %v1518
  %v1522 = vunpack.c.l.s4 1966171168
  %v1523 = vunpack.c.0.s8 %v1522
  %v1524 = vlaneseq
  %v1525 = vshrl.u32 %v1524, 7
  %v1526 = vsub.s32 %v1523, %v1525
  %v1527 = vrot.slane %v1511, %v1526
  %v1529 = vunpack.c.l.s4 1966171168
  %v1530 = vunpack.c.0.s8 %v1529
  %v1531 = vlaneseq
  %v1532 = vshrl.u32 %v1531, 7
  %v1533 = vsub.s32 %v1530, %v1532
  %v1534 = vrot.slane %v1518, %v1533
  %v1536 = vunpack.c.l.s4 1966171168
  %v1537 = vunpack.c.0.s8 %v1536
  %v1538 = vlaneseq
  %v1539 = vshrl.u32 %v1538, 7
  %v1540 = vsub.s32 %v1537, %v1539
  %v1541 = vrot.slane %v1519, %v1540
  %v1543 = vunpack.c.l.s4 1966171168
  %v1544 = vunpack.c.0.s8 %v1543
  %v1545 = vlaneseq
  %v1546 = vshrl.u32 %v1545, 7
  %v1547 = vsub.s32 %v1544, %v1546
  %v1548 = vrot.slane %v1520, %v1547
  %v1549 = vcombine.high %v1527, %v1527
  %v1550 = vcombine.high %v1534, %v1534
  %v1551 = vcombine.high %v1541, %v1541
  %v1552 = vcombine.high %v1548, %v1548
  %v1553 = vcombine.high %v260, %v260
  %v1555 = vunpack.c.l.s4 1966171168
  %v1556 = vunpack.c.0.s8 %v1555
  %v1557 = vlaneseq
  %v1558 = vshrl.u32 %v1557, 7
  %v1559 = vsub.s32 %v1556, %v1558
  %v1560 = vrot.slane %v260, %v1559
  %v1562 = vunpack.c.l.s4 1966171168
  %v1563 = vunpack.c.0.s8 %v1562
  %v1564 = vlaneseq
  %v1565 = vshrl.u32 %v1564, 7
  %v1566 = vsub.s32 %v1563, %v1565
  %v1567 = vrot.slane %v1553, %v1566
  %v1568 = vcombine.high %v1560, %v1560
  %v1569 = vcombine.high %v1567, %v1567
  %v1571 = vunpack.c.l.s4 1966171168
  %v1572 = vunpack.c.0.s8 %v1571
  %v1573 = vlaneseq
  %v1574 = vshrl.u32 %v1573, 7
  %v1575 = vsub.s32 %v1572, %v1574
  %v1576 = vrot.slane %v1560, %v1575
  %v1578 = vunpack.c.l.s4 1966171168
  %v1579 = vunpack.c.0.s8 %v1578
  %v1580 = vlaneseq
  %v1581 = vshrl.u32 %v1580, 7
  %v1582 = vsub.s32 %v1579, %v1581
  %v1583 = vrot.slane %v1567, %v1582
  %v1585 = vunpack.c.l.s4 1966171168
  %v1586 = vunpack.c.0.s8 %v1585
  %v1587 = vlaneseq
  %v1588 = vshrl.u32 %v1587, 7
  %v1589 = vsub.s32 %v1586, %v1588
  %v1590 = vrot.slane %v1568, %v1589
  %v1592 = vunpack.c.l.s4 1966171168
  %v1593 = vunpack.c.0.s8 %v1592
  %v1594 = vlaneseq
  %v1595 = vshrl.u32 %v1594, 7
  %v1596 = vsub.s32 %v1593, %v1595
  %v1597 = vrot.slane %v1569, %v1596
  %v1598 = vcombine.high %v1576, %v1576
  %v1599 = vcombine.high %v1583, %v1583
  %v1600 = vcombine.high %v1590, %v1590
  %v1601 = vcombine.high %v1597, %v1597
  %v1602 = vcombine.high %v263, %v263
  %v1604 = vunpack.c.l.s4 1966171168
  %v1605 = vunpack.c.0.s8 %v1604
  %v1606 = vlaneseq
  %v1607 = vshrl.u32 %v1606, 7
  %v1608 = vsub.s32 %v1605, %v1607
  %v1609 = vrot.slane %v263, %v1608
  %v1611 = vunpack.c.l.s4 1966171168
  %v1612 = vunpack.c.0.s8 %v1611
  %v1613 = vlaneseq
  %v1614 = vshrl.u32 %v1613, 7
  %v1615 = vsub.s32 %v1612, %v1614
  %v1616 = vrot.slane %v1602, %v1615
  %v1617 = vcombine.high %v1609, %v1609
  %v1618 = vcombine.high %v1616, %v1616
  %v1620 = vunpack.c.l.s4 1966171168
  %v1621 = vunpack.c.0.s8 %v1620
  %v1622 = vlaneseq
  %v1623 = vshrl.u32 %v1622, 7
  %v1624 = vsub.s32 %v1621, %v1623
  %v1625 = vrot.slane %v1609, %v1624
  %v1627 = vunpack.c.l.s4 1966171168
  %v1628 = vunpack.c.0.s8 %v1627
  %v1629 = vlaneseq
  %v1630 = vshrl.u32 %v1629, 7
  %v1631 = vsub.s32 %v1628, %v1630
  %v1632 = vrot.slane %v1616, %v1631
  %v1634 = vunpack.c.l.s4 1966171168
  %v1635 = vunpack.c.0.s8 %v1634
  %v1636 = vlaneseq
  %v1637 = vshrl.u32 %v1636, 7
  %v1638 = vsub.s32 %v1635, %v1637
  %v1639 = vrot.slane %v1617, %v1638
  %v1641 = vunpack.c.l.s4 1966171168
  %v1642 = vunpack.c.0.s8 %v1641
  %v1643 = vlaneseq
  %v1644 = vshrl.u32 %v1643, 7
  %v1645 = vsub.s32 %v1642, %v1644
  %v1646 = vrot.slane %v1618, %v1645
  %v1647 = vcombine.high %v1625, %v1625
  %v1648 = vcombine.high %v1632, %v1632
  %v1649 = vcombine.high %v1639, %v1639
  %v1650 = vcombine.high %v1646, %v1646
  %v1651 = vcombine.high %v268, %v268
  %v1653 = vunpack.c.l.s4 1966171168
  %v1654 = vunpack.c.0.s8 %v1653
  %v1655 = vlaneseq
  %v1656 = vshrl.u32 %v1655, 7
  %v1657 = vsub.s32 %v1654, %v1656
  %v1658 = vrot.slane %v268, %v1657
  %v1660 = vunpack.c.l.s4 1966171168
  %v1661 = vunpack.c.0.s8 %v1660
  %v1662 = vlaneseq
  %v1663 = vshrl.u32 %v1662, 7
  %v1664 = vsub.s32 %v1661, %v1663
  %v1665 = vrot.slane %v1651, %v1664
  %v1666 = vcombine.high %v1658, %v1658
  %v1667 = vcombine.high %v1665, %v1665
  %v1669 = vunpack.c.l.s4 1966171168
  %v1670 = vunpack.c.0.s8 %v1669
  %v1671 = vlaneseq
  %v1672 = vshrl.u32 %v1671, 7
  %v1673 = vsub.s32 %v1670, %v1672
  %v1674 = vrot.slane %v1658, %v1673
  %v1676 = vunpack.c.l.s4 1966171168
  %v1677 = vunpack.c.0.s8 %v1676
  %v1678 = vlaneseq
  %v1679 = vshrl.u32 %v1678, 7
  %v1680 = vsub.s32 %v1677, %v1679
  %v1681 = vrot.slane %v1665, %v1680
  %v1683 = vunpack.c.l.s4 1966171168
  %v1684 = vunpack.c.0.s8 %v1683
  %v1685 = vlaneseq
  %v1686 = vshrl.u32 %v1685, 7
  %v1687 = vsub.s32 %v1684, %v1686
  %v1688 = vrot.slane %v1666, %v1687
  %v1690 = vunpack.c.l.s4 1966171168
  %v1691 = vunpack.c.0.s8 %v1690
  %v1692 = vlaneseq
  %v1693 = vshrl.u32 %v1692, 7
  %v1694 = vsub.s32 %v1691, %v1693
  %v1695 = vrot.slane %v1667, %v1694
  %v1696 = vcombine.high %v1674, %v1674
  %v1697 = vcombine.high %v1681, %v1681
  %v1698 = vcombine.high %v1688, %v1688
  %v1699 = vcombine.high %v1695, %v1695
  %v1700 = vcombine.high %v271, %v271
  %v1702 = vunpack.c.l.s4 1966171168
  %v1703 = vunpack.c.0.s8 %v1702
  %v1704 = vlaneseq
  %v1705 = vshrl.u32 %v1704, 7
  %v1706 = vsub.s32 %v1703, %v1705
  %v1707 = vrot.slane %v271, %v1706
  %v1709 = vunpack.c.l.s4 1966171168
  %v1710 = vunpack.c.0.s8 %v1709
  %v1711 = vlaneseq
  %v1712 = vshrl.u32 %v1711, 7
  %v1713 = vsub.s32 %v1710, %v1712
  %v1714 = vrot.slane %v1700, %v1713
  %v1715 = vcombine.high %v1707, %v1707
  %v1716 = vcombine.high %v1714, %v1714
  %v1718 = vunpack.c.l.s4 1966171168
  %v1719 = vunpack.c.0.s8 %v1718
  %v1720 = vlaneseq
  %v1721 = vshrl.u32 %v1720, 7
  %v1722 = vsub.s32 %v1719, %v1721
  %v1723 = vrot.slane %v1707, %v1722
  %v1725 = vunpack.c.l.s4 1966171168
  %v1726 = vunpack.c.0.s8 %v1725
  %v1727 = vlaneseq
  %v1728 = vshrl.u32 %v1727, 7
  %v1729 = vsub.s32 %v1726, %v1728
  %v1730 = vrot.slane %v1714, %v1729
  %v1732 = vunpack.c.l.s4 1966171168
  %v1733 = vunpack.c.0.s8 %v1732
  %v1734 = vlaneseq
  %v1735 = vshrl.u32 %v1734, 7
  %v1736 = vsub.s32 %v1733, %v1735
  %v1737 = vrot.slane %v1715, %v1736
  %v1739 = vunpack.c.l.s4 1966171168
  %v1740 = vunpack.c.0.s8 %v1739
  %v1741 = vlaneseq
  %v1742 = vshrl.u32 %v1741, 7
  %v1743 = vsub.s32 %v1740, %v1742
  %v1744 = vrot.slane %v1716, %v1743
  %v1745 = vcombine.high %v1723, %v1723
  %v1746 = vcombine.high %v1730, %v1730
  %v1747 = vcombine.high %v1737, %v1737
  %v1748 = vcombine.high %v1744, %v1744
  %v1749 = vcombine.high %v276, %v276
  %v1751 = vunpack.c.l.s4 1966171168
  %v1752 = vunpack.c.0.s8 %v1751
  %v1753 = vlaneseq
  %v1754 = vshrl.u32 %v1753, 7
  %v1755 = vsub.s32 %v1752, %v1754
  %v1756 = vrot.slane %v276, %v1755
  %v1758 = vunpack.c.l.s4 1966171168
  %v1759 = vunpack.c.0.s8 %v1758
  %v1760 = vlaneseq
  %v1761 = vshrl.u32 %v1760, 7
  %v1762 = vsub.s32 %v1759, %v1761
  %v1763 = vrot.slane %v1749, %v1762
  %v1764 = vcombine.high %v1756, %v1756
  %v1765 = vcombine.high %v1763, %v1763
  %v1767 = vunpack.c.l.s4 1966171168
  %v1768 = vunpack.c.0.s8 %v1767
  %v1769 = vlaneseq
  %v1770 = vshrl.u32 %v1769, 7
  %v1771 = vsub.s32 %v1768, %v1770
  %v1772 = vrot.slane %v1756, %v1771
  %v1774 = vunpack.c.l.s4 1966171168
  %v1775 = vunpack.c.0.s8 %v1774
  %v1776 = vlaneseq
  %v1777 = vshrl.u32 %v1776, 7
  %v1778 = vsub.s32 %v1775, %v1777
  %v1779 = vrot.slane %v1763, %v1778
  %v1781 = vunpack.c.l.s4 1966171168
  %v1782 = vunpack.c.0.s8 %v1781
  %v1783 = vlaneseq
  %v1784 = vshrl.u32 %v1783, 7
  %v1785 = vsub.s32 %v1782, %v1784
  %v1786 = vrot.slane %v1764, %v1785
  %v1788 = vunpack.c.l.s4 1966171168
  %v1789 = vunpack.c.0.s8 %v1788
  %v1790 = vlaneseq
  %v1791 = vshrl.u32 %v1790, 7
  %v1792 = vsub.s32 %v1789, %v1791
  %v1793 = vrot.slane %v1765, %v1792
  %v1794 = vcombine.high %v1772, %v1772
  %v1795 = vcombine.high %v1779, %v1779
  %v1796 = vcombine.high %v1786, %v1786
  %v1797 = vcombine.high %v1793, %v1793
  %v1798 = vcombine.high %v279, %v279
  %v1800 = vunpack.c.l.s4 1966171168
  %v1801 = vunpack.c.0.s8 %v1800
  %v1802 = vlaneseq
  %v1803 = vshrl.u32 %v1802, 7
  %v1804 = vsub.s32 %v1801, %v1803
  %v1805 = vrot.slane %v279, %v1804
  %v1807 = vunpack.c.l.s4 1966171168
  %v1808 = vunpack.c.0.s8 %v1807
  %v1809 = vlaneseq
  %v1810 = vshrl.u32 %v1809, 7
  %v1811 = vsub.s32 %v1808, %v1810
  %v1812 = vrot.slane %v1798, %v1811
  %v1813 = vcombine.high %v1805, %v1805
  %v1814 = vcombine.high %v1812, %v1812
  %v1816 = vunpack.c.l.s4 1966171168
  %v1817 = vunpack.c.0.s8 %v1816
  %v1818 = vlaneseq
  %v1819 = vshrl.u32 %v1818, 7
  %v1820 = vsub.s32 %v1817, %v1819
  %v1821 = vrot.slane %v1805, %v1820
  %v1823 = vunpack.c.l.s4 1966171168
  %v1824 = vunpack.c.0.s8 %v1823
  %v1825 = vlaneseq
  %v1826 = vshrl.u32 %v1825, 7
  %v1827 = vsub.s32 %v1824, %v1826
  %v1828 = vrot.slane %v1812, %v1827
  %v1830 = vunpack.c.l.s4 1966171168
  %v1831 = vunpack.c.0.s8 %v1830
  %v1832 = vlaneseq
  %v1833 = vshrl.u32 %v1832, 7
  %v1834 = vsub.s32 %v1831, %v1833
  %v1835 = vrot.slane %v1813, %v1834
  %v1837 = vunpack.c.l.s4 1966171168
  %v1838 = vunpack.c.0.s8 %v1837
  %v1839 = vlaneseq
  %v1840 = vshrl.u32 %v1839, 7
  %v1841 = vsub.s32 %v1838, %v1840
  %v1842 = vrot.slane %v1814, %v1841
  %v1843 = vcombine.high %v1821, %v1821
  %v1844 = vcombine.high %v1828, %v1828
  %v1845 = vcombine.high %v1835, %v1835
  %v1846 = vcombine.high %v1842, %v1842
  %v1847 = vlaneseq
  %v1848 = vshrl.u32 %v1847, 7
  %v1849 = vsub.s32 0, %v1848
  %v1850 = vrot.slane %v1478, %v1849
  %v1851 = vlaneseq
  %v1852 = vshrl.u32 %v1851, 7
  %v1853 = vsub.s32 0, %v1852
  %v1854 = vrot.slane %v1492, %v1853
  %v1855 = vlaneseq
  %v1856 = vshrl.u32 %v1855, 7
  %v1857 = vsub.s32 0, %v1856
  %v1858 = vrot.slane %v1500, %v1857
  %v1859 = vlaneseq
  %v1860 = vshrl.u32 %v1859, 7
  %v1861 = vsub.s32 0, %v1860
  %v1862 = vrot.slane %v1502, %v1861
  %v1863 = vlaneseq
  %v1864 = vshrl.u32 %v1863, 7
  %v1865 = vsub.s32 0, %v1864
  %v1866 = vrot.slane %v1485, %v1865
  %v1867 = vlaneseq
  %v1868 = vshrl.u32 %v1867, 7
  %v1869 = vsub.s32 0, %v1868
  %v1870 = vrot.slane %v1499, %v1869
  %v1871 = vlaneseq
  %v1872 = vshrl.u32 %v1871, 7
  %v1873 = vsub.s32 0, %v1872
  %v1874 = vrot.slane %v1501, %v1873
  %v1875 = vlaneseq
  %v1876 = vshrl.u32 %v1875, 7
  %v1877 = vsub.s32 0, %v1876
  %v1878 = vrot.slane %v1503, %v1877
  %v1879 = vlaneseq
  %v1880 = vshrl.u32 %v1879, 7
  %v1881 = vsub.s32 0, %v1880
  %v1882 = vrot.slane %v1527, %v1881
  %v1883 = vlaneseq
  %v1884 = vshrl.u32 %v1883, 7
  %v1885 = vsub.s32 0, %v1884
  %v1886 = vrot.slane %v1541, %v1885
  %v1887 = vlaneseq
  %v1888 = vshrl.u32 %v1887, 7
  %v1889 = vsub.s32 0, %v1888
  %v1890 = vrot.slane %v1549, %v1889
  %v1891 = vlaneseq
  %v1892 = vshrl.u32 %v1891, 7
  %v1893 = vsub.s32 0, %v1892
  %v1894 = vrot.slane %v1551, %v1893
  %v1895 = vlaneseq
  %v1896 = vshrl.u32 %v1895, 7
  %v1897 = vsub.s32 0, %v1896
  %v1898 = vrot.slane %v1534, %v1897
  %v1899 = vlaneseq
  %v1900 = vshrl.u32 %v1899, 7
  %v1901 = vsub.s32 0, %v1900
  %v1902 = vrot.slane %v1548, %v1901
  %v1903 = vlaneseq
  %v1904 = vshrl.u32 %v1903, 7
  %v1905 = vsub.s32 0, %v1904
  %v1906 = vrot.slane %v1550, %v1905
  %v1907 = vlaneseq
  %v1908 = vshrl.u32 %v1907, 7
  %v1909 = vsub.s32 0, %v1908
  %v1910 = vrot.slane %v1552, %v1909
  %v1911 = vlaneseq
  %v1912 = vshrl.u32 %v1911, 7
  %v1913 = vsub.s32 0, %v1912
  %v1914 = vrot.slane %v1576, %v1913
  %v1915 = vlaneseq
  %v1916 = vshrl.u32 %v1915, 7
  %v1917 = vsub.s32 0, %v1916
  %v1918 = vrot.slane %v1590, %v1917
  %v1919 = vlaneseq
  %v1920 = vshrl.u32 %v1919, 7
  %v1921 = vsub.s32 0, %v1920
  %v1922 = vrot.slane %v1598, %v1921
  %v1923 = vlaneseq
  %v1924 = vshrl.u32 %v1923, 7
  %v1925 = vsub.s32 0, %v1924
  %v1926 = vrot.slane %v1600, %v1925
  %v1927 = vlaneseq
  %v1928 = vshrl.u32 %v1927, 7
  %v1929 = vsub.s32 0, %v1928
  %v1930 = vrot.slane %v1583, %v1929
  %v1931 = vlaneseq
  %v1932 = vshrl.u32 %v1931, 7
  %v1933 = vsub.s32 0, %v1932
  %v1934 = vrot.slane %v1597, %v1933
  %v1935 = vlaneseq
  %v1936 = vshrl.u32 %v1935, 7
  %v1937 = vsub.s32 0, %v1936
  %v1938 = vrot.slane %v1599, %v1937
  %v1939 = vlaneseq
  %v1940 = vshrl.u32 %v1939, 7
  %v1941 = vsub.s32 0, %v1940
  %v1942 = vrot.slane %v1601, %v1941
  %v1943 = vlaneseq
  %v1944 = vshrl.u32 %v1943, 7
  %v1945 = vsub.s32 0, %v1944
  %v1946 = vrot.slane %v1625, %v1945
  %v1947 = vlaneseq
  %v1948 = vshrl.u32 %v1947, 7
  %v1949 = vsub.s32 0, %v1948
  %v1950 = vrot.slane %v1639, %v1949
  %v1951 = vlaneseq
  %v1952 = vshrl.u32 %v1951, 7
  %v1953 = vsub.s32 0, %v1952
  %v1954 = vrot.slane %v1647, %v1953
  %v1955 = vlaneseq
  %v1956 = vshrl.u32 %v1955, 7
  %v1957 = vsub.s32 0, %v1956
  %v1958 = vrot.slane %v1649, %v1957
  %v1959 = vlaneseq
  %v1960 = vshrl.u32 %v1959, 7
  %v1961 = vsub.s32 0, %v1960
  %v1962 = vrot.slane %v1632, %v1961
  %v1963 = vlaneseq
  %v1964 = vshrl.u32 %v1963, 7
  %v1965 = vsub.s32 0, %v1964
  %v1966 = vrot.slane %v1646, %v1965
  %v1967 = vlaneseq
  %v1968 = vshrl.u32 %v1967, 7
  %v1969 = vsub.s32 0, %v1968
  %v1970 = vrot.slane %v1648, %v1969
  %v1971 = vlaneseq
  %v1972 = vshrl.u32 %v1971, 7
  %v1973 = vsub.s32 0, %v1972
  %v1974 = vrot.slane %v1650, %v1973
  %v1975 = vlaneseq
  %v1976 = vshrl.u32 %v1975, 7
  %v1977 = vsub.s32 0, %v1976
  %v1978 = vrot.slane %v1674, %v1977
  %v1979 = vlaneseq
  %v1980 = vshrl.u32 %v1979, 7
  %v1981 = vsub.s32 0, %v1980
  %v1982 = vrot.slane %v1688, %v1981
  %v1983 = vlaneseq
  %v1984 = vshrl.u32 %v1983, 7
  %v1985 = vsub.s32 0, %v1984
  %v1986 = vrot.slane %v1696, %v1985
  %v1987 = vlaneseq
  %v1988 = vshrl.u32 %v1987, 7
  %v1989 = vsub.s32 0, %v1988
  %v1990 = vrot.slane %v1698, %v1989
  %v1991 = vlaneseq
  %v1992 = vshrl.u32 %v1991, 7
  %v1993 = vsub.s32 0, %v1992
  %v1994 = vrot.slane %v1681, %v1993
  %v1995 = vlaneseq
  %v1996 = vshrl.u32 %v1995, 7
  %v1997 = vsub.s32 0, %v1996
  %v1998 = vrot.slane %v1695, %v1997
  %v1999 = vlaneseq
  %v2000 = vshrl.u32 %v1999, 7
  %v2001 = vsub.s32 0, %v2000
  %v2002 = vrot.slane %v1697, %v2001
  %v2003 = vlaneseq
  %v2004 = vshrl.u32 %v2003, 7
  %v2005 = vsub.s32 0, %v2004
  %v2006 = vrot.slane %v1699, %v2005
  %v2007 = vlaneseq
  %v2008 = vshrl.u32 %v2007, 7
  %v2009 = vsub.s32 0, %v2008
  %v2010 = vrot.slane %v1723, %v2009
  %v2011 = vlaneseq
  %v2012 = vshrl.u32 %v2011, 7
  %v2013 = vsub.s32 0, %v2012
  %v2014 = vrot.slane %v1737, %v2013
  %v2015 = vlaneseq
  %v2016 = vshrl.u32 %v2015, 7
  %v2017 = vsub.s32 0, %v2016
  %v2018 = vrot.slane %v1745, %v2017
  %v2019 = vlaneseq
  %v2020 = vshrl.u32 %v2019, 7
  %v2021 = vsub.s32 0, %v2020
  %v2022 = vrot.slane %v1747, %v2021
  %v2023 = vlaneseq
  %v2024 = vshrl.u32 %v2023, 7
  %v2025 = vsub.s32 0, %v2024
  %v2026 = vrot.slane %v1730, %v2025
  %v2027 = vlaneseq
  %v2028 = vshrl.u32 %v2027, 7
  %v2029 = vsub.s32 0, %v2028
  %v2030 = vrot.slane %v1744, %v2029
  %v2031 = vlaneseq
  %v2032 = vshrl.u32 %v2031, 7
  %v2033 = vsub.s32 0, %v2032
  %v2034 = vrot.slane %v1746, %v2033
  %v2035 = vlaneseq
  %v2036 = vshrl.u32 %v2035, 7
  %v2037 = vsub.s32 0, %v2036
  %v2038 = vrot.slane %v1748, %v2037
  %v2039 = vlaneseq
  %v2040 = vshrl.u32 %v2039, 7
  %v2041 = vsub.s32 0, %v2040
  %v2042 = vrot.slane %v1772, %v2041
  %v2043 = vlaneseq
  %v2044 = vshrl.u32 %v2043, 7
  %v2045 = vsub.s32 0, %v2044
  %v2046 = vrot.slane %v1786, %v2045
  %v2047 = vlaneseq
  %v2048 = vshrl.u32 %v2047, 7
  %v2049 = vsub.s32 0, %v2048
  %v2050 = vrot.slane %v1794, %v2049
  %v2051 = vlaneseq
  %v2052 = vshrl.u32 %v2051, 7
  %v2053 = vsub.s32 0, %v2052
  %v2054 = vrot.slane %v1796, %v2053
  %v2055 = vlaneseq
  %v2056 = vshrl.u32 %v2055, 7
  %v2057 = vsub.s32 0, %v2056
  %v2058 = vrot.slane %v1779, %v2057
  %v2059 = vlaneseq
  %v2060 = vshrl.u32 %v2059, 7
  %v2061 = vsub.s32 0, %v2060
  %v2062 = vrot.slane %v1793, %v2061
  %v2063 = vlaneseq
  %v2064 = vshrl.u32 %v2063, 7
  %v2065 = vsub.s32 0, %v2064
  %v2066 = vrot.slane %v1795, %v2065
  %v2067 = vlaneseq
  %v2068 = vshrl.u32 %v2067, 7
  %v2069 = vsub.s32 0, %v2068
  %v2070 = vrot.slane %v1797, %v2069
  %v2071 = vlaneseq
  %v2072 = vshrl.u32 %v2071, 7
  %v2073 = vsub.s32 0, %v2072
  %v2074 = vrot.slane %v1821, %v2073
  %v2075 = vlaneseq
  %v2076 = vshrl.u32 %v2075, 7
  %v2077 = vsub.s32 0, %v2076
  %v2078 = vrot.slane %v1835, %v2077
  %v2079 = vlaneseq
  %v2080 = vshrl.u32 %v2079, 7
  %v2081 = vsub.s32 0, %v2080
  %v2082 = vrot.slane %v1843, %v2081
  %v2083 = vlaneseq
  %v2084 = vshrl.u32 %v2083, 7
  %v2085 = vsub.s32 0, %v2084
  %v2086 = vrot.slane %v1845, %v2085
  %v2087 = vlaneseq
  %v2088 = vshrl.u32 %v2087, 7
  %v2089 = vsub.s32 0, %v2088
  %v2090 = vrot.slane %v1828, %v2089
  %v2091 = vlaneseq
  %v2092 = vshrl.u32 %v2091, 7
  %v2093 = vsub.s32 0, %v2092
  %v2094 = vrot.slane %v1842, %v2093
  %v2095 = vlaneseq
  %v2096 = vshrl.u32 %v2095, 7
  %v2097 = vsub.s32 0, %v2096
  %v2098 = vrot.slane %v1844, %v2097
  %v2099 = vlaneseq
  %v2100 = vshrl.u32 %v2099, 7
  %v2101 = vsub.s32 0, %v2100
  %v2102 = vrot.slane %v1846, %v2101
  %v2167 = vsub.f32 %v1850, %v1383
  %v2168 = vsub.f32 %v1854, %v1384
  %v2169 = vsub.f32 %v1858, %v1385
  %v2170 = vsub.f32 %v1862, %v1386
  %v2171 = vsub.f32 %v1866, %v1387
  %v2172 = vsub.f32 %v1870, %v1388
  %v2173 = vsub.f32 %v1874, %v1389
  %v2174 = vsub.f32 %v1878, %v1390
  %v2175 = vsub.f32 %v1882, %v1391
  %v2176 = vsub.f32 %v1886, %v1392
  %v2177 = vsub.f32 %v1890, %v1393
  %v2178 = vsub.f32 %v1894, %v1394
  %v2179 = vsub.f32 %v1898, %v1395
  %v2180 = vsub.f32 %v1902, %v1396
  %v2181 = vsub.f32 %v1906, %v1397
  %v2182 = vsub.f32 %v1910, %v1398
  %v2183 = vsub.f32 %v1914, %v1399
  %v2184 = vsub.f32 %v1918, %v1400
  %v2185 = vsub.f32 %v1922, %v1401
  %v2186 = vsub.f32 %v1926, %v1402
  %v2187 = vsub.f32 %v1930, %v1403
  %v2188 = vsub.f32 %v1934, %v1404
  %v2189 = vsub.f32 %v1938, %v1405
  %v2190 = vsub.f32 %v1942, %v1406
  %v2191 = vsub.f32 %v1946, %v1407
  %v2192 = vsub.f32 %v1950, %v1408
  %v2193 = vsub.f32 %v1954, %v1409
  %v2194 = vsub.f32 %v1958, %v1410
  %v2195 = vsub.f32 %v1962, %v1411
  %v2196 = vsub.f32 %v1966, %v1412
  %v2197 = vsub.f32 %v1970, %v1413
  %v2198 = vsub.f32 %v1974, %v1414
  %v2199 = vsub.f32 %v1978, %v1415
  %v2200 = vsub.f32 %v1982, %v1416
  %v2201 = vsub.f32 %v1986, %v1417
  %v2202 = vsub.f32 %v1990, %v1418
  %v2203 = vsub.f32 %v1994, %v1419
  %v2204 = vsub.f32 %v1998, %v1420
  %v2205 = vsub.f32 %v2002, %v1421
  %v2206 = vsub.f32 %v2006, %v1422
  %v2207 = vsub.f32 %v2010, %v1423
  %v2208 = vsub.f32 %v2014, %v1424
  %v2209 = vsub.f32 %v2018, %v1425
  %v2210 = vsub.f32 %v2022, %v1426
  %v2211 = vsub.f32 %v2026, %v1427
  %v2212 = vsub.f32 %v2030, %v1428
  %v2213 = vsub.f32 %v2034, %v1429
  %v2214 = vsub.f32 %v2038, %v1430
  %v2215 = vsub.f32 %v2042, %v1431
  %v2216 = vsub.f32 %v2046, %v1432
  %v2217 = vsub.f32 %v2050, %v1433
  %v2218 = vsub.f32 %v2054, %v1434
  %v2219 = vsub.f32 %v2058, %v1435
  %v2220 = vsub.f32 %v2062, %v1436
  %v2221 = vsub.f32 %v2066, %v1437
  %v2222 = vsub.f32 %v2070, %v1438
  %v2223 = vsub.f32 %v2074, %v1439
  %v2224 = vsub.f32 %v2078, %v1440
  %v2225 = vsub.f32 %v2082, %v1441
  %v2226 = vsub.f32 %v2086, %v1442
  %v2227 = vsub.f32 %v2090, %v1443
  %v2228 = vsub.f32 %v2094, %v1444
  %v2229 = vsub.f32 %v2098, %v1445
  %v2230 = vsub.f32 %v2102, %v1446
  %v2231 = vld [vmem:[%s5] sm:$0x1]
  %v2233 = vlaneseq
  %v2234 = vshrl.u32 %v2233, 7
  %v2235 = vsub.s32 0, %v2234
  %v2236 = vrot.slane %v2231, %v2235
  %v2238 = vadd.f32 %v2167, %v2236
  %v2239 = vadd.f32 %v2168, %v2236
  %v2240 = vadd.f32 %v2169, %v2236
  %v2241 = vadd.f32 %v2170, %v2236
  %v2242 = vadd.f32 %v2171, %v2236
  %v2243 = vadd.f32 %v2172, %v2236
  %v2244 = vadd.f32 %v2173, %v2236
  %v2245 = vadd.f32 %v2174, %v2236
  %v2246 = vadd.f32 %v2175, %v2236
  %v2247 = vadd.f32 %v2176, %v2236
  %v2248 = vadd.f32 %v2177, %v2236
  %v2249 = vadd.f32 %v2178, %v2236
  %v2250 = vadd.f32 %v2179, %v2236
  %v2251 = vadd.f32 %v2180, %v2236
  %v2252 = vadd.f32 %v2181, %v2236
  %v2253 = vadd.f32 %v2182, %v2236
  %v2254 = vadd.f32 %v2183, %v2236
  %v2255 = vadd.f32 %v2184, %v2236
  %v2256 = vadd.f32 %v2185, %v2236
  %v2257 = vadd.f32 %v2186, %v2236
  %v2258 = vadd.f32 %v2187, %v2236
  %v2259 = vadd.f32 %v2188, %v2236
  %v2260 = vadd.f32 %v2189, %v2236
  %v2261 = vadd.f32 %v2190, %v2236
  %v2262 = vadd.f32 %v2191, %v2236
  %v2263 = vadd.f32 %v2192, %v2236
  %v2264 = vadd.f32 %v2193, %v2236
  %v2265 = vadd.f32 %v2194, %v2236
  %v2266 = vadd.f32 %v2195, %v2236
  %v2267 = vadd.f32 %v2196, %v2236
  %v2268 = vadd.f32 %v2197, %v2236
  %v2269 = vadd.f32 %v2198, %v2236
  %v2270 = vadd.f32 %v2199, %v2236
  %v2271 = vadd.f32 %v2200, %v2236
  %v2272 = vadd.f32 %v2201, %v2236
  %v2273 = vadd.f32 %v2202, %v2236
  %v2274 = vadd.f32 %v2203, %v2236
  %v2275 = vadd.f32 %v2204, %v2236
  %v2276 = vadd.f32 %v2205, %v2236
  %v2277 = vadd.f32 %v2206, %v2236
  %v2278 = vadd.f32 %v2207, %v2236
  %v2279 = vadd.f32 %v2208, %v2236
  %v2280 = vadd.f32 %v2209, %v2236
  %v2281 = vadd.f32 %v2210, %v2236
  %v2282 = vadd.f32 %v2211, %v2236
  %v2283 = vadd.f32 %v2212, %v2236
  %v2284 = vadd.f32 %v2213, %v2236
  %v2285 = vadd.f32 %v2214, %v2236
  %v2286 = vadd.f32 %v2215, %v2236
  %v2287 = vadd.f32 %v2216, %v2236
  %v2288 = vadd.f32 %v2217, %v2236
  %v2289 = vadd.f32 %v2218, %v2236
  %v2290 = vadd.f32 %v2219, %v2236
  %v2291 = vadd.f32 %v2220, %v2236
  %v2292 = vadd.f32 %v2221, %v2236
  %v2293 = vadd.f32 %v2222, %v2236
  %v2294 = vadd.f32 %v2223, %v2236
  %v2295 = vadd.f32 %v2224, %v2236
  %v2296 = vadd.f32 %v2225, %v2236
  %v2297 = vadd.f32 %v2226, %v2236
  %v2298 = vadd.f32 %v2227, %v2236
  %v2299 = vadd.f32 %v2228, %v2236
  %v2300 = vadd.f32 %v2229, %v2236
  %v2301 = vadd.f32 %v2230, %v2236
  %v2302 = vmax.f32 %v2238, 0.0
  %v2303 = vmax.f32 %v2239, 0.0
  %v2304 = vmax.f32 %v2240, 0.0
  %v2305 = vmax.f32 %v2241, 0.0
  %v2306 = vmax.f32 %v2242, 0.0
  %v2307 = vmax.f32 %v2243, 0.0
  %v2308 = vmax.f32 %v2244, 0.0
  %v2309 = vmax.f32 %v2245, 0.0
  %v2310 = vmax.f32 %v2246, 0.0
  %v2311 = vmax.f32 %v2247, 0.0
  %v2312 = vmax.f32 %v2248, 0.0
  %v2313 = vmax.f32 %v2249, 0.0
  %v2314 = vmax.f32 %v2250, 0.0
  %v2315 = vmax.f32 %v2251, 0.0
  %v2316 = vmax.f32 %v2252, 0.0
  %v2317 = vmax.f32 %v2253, 0.0
  %v2318 = vmax.f32 %v2254, 0.0
  %v2319 = vmax.f32 %v2255, 0.0
  %v2320 = vmax.f32 %v2256, 0.0
  %v2321 = vmax.f32 %v2257, 0.0
  %v2322 = vmax.f32 %v2258, 0.0
  %v2323 = vmax.f32 %v2259, 0.0
  %v2324 = vmax.f32 %v2260, 0.0
  %v2325 = vmax.f32 %v2261, 0.0
  %v2326 = vmax.f32 %v2262, 0.0
  %v2327 = vmax.f32 %v2263, 0.0
  %v2328 = vmax.f32 %v2264, 0.0
  %v2329 = vmax.f32 %v2265, 0.0
  %v2330 = vmax.f32 %v2266, 0.0
  %v2331 = vmax.f32 %v2267, 0.0
  %v2332 = vmax.f32 %v2268, 0.0
  %v2333 = vmax.f32 %v2269, 0.0
  %v2334 = vmax.f32 %v2270, 0.0
  %v2335 = vmax.f32 %v2271, 0.0
  %v2336 = vmax.f32 %v2272, 0.0
  %v2337 = vmax.f32 %v2273, 0.0
  %v2338 = vmax.f32 %v2274, 0.0
  %v2339 = vmax.f32 %v2275, 0.0
  %v2340 = vmax.f32 %v2276, 0.0
  %v2341 = vmax.f32 %v2277, 0.0
  %v2342 = vmax.f32 %v2278, 0.0
  %v2343 = vmax.f32 %v2279, 0.0
  %v2344 = vmax.f32 %v2280, 0.0
  %v2345 = vmax.f32 %v2281, 0.0
  %v2346 = vmax.f32 %v2282, 0.0
  %v2347 = vmax.f32 %v2283, 0.0
  %v2348 = vmax.f32 %v2284, 0.0
  %v2349 = vmax.f32 %v2285, 0.0
  %v2350 = vmax.f32 %v2286, 0.0
  %v2351 = vmax.f32 %v2287, 0.0
  %v2352 = vmax.f32 %v2288, 0.0
  %v2353 = vmax.f32 %v2289, 0.0
  %v2354 = vmax.f32 %v2290, 0.0
  %v2355 = vmax.f32 %v2291, 0.0
  %v2356 = vmax.f32 %v2292, 0.0
  %v2357 = vmax.f32 %v2293, 0.0
  %v2358 = vmax.f32 %v2294, 0.0
  %v2359 = vmax.f32 %v2295, 0.0
  %v2360 = vmax.f32 %v2296, 0.0
  %v2361 = vmax.f32 %v2297, 0.0
  %v2362 = vmax.f32 %v2298, 0.0
  %v2363 = vmax.f32 %v2299, 0.0
  %v2364 = vmax.f32 %v2300, 0.0
  %v2365 = vmax.f32 %v2301, 0.0
  %v2366 = vpack.c.bf16 %v2303, %v2302
  %v2367 = vpack.c.bf16 %v2305, %v2304
  %v2368 = vpack.c.bf16 %v2307, %v2306
  %v2369 = vpack.c.bf16 %v2309, %v2308
  %v2370 = vpack.c.bf16 %v2311, %v2310
  %v2371 = vpack.c.bf16 %v2313, %v2312
  %v2372 = vpack.c.bf16 %v2315, %v2314
  %v2373 = vpack.c.bf16 %v2317, %v2316
  %v2374 = vpack.c.bf16 %v2319, %v2318
  %v2375 = vpack.c.bf16 %v2321, %v2320
  %v2376 = vpack.c.bf16 %v2323, %v2322
  %v2377 = vpack.c.bf16 %v2325, %v2324
  %v2378 = vpack.c.bf16 %v2327, %v2326
  %v2379 = vpack.c.bf16 %v2329, %v2328
  %v2380 = vpack.c.bf16 %v2331, %v2330
  %v2381 = vpack.c.bf16 %v2333, %v2332
  %v2382 = vpack.c.bf16 %v2335, %v2334
  %v2383 = vpack.c.bf16 %v2337, %v2336
  %v2384 = vpack.c.bf16 %v2339, %v2338
  %v2385 = vpack.c.bf16 %v2341, %v2340
  %v2386 = vpack.c.bf16 %v2343, %v2342
  %v2387 = vpack.c.bf16 %v2345, %v2344
  %v2388 = vpack.c.bf16 %v2347, %v2346
  %v2389 = vpack.c.bf16 %v2349, %v2348
  %v2390 = vpack.c.bf16 %v2351, %v2350
  %v2391 = vpack.c.bf16 %v2353, %v2352
  %v2392 = vpack.c.bf16 %v2355, %v2354
  %v2393 = vpack.c.bf16 %v2357, %v2356
  %v2394 = vpack.c.bf16 %v2359, %v2358
  %v2395 = vpack.c.bf16 %v2361, %v2360
  %v2396 = vpack.c.bf16 %v2363, %v2362
  %v2397 = vpack.c.bf16 %v2365, %v2364
  %v2398 = vld [vmem:[%s6] sm:$0xf]
  %v2399 = vld [vmem:[%s6 + $0x4] sm:$0xf]
  %v2400 = vld [vmem:[%s6 + $0x8] sm:$0xf]
  %v2401 = vld [vmem:[%s6 + $0xc] sm:$0xf]
  %v2402 = vld [vmem:[%s6 + $0x10] sm:$0xf]
  %v2403 = vld [vmem:[%s6 + $0x14] sm:$0xf]
  %v2404 = vld [vmem:[%s6 + $0x18] sm:$0xf]
  %v2405 = vld [vmem:[%s6 + $0x1c] sm:$0xf]
  %v2406 = vld [vmem:[%s6 + $0x20] sm:$0xf]
  %v2407 = vld [vmem:[%s6 + $0x24] sm:$0xf]
  %v2408 = vld [vmem:[%s6 + $0x28] sm:$0xf]
  %v2409 = vld [vmem:[%s6 + $0x2c] sm:$0xf]
  %v2410 = vld [vmem:[%s7] sm:$0x1]
  %v2412 = vlaneseq
  %v2413 = vshrl.u32 %v2412, 7
  %v2414 = vsub.s32 0, %v2413
  %v2415 = vrot.slane %v2410, %v2414
  %v2429 = vunpack.c.l.b16 %v2398
  %v2430 = vunpack.c.l.b16 %v2399
  %v2431 = vunpack.c.l.b16 %v2400
  %v2432 = vunpack.c.l.b16 %v2401
  %v2433 = vunpack.c.l.b16 %v2402
  %v2434 = vunpack.c.l.b16 %v2403
  %v2435 = vunpack.c.l.b16 %v2404
  %v2436 = vunpack.c.l.b16 %v2405
  %v2437 = vunpack.c.l.b16 %v2406
  %v2438 = vunpack.c.l.b16 %v2407
  %v2439 = vunpack.c.l.b16 %v2408
  %v2440 = vunpack.c.l.b16 %v2409
  %v2441 = vpack.c.b16 %v2430, %v2429
  %v2442 = vpack.c.b16 %v2432, %v2431
  %v2443 = vpack.c.b16 %v2434, %v2433
  %v2444 = vpack.c.b16 %v2436, %v2435
  %v2445 = vpack.c.b16 %v2438, %v2437
  %v2446 = vpack.c.b16 %v2440, %v2439
  %vm2453 = vcmask 785408
  %v2455 = vsel %vm2453, %v2366, 0
  %v2458 = vsel %vm2453, %v2367, 0
  %v2461 = vsel %vm2453, %v2368, 0
  %v2464 = vsel %vm2453, %v2369, 0
  %v2467 = vsel %vm2453, %v2370, 0
  %v2470 = vsel %vm2453, %v2371, 0
  %v2473 = vsel %vm2453, %v2372, 0
  %v2476 = vsel %vm2453, %v2373, 0
  %v2479 = vsel %vm2453, %v2374, 0
  %v2482 = vsel %vm2453, %v2375, 0
  %v2485 = vsel %vm2453, %v2376, 0
  %v2488 = vsel %vm2453, %v2377, 0
  %v2491 = vsel %vm2453, %v2378, 0
  %v2494 = vsel %vm2453, %v2379, 0
  %v2497 = vsel %vm2453, %v2380, 0
  %v2500 = vsel %vm2453, %v2381, 0
  %v2503 = vsel %vm2453, %v2382, 0
  %v2506 = vsel %vm2453, %v2383, 0
  %v2509 = vsel %vm2453, %v2384, 0
  %v2512 = vsel %vm2453, %v2385, 0
  %v2515 = vsel %vm2453, %v2386, 0
  %v2518 = vsel %vm2453, %v2387, 0
  %v2521 = vsel %vm2453, %v2388, 0
  %v2524 = vsel %vm2453, %v2389, 0
  %v2527 = vsel %vm2453, %v2390, 0
  %v2530 = vsel %vm2453, %v2391, 0
  %v2533 = vsel %vm2453, %v2392, 0
  %v2536 = vsel %vm2453, %v2393, 0
  %v2539 = vsel %vm2453, %v2394, 0
  %v2542 = vsel %vm2453, %v2395, 0
  %v2545 = vsel %vm2453, %v2396, 0
  %v2548 = vsel %vm2453, %v2397, 0
  %2550 = vmatprep.subr.bf16.mxu0 0
  %2551 = vmatpush1.bf16.msra.mxu0 0
  %2552 = vmatprep.subr.bf16.mxu0 0
  %2553 = vmatpush1.bf16.msra.mxu0 0
  %2554 = vmatprep.subr.bf16.mxu0 0
  %2555 = vmatpush1.bf16.msra.mxu0 %v2446
  %2556 = vmatprep.subr.bf16.mxu0 0
  %2557 = vmatpush1.bf16.msra.mxu0 %v2445
  %2558 = vmatprep.subr.bf16.mxu0 0
  %2559 = vmatpush1.bf16.msra.mxu0 %v2444
  %2560 = vmatprep.subr.bf16.mxu0 0
  %2561 = vmatpush1.bf16.msra.mxu0 %v2443
  %2562 = vmatprep.subr.bf16.mxu0 0
  %2563 = vmatpush1.bf16.msra.mxu0 %v2442
  %2564 = vmatprep.subr.bf16.mxu0 0
  %2565 = vmatpush1.bf16.msra.mxu0 %v2441
  %2566 = vmatprep.subr.bf16.mxu0 0
  %2567 = vmatpush2.bf16.msra.mxu0 0
  %2568 = vmatprep.subr.bf16.mxu0 0
  %2569 = vmatpush2.bf16.msra.mxu0 0
  %2570 = vmatprep.subr.bf16.mxu0 0
  %2571 = vmatpush2.bf16.msra.mxu0 0
  %2572 = vmatprep.subr.bf16.mxu0 0
  %2573 = vmatpush2.bf16.msra.mxu0 0
  %2574 = vmatprep.subr.bf16.mxu0 0
  %2575 = vmatpush2.bf16.msra.mxu0 0
  %2576 = vmatprep.subr.bf16.mxu0 0
  %2577 = vmatpush2.bf16.msra.mxu0 0
  %2578 = vmatprep.subr.bf16.mxu0 0
  %2579 = vmatpush2.bf16.msra.mxu0 0
  %2580 = vmatprep.subr.bf16.mxu0 0
  %2581 = vmatpush2.bf16.msra.mxu0 0
  %2582 = vmatprep.mubr.bf16.mxu0 0
  %2583 = vmatmul.mubr.bf16.gmra.mxu0 %v2455
  %v2584 = vpop.f32.mrf.mxu0
  %v2585 = vadd.f32 %v2415, %v2584
  %v2586 = vpop.f32.mrf.mxu0
  %v2587 = vpop.f32.mrf.mxu0
  %v2588 = vadd.f32 %v2415, %v2587
  %v2589 = vpop.f32.mrf.mxu0
  %2590 = vmatprep.mubr.bf16.mxu0 0
  %2591 = vmatmul.mubr.bf16.gmra.mxu0 %v2458
  %v2592 = vpop.f32.mrf.mxu0
  %v2593 = vadd.f32 %v2415, %v2592
  %v2594 = vpop.f32.mrf.mxu0
  %v2595 = vpop.f32.mrf.mxu0
  %v2596 = vadd.f32 %v2415, %v2595
  %v2597 = vpop.f32.mrf.mxu0
  %2598 = vmatprep.mubr.bf16.mxu0 0
  %2599 = vmatmul.mubr.bf16.gmra.mxu0 %v2461
  %v2600 = vpop.f32.mrf.mxu0
  %v2601 = vadd.f32 %v2415, %v2600
  %v2602 = vpop.f32.mrf.mxu0
  %v2603 = vpop.f32.mrf.mxu0
  %v2604 = vadd.f32 %v2415, %v2603
  %v2605 = vpop.f32.mrf.mxu0
  %2606 = vmatprep.mubr.bf16.mxu0 0
  %2607 = vmatmul.mubr.bf16.gmra.mxu0 %v2464
  %v2608 = vpop.f32.mrf.mxu0
  %v2609 = vadd.f32 %v2415, %v2608
  %v2610 = vpop.f32.mrf.mxu0
  %v2611 = vpop.f32.mrf.mxu0
  %v2612 = vadd.f32 %v2415, %v2611
  %v2613 = vpop.f32.mrf.mxu0
  %2614 = vmatprep.mubr.bf16.mxu0 0
  %2615 = vmatmul.mubr.bf16.gmra.mxu0 %v2467
  %v2616 = vpop.f32.mrf.mxu0
  %v2617 = vadd.f32 %v2415, %v2616
  %v2618 = vpop.f32.mrf.mxu0
  %v2619 = vpop.f32.mrf.mxu0
  %v2620 = vadd.f32 %v2415, %v2619
  %v2621 = vpop.f32.mrf.mxu0
  %2622 = vmatprep.mubr.bf16.mxu0 0
  %2623 = vmatmul.mubr.bf16.gmra.mxu0 %v2470
  %v2624 = vpop.f32.mrf.mxu0
  %v2625 = vadd.f32 %v2415, %v2624
  %v2626 = vpop.f32.mrf.mxu0
  %v2627 = vpop.f32.mrf.mxu0
  %v2628 = vadd.f32 %v2415, %v2627
  %v2629 = vpop.f32.mrf.mxu0
  %2630 = vmatprep.mubr.bf16.mxu0 0
  %2631 = vmatmul.mubr.bf16.gmra.mxu0 %v2473
  %v2632 = vpop.f32.mrf.mxu0
  %v2633 = vadd.f32 %v2415, %v2632
  %v2634 = vpop.f32.mrf.mxu0
  %v2635 = vpop.f32.mrf.mxu0
  %v2636 = vadd.f32 %v2415, %v2635
  %v2637 = vpop.f32.mrf.mxu0
  %2638 = vmatprep.mubr.bf16.mxu0 0
  %2639 = vmatmul.mubr.bf16.gmra.mxu0 %v2476
  %v2640 = vpop.f32.mrf.mxu0
  %v2641 = vadd.f32 %v2415, %v2640
  %v2642 = vpop.f32.mrf.mxu0
  %v2643 = vpop.f32.mrf.mxu0
  %v2644 = vadd.f32 %v2415, %v2643
  %v2645 = vpop.f32.mrf.mxu0
  %2646 = vmatprep.mubr.bf16.mxu0 0
  %2647 = vmatmul.mubr.bf16.gmra.mxu0 %v2479
  %v2648 = vpop.f32.mrf.mxu0
  %v2649 = vadd.f32 %v2415, %v2648
  %v2650 = vpop.f32.mrf.mxu0
  %v2651 = vpop.f32.mrf.mxu0
  %v2652 = vadd.f32 %v2415, %v2651
  %v2653 = vpop.f32.mrf.mxu0
  %2654 = vmatprep.mubr.bf16.mxu0 0
  %2655 = vmatmul.mubr.bf16.gmra.mxu0 %v2482
  %v2656 = vpop.f32.mrf.mxu0
  %v2657 = vadd.f32 %v2415, %v2656
  %v2658 = vpop.f32.mrf.mxu0
  %v2659 = vpop.f32.mrf.mxu0
  %v2660 = vadd.f32 %v2415, %v2659
  %v2661 = vpop.f32.mrf.mxu0
  %2662 = vmatprep.mubr.bf16.mxu0 0
  %2663 = vmatmul.mubr.bf16.gmra.mxu0 %v2485
  %v2664 = vpop.f32.mrf.mxu0
  %v2665 = vadd.f32 %v2415, %v2664
  %v2666 = vpop.f32.mrf.mxu0
  %v2667 = vpop.f32.mrf.mxu0
  %v2668 = vadd.f32 %v2415, %v2667
  %v2669 = vpop.f32.mrf.mxu0
  %2670 = vmatprep.mubr.bf16.mxu0 0
  %2671 = vmatmul.mubr.bf16.gmra.mxu0 %v2488
  %v2672 = vpop.f32.mrf.mxu0
  %v2673 = vadd.f32 %v2415, %v2672
  %v2674 = vpop.f32.mrf.mxu0
  %v2675 = vpop.f32.mrf.mxu0
  %v2676 = vadd.f32 %v2415, %v2675
  %v2677 = vpop.f32.mrf.mxu0
  %2678 = vmatprep.mubr.bf16.mxu0 0
  %2679 = vmatmul.mubr.bf16.gmra.mxu0 %v2491
  %v2680 = vpop.f32.mrf.mxu0
  %v2681 = vadd.f32 %v2415, %v2680
  %v2682 = vpop.f32.mrf.mxu0
  %v2683 = vpop.f32.mrf.mxu0
  %v2684 = vadd.f32 %v2415, %v2683
  %v2685 = vpop.f32.mrf.mxu0
  %2686 = vmatprep.mubr.bf16.mxu0 0
  %2687 = vmatmul.mubr.bf16.gmra.mxu0 %v2494
  %v2688 = vpop.f32.mrf.mxu0
  %v2689 = vadd.f32 %v2415, %v2688
  %v2690 = vpop.f32.mrf.mxu0
  %v2691 = vpop.f32.mrf.mxu0
  %v2692 = vadd.f32 %v2415, %v2691
  %v2693 = vpop.f32.mrf.mxu0
  %2694 = vmatprep.mubr.bf16.mxu0 0
  %2695 = vmatmul.mubr.bf16.gmra.mxu0 %v2497
  %v2696 = vpop.f32.mrf.mxu0
  %v2697 = vadd.f32 %v2415, %v2696
  %v2698 = vpop.f32.mrf.mxu0
  %v2699 = vpop.f32.mrf.mxu0
  %v2700 = vadd.f32 %v2415, %v2699
  %v2701 = vpop.f32.mrf.mxu0
  %2702 = vmatprep.mubr.bf16.mxu0 0
  %2703 = vmatmul.mubr.bf16.gmra.mxu0 %v2500
  %v2704 = vpop.f32.mrf.mxu0
  %v2705 = vadd.f32 %v2415, %v2704
  %v2706 = vpop.f32.mrf.mxu0
  %v2707 = vpop.f32.mrf.mxu0
  %v2708 = vadd.f32 %v2415, %v2707
  %v2709 = vpop.f32.mrf.mxu0
  %2710 = vmatprep.mubr.bf16.mxu0 0
  %2711 = vmatmul.mubr.bf16.gmra.mxu0 %v2503
  %v2712 = vpop.f32.mrf.mxu0
  %v2713 = vadd.f32 %v2415, %v2712
  %v2714 = vpop.f32.mrf.mxu0
  %v2715 = vpop.f32.mrf.mxu0
  %v2716 = vadd.f32 %v2415, %v2715
  %v2717 = vpop.f32.mrf.mxu0
  %2718 = vmatprep.mubr.bf16.mxu0 0
  %2719 = vmatmul.mubr.bf16.gmra.mxu0 %v2506
  %v2720 = vpop.f32.mrf.mxu0
  %v2721 = vadd.f32 %v2415, %v2720
  %v2722 = vpop.f32.mrf.mxu0
  %v2723 = vpop.f32.mrf.mxu0
  %v2724 = vadd.f32 %v2415, %v2723
  %v2725 = vpop.f32.mrf.mxu0
  %2726 = vmatprep.mubr.bf16.mxu0 0
  %2727 = vmatmul.mubr.bf16.gmra.mxu0 %v2509
  %v2728 = vpop.f32.mrf.mxu0
  %v2729 = vadd.f32 %v2415, %v2728
  %v2730 = vpop.f32.mrf.mxu0
  %v2731 = vpop.f32.mrf.mxu0
  %v2732 = vadd.f32 %v2415, %v2731
  %v2733 = vpop.f32.mrf.mxu0
  %2734 = vmatprep.mubr.bf16.mxu0 0
  %2735 = vmatmul.mubr.bf16.gmra.mxu0 %v2512
  %v2736 = vpop.f32.mrf.mxu0
  %v2737 = vadd.f32 %v2415, %v2736
  %v2738 = vpop.f32.mrf.mxu0
  %v2739 = vpop.f32.mrf.mxu0
  %v2740 = vadd.f32 %v2415, %v2739
  %v2741 = vpop.f32.mrf.mxu0
  %2742 = vmatprep.mubr.bf16.mxu0 0
  %2743 = vmatmul.mubr.bf16.gmra.mxu0 %v2515
  %v2744 = vpop.f32.mrf.mxu0
  %v2745 = vadd.f32 %v2415, %v2744
  %v2746 = vpop.f32.mrf.mxu0
  %v2747 = vpop.f32.mrf.mxu0
  %v2748 = vadd.f32 %v2415, %v2747
  %v2749 = vpop.f32.mrf.mxu0
  %2750 = vmatprep.mubr.bf16.mxu0 0
  %2751 = vmatmul.mubr.bf16.gmra.mxu0 %v2518
  %v2752 = vpop.f32.mrf.mxu0
  %v2753 = vadd.f32 %v2415, %v2752
  %v2754 = vpop.f32.mrf.mxu0
  %v2755 = vpop.f32.mrf.mxu0
  %v2756 = vadd.f32 %v2415, %v2755
  %v2757 = vpop.f32.mrf.mxu0
  %2758 = vmatprep.mubr.bf16.mxu0 0
  %2759 = vmatmul.mubr.bf16.gmra.mxu0 %v2521
  %v2760 = vpop.f32.mrf.mxu0
  %v2761 = vadd.f32 %v2415, %v2760
  %v2762 = vpop.f32.mrf.mxu0
  %v2763 = vpop.f32.mrf.mxu0
  %v2764 = vadd.f32 %v2415, %v2763
  %v2765 = vpop.f32.mrf.mxu0
  %2766 = vmatprep.mubr.bf16.mxu0 0
  %2767 = vmatmul.mubr.bf16.gmra.mxu0 %v2524
  %v2768 = vpop.f32.mrf.mxu0
  %v2769 = vadd.f32 %v2415, %v2768
  %v2770 = vpop.f32.mrf.mxu0
  %v2771 = vpop.f32.mrf.mxu0
  %v2772 = vadd.f32 %v2415, %v2771
  %v2773 = vpop.f32.mrf.mxu0
  %2774 = vmatprep.mubr.bf16.mxu0 0
  %2775 = vmatmul.mubr.bf16.gmra.mxu0 %v2527
  %v2776 = vpop.f32.mrf.mxu0
  %v2777 = vadd.f32 %v2415, %v2776
  %v2778 = vpop.f32.mrf.mxu0
  %v2779 = vpop.f32.mrf.mxu0
  %v2780 = vadd.f32 %v2415, %v2779
  %v2781 = vpop.f32.mrf.mxu0
  %2782 = vmatprep.mubr.bf16.mxu0 0
  %2783 = vmatmul.mubr.bf16.gmra.mxu0 %v2530
  %v2784 = vpop.f32.mrf.mxu0
  %v2785 = vadd.f32 %v2415, %v2784
  %v2786 = vpop.f32.mrf.mxu0
  %v2787 = vpop.f32.mrf.mxu0
  %v2788 = vadd.f32 %v2415, %v2787
  %v2789 = vpop.f32.mrf.mxu0
  %2790 = vmatprep.mubr.bf16.mxu0 0
  %2791 = vmatmul.mubr.bf16.gmra.mxu0 %v2533
  %v2792 = vpop.f32.mrf.mxu0
  %v2793 = vadd.f32 %v2415, %v2792
  %v2794 = vpop.f32.mrf.mxu0
  %v2795 = vpop.f32.mrf.mxu0
  %v2796 = vadd.f32 %v2415, %v2795
  %v2797 = vpop.f32.mrf.mxu0
  %2798 = vmatprep.mubr.bf16.mxu0 0
  %2799 = vmatmul.mubr.bf16.gmra.mxu0 %v2536
  %v2800 = vpop.f32.mrf.mxu0
  %v2801 = vadd.f32 %v2415, %v2800
  %v2802 = vpop.f32.mrf.mxu0
  %v2803 = vpop.f32.mrf.mxu0
  %v2804 = vadd.f32 %v2415, %v2803
  %v2805 = vpop.f32.mrf.mxu0
  %2806 = vmatprep.mubr.bf16.mxu0 0
  %2807 = vmatmul.mubr.bf16.gmra.mxu0 %v2539
  %v2808 = vpop.f32.mrf.mxu0
  %v2809 = vadd.f32 %v2415, %v2808
  %v2810 = vpop.f32.mrf.mxu0
  %v2811 = vpop.f32.mrf.mxu0
  %v2812 = vadd.f32 %v2415, %v2811
  %v2813 = vpop.f32.mrf.mxu0
  %2814 = vmatprep.mubr.bf16.mxu0 0
  %2815 = vmatmul.mubr.bf16.gmra.mxu0 %v2542
  %v2816 = vpop.f32.mrf.mxu0
  %v2817 = vadd.f32 %v2415, %v2816
  %v2818 = vpop.f32.mrf.mxu0
  %v2819 = vpop.f32.mrf.mxu0
  %v2820 = vadd.f32 %v2415, %v2819
  %v2821 = vpop.f32.mrf.mxu0
  %2822 = vmatprep.mubr.bf16.mxu0 0
  %2823 = vmatmul.mubr.bf16.gmra.mxu0 %v2545
  %v2824 = vpop.f32.mrf.mxu0
  %v2825 = vadd.f32 %v2415, %v2824
  %v2826 = vpop.f32.mrf.mxu0
  %v2827 = vpop.f32.mrf.mxu0
  %v2828 = vadd.f32 %v2415, %v2827
  %v2829 = vpop.f32.mrf.mxu0
  %2830 = vmatprep.mubr.bf16.mxu0 0
  %2831 = vmatmul.mubr.bf16.gmra.mxu0 %v2548
  %v2832 = vpop.f32.mrf.mxu0
  %v2833 = vadd.f32 %v2415, %v2832
  %v2834 = vpop.f32.mrf.mxu0
  %v2835 = vpop.f32.mrf.mxu0
  %v2836 = vadd.f32 %v2415, %v2835
  %v2837 = vpop.f32.mrf.mxu0
  %2838 = vdwg.mxu0
  %v2839 = vld [vmem:[%s8] sm:$0xf]
  %v2840 = vld [vmem:[%s8 + $0x4] sm:$0xf]
  %v2841 = vld [vmem:[%s8 + $0x8] sm:$0xf]
  %v2842 = vld [vmem:[%s8 + $0xc] sm:$0xf]
  %v2907 = vunpack.c.l.b16 %v48
  %v2908 = vunpack.c.l.b16 %v49
  %v2909 = vunpack.c.l.b16 %v50
  %v2910 = vunpack.c.l.b16 %v51
  %v2911 = vunpack.c.l.b16 %v52
  %v2912 = vunpack.c.l.b16 %v53
  %v2913 = vunpack.c.l.b16 %v54
  %v2914 = vunpack.c.l.b16 %v55
  %v2915 = vunpack.c.l.b16 %v56
  %v2916 = vunpack.c.l.b16 %v57
  %v2917 = vunpack.c.l.b16 %v58
  %v2918 = vunpack.c.l.b16 %v59
  %v2919 = vunpack.c.l.b16 %v60
  %v2920 = vunpack.c.l.b16 %v61
  %v2921 = vunpack.c.l.b16 %v62
  %v2922 = vunpack.c.l.b16 %v63
  %v2923 = vunpack.c.l.b16 %v64
  %v2924 = vunpack.c.l.b16 %v65
  %v2925 = vunpack.c.l.b16 %v66
  %v2926 = vunpack.c.l.b16 %v67
  %v2927 = vunpack.c.l.b16 %v68
  %v2928 = vunpack.c.l.b16 %v69
  %v2929 = vunpack.c.l.b16 %v70
  %v2930 = vunpack.c.l.b16 %v71
  %v2931 = vunpack.c.l.b16 %v72
  %v2932 = vunpack.c.l.b16 %v73
  %v2933 = vunpack.c.l.b16 %v74
  %v2934 = vunpack.c.l.b16 %v75
  %v2935 = vunpack.c.l.b16 %v76
  %v2936 = vunpack.c.l.b16 %v77
  %v2937 = vunpack.c.l.b16 %v78
  %v2938 = vunpack.c.l.b16 %v79
  %v2939 = vunpack.c.l.b16 %v80
  %v2940 = vunpack.c.l.b16 %v81
  %v2941 = vunpack.c.l.b16 %v82
  %v2942 = vunpack.c.l.b16 %v83
  %v2943 = vunpack.c.l.b16 %v84
  %v2944 = vunpack.c.l.b16 %v85
  %v2945 = vunpack.c.l.b16 %v86
  %v2946 = vunpack.c.l.b16 %v87
  %v2947 = vunpack.c.l.b16 %v88
  %v2948 = vunpack.c.l.b16 %v89
  %v2949 = vunpack.c.l.b16 %v90
  %v2950 = vunpack.c.l.b16 %v91
  %v2951 = vunpack.c.l.b16 %v92
  %v2952 = vunpack.c.l.b16 %v93
  %v2953 = vunpack.c.l.b16 %v94
  %v2954 = vunpack.c.l.b16 %v95
  %v2955 = vunpack.c.l.b16 %v96
  %v2956 = vunpack.c.l.b16 %v97
  %v2957 = vunpack.c.l.b16 %v98
  %v2958 = vunpack.c.l.b16 %v99
  %v2959 = vunpack.c.l.b16 %v100
  %v2960 = vunpack.c.l.b16 %v101
  %v2961 = vunpack.c.l.b16 %v102
  %v2962 = vunpack.c.l.b16 %v103
  %v2963 = vunpack.c.l.b16 %v104
  %v2964 = vunpack.c.l.b16 %v105
  %v2965 = vunpack.c.l.b16 %v106
  %v2966 = vunpack.c.l.b16 %v107
  %v2967 = vunpack.c.l.b16 %v108
  %v2968 = vunpack.c.l.b16 %v109
  %v2969 = vunpack.c.l.b16 %v110
  %v2970 = vunpack.c.l.b16 %v111
  %v2971 = vpack.c.b16 %v2908, %v2907
  %v2972 = vpack.c.b16 %v2910, %v2909
  %v2973 = vpack.c.b16 %v2912, %v2911
  %v2974 = vpack.c.b16 %v2914, %v2913
  %v2975 = vpack.c.b16 %v2916, %v2915
  %v2976 = vpack.c.b16 %v2918, %v2917
  %v2977 = vpack.c.b16 %v2920, %v2919
  %v2978 = vpack.c.b16 %v2922, %v2921
  %v2979 = vpack.c.b16 %v2924, %v2923
  %v2980 = vpack.c.b16 %v2926, %v2925
  %v2981 = vpack.c.b16 %v2928, %v2927
  %v2982 = vpack.c.b16 %v2930, %v2929
  %v2983 = vpack.c.b16 %v2932, %v2931
  %v2984 = vpack.c.b16 %v2934, %v2933
  %v2985 = vpack.c.b16 %v2936, %v2935
  %v2986 = vpack.c.b16 %v2938, %v2937
  %v2987 = vpack.c.b16 %v2940, %v2939
  %v2988 = vpack.c.b16 %v2942, %v2941
  %v2989 = vpack.c.b16 %v2944, %v2943
  %v2990 = vpack.c.b16 %v2946, %v2945
  %v2991 = vpack.c.b16 %v2948, %v2947
  %v2992 = vpack.c.b16 %v2950, %v2949
  %v2993 = vpack.c.b16 %v2952, %v2951
  %v2994 = vpack.c.b16 %v2954, %v2953
  %v2995 = vpack.c.b16 %v2956, %v2955
  %v2996 = vpack.c.b16 %v2958, %v2957
  %v2997 = vpack.c.b16 %v2960, %v2959
  %v2998 = vpack.c.b16 %v2962, %v2961
  %v2999 = vpack.c.b16 %v2964, %v2963
  %v3000 = vpack.c.b16 %v2966, %v2965
  %v3001 = vpack.c.b16 %v2968, %v2967
  %v3002 = vpack.c.b16 %v2970, %v2969
  %v3007 = vunpack.c.l.b16 %v2839
  %v3008 = vunpack.c.l.b16 %v2840
  %v3009 = vunpack.c.l.b16 %v2841
  %v3010 = vunpack.c.l.b16 %v2842
  %v3011 = vpack.c.b16 %v3008, %v3007
  %v3012 = vpack.c.b16 %v3010, %v3009
  %vm3015 = vcmask 261120
  %v3017 = vsel %vm3015, %v2971, 0
  %v3020 = vsel %vm3015, %v2972, 0
  %v3023 = vsel %vm3015, %v2973, 0
  %v3026 = vsel %vm3015, %v2974, 0
  %v3029 = vsel %vm3015, %v2975, 0
  %v3032 = vsel %vm3015, %v2976, 0
  %v3035 = vsel %vm3015, %v2977, 0
  %v3038 = vsel %vm3015, %v2978, 0
  %v3041 = vsel %vm3015, %v2979, 0
  %v3044 = vsel %vm3015, %v2980, 0
  %v3047 = vsel %vm3015, %v2981, 0
  %v3050 = vsel %vm3015, %v2982, 0
  %v3053 = vsel %vm3015, %v2983, 0
  %v3056 = vsel %vm3015, %v2984, 0
  %v3059 = vsel %vm3015, %v2985, 0
  %v3062 = vsel %vm3015, %v2986, 0
  %v3065 = vsel %vm3015, %v2987, 0
  %v3068 = vsel %vm3015, %v2988, 0
  %v3071 = vsel %vm3015, %v2989, 0
  %v3074 = vsel %vm3015, %v2990, 0
  %v3077 = vsel %vm3015, %v2991, 0
  %v3080 = vsel %vm3015, %v2992, 0
  %v3083 = vsel %vm3015, %v2993, 0
  %v3086 = vsel %vm3015, %v2994, 0
  %v3089 = vsel %vm3015, %v2995, 0
  %v3092 = vsel %vm3015, %v2996, 0
  %v3095 = vsel %vm3015, %v2997, 0
  %v3098 = vsel %vm3015, %v2998, 0
  %v3101 = vsel %vm3015, %v2999, 0
  %v3104 = vsel %vm3015, %v3000, 0
  %v3107 = vsel %vm3015, %v3001, 0
  %v3110 = vsel %vm3015, %v3002, 0
  %3112 = vmatprep.subr.bf16.mxu0 0
  %3113 = vmatpush1.bf16.msra.mxu0 0
  %3114 = vmatprep.subr.bf16.mxu0 0
  %3115 = vmatpush1.bf16.msra.mxu0 0
  %3116 = vmatprep.subr.bf16.mxu0 0
  %3117 = vmatpush1.bf16.msra.mxu0 0
  %3118 = vmatprep.subr.bf16.mxu0 0
  %3119 = vmatpush1.bf16.msra.mxu0 0
  %3120 = vmatprep.subr.bf16.mxu0 0
  %3121 = vmatpush1.bf16.msra.mxu0 0
  %3122 = vmatprep.subr.bf16.mxu0 0
  %3123 = vmatpush1.bf16.msra.mxu0 0
  %3124 = vmatprep.subr.bf16.mxu0 0
  %3125 = vmatpush1.bf16.msra.mxu0 %v3012
  %3126 = vmatprep.subr.bf16.mxu0 0
  %3127 = vmatpush1.bf16.msra.mxu0 %v3011
  %3128 = vmatprep.subr.bf16.mxu0 0
  %3129 = vmatpush2.bf16.msra.mxu0 0
  %3130 = vmatprep.subr.bf16.mxu0 0
  %3131 = vmatpush2.bf16.msra.mxu0 0
  %3132 = vmatprep.subr.bf16.mxu0 0
  %3133 = vmatpush2.bf16.msra.mxu0 0
  %3134 = vmatprep.subr.bf16.mxu0 0
  %3135 = vmatpush2.bf16.msra.mxu0 0
  %3136 = vmatprep.subr.bf16.mxu0 0
  %3137 = vmatpush2.bf16.msra.mxu0 0
  %3138 = vmatprep.subr.bf16.mxu0 0
  %3139 = vmatpush2.bf16.msra.mxu0 0
  %3140 = vmatprep.subr.bf16.mxu0 0
  %3141 = vmatpush2.bf16.msra.mxu0 0
  %3142 = vmatprep.subr.bf16.mxu0 0
  %3143 = vmatpush2.bf16.msra.mxu0 0
  %3144 = vmatprep.mubr.bf16.mxu0 0
  %3145 = vmatmul.mubr.bf16.gmra.mxu0 %v3017
  %v3146 = vpop.f32.mrf.mxu0
  %v3147 = vadd.f32 0.0, %v3146
  %v3148 = vpop.f32.mrf.mxu0
  %v3149 = vpop.f32.mrf.mxu0
  %v3150 = vadd.f32 0.0, %v3149
  %v3151 = vpop.f32.mrf.mxu0
  %3152 = vmatprep.mubr.bf16.mxu0 0
  %3153 = vmatmul.mubr.bf16.gmra.mxu0 %v3020
  %v3154 = vpop.f32.mrf.mxu0
  %v3155 = vadd.f32 0.0, %v3154
  %v3156 = vpop.f32.mrf.mxu0
  %v3157 = vpop.f32.mrf.mxu0
  %v3158 = vadd.f32 0.0, %v3157
  %v3159 = vpop.f32.mrf.mxu0
  %3160 = vmatprep.mubr.bf16.mxu0 0
  %3161 = vmatmul.mubr.bf16.gmra.mxu0 %v3023
  %v3162 = vpop.f32.mrf.mxu0
  %v3163 = vadd.f32 0.0, %v3162
  %v3164 = vpop.f32.mrf.mxu0
  %v3165 = vpop.f32.mrf.mxu0
  %v3166 = vadd.f32 0.0, %v3165
  %v3167 = vpop.f32.mrf.mxu0
  %3168 = vmatprep.mubr.bf16.mxu0 0
  %3169 = vmatmul.mubr.bf16.gmra.mxu0 %v3026
  %v3170 = vpop.f32.mrf.mxu0
  %v3171 = vadd.f32 0.0, %v3170
  %v3172 = vpop.f32.mrf.mxu0
  %v3173 = vpop.f32.mrf.mxu0
  %v3174 = vadd.f32 0.0, %v3173
  %v3175 = vpop.f32.mrf.mxu0
  %3176 = vmatprep.mubr.bf16.mxu0 0
  %3177 = vmatmul.mubr.bf16.gmra.mxu0 %v3029
  %v3178 = vpop.f32.mrf.mxu0
  %v3179 = vadd.f32 0.0, %v3178
  %v3180 = vpop.f32.mrf.mxu0
  %v3181 = vpop.f32.mrf.mxu0
  %v3182 = vadd.f32 0.0, %v3181
  %v3183 = vpop.f32.mrf.mxu0
  %3184 = vmatprep.mubr.bf16.mxu0 0
  %3185 = vmatmul.mubr.bf16.gmra.mxu0 %v3032
  %v3186 = vpop.f32.mrf.mxu0
  %v3187 = vadd.f32 0.0, %v3186
  %v3188 = vpop.f32.mrf.mxu0
  %v3189 = vpop.f32.mrf.mxu0
  %v3190 = vadd.f32 0.0, %v3189
  %v3191 = vpop.f32.mrf.mxu0
  %3192 = vmatprep.mubr.bf16.mxu0 0
  %3193 = vmatmul.mubr.bf16.gmra.mxu0 %v3035
  %v3194 = vpop.f32.mrf.mxu0
  %v3195 = vadd.f32 0.0, %v3194
  %v3196 = vpop.f32.mrf.mxu0
  %v3197 = vpop.f32.mrf.mxu0
  %v3198 = vadd.f32 0.0, %v3197
  %v3199 = vpop.f32.mrf.mxu0
  %3200 = vmatprep.mubr.bf16.mxu0 0
  %3201 = vmatmul.mubr.bf16.gmra.mxu0 %v3038
  %v3202 = vpop.f32.mrf.mxu0
  %v3203 = vadd.f32 0.0, %v3202
  %v3204 = vpop.f32.mrf.mxu0
  %v3205 = vpop.f32.mrf.mxu0
  %v3206 = vadd.f32 0.0, %v3205
  %v3207 = vpop.f32.mrf.mxu0
  %3208 = vmatprep.mubr.bf16.mxu0 0
  %3209 = vmatmul.mubr.bf16.gmra.mxu0 %v3041
  %v3210 = vpop.f32.mrf.mxu0
  %v3211 = vadd.f32 0.0, %v3210
  %v3212 = vpop.f32.mrf.mxu0
  %v3213 = vpop.f32.mrf.mxu0
  %v3214 = vadd.f32 0.0, %v3213
  %v3215 = vpop.f32.mrf.mxu0
  %3216 = vmatprep.mubr.bf16.mxu0 0
  %3217 = vmatmul.mubr.bf16.gmra.mxu0 %v3044
  %v3218 = vpop.f32.mrf.mxu0
  %v3219 = vadd.f32 0.0, %v3218
  %v3220 = vpop.f32.mrf.mxu0
  %v3221 = vpop.f32.mrf.mxu0
  %v3222 = vadd.f32 0.0, %v3221
  %v3223 = vpop.f32.mrf.mxu0
  %3224 = vmatprep.mubr.bf16.mxu0 0
  %3225 = vmatmul.mubr.bf16.gmra.mxu0 %v3047
  %v3226 = vpop.f32.mrf.mxu0
  %v3227 = vadd.f32 0.0, %v3226
  %v3228 = vpop.f32.mrf.mxu0
  %v3229 = vpop.f32.mrf.mxu0
  %v3230 = vadd.f32 0.0, %v3229
  %v3231 = vpop.f32.mrf.mxu0
  %3232 = vmatprep.mubr.bf16.mxu0 0
  %3233 = vmatmul.mubr.bf16.gmra.mxu0 %v3050
  %v3234 = vpop.f32.mrf.mxu0
  %v3235 = vadd.f32 0.0, %v3234
  %v3236 = vpop.f32.mrf.mxu0
  %v3237 = vpop.f32.mrf.mxu0
  %v3238 = vadd.f32 0.0, %v3237
  %v3239 = vpop.f32.mrf.mxu0
  %3240 = vmatprep.mubr.bf16.mxu0 0
  %3241 = vmatmul.mubr.bf16.gmra.mxu0 %v3053
  %v3242 = vpop.f32.mrf.mxu0
  %v3243 = vadd.f32 0.0, %v3242
  %v3244 = vpop.f32.mrf.mxu0
  %v3245 = vpop.f32.mrf.mxu0
  %v3246 = vadd.f32 0.0, %v3245
  %v3247 = vpop.f32.mrf.mxu0
  %3248 = vmatprep.mubr.bf16.mxu0 0
  %3249 = vmatmul.mubr.bf16.gmra.mxu0 %v3056
  %v3250 = vpop.f32.mrf.mxu0
  %v3251 = vadd.f32 0.0, %v3250
  %v3252 = vpop.f32.mrf.mxu0
  %v3253 = vpop.f32.mrf.mxu0
  %v3254 = vadd.f32 0.0, %v3253
  %v3255 = vpop.f32.mrf.mxu0
  %3256 = vmatprep.mubr.bf16.mxu0 0
  %3257 = vmatmul.mubr.bf16.gmra.mxu0 %v3059
  %v3258 = vpop.f32.mrf.mxu0
  %v3259 = vadd.f32 0.0, %v3258
  %v3260 = vpop.f32.mrf.mxu0
  %v3261 = vpop.f32.mrf.mxu0
  %v3262 = vadd.f32 0.0, %v3261
  %v3263 = vpop.f32.mrf.mxu0
  %3264 = vmatprep.mubr.bf16.mxu0 0
  %3265 = vmatmul.mubr.bf16.gmra.mxu0 %v3062
  %v3266 = vpop.f32.mrf.mxu0
  %v3267 = vadd.f32 0.0, %v3266
  %v3268 = vpop.f32.mrf.mxu0
  %v3269 = vpop.f32.mrf.mxu0
  %v3270 = vadd.f32 0.0, %v3269
  %v3271 = vpop.f32.mrf.mxu0
  %3272 = vmatprep.mubr.bf16.mxu0 0
  %3273 = vmatmul.mubr.bf16.gmra.mxu0 %v3065
  %v3274 = vpop.f32.mrf.mxu0
  %v3275 = vadd.f32 0.0, %v3274
  %v3276 = vpop.f32.mrf.mxu0
  %v3277 = vpop.f32.mrf.mxu0
  %v3278 = vadd.f32 0.0, %v3277
  %v3279 = vpop.f32.mrf.mxu0
  %3280 = vmatprep.mubr.bf16.mxu0 0
  %3281 = vmatmul.mubr.bf16.gmra.mxu0 %v3068
  %v3282 = vpop.f32.mrf.mxu0
  %v3283 = vadd.f32 0.0, %v3282
  %v3284 = vpop.f32.mrf.mxu0
  %v3285 = vpop.f32.mrf.mxu0
  %v3286 = vadd.f32 0.0, %v3285
  %v3287 = vpop.f32.mrf.mxu0
  %3288 = vmatprep.mubr.bf16.mxu0 0
  %3289 = vmatmul.mubr.bf16.gmra.mxu0 %v3071
  %v3290 = vpop.f32.mrf.mxu0
  %v3291 = vadd.f32 0.0, %v3290
  %v3292 = vpop.f32.mrf.mxu0
  %v3293 = vpop.f32.mrf.mxu0
  %v3294 = vadd.f32 0.0, %v3293
  %v3295 = vpop.f32.mrf.mxu0
  %3296 = vmatprep.mubr.bf16.mxu0 0
  %3297 = vmatmul.mubr.bf16.gmra.mxu0 %v3074
  %v3298 = vpop.f32.mrf.mxu0
  %v3299 = vadd.f32 0.0, %v3298
  %v3300 = vpop.f32.mrf.mxu0
  %v3301 = vpop.f32.mrf.mxu0
  %v3302 = vadd.f32 0.0, %v3301
  %v3303 = vpop.f32.mrf.mxu0
  %3304 = vmatprep.mubr.bf16.mxu0 0
  %3305 = vmatmul.mubr.bf16.gmra.mxu0 %v3077
  %v3306 = vpop.f32.mrf.mxu0
  %v3307 = vadd.f32 0.0, %v3306
  %v3308 = vpop.f32.mrf.mxu0
  %v3309 = vpop.f32.mrf.mxu0
  %v3310 = vadd.f32 0.0, %v3309
  %v3311 = vpop.f32.mrf.mxu0
  %3312 = vmatprep.mubr.bf16.mxu0 0
  %3313 = vmatmul.mubr.bf16.gmra.mxu0 %v3080
  %v3314 = vpop.f32.mrf.mxu0
  %v3315 = vadd.f32 0.0, %v3314
  %v3316 = vpop.f32.mrf.mxu0
  %v3317 = vpop.f32.mrf.mxu0
  %v3318 = vadd.f32 0.0, %v3317
  %v3319 = vpop.f32.mrf.mxu0
  %3320 = vmatprep.mubr.bf16.mxu0 0
  %3321 = vmatmul.mubr.bf16.gmra.mxu0 %v3083
  %v3322 = vpop.f32.mrf.mxu0
  %v3323 = vadd.f32 0.0, %v3322
  %v3324 = vpop.f32.mrf.mxu0
  %v3325 = vpop.f32.mrf.mxu0
  %v3326 = vadd.f32 0.0, %v3325
  %v3327 = vpop.f32.mrf.mxu0
  %3328 = vmatprep.mubr.bf16.mxu0 0
  %3329 = vmatmul.mubr.bf16.gmra.mxu0 %v3086
  %v3330 = vpop.f32.mrf.mxu0
  %v3331 = vadd.f32 0.0, %v3330
  %v3332 = vpop.f32.mrf.mxu0
  %v3333 = vpop.f32.mrf.mxu0
  %v3334 = vadd.f32 0.0, %v3333
  %v3335 = vpop.f32.mrf.mxu0
  %3336 = vmatprep.mubr.bf16.mxu0 0
  %3337 = vmatmul.mubr.bf16.gmra.mxu0 %v3089
  %v3338 = vpop.f32.mrf.mxu0
  %v3339 = vadd.f32 0.0, %v3338
  %v3340 = vpop.f32.mrf.mxu0
  %v3341 = vpop.f32.mrf.mxu0
  %v3342 = vadd.f32 0.0, %v3341
  %v3343 = vpop.f32.mrf.mxu0
  %3344 = vmatprep.mubr.bf16.mxu0 0
  %3345 = vmatmul.mubr.bf16.gmra.mxu0 %v3092
  %v3346 = vpop.f32.mrf.mxu0
  %v3347 = vadd.f32 0.0, %v3346
  %v3348 = vpop.f32.mrf.mxu0
  %v3349 = vpop.f32.mrf.mxu0
  %v3350 = vadd.f32 0.0, %v3349
  %v3351 = vpop.f32.mrf.mxu0
  %3352 = vmatprep.mubr.bf16.mxu0 0
  %3353 = vmatmul.mubr.bf16.gmra.mxu0 %v3095
  %v3354 = vpop.f32.mrf.mxu0
  %v3355 = vadd.f32 0.0, %v3354
  %v3356 = vpop.f32.mrf.mxu0
  %v3357 = vpop.f32.mrf.mxu0
  %v3358 = vadd.f32 0.0, %v3357
  %v3359 = vpop.f32.mrf.mxu0
  %3360 = vmatprep.mubr.bf16.mxu0 0
  %3361 = vmatmul.mubr.bf16.gmra.mxu0 %v3098
  %v3362 = vpop.f32.mrf.mxu0
  %v3363 = vadd.f32 0.0, %v3362
  %v3364 = vpop.f32.mrf.mxu0
  %v3365 = vpop.f32.mrf.mxu0
  %v3366 = vadd.f32 0.0, %v3365
  %v3367 = vpop.f32.mrf.mxu0
  %3368 = vmatprep.mubr.bf16.mxu0 0
  %3369 = vmatmul.mubr.bf16.gmra.mxu0 %v3101
  %v3370 = vpop.f32.mrf.mxu0
  %v3371 = vadd.f32 0.0, %v3370
  %v3372 = vpop.f32.mrf.mxu0
  %v3373 = vpop.f32.mrf.mxu0
  %v3374 = vadd.f32 0.0, %v3373
  %v3375 = vpop.f32.mrf.mxu0
  %3376 = vmatprep.mubr.bf16.mxu0 0
  %3377 = vmatmul.mubr.bf16.gmra.mxu0 %v3104
  %v3378 = vpop.f32.mrf.mxu0
  %v3379 = vadd.f32 0.0, %v3378
  %v3380 = vpop.f32.mrf.mxu0
  %v3381 = vpop.f32.mrf.mxu0
  %v3382 = vadd.f32 0.0, %v3381
  %v3383 = vpop.f32.mrf.mxu0
  %3384 = vmatprep.mubr.bf16.mxu0 0
  %3385 = vmatmul.mubr.bf16.gmra.mxu0 %v3107
  %v3386 = vpop.f32.mrf.mxu0
  %v3387 = vadd.f32 0.0, %v3386
  %v3388 = vpop.f32.mrf.mxu0
  %v3389 = vpop.f32.mrf.mxu0
  %v3390 = vadd.f32 0.0, %v3389
  %v3391 = vpop.f32.mrf.mxu0
  %3392 = vmatprep.mubr.bf16.mxu0 0
  %3393 = vmatmul.mubr.bf16.gmra.mxu0 %v3110
  %v3394 = vpop.f32.mrf.mxu0
  %v3395 = vadd.f32 0.0, %v3394
  %v3396 = vpop.f32.mrf.mxu0
  %v3397 = vpop.f32.mrf.mxu0
  %v3398 = vadd.f32 0.0, %v3397
  %v3399 = vpop.f32.mrf.mxu0
  %3400 = vdwg.mxu0
  %v3401 = vadd.f32 %v3147, %v2585
  %v3402 = vadd.f32 %v3150, %v2588
  %v3403 = vadd.f32 %v3155, %v2593
  %v3404 = vadd.f32 %v3158, %v2596
  %v3405 = vadd.f32 %v3163, %v2601
  %v3406 = vadd.f32 %v3166, %v2604
  %v3407 = vadd.f32 %v3171, %v2609
  %v3408 = vadd.f32 %v3174, %v2612
  %v3409 = vadd.f32 %v3179, %v2617
  %v3410 = vadd.f32 %v3182, %v2620
  %v3411 = vadd.f32 %v3187, %v2625
  %v3412 = vadd.f32 %v3190, %v2628
  %v3413 = vadd.f32 %v3195, %v2633
  %v3414 = vadd.f32 %v3198, %v2636
  %v3415 = vadd.f32 %v3203, %v2641
  %v3416 = vadd.f32 %v3206, %v2644
  %v3417 = vadd.f32 %v3211, %v2649
  %v3418 = vadd.f32 %v3214, %v2652
  %v3419 = vadd.f32 %v3219, %v2657
  %v3420 = vadd.f32 %v3222, %v2660
  %v3421 = vadd.f32 %v3227, %v2665
  %v3422 = vadd.f32 %v3230, %v2668
  %v3423 = vadd.f32 %v3235, %v2673
  %v3424 = vadd.f32 %v3238, %v2676
  %v3425 = vadd.f32 %v3243, %v2681
  %v3426 = vadd.f32 %v3246, %v2684
  %v3427 = vadd.f32 %v3251, %v2689
  %v3428 = vadd.f32 %v3254, %v2692
  %v3429 = vadd.f32 %v3259, %v2697
  %v3430 = vadd.f32 %v3262, %v2700
  %v3431 = vadd.f32 %v3267, %v2705
  %v3432 = vadd.f32 %v3270, %v2708
  %v3433 = vadd.f32 %v3275, %v2713
  %v3434 = vadd.f32 %v3278, %v2716
  %v3435 = vadd.f32 %v3283, %v2721
  %v3436 = vadd.f32 %v3286, %v2724
  %v3437 = vadd.f32 %v3291, %v2729
  %v3438 = vadd.f32 %v3294, %v2732
  %v3439 = vadd.f32 %v3299, %v2737
  %v3440 = vadd.f32 %v3302, %v2740
  %v3441 = vadd.f32 %v3307, %v2745
  %v3442 = vadd.f32 %v3310, %v2748
  %v3443 = vadd.f32 %v3315, %v2753
  %v3444 = vadd.f32 %v3318, %v2756
  %v3445 = vadd.f32 %v3323, %v2761
  %v3446 = vadd.f32 %v3326, %v2764
  %v3447 = vadd.f32 %v3331, %v2769
  %v3448 = vadd.f32 %v3334, %v2772
  %v3449 = vadd.f32 %v3339, %v2777
  %v3450 = vadd.f32 %v3342, %v2780
  %v3451 = vadd.f32 %v3347, %v2785
  %v3452 = vadd.f32 %v3350, %v2788
  %v3453 = vadd.f32 %v3355, %v2793
  %v3454 = vadd.f32 %v3358, %v2796
  %v3455 = vadd.f32 %v3363, %v2801
  %v3456 = vadd.f32 %v3366, %v2804
  %v3457 = vadd.f32 %v3371, %v2809
  %v3458 = vadd.f32 %v3374, %v2812
  %v3459 = vadd.f32 %v3379, %v2817
  %v3460 = vadd.f32 %v3382, %v2820
  %v3461 = vadd.f32 %v3387, %v2825
  %v3462 = vadd.f32 %v3390, %v2828
  %v3463 = vadd.f32 %v3395, %v2833
  %v3464 = vadd.f32 %v3398, %v2836
  %v3465 = vld [vmem:[%s9] sm:$0x7]
  %v3466 = vlaneseq
  %v3467 = vshrl.u32 %v3466, 7
  %v3468 = vsub.s32 0, %v3467
  %v3469 = vrot.slane %v112, %v3468
  %v3470 = vlaneseq
  %v3471 = vshrl.u32 %v3470, 7
  %v3472 = vsub.s32 0, %v3471
  %v3473 = vrot.slane %v113, %v3472
  %v3474 = vlaneseq
  %v3475 = vshrl.u32 %v3474, 7
  %v3476 = vsub.s32 0, %v3475
  %v3477 = vrot.slane %v114, %v3476
  %v3478 = vlaneseq
  %v3479 = vshrl.u32 %v3478, 7
  %v3480 = vsub.s32 0, %v3479
  %v3481 = vrot.slane %v115, %v3480
  %v3482 = vlaneseq
  %v3483 = vshrl.u32 %v3482, 7
  %v3484 = vsub.s32 0, %v3483
  %v3485 = vrot.slane %v116, %v3484
  %v3486 = vlaneseq
  %v3487 = vshrl.u32 %v3486, 7
  %v3488 = vsub.s32 0, %v3487
  %v3489 = vrot.slane %v117, %v3488
  %v3490 = vlaneseq
  %v3491 = vshrl.u32 %v3490, 7
  %v3492 = vsub.s32 0, %v3491
  %v3493 = vrot.slane %v118, %v3492
  %v3494 = vlaneseq
  %v3495 = vshrl.u32 %v3494, 7
  %v3496 = vsub.s32 0, %v3495
  %v3497 = vrot.slane %v119, %v3496
  %v3498 = vlaneseq
  %v3499 = vshrl.u32 %v3498, 7
  %v3500 = vsub.s32 0, %v3499
  %v3501 = vrot.slane %v120, %v3500
  %v3502 = vlaneseq
  %v3503 = vshrl.u32 %v3502, 7
  %v3504 = vsub.s32 0, %v3503
  %v3505 = vrot.slane %v121, %v3504
  %v3506 = vlaneseq
  %v3507 = vshrl.u32 %v3506, 7
  %v3508 = vsub.s32 0, %v3507
  %v3509 = vrot.slane %v122, %v3508
  %v3510 = vlaneseq
  %v3511 = vshrl.u32 %v3510, 7
  %v3512 = vsub.s32 0, %v3511
  %v3513 = vrot.slane %v123, %v3512
  %v3514 = vlaneseq
  %v3515 = vshrl.u32 %v3514, 7
  %v3516 = vsub.s32 0, %v3515
  %v3517 = vrot.slane %v124, %v3516
  %v3518 = vlaneseq
  %v3519 = vshrl.u32 %v3518, 7
  %v3520 = vsub.s32 0, %v3519
  %v3521 = vrot.slane %v125, %v3520
  %v3522 = vlaneseq
  %v3523 = vshrl.u32 %v3522, 7
  %v3524 = vsub.s32 0, %v3523
  %v3525 = vrot.slane %v126, %v3524
  %v3526 = vlaneseq
  %v3527 = vshrl.u32 %v3526, 7
  %v3528 = vsub.s32 0, %v3527
  %v3529 = vrot.slane %v127, %v3528
  %v3530 = vlaneseq
  %v3531 = vshrl.u32 %v3530, 7
  %v3532 = vsub.s32 0, %v3531
  %v3533 = vrot.slane %v128, %v3532
  %v3534 = vlaneseq
  %v3535 = vshrl.u32 %v3534, 7
  %v3536 = vsub.s32 0, %v3535
  %v3537 = vrot.slane %v129, %v3536
  %v3538 = vlaneseq
  %v3539 = vshrl.u32 %v3538, 7
  %v3540 = vsub.s32 0, %v3539
  %v3541 = vrot.slane %v130, %v3540
  %v3542 = vlaneseq
  %v3543 = vshrl.u32 %v3542, 7
  %v3544 = vsub.s32 0, %v3543
  %v3545 = vrot.slane %v131, %v3544
  %v3546 = vlaneseq
  %v3547 = vshrl.u32 %v3546, 7
  %v3548 = vsub.s32 0, %v3547
  %v3549 = vrot.slane %v132, %v3548
  %v3550 = vlaneseq
  %v3551 = vshrl.u32 %v3550, 7
  %v3552 = vsub.s32 0, %v3551
  %v3553 = vrot.slane %v133, %v3552
  %v3554 = vlaneseq
  %v3555 = vshrl.u32 %v3554, 7
  %v3556 = vsub.s32 0, %v3555
  %v3557 = vrot.slane %v134, %v3556
  %v3558 = vlaneseq
  %v3559 = vshrl.u32 %v3558, 7
  %v3560 = vsub.s32 0, %v3559
  %v3561 = vrot.slane %v135, %v3560
  %v3562 = vlaneseq
  %v3563 = vshrl.u32 %v3562, 7
  %v3564 = vsub.s32 0, %v3563
  %v3565 = vrot.slane %v136, %v3564
  %v3566 = vlaneseq
  %v3567 = vshrl.u32 %v3566, 7
  %v3568 = vsub.s32 0, %v3567
  %v3569 = vrot.slane %v137, %v3568
  %v3570 = vlaneseq
  %v3571 = vshrl.u32 %v3570, 7
  %v3572 = vsub.s32 0, %v3571
  %v3573 = vrot.slane %v138, %v3572
  %v3574 = vlaneseq
  %v3575 = vshrl.u32 %v3574, 7
  %v3576 = vsub.s32 0, %v3575
  %v3577 = vrot.slane %v139, %v3576
  %v3578 = vlaneseq
  %v3579 = vshrl.u32 %v3578, 7
  %v3580 = vsub.s32 0, %v3579
  %v3581 = vrot.slane %v140, %v3580
  %v3582 = vlaneseq
  %v3583 = vshrl.u32 %v3582, 7
  %v3584 = vsub.s32 0, %v3583
  %v3585 = vrot.slane %v141, %v3584
  %v3586 = vlaneseq
  %v3587 = vshrl.u32 %v3586, 7
  %v3588 = vsub.s32 0, %v3587
  %v3589 = vrot.slane %v142, %v3588
  %v3590 = vlaneseq
  %v3591 = vshrl.u32 %v3590, 7
  %v3592 = vsub.s32 0, %v3591
  %v3593 = vrot.slane %v143, %v3592
  %v3594 = vlaneseq
  %v3595 = vshrl.u32 %v3594, 7
  %v3596 = vsub.s32 0, %v3595
  %v3597 = vrot.slane %v144, %v3596
  %v3598 = vlaneseq
  %v3599 = vshrl.u32 %v3598, 7
  %v3600 = vsub.s32 0, %v3599
  %v3601 = vrot.slane %v145, %v3600
  %v3602 = vlaneseq
  %v3603 = vshrl.u32 %v3602, 7
  %v3604 = vsub.s32 0, %v3603
  %v3605 = vrot.slane %v146, %v3604
  %v3606 = vlaneseq
  %v3607 = vshrl.u32 %v3606, 7
  %v3608 = vsub.s32 0, %v3607
  %v3609 = vrot.slane %v147, %v3608
  %v3610 = vlaneseq
  %v3611 = vshrl.u32 %v3610, 7
  %v3612 = vsub.s32 0, %v3611
  %v3613 = vrot.slane %v148, %v3612
  %v3614 = vlaneseq
  %v3615 = vshrl.u32 %v3614, 7
  %v3616 = vsub.s32 0, %v3615
  %v3617 = vrot.slane %v149, %v3616
  %v3618 = vlaneseq
  %v3619 = vshrl.u32 %v3618, 7
  %v3620 = vsub.s32 0, %v3619
  %v3621 = vrot.slane %v150, %v3620
  %v3622 = vlaneseq
  %v3623 = vshrl.u32 %v3622, 7
  %v3624 = vsub.s32 0, %v3623
  %v3625 = vrot.slane %v151, %v3624
  %v3626 = vlaneseq
  %v3627 = vshrl.u32 %v3626, 7
  %v3628 = vsub.s32 0, %v3627
  %v3629 = vrot.slane %v152, %v3628
  %v3630 = vlaneseq
  %v3631 = vshrl.u32 %v3630, 7
  %v3632 = vsub.s32 0, %v3631
  %v3633 = vrot.slane %v153, %v3632
  %v3634 = vlaneseq
  %v3635 = vshrl.u32 %v3634, 7
  %v3636 = vsub.s32 0, %v3635
  %v3637 = vrot.slane %v154, %v3636
  %v3638 = vlaneseq
  %v3639 = vshrl.u32 %v3638, 7
  %v3640 = vsub.s32 0, %v3639
  %v3641 = vrot.slane %v155, %v3640
  %v3642 = vlaneseq
  %v3643 = vshrl.u32 %v3642, 7
  %v3644 = vsub.s32 0, %v3643
  %v3645 = vrot.slane %v156, %v3644
  %v3646 = vlaneseq
  %v3647 = vshrl.u32 %v3646, 7
  %v3648 = vsub.s32 0, %v3647
  %v3649 = vrot.slane %v157, %v3648
  %v3650 = vlaneseq
  %v3651 = vshrl.u32 %v3650, 7
  %v3652 = vsub.s32 0, %v3651
  %v3653 = vrot.slane %v158, %v3652
  %v3654 = vlaneseq
  %v3655 = vshrl.u32 %v3654, 7
  %v3656 = vsub.s32 0, %v3655
  %v3657 = vrot.slane %v159, %v3656
  %v3658 = vlaneseq
  %v3659 = vshrl.u32 %v3658, 7
  %v3660 = vsub.s32 0, %v3659
  %v3661 = vrot.slane %v160, %v3660
  %v3662 = vlaneseq
  %v3663 = vshrl.u32 %v3662, 7
  %v3664 = vsub.s32 0, %v3663
  %v3665 = vrot.slane %v161, %v3664
  %v3666 = vlaneseq
  %v3667 = vshrl.u32 %v3666, 7
  %v3668 = vsub.s32 0, %v3667
  %v3669 = vrot.slane %v162, %v3668
  %v3670 = vlaneseq
  %v3671 = vshrl.u32 %v3670, 7
  %v3672 = vsub.s32 0, %v3671
  %v3673 = vrot.slane %v163, %v3672
  %v3674 = vlaneseq
  %v3675 = vshrl.u32 %v3674, 7
  %v3676 = vsub.s32 0, %v3675
  %v3677 = vrot.slane %v164, %v3676
  %v3678 = vlaneseq
  %v3679 = vshrl.u32 %v3678, 7
  %v3680 = vsub.s32 0, %v3679
  %v3681 = vrot.slane %v165, %v3680
  %v3682 = vlaneseq
  %v3683 = vshrl.u32 %v3682, 7
  %v3684 = vsub.s32 0, %v3683
  %v3685 = vrot.slane %v166, %v3684
  %v3686 = vlaneseq
  %v3687 = vshrl.u32 %v3686, 7
  %v3688 = vsub.s32 0, %v3687
  %v3689 = vrot.slane %v167, %v3688
  %v3690 = vlaneseq
  %v3691 = vshrl.u32 %v3690, 7
  %v3692 = vsub.s32 0, %v3691
  %v3693 = vrot.slane %v168, %v3692
  %v3694 = vlaneseq
  %v3695 = vshrl.u32 %v3694, 7
  %v3696 = vsub.s32 0, %v3695
  %v3697 = vrot.slane %v169, %v3696
  %v3698 = vlaneseq
  %v3699 = vshrl.u32 %v3698, 7
  %v3700 = vsub.s32 0, %v3699
  %v3701 = vrot.slane %v170, %v3700
  %v3702 = vlaneseq
  %v3703 = vshrl.u32 %v3702, 7
  %v3704 = vsub.s32 0, %v3703
  %v3705 = vrot.slane %v171, %v3704
  %v3706 = vlaneseq
  %v3707 = vshrl.u32 %v3706, 7
  %v3708 = vsub.s32 0, %v3707
  %v3709 = vrot.slane %v172, %v3708
  %v3710 = vlaneseq
  %v3711 = vshrl.u32 %v3710, 7
  %v3712 = vsub.s32 0, %v3711
  %v3713 = vrot.slane %v173, %v3712
  %v3714 = vlaneseq
  %v3715 = vshrl.u32 %v3714, 7
  %v3716 = vsub.s32 0, %v3715
  %v3717 = vrot.slane %v174, %v3716
  %v3718 = vlaneseq
  %v3719 = vshrl.u32 %v3718, 7
  %v3720 = vsub.s32 0, %v3719
  %v3721 = vrot.slane %v175, %v3720
  %v3722 = vsub.f32 %v112, %v3469
  %v3723 = vsub.f32 %v113, %v3473
  %v3724 = vsub.f32 %v114, %v3477
  %v3725 = vsub.f32 %v115, %v3481
  %v3726 = vsub.f32 %v116, %v3485
  %v3727 = vsub.f32 %v117, %v3489
  %v3728 = vsub.f32 %v118, %v3493
  %v3729 = vsub.f32 %v119, %v3497
  %v3730 = vsub.f32 %v120, %v3501
  %v3731 = vsub.f32 %v121, %v3505
  %v3732 = vsub.f32 %v122, %v3509
  %v3733 = vsub.f32 %v123, %v3513
  %v3734 = vsub.f32 %v124, %v3517
  %v3735 = vsub.f32 %v125, %v3521
  %v3736 = vsub.f32 %v126, %v3525
  %v3737 = vsub.f32 %v127, %v3529
  %v3738 = vsub.f32 %v128, %v3533
  %v3739 = vsub.f32 %v129, %v3537
  %v3740 = vsub.f32 %v130, %v3541
  %v3741 = vsub.f32 %v131, %v3545
  %v3742 = vsub.f32 %v132, %v3549
  %v3743 = vsub.f32 %v133, %v3553
  %v3744 = vsub.f32 %v134, %v3557
  %v3745 = vsub.f32 %v135, %v3561
  %v3746 = vsub.f32 %v136, %v3565
  %v3747 = vsub.f32 %v137, %v3569
  %v3748 = vsub.f32 %v138, %v3573
  %v3749 = vsub.f32 %v139, %v3577
  %v3750 = vsub.f32 %v140, %v3581
  %v3751 = vsub.f32 %v141, %v3585
  %v3752 = vsub.f32 %v142, %v3589
  %v3753 = vsub.f32 %v143, %v3593
  %v3754 = vsub.f32 %v144, %v3597
  %v3755 = vsub.f32 %v145, %v3601
  %v3756 = vsub.f32 %v146, %v3605
  %v3757 = vsub.f32 %v147, %v3609
  %v3758 = vsub.f32 %v148, %v3613
  %v3759 = vsub.f32 %v149, %v3617
  %v3760 = vsub.f32 %v150, %v3621
  %v3761 = vsub.f32 %v151, %v3625
  %v3762 = vsub.f32 %v152, %v3629
  %v3763 = vsub.f32 %v153, %v3633
  %v3764 = vsub.f32 %v154, %v3637
  %v3765 = vsub.f32 %v155, %v3641
  %v3766 = vsub.f32 %v156, %v3645
  %v3767 = vsub.f32 %v157, %v3649
  %v3768 = vsub.f32 %v158, %v3653
  %v3769 = vsub.f32 %v159, %v3657
  %v3770 = vsub.f32 %v160, %v3661
  %v3771 = vsub.f32 %v161, %v3665
  %v3772 = vsub.f32 %v162, %v3669
  %v3773 = vsub.f32 %v163, %v3673
  %v3774 = vsub.f32 %v164, %v3677
  %v3775 = vsub.f32 %v165, %v3681
  %v3776 = vsub.f32 %v166, %v3685
  %v3777 = vsub.f32 %v167, %v3689
  %v3778 = vsub.f32 %v168, %v3693
  %v3779 = vsub.f32 %v169, %v3697
  %v3780 = vsub.f32 %v170, %v3701
  %v3781 = vsub.f32 %v171, %v3705
  %v3782 = vsub.f32 %v172, %v3709
  %v3783 = vsub.f32 %v173, %v3713
  %v3784 = vsub.f32 %v174, %v3717
  %v3785 = vsub.f32 %v175, %v3721
  %3787 = vset.pattern.permute.xlu0 0
  %3788 = vperm.xlu0 %3787, %v3722
  %v3789 = vpop.permute.xlu0 %3788
  %3792 = vset.pattern.permute.xlu0 0
  %3793 = vperm.xlu0 %3792, %v3723
  %v3794 = vpop.permute.xlu0 %3793
  %3797 = vset.pattern.permute.xlu0 0
  %3798 = vperm.xlu0 %3797, %v3724
  %v3799 = vpop.permute.xlu0 %3798
  %3802 = vset.pattern.permute.xlu0 0
  %3803 = vperm.xlu0 %3802, %v3725
  %v3804 = vpop.permute.xlu0 %3803
  %3807 = vset.pattern.permute.xlu0 0
  %3808 = vperm.xlu0 %3807, %v3726
  %v3809 = vpop.permute.xlu0 %3808
  %3812 = vset.pattern.permute.xlu0 0
  %3813 = vperm.xlu0 %3812, %v3727
  %v3814 = vpop.permute.xlu0 %3813
  %3817 = vset.pattern.permute.xlu0 0
  %3818 = vperm.xlu0 %3817, %v3728
  %v3819 = vpop.permute.xlu0 %3818
  %3822 = vset.pattern.permute.xlu0 0
  %3823 = vperm.xlu0 %3822, %v3729
  %v3824 = vpop.permute.xlu0 %3823
  %3827 = vset.pattern.permute.xlu0 0
  %3828 = vperm.xlu0 %3827, %v3730
  %v3829 = vpop.permute.xlu0 %3828
  %3832 = vset.pattern.permute.xlu0 0
  %3833 = vperm.xlu0 %3832, %v3731
  %v3834 = vpop.permute.xlu0 %3833
  %3837 = vset.pattern.permute.xlu0 0
  %3838 = vperm.xlu0 %3837, %v3732
  %v3839 = vpop.permute.xlu0 %3838
  %3842 = vset.pattern.permute.xlu0 0
  %3843 = vperm.xlu0 %3842, %v3733
  %v3844 = vpop.permute.xlu0 %3843
  %3847 = vset.pattern.permute.xlu0 0
  %3848 = vperm.xlu0 %3847, %v3734
  %v3849 = vpop.permute.xlu0 %3848
  %3852 = vset.pattern.permute.xlu0 0
  %3853 = vperm.xlu0 %3852, %v3735
  %v3854 = vpop.permute.xlu0 %3853
  %3857 = vset.pattern.permute.xlu0 0
  %3858 = vperm.xlu0 %3857, %v3736
  %v3859 = vpop.permute.xlu0 %3858
  %3862 = vset.pattern.permute.xlu0 0
  %3863 = vperm.xlu0 %3862, %v3737
  %v3864 = vpop.permute.xlu0 %3863
  %3867 = vset.pattern.permute.xlu0 0
  %3868 = vperm.xlu0 %3867, %v3738
  %v3869 = vpop.permute.xlu0 %3868
  %3872 = vset.pattern.permute.xlu0 0
  %3873 = vperm.xlu0 %3872, %v3739
  %v3874 = vpop.permute.xlu0 %3873
  %3877 = vset.pattern.permute.xlu0 0
  %3878 = vperm.xlu0 %3877, %v3740
  %v3879 = vpop.permute.xlu0 %3878
  %3882 = vset.pattern.permute.xlu0 0
  %3883 = vperm.xlu0 %3882, %v3741
  %v3884 = vpop.permute.xlu0 %3883
  %3887 = vset.pattern.permute.xlu0 0
  %3888 = vperm.xlu0 %3887, %v3742
  %v3889 = vpop.permute.xlu0 %3888
  %3892 = vset.pattern.permute.xlu0 0
  %3893 = vperm.xlu0 %3892, %v3743
  %v3894 = vpop.permute.xlu0 %3893
  %3897 = vset.pattern.permute.xlu0 0
  %3898 = vperm.xlu0 %3897, %v3744
  %v3899 = vpop.permute.xlu0 %3898
  %3902 = vset.pattern.permute.xlu0 0
  %3903 = vperm.xlu0 %3902, %v3745
  %v3904 = vpop.permute.xlu0 %3903
  %3907 = vset.pattern.permute.xlu0 0
  %3908 = vperm.xlu0 %3907, %v3746
  %v3909 = vpop.permute.xlu0 %3908
  %3912 = vset.pattern.permute.xlu0 0
  %3913 = vperm.xlu0 %3912, %v3747
  %v3914 = vpop.permute.xlu0 %3913
  %3917 = vset.pattern.permute.xlu0 0
  %3918 = vperm.xlu0 %3917, %v3748
  %v3919 = vpop.permute.xlu0 %3918
  %3922 = vset.pattern.permute.xlu0 0
  %3923 = vperm.xlu0 %3922, %v3749
  %v3924 = vpop.permute.xlu0 %3923
  %3927 = vset.pattern.permute.xlu0 0
  %3928 = vperm.xlu0 %3927, %v3750
  %v3929 = vpop.permute.xlu0 %3928
  %3932 = vset.pattern.permute.xlu0 0
  %3933 = vperm.xlu0 %3932, %v3751
  %v3934 = vpop.permute.xlu0 %3933
  %3937 = vset.pattern.permute.xlu0 0
  %3938 = vperm.xlu0 %3937, %v3752
  %v3939 = vpop.permute.xlu0 %3938
  %3942 = vset.pattern.permute.xlu0 0
  %3943 = vperm.xlu0 %3942, %v3753
  %v3944 = vpop.permute.xlu0 %3943
  %3947 = vset.pattern.permute.xlu0 0
  %3948 = vperm.xlu0 %3947, %v3754
  %v3949 = vpop.permute.xlu0 %3948
  %3952 = vset.pattern.permute.xlu0 0
  %3953 = vperm.xlu0 %3952, %v3755
  %v3954 = vpop.permute.xlu0 %3953
  %3957 = vset.pattern.permute.xlu0 0
  %3958 = vperm.xlu0 %3957, %v3756
  %v3959 = vpop.permute.xlu0 %3958
  %3962 = vset.pattern.permute.xlu0 0
  %3963 = vperm.xlu0 %3962, %v3757
  %v3964 = vpop.permute.xlu0 %3963
  %3967 = vset.pattern.permute.xlu0 0
  %3968 = vperm.xlu0 %3967, %v3758
  %v3969 = vpop.permute.xlu0 %3968
  %3972 = vset.pattern.permute.xlu0 0
  %3973 = vperm.xlu0 %3972, %v3759
  %v3974 = vpop.permute.xlu0 %3973
  %3977 = vset.pattern.permute.xlu0 0
  %3978 = vperm.xlu0 %3977, %v3760
  %v3979 = vpop.permute.xlu0 %3978
  %3982 = vset.pattern.permute.xlu0 0
  %3983 = vperm.xlu0 %3982, %v3761
  %v3984 = vpop.permute.xlu0 %3983
  %3987 = vset.pattern.permute.xlu0 0
  %3988 = vperm.xlu0 %3987, %v3762
  %v3989 = vpop.permute.xlu0 %3988
  %3992 = vset.pattern.permute.xlu0 0
  %3993 = vperm.xlu0 %3992, %v3763
  %v3994 = vpop.permute.xlu0 %3993
  %3997 = vset.pattern.permute.xlu0 0
  %3998 = vperm.xlu0 %3997, %v3764
  %v3999 = vpop.permute.xlu0 %3998
  %4002 = vset.pattern.permute.xlu0 0
  %4003 = vperm.xlu0 %4002, %v3765
  %v4004 = vpop.permute.xlu0 %4003
  %4007 = vset.pattern.permute.xlu0 0
  %4008 = vperm.xlu0 %4007, %v3766
  %v4009 = vpop.permute.xlu0 %4008
  %4012 = vset.pattern.permute.xlu0 0
  %4013 = vperm.xlu0 %4012, %v3767
  %v4014 = vpop.permute.xlu0 %4013
  %4017 = vset.pattern.permute.xlu0 0
  %4018 = vperm.xlu0 %4017, %v3768
  %v4019 = vpop.permute.xlu0 %4018
  %4022 = vset.pattern.permute.xlu0 0
  %4023 = vperm.xlu0 %4022, %v3769
  %v4024 = vpop.permute.xlu0 %4023
  %4027 = vset.pattern.permute.xlu0 0
  %4028 = vperm.xlu0 %4027, %v3770
  %v4029 = vpop.permute.xlu0 %4028
  %4032 = vset.pattern.permute.xlu0 0
  %4033 = vperm.xlu0 %4032, %v3771
  %v4034 = vpop.permute.xlu0 %4033
  %4037 = vset.pattern.permute.xlu0 0
  %4038 = vperm.xlu0 %4037, %v3772
  %v4039 = vpop.permute.xlu0 %4038
  %4042 = vset.pattern.permute.xlu0 0
  %4043 = vperm.xlu0 %4042, %v3773
  %v4044 = vpop.permute.xlu0 %4043
  %4047 = vset.pattern.permute.xlu0 0
  %4048 = vperm.xlu0 %4047, %v3774
  %v4049 = vpop.permute.xlu0 %4048
  %4052 = vset.pattern.permute.xlu0 0
  %4053 = vperm.xlu0 %4052, %v3775
  %v4054 = vpop.permute.xlu0 %4053
  %4057 = vset.pattern.permute.xlu0 0
  %4058 = vperm.xlu0 %4057, %v3776
  %v4059 = vpop.permute.xlu0 %4058
  %4062 = vset.pattern.permute.xlu0 0
  %4063 = vperm.xlu0 %4062, %v3777
  %v4064 = vpop.permute.xlu0 %4063
  %4067 = vset.pattern.permute.xlu0 0
  %4068 = vperm.xlu0 %4067, %v3778
  %v4069 = vpop.permute.xlu0 %4068
  %4072 = vset.pattern.permute.xlu0 0
  %4073 = vperm.xlu0 %4072, %v3779
  %v4074 = vpop.permute.xlu0 %4073
  %4077 = vset.pattern.permute.xlu0 0
  %4078 = vperm.xlu0 %4077, %v3780
  %v4079 = vpop.permute.xlu0 %4078
  %4082 = vset.pattern.permute.xlu0 0
  %4083 = vperm.xlu0 %4082, %v3781
  %v4084 = vpop.permute.xlu0 %4083
  %4087 = vset.pattern.permute.xlu0 0
  %4088 = vperm.xlu0 %4087, %v3782
  %v4089 = vpop.permute.xlu0 %4088
  %4092 = vset.pattern.permute.xlu0 0
  %4093 = vperm.xlu0 %4092, %v3783
  %v4094 = vpop.permute.xlu0 %4093
  %4097 = vset.pattern.permute.xlu0 0
  %4098 = vperm.xlu0 %4097, %v3784
  %v4099 = vpop.permute.xlu0 %4098
  %4102 = vset.pattern.permute.xlu0 0
  %4103 = vperm.xlu0 %4102, %v3785
  %v4104 = vpop.permute.xlu0 %4103
  %v4106 = vlaneseq
  %v4107 = vshrl.u32 %v4106, 7
  %v4108 = vsub.s32 0, %v4107
  %v4109 = vrot.slane %v3465, %v4108
  %v4110 = vmul.f32 %v3789, %v4109
  %v4111 = vmul.f32 %v3794, %v4109
  %v4112 = vmul.f32 %v3799, %v4109
  %v4113 = vmul.f32 %v3804, %v4109
  %v4114 = vmul.f32 %v3809, %v4109
  %v4115 = vmul.f32 %v3814, %v4109
  %v4116 = vmul.f32 %v3819, %v4109
  %v4117 = vmul.f32 %v3824, %v4109
  %v4118 = vmul.f32 %v3829, %v4109
  %v4119 = vmul.f32 %v3834, %v4109
  %v4120 = vmul.f32 %v3839, %v4109
  %v4121 = vmul.f32 %v3844, %v4109
  %v4122 = vmul.f32 %v3849, %v4109
  %v4123 = vmul.f32 %v3854, %v4109
  %v4124 = vmul.f32 %v3859, %v4109
  %v4125 = vmul.f32 %v3864, %v4109
  %v4126 = vmul.f32 %v3869, %v4109
  %v4127 = vmul.f32 %v3874, %v4109
  %v4128 = vmul.f32 %v3879, %v4109
  %v4129 = vmul.f32 %v3884, %v4109
  %v4130 = vmul.f32 %v3889, %v4109
  %v4131 = vmul.f32 %v3894, %v4109
  %v4132 = vmul.f32 %v3899, %v4109
  %v4133 = vmul.f32 %v3904, %v4109
  %v4134 = vmul.f32 %v3909, %v4109
  %v4135 = vmul.f32 %v3914, %v4109
  %v4136 = vmul.f32 %v3919, %v4109
  %v4137 = vmul.f32 %v3924, %v4109
  %v4138 = vmul.f32 %v3929, %v4109
  %v4139 = vmul.f32 %v3934, %v4109
  %v4140 = vmul.f32 %v3939, %v4109
  %v4141 = vmul.f32 %v3944, %v4109
  %v4142 = vmul.f32 %v3949, %v4109
  %v4143 = vmul.f32 %v3954, %v4109
  %v4144 = vmul.f32 %v3959, %v4109
  %v4145 = vmul.f32 %v3964, %v4109
  %v4146 = vmul.f32 %v3969, %v4109
  %v4147 = vmul.f32 %v3974, %v4109
  %v4148 = vmul.f32 %v3979, %v4109
  %v4149 = vmul.f32 %v3984, %v4109
  %v4150 = vmul.f32 %v3989, %v4109
  %v4151 = vmul.f32 %v3994, %v4109
  %v4152 = vmul.f32 %v3999, %v4109
  %v4153 = vmul.f32 %v4004, %v4109
  %v4154 = vmul.f32 %v4009, %v4109
  %v4155 = vmul.f32 %v4014, %v4109
  %v4156 = vmul.f32 %v4019, %v4109
  %v4157 = vmul.f32 %v4024, %v4109
  %v4158 = vmul.f32 %v4029, %v4109
  %v4159 = vmul.f32 %v4034, %v4109
  %v4160 = vmul.f32 %v4039, %v4109
  %v4161 = vmul.f32 %v4044, %v4109
  %v4162 = vmul.f32 %v4049, %v4109
  %v4163 = vmul.f32 %v4054, %v4109
  %v4164 = vmul.f32 %v4059, %v4109
  %v4165 = vmul.f32 %v4064, %v4109
  %v4166 = vmul.f32 %v4069, %v4109
  %v4167 = vmul.f32 %v4074, %v4109
  %v4168 = vmul.f32 %v4079, %v4109
  %v4169 = vmul.f32 %v4084, %v4109
  %v4170 = vmul.f32 %v4089, %v4109
  %v4171 = vmul.f32 %v4094, %v4109
  %v4172 = vmul.f32 %v4099, %v4109
  %v4173 = vmul.f32 %v4104, %v4109
  %4174 = vset.pattern.permute.xlu0 1
  %4175 = vperm.xlu0 %4174, %v3722
  %v4176 = vpop.permute.xlu0 %4175
  %4178 = vset.pattern.permute.xlu0 1
  %4179 = vperm.xlu0 %4178, %v3723
  %v4180 = vpop.permute.xlu0 %4179
  %4182 = vset.pattern.permute.xlu0 1
  %4183 = vperm.xlu0 %4182, %v3724
  %v4184 = vpop.permute.xlu0 %4183
  %4186 = vset.pattern.permute.xlu0 1
  %4187 = vperm.xlu0 %4186, %v3725
  %v4188 = vpop.permute.xlu0 %4187
  %4190 = vset.pattern.permute.xlu0 1
  %4191 = vperm.xlu0 %4190, %v3726
  %v4192 = vpop.permute.xlu0 %4191
  %4194 = vset.pattern.permute.xlu0 1
  %4195 = vperm.xlu0 %4194, %v3727
  %v4196 = vpop.permute.xlu0 %4195
  %4198 = vset.pattern.permute.xlu0 1
  %4199 = vperm.xlu0 %4198, %v3728
  %v4200 = vpop.permute.xlu0 %4199
  %4202 = vset.pattern.permute.xlu0 1
  %4203 = vperm.xlu0 %4202, %v3729
  %v4204 = vpop.permute.xlu0 %4203
  %4206 = vset.pattern.permute.xlu0 1
  %4207 = vperm.xlu0 %4206, %v3730
  %v4208 = vpop.permute.xlu0 %4207
  %4210 = vset.pattern.permute.xlu0 1
  %4211 = vperm.xlu0 %4210, %v3731
  %v4212 = vpop.permute.xlu0 %4211
  %4214 = vset.pattern.permute.xlu0 1
  %4215 = vperm.xlu0 %4214, %v3732
  %v4216 = vpop.permute.xlu0 %4215
  %4218 = vset.pattern.permute.xlu0 1
  %4219 = vperm.xlu0 %4218, %v3733
  %v4220 = vpop.permute.xlu0 %4219
  %4222 = vset.pattern.permute.xlu0 1
  %4223 = vperm.xlu0 %4222, %v3734
  %v4224 = vpop.permute.xlu0 %4223
  %4226 = vset.pattern.permute.xlu0 1
  %4227 = vperm.xlu0 %4226, %v3735
  %v4228 = vpop.permute.xlu0 %4227
  %4230 = vset.pattern.permute.xlu0 1
  %4231 = vperm.xlu0 %4230, %v3736
  %v4232 = vpop.permute.xlu0 %4231
  %4234 = vset.pattern.permute.xlu0 1
  %4235 = vperm.xlu0 %4234, %v3737
  %v4236 = vpop.permute.xlu0 %4235
  %4238 = vset.pattern.permute.xlu0 1
  %4239 = vperm.xlu0 %4238, %v3738
  %v4240 = vpop.permute.xlu0 %4239
  %4242 = vset.pattern.permute.xlu0 1
  %4243 = vperm.xlu0 %4242, %v3739
  %v4244 = vpop.permute.xlu0 %4243
  %4246 = vset.pattern.permute.xlu0 1
  %4247 = vperm.xlu0 %4246, %v3740
  %v4248 = vpop.permute.xlu0 %4247
  %4250 = vset.pattern.permute.xlu0 1
  %4251 = vperm.xlu0 %4250, %v3741
  %v4252 = vpop.permute.xlu0 %4251
  %4254 = vset.pattern.permute.xlu0 1
  %4255 = vperm.xlu0 %4254, %v3742
  %v4256 = vpop.permute.xlu0 %4255
  %4258 = vset.pattern.permute.xlu0 1
  %4259 = vperm.xlu0 %4258, %v3743
  %v4260 = vpop.permute.xlu0 %4259
  %4262 = vset.pattern.permute.xlu0 1
  %4263 = vperm.xlu0 %4262, %v3744
  %v4264 = vpop.permute.xlu0 %4263
  %4266 = vset.pattern.permute.xlu0 1
  %4267 = vperm.xlu0 %4266, %v3745
  %v4268 = vpop.permute.xlu0 %4267
  %4270 = vset.pattern.permute.xlu0 1
  %4271 = vperm.xlu0 %4270, %v3746
  %v4272 = vpop.permute.xlu0 %4271
  %4274 = vset.pattern.permute.xlu0 1
  %4275 = vperm.xlu0 %4274, %v3747
  %v4276 = vpop.permute.xlu0 %4275
  %4278 = vset.pattern.permute.xlu0 1
  %4279 = vperm.xlu0 %4278, %v3748
  %v4280 = vpop.permute.xlu0 %4279
  %4282 = vset.pattern.permute.xlu0 1
  %4283 = vperm.xlu0 %4282, %v3749
  %v4284 = vpop.permute.xlu0 %4283
  %4286 = vset.pattern.permute.xlu0 1
  %4287 = vperm.xlu0 %4286, %v3750
  %v4288 = vpop.permute.xlu0 %4287
  %4290 = vset.pattern.permute.xlu0 1
  %4291 = vperm.xlu0 %4290, %v3751
  %v4292 = vpop.permute.xlu0 %4291
  %4294 = vset.pattern.permute.xlu0 1
  %4295 = vperm.xlu0 %4294, %v3752
  %v4296 = vpop.permute.xlu0 %4295
  %4298 = vset.pattern.permute.xlu0 1
  %4299 = vperm.xlu0 %4298, %v3753
  %v4300 = vpop.permute.xlu0 %4299
  %4302 = vset.pattern.permute.xlu0 1
  %4303 = vperm.xlu0 %4302, %v3754
  %v4304 = vpop.permute.xlu0 %4303
  %4306 = vset.pattern.permute.xlu0 1
  %4307 = vperm.xlu0 %4306, %v3755
  %v4308 = vpop.permute.xlu0 %4307
  %4310 = vset.pattern.permute.xlu0 1
  %4311 = vperm.xlu0 %4310, %v3756
  %v4312 = vpop.permute.xlu0 %4311
  %4314 = vset.pattern.permute.xlu0 1
  %4315 = vperm.xlu0 %4314, %v3757
  %v4316 = vpop.permute.xlu0 %4315
  %4318 = vset.pattern.permute.xlu0 1
  %4319 = vperm.xlu0 %4318, %v3758
  %v4320 = vpop.permute.xlu0 %4319
  %4322 = vset.pattern.permute.xlu0 1
  %4323 = vperm.xlu0 %4322, %v3759
  %v4324 = vpop.permute.xlu0 %4323
  %4326 = vset.pattern.permute.xlu0 1
  %4327 = vperm.xlu0 %4326, %v3760
  %v4328 = vpop.permute.xlu0 %4327
  %4330 = vset.pattern.permute.xlu0 1
  %4331 = vperm.xlu0 %4330, %v3761
  %v4332 = vpop.permute.xlu0 %4331
  %4334 = vset.pattern.permute.xlu0 1
  %4335 = vperm.xlu0 %4334, %v3762
  %v4336 = vpop.permute.xlu0 %4335
  %4338 = vset.pattern.permute.xlu0 1
  %4339 = vperm.xlu0 %4338, %v3763
  %v4340 = vpop.permute.xlu0 %4339
  %4342 = vset.pattern.permute.xlu0 1
  %4343 = vperm.xlu0 %4342, %v3764
  %v4344 = vpop.permute.xlu0 %4343
  %4346 = vset.pattern.permute.xlu0 1
  %4347 = vperm.xlu0 %4346, %v3765
  %v4348 = vpop.permute.xlu0 %4347
  %4350 = vset.pattern.permute.xlu0 1
  %4351 = vperm.xlu0 %4350, %v3766
  %v4352 = vpop.permute.xlu0 %4351
  %4354 = vset.pattern.permute.xlu0 1
  %4355 = vperm.xlu0 %4354, %v3767
  %v4356 = vpop.permute.xlu0 %4355
  %4358 = vset.pattern.permute.xlu0 1
  %4359 = vperm.xlu0 %4358, %v3768
  %v4360 = vpop.permute.xlu0 %4359
  %4362 = vset.pattern.permute.xlu0 1
  %4363 = vperm.xlu0 %4362, %v3769
  %v4364 = vpop.permute.xlu0 %4363
  %4366 = vset.pattern.permute.xlu0 1
  %4367 = vperm.xlu0 %4366, %v3770
  %v4368 = vpop.permute.xlu0 %4367
  %4370 = vset.pattern.permute.xlu0 1
  %4371 = vperm.xlu0 %4370, %v3771
  %v4372 = vpop.permute.xlu0 %4371
  %4374 = vset.pattern.permute.xlu0 1
  %4375 = vperm.xlu0 %4374, %v3772
  %v4376 = vpop.permute.xlu0 %4375
  %4378 = vset.pattern.permute.xlu0 1
  %4379 = vperm.xlu0 %4378, %v3773
  %v4380 = vpop.permute.xlu0 %4379
  %4382 = vset.pattern.permute.xlu0 1
  %4383 = vperm.xlu0 %4382, %v3774
  %v4384 = vpop.permute.xlu0 %4383
  %4386 = vset.pattern.permute.xlu0 1
  %4387 = vperm.xlu0 %4386, %v3775
  %v4388 = vpop.permute.xlu0 %4387
  %4390 = vset.pattern.permute.xlu0 1
  %4391 = vperm.xlu0 %4390, %v3776
  %v4392 = vpop.permute.xlu0 %4391
  %4394 = vset.pattern.permute.xlu0 1
  %4395 = vperm.xlu0 %4394, %v3777
  %v4396 = vpop.permute.xlu0 %4395
  %4398 = vset.pattern.permute.xlu0 1
  %4399 = vperm.xlu0 %4398, %v3778
  %v4400 = vpop.permute.xlu0 %4399
  %4402 = vset.pattern.permute.xlu0 1
  %4403 = vperm.xlu0 %4402, %v3779
  %v4404 = vpop.permute.xlu0 %4403
  %4406 = vset.pattern.permute.xlu0 1
  %4407 = vperm.xlu0 %4406, %v3780
  %v4408 = vpop.permute.xlu0 %4407
  %4410 = vset.pattern.permute.xlu0 1
  %4411 = vperm.xlu0 %4410, %v3781
  %v4412 = vpop.permute.xlu0 %4411
  %4414 = vset.pattern.permute.xlu0 1
  %4415 = vperm.xlu0 %4414, %v3782
  %v4416 = vpop.permute.xlu0 %4415
  %4418 = vset.pattern.permute.xlu0 1
  %4419 = vperm.xlu0 %4418, %v3783
  %v4420 = vpop.permute.xlu0 %4419
  %4422 = vset.pattern.permute.xlu0 1
  %4423 = vperm.xlu0 %4422, %v3784
  %v4424 = vpop.permute.xlu0 %4423
  %4426 = vset.pattern.permute.xlu0 1
  %4427 = vperm.xlu0 %4426, %v3785
  %v4428 = vpop.permute.xlu0 %4427
  %v4430 = vlaneseq
  %v4431 = vshrl.u32 %v4430, 7
  %v4432 = vsub.s32 1, %v4431
  %v4433 = vrot.slane %v3465, %v4432
  %v4434 = vmul.f32 %v4176, %v4433
  %v4435 = vmul.f32 %v4180, %v4433
  %v4436 = vmul.f32 %v4184, %v4433
  %v4437 = vmul.f32 %v4188, %v4433
  %v4438 = vmul.f32 %v4192, %v4433
  %v4439 = vmul.f32 %v4196, %v4433
  %v4440 = vmul.f32 %v4200, %v4433
  %v4441 = vmul.f32 %v4204, %v4433
  %v4442 = vmul.f32 %v4208, %v4433
  %v4443 = vmul.f32 %v4212, %v4433
  %v4444 = vmul.f32 %v4216, %v4433
  %v4445 = vmul.f32 %v4220, %v4433
  %v4446 = vmul.f32 %v4224, %v4433
  %v4447 = vmul.f32 %v4228, %v4433
  %v4448 = vmul.f32 %v4232, %v4433
  %v4449 = vmul.f32 %v4236, %v4433
  %v4450 = vmul.f32 %v4240, %v4433
  %v4451 = vmul.f32 %v4244, %v4433
  %v4452 = vmul.f32 %v4248, %v4433
  %v4453 = vmul.f32 %v4252, %v4433
  %v4454 = vmul.f32 %v4256, %v4433
  %v4455 = vmul.f32 %v4260, %v4433
  %v4456 = vmul.f32 %v4264, %v4433
  %v4457 = vmul.f32 %v4268, %v4433
  %v4458 = vmul.f32 %v4272, %v4433
  %v4459 = vmul.f32 %v4276, %v4433
  %v4460 = vmul.f32 %v4280, %v4433
  %v4461 = vmul.f32 %v4284, %v4433
  %v4462 = vmul.f32 %v4288, %v4433
  %v4463 = vmul.f32 %v4292, %v4433
  %v4464 = vmul.f32 %v4296, %v4433
  %v4465 = vmul.f32 %v4300, %v4433
  %v4466 = vmul.f32 %v4304, %v4433
  %v4467 = vmul.f32 %v4308, %v4433
  %v4468 = vmul.f32 %v4312, %v4433
  %v4469 = vmul.f32 %v4316, %v4433
  %v4470 = vmul.f32 %v4320, %v4433
  %v4471 = vmul.f32 %v4324, %v4433
  %v4472 = vmul.f32 %v4328, %v4433
  %v4473 = vmul.f32 %v4332, %v4433
  %v4474 = vmul.f32 %v4336, %v4433
  %v4475 = vmul.f32 %v4340, %v4433
  %v4476 = vmul.f32 %v4344, %v4433
  %v4477 = vmul.f32 %v4348, %v4433
  %v4478 = vmul.f32 %v4352, %v4433
  %v4479 = vmul.f32 %v4356, %v4433
  %v4480 = vmul.f32 %v4360, %v4433
  %v4481 = vmul.f32 %v4364, %v4433
  %v4482 = vmul.f32 %v4368, %v4433
  %v4483 = vmul.f32 %v4372, %v4433
  %v4484 = vmul.f32 %v4376, %v4433
  %v4485 = vmul.f32 %v4380, %v4433
  %v4486 = vmul.f32 %v4384, %v4433
  %v4487 = vmul.f32 %v4388, %v4433
  %v4488 = vmul.f32 %v4392, %v4433
  %v4489 = vmul.f32 %v4396, %v4433
  %v4490 = vmul.f32 %v4400, %v4433
  %v4491 = vmul.f32 %v4404, %v4433
  %v4492 = vmul.f32 %v4408, %v4433
  %v4493 = vmul.f32 %v4412, %v4433
  %v4494 = vmul.f32 %v4416, %v4433
  %v4495 = vmul.f32 %v4420, %v4433
  %v4496 = vmul.f32 %v4424, %v4433
  %v4497 = vmul.f32 %v4428, %v4433
  %v4498 = vadd.f32 %v4110, %v4434
  %v4499 = vadd.f32 %v4111, %v4435
  %v4500 = vadd.f32 %v4112, %v4436
  %v4501 = vadd.f32 %v4113, %v4437
  %v4502 = vadd.f32 %v4114, %v4438
  %v4503 = vadd.f32 %v4115, %v4439
  %v4504 = vadd.f32 %v4116, %v4440
  %v4505 = vadd.f32 %v4117, %v4441
  %v4506 = vadd.f32 %v4118, %v4442
  %v4507 = vadd.f32 %v4119, %v4443
  %v4508 = vadd.f32 %v4120, %v4444
  %v4509 = vadd.f32 %v4121, %v4445
  %v4510 = vadd.f32 %v4122, %v4446
  %v4511 = vadd.f32 %v4123, %v4447
  %v4512 = vadd.f32 %v4124, %v4448
  %v4513 = vadd.f32 %v4125, %v4449
  %v4514 = vadd.f32 %v4126, %v4450
  %v4515 = vadd.f32 %v4127, %v4451
  %v4516 = vadd.f32 %v4128, %v4452
  %v4517 = vadd.f32 %v4129, %v4453
  %v4518 = vadd.f32 %v4130, %v4454
  %v4519 = vadd.f32 %v4131, %v4455
  %v4520 = vadd.f32 %v4132, %v4456
  %v4521 = vadd.f32 %v4133, %v4457
  %v4522 = vadd.f32 %v4134, %v4458
  %v4523 = vadd.f32 %v4135, %v4459
  %v4524 = vadd.f32 %v4136, %v4460
  %v4525 = vadd.f32 %v4137, %v4461
  %v4526 = vadd.f32 %v4138, %v4462
  %v4527 = vadd.f32 %v4139, %v4463
  %v4528 = vadd.f32 %v4140, %v4464
  %v4529 = vadd.f32 %v4141, %v4465
  %v4530 = vadd.f32 %v4142, %v4466
  %v4531 = vadd.f32 %v4143, %v4467
  %v4532 = vadd.f32 %v4144, %v4468
  %v4533 = vadd.f32 %v4145, %v4469
  %v4534 = vadd.f32 %v4146, %v4470
  %v4535 = vadd.f32 %v4147, %v4471
  %v4536 = vadd.f32 %v4148, %v4472
  %v4537 = vadd.f32 %v4149, %v4473
  %v4538 = vadd.f32 %v4150, %v4474
  %v4539 = vadd.f32 %v4151, %v4475
  %v4540 = vadd.f32 %v4152, %v4476
  %v4541 = vadd.f32 %v4153, %v4477
  %v4542 = vadd.f32 %v4154, %v4478
  %v4543 = vadd.f32 %v4155, %v4479
  %v4544 = vadd.f32 %v4156, %v4480
  %v4545 = vadd.f32 %v4157, %v4481
  %v4546 = vadd.f32 %v4158, %v4482
  %v4547 = vadd.f32 %v4159, %v4483
  %v4548 = vadd.f32 %v4160, %v4484
  %v4549 = vadd.f32 %v4161, %v4485
  %v4550 = vadd.f32 %v4162, %v4486
  %v4551 = vadd.f32 %v4163, %v4487
  %v4552 = vadd.f32 %v4164, %v4488
  %v4553 = vadd.f32 %v4165, %v4489
  %v4554 = vadd.f32 %v4166, %v4490
  %v4555 = vadd.f32 %v4167, %v4491
  %v4556 = vadd.f32 %v4168, %v4492
  %v4557 = vadd.f32 %v4169, %v4493
  %v4558 = vadd.f32 %v4170, %v4494
  %v4559 = vadd.f32 %v4171, %v4495
  %v4560 = vadd.f32 %v4172, %v4496
  %v4561 = vadd.f32 %v4173, %v4497
  %4562 = vset.pattern.permute.xlu0 2
  %4563 = vperm.xlu0 %4562, %v3722
  %v4564 = vpop.permute.xlu0 %4563
  %4566 = vset.pattern.permute.xlu0 2
  %4567 = vperm.xlu0 %4566, %v3723
  %v4568 = vpop.permute.xlu0 %4567
  %4570 = vset.pattern.permute.xlu0 2
  %4571 = vperm.xlu0 %4570, %v3724
  %v4572 = vpop.permute.xlu0 %4571
  %4574 = vset.pattern.permute.xlu0 2
  %4575 = vperm.xlu0 %4574, %v3725
  %v4576 = vpop.permute.xlu0 %4575
  %4578 = vset.pattern.permute.xlu0 2
  %4579 = vperm.xlu0 %4578, %v3726
  %v4580 = vpop.permute.xlu0 %4579
  %4582 = vset.pattern.permute.xlu0 2
  %4583 = vperm.xlu0 %4582, %v3727
  %v4584 = vpop.permute.xlu0 %4583
  %4586 = vset.pattern.permute.xlu0 2
  %4587 = vperm.xlu0 %4586, %v3728
  %v4588 = vpop.permute.xlu0 %4587
  %4590 = vset.pattern.permute.xlu0 2
  %4591 = vperm.xlu0 %4590, %v3729
  %v4592 = vpop.permute.xlu0 %4591
  %4594 = vset.pattern.permute.xlu0 2
  %4595 = vperm.xlu0 %4594, %v3730
  %v4596 = vpop.permute.xlu0 %4595
  %4598 = vset.pattern.permute.xlu0 2
  %4599 = vperm.xlu0 %4598, %v3731
  %v4600 = vpop.permute.xlu0 %4599
  %4602 = vset.pattern.permute.xlu0 2
  %4603 = vperm.xlu0 %4602, %v3732
  %v4604 = vpop.permute.xlu0 %4603
  %4606 = vset.pattern.permute.xlu0 2
  %4607 = vperm.xlu0 %4606, %v3733
  %v4608 = vpop.permute.xlu0 %4607
  %4610 = vset.pattern.permute.xlu0 2
  %4611 = vperm.xlu0 %4610, %v3734
  %v4612 = vpop.permute.xlu0 %4611
  %4614 = vset.pattern.permute.xlu0 2
  %4615 = vperm.xlu0 %4614, %v3735
  %v4616 = vpop.permute.xlu0 %4615
  %4618 = vset.pattern.permute.xlu0 2
  %4619 = vperm.xlu0 %4618, %v3736
  %v4620 = vpop.permute.xlu0 %4619
  %4622 = vset.pattern.permute.xlu0 2
  %4623 = vperm.xlu0 %4622, %v3737
  %v4624 = vpop.permute.xlu0 %4623
  %4626 = vset.pattern.permute.xlu0 2
  %4627 = vperm.xlu0 %4626, %v3738
  %v4628 = vpop.permute.xlu0 %4627
  %4630 = vset.pattern.permute.xlu0 2
  %4631 = vperm.xlu0 %4630, %v3739
  %v4632 = vpop.permute.xlu0 %4631
  %4634 = vset.pattern.permute.xlu0 2
  %4635 = vperm.xlu0 %4634, %v3740
  %v4636 = vpop.permute.xlu0 %4635
  %4638 = vset.pattern.permute.xlu0 2
  %4639 = vperm.xlu0 %4638, %v3741
  %v4640 = vpop.permute.xlu0 %4639
  %4642 = vset.pattern.permute.xlu0 2
  %4643 = vperm.xlu0 %4642, %v3742
  %v4644 = vpop.permute.xlu0 %4643
  %4646 = vset.pattern.permute.xlu0 2
  %4647 = vperm.xlu0 %4646, %v3743
  %v4648 = vpop.permute.xlu0 %4647
  %4650 = vset.pattern.permute.xlu0 2
  %4651 = vperm.xlu0 %4650, %v3744
  %v4652 = vpop.permute.xlu0 %4651
  %4654 = vset.pattern.permute.xlu0 2
  %4655 = vperm.xlu0 %4654, %v3745
  %v4656 = vpop.permute.xlu0 %4655
  %4658 = vset.pattern.permute.xlu0 2
  %4659 = vperm.xlu0 %4658, %v3746
  %v4660 = vpop.permute.xlu0 %4659
  %4662 = vset.pattern.permute.xlu0 2
  %4663 = vperm.xlu0 %4662, %v3747
  %v4664 = vpop.permute.xlu0 %4663
  %4666 = vset.pattern.permute.xlu0 2
  %4667 = vperm.xlu0 %4666, %v3748
  %v4668 = vpop.permute.xlu0 %4667
  %4670 = vset.pattern.permute.xlu0 2
  %4671 = vperm.xlu0 %4670, %v3749
  %v4672 = vpop.permute.xlu0 %4671
  %4674 = vset.pattern.permute.xlu0 2
  %4675 = vperm.xlu0 %4674, %v3750
  %v4676 = vpop.permute.xlu0 %4675
  %4678 = vset.pattern.permute.xlu0 2
  %4679 = vperm.xlu0 %4678, %v3751
  %v4680 = vpop.permute.xlu0 %4679
  %4682 = vset.pattern.permute.xlu0 2
  %4683 = vperm.xlu0 %4682, %v3752
  %v4684 = vpop.permute.xlu0 %4683
  %4686 = vset.pattern.permute.xlu0 2
  %4687 = vperm.xlu0 %4686, %v3753
  %v4688 = vpop.permute.xlu0 %4687
  %4690 = vset.pattern.permute.xlu0 2
  %4691 = vperm.xlu0 %4690, %v3754
  %v4692 = vpop.permute.xlu0 %4691
  %4694 = vset.pattern.permute.xlu0 2
  %4695 = vperm.xlu0 %4694, %v3755
  %v4696 = vpop.permute.xlu0 %4695
  %4698 = vset.pattern.permute.xlu0 2
  %4699 = vperm.xlu0 %4698, %v3756
  %v4700 = vpop.permute.xlu0 %4699
  %4702 = vset.pattern.permute.xlu0 2
  %4703 = vperm.xlu0 %4702, %v3757
  %v4704 = vpop.permute.xlu0 %4703
  %4706 = vset.pattern.permute.xlu0 2
  %4707 = vperm.xlu0 %4706, %v3758
  %v4708 = vpop.permute.xlu0 %4707
  %4710 = vset.pattern.permute.xlu0 2
  %4711 = vperm.xlu0 %4710, %v3759
  %v4712 = vpop.permute.xlu0 %4711
  %4714 = vset.pattern.permute.xlu0 2
  %4715 = vperm.xlu0 %4714, %v3760
  %v4716 = vpop.permute.xlu0 %4715
  %4718 = vset.pattern.permute.xlu0 2
  %4719 = vperm.xlu0 %4718, %v3761
  %v4720 = vpop.permute.xlu0 %4719
  %4722 = vset.pattern.permute.xlu0 2
  %4723 = vperm.xlu0 %4722, %v3762
  %v4724 = vpop.permute.xlu0 %4723
  %4726 = vset.pattern.permute.xlu0 2
  %4727 = vperm.xlu0 %4726, %v3763
  %v4728 = vpop.permute.xlu0 %4727
  %4730 = vset.pattern.permute.xlu0 2
  %4731 = vperm.xlu0 %4730, %v3764
  %v4732 = vpop.permute.xlu0 %4731
  %4734 = vset.pattern.permute.xlu0 2
  %4735 = vperm.xlu0 %4734, %v3765
  %v4736 = vpop.permute.xlu0 %4735
  %4738 = vset.pattern.permute.xlu0 2
  %4739 = vperm.xlu0 %4738, %v3766
  %v4740 = vpop.permute.xlu0 %4739
  %4742 = vset.pattern.permute.xlu0 2
  %4743 = vperm.xlu0 %4742, %v3767
  %v4744 = vpop.permute.xlu0 %4743
  %4746 = vset.pattern.permute.xlu0 2
  %4747 = vperm.xlu0 %4746, %v3768
  %v4748 = vpop.permute.xlu0 %4747
  %4750 = vset.pattern.permute.xlu0 2
  %4751 = vperm.xlu0 %4750, %v3769
  %v4752 = vpop.permute.xlu0 %4751
  %4754 = vset.pattern.permute.xlu0 2
  %4755 = vperm.xlu0 %4754, %v3770
  %v4756 = vpop.permute.xlu0 %4755
  %4758 = vset.pattern.permute.xlu0 2
  %4759 = vperm.xlu0 %4758, %v3771
  %v4760 = vpop.permute.xlu0 %4759
  %4762 = vset.pattern.permute.xlu0 2
  %4763 = vperm.xlu0 %4762, %v3772
  %v4764 = vpop.permute.xlu0 %4763
  %4766 = vset.pattern.permute.xlu0 2
  %4767 = vperm.xlu0 %4766, %v3773
  %v4768 = vpop.permute.xlu0 %4767
  %4770 = vset.pattern.permute.xlu0 2
  %4771 = vperm.xlu0 %4770, %v3774
  %v4772 = vpop.permute.xlu0 %4771
  %4774 = vset.pattern.permute.xlu0 2
  %4775 = vperm.xlu0 %4774, %v3775
  %v4776 = vpop.permute.xlu0 %4775
  %4778 = vset.pattern.permute.xlu0 2
  %4779 = vperm.xlu0 %4778, %v3776
  %v4780 = vpop.permute.xlu0 %4779
  %4782 = vset.pattern.permute.xlu0 2
  %4783 = vperm.xlu0 %4782, %v3777
  %v4784 = vpop.permute.xlu0 %4783
  %4786 = vset.pattern.permute.xlu0 2
  %4787 = vperm.xlu0 %4786, %v3778
  %v4788 = vpop.permute.xlu0 %4787
  %4790 = vset.pattern.permute.xlu0 2
  %4791 = vperm.xlu0 %4790, %v3779
  %v4792 = vpop.permute.xlu0 %4791
  %4794 = vset.pattern.permute.xlu0 2
  %4795 = vperm.xlu0 %4794, %v3780
  %v4796 = vpop.permute.xlu0 %4795
  %4798 = vset.pattern.permute.xlu0 2
  %4799 = vperm.xlu0 %4798, %v3781
  %v4800 = vpop.permute.xlu0 %4799
  %4802 = vset.pattern.permute.xlu0 2
  %4803 = vperm.xlu0 %4802, %v3782
  %v4804 = vpop.permute.xlu0 %4803
  %4806 = vset.pattern.permute.xlu0 2
  %4807 = vperm.xlu0 %4806, %v3783
  %v4808 = vpop.permute.xlu0 %4807
  %4810 = vset.pattern.permute.xlu0 2
  %4811 = vperm.xlu0 %4810, %v3784
  %v4812 = vpop.permute.xlu0 %4811
  %4814 = vset.pattern.permute.xlu0 2
  %4815 = vperm.xlu0 %4814, %v3785
  %v4816 = vpop.permute.xlu0 %4815
  %v4818 = vlaneseq
  %v4819 = vshrl.u32 %v4818, 7
  %v4820 = vsub.s32 2, %v4819
  %v4821 = vrot.slane %v3465, %v4820
  %v4822 = vmul.f32 %v4564, %v4821
  %v4823 = vmul.f32 %v4568, %v4821
  %v4824 = vmul.f32 %v4572, %v4821
  %v4825 = vmul.f32 %v4576, %v4821
  %v4826 = vmul.f32 %v4580, %v4821
  %v4827 = vmul.f32 %v4584, %v4821
  %v4828 = vmul.f32 %v4588, %v4821
  %v4829 = vmul.f32 %v4592, %v4821
  %v4830 = vmul.f32 %v4596, %v4821
  %v4831 = vmul.f32 %v4600, %v4821
  %v4832 = vmul.f32 %v4604, %v4821
  %v4833 = vmul.f32 %v4608, %v4821
  %v4834 = vmul.f32 %v4612, %v4821
  %v4835 = vmul.f32 %v4616, %v4821
  %v4836 = vmul.f32 %v4620, %v4821
  %v4837 = vmul.f32 %v4624, %v4821
  %v4838 = vmul.f32 %v4628, %v4821
  %v4839 = vmul.f32 %v4632, %v4821
  %v4840 = vmul.f32 %v4636, %v4821
  %v4841 = vmul.f32 %v4640, %v4821
  %v4842 = vmul.f32 %v4644, %v4821
  %v4843 = vmul.f32 %v4648, %v4821
  %v4844 = vmul.f32 %v4652, %v4821
  %v4845 = vmul.f32 %v4656, %v4821
  %v4846 = vmul.f32 %v4660, %v4821
  %v4847 = vmul.f32 %v4664, %v4821
  %v4848 = vmul.f32 %v4668, %v4821
  %v4849 = vmul.f32 %v4672, %v4821
  %v4850 = vmul.f32 %v4676, %v4821
  %v4851 = vmul.f32 %v4680, %v4821
  %v4852 = vmul.f32 %v4684, %v4821
  %v4853 = vmul.f32 %v4688, %v4821
  %v4854 = vmul.f32 %v4692, %v4821
  %v4855 = vmul.f32 %v4696, %v4821
  %v4856 = vmul.f32 %v4700, %v4821
  %v4857 = vmul.f32 %v4704, %v4821
  %v4858 = vmul.f32 %v4708, %v4821
  %v4859 = vmul.f32 %v4712, %v4821
  %v4860 = vmul.f32 %v4716, %v4821
  %v4861 = vmul.f32 %v4720, %v4821
  %v4862 = vmul.f32 %v4724, %v4821
  %v4863 = vmul.f32 %v4728, %v4821
  %v4864 = vmul.f32 %v4732, %v4821
  %v4865 = vmul.f32 %v4736, %v4821
  %v4866 = vmul.f32 %v4740, %v4821
  %v4867 = vmul.f32 %v4744, %v4821
  %v4868 = vmul.f32 %v4748, %v4821
  %v4869 = vmul.f32 %v4752, %v4821
  %v4870 = vmul.f32 %v4756, %v4821
  %v4871 = vmul.f32 %v4760, %v4821
  %v4872 = vmul.f32 %v4764, %v4821
  %v4873 = vmul.f32 %v4768, %v4821
  %v4874 = vmul.f32 %v4772, %v4821
  %v4875 = vmul.f32 %v4776, %v4821
  %v4876 = vmul.f32 %v4780, %v4821
  %v4877 = vmul.f32 %v4784, %v4821
  %v4878 = vmul.f32 %v4788, %v4821
  %v4879 = vmul.f32 %v4792, %v4821
  %v4880 = vmul.f32 %v4796, %v4821
  %v4881 = vmul.f32 %v4800, %v4821
  %v4882 = vmul.f32 %v4804, %v4821
  %v4883 = vmul.f32 %v4808, %v4821
  %v4884 = vmul.f32 %v4812, %v4821
  %v4885 = vmul.f32 %v4816, %v4821
  %v4886 = vadd.f32 %v4498, %v4822
  %v4887 = vadd.f32 %v4499, %v4823
  %v4888 = vadd.f32 %v4500, %v4824
  %v4889 = vadd.f32 %v4501, %v4825
  %v4890 = vadd.f32 %v4502, %v4826
  %v4891 = vadd.f32 %v4503, %v4827
  %v4892 = vadd.f32 %v4504, %v4828
  %v4893 = vadd.f32 %v4505, %v4829
  %v4894 = vadd.f32 %v4506, %v4830
  %v4895 = vadd.f32 %v4507, %v4831
  %v4896 = vadd.f32 %v4508, %v4832
  %v4897 = vadd.f32 %v4509, %v4833
  %v4898 = vadd.f32 %v4510, %v4834
  %v4899 = vadd.f32 %v4511, %v4835
  %v4900 = vadd.f32 %v4512, %v4836
  %v4901 = vadd.f32 %v4513, %v4837
  %v4902 = vadd.f32 %v4514, %v4838
  %v4903 = vadd.f32 %v4515, %v4839
  %v4904 = vadd.f32 %v4516, %v4840
  %v4905 = vadd.f32 %v4517, %v4841
  %v4906 = vadd.f32 %v4518, %v4842
  %v4907 = vadd.f32 %v4519, %v4843
  %v4908 = vadd.f32 %v4520, %v4844
  %v4909 = vadd.f32 %v4521, %v4845
  %v4910 = vadd.f32 %v4522, %v4846
  %v4911 = vadd.f32 %v4523, %v4847
  %v4912 = vadd.f32 %v4524, %v4848
  %v4913 = vadd.f32 %v4525, %v4849
  %v4914 = vadd.f32 %v4526, %v4850
  %v4915 = vadd.f32 %v4527, %v4851
  %v4916 = vadd.f32 %v4528, %v4852
  %v4917 = vadd.f32 %v4529, %v4853
  %v4918 = vadd.f32 %v4530, %v4854
  %v4919 = vadd.f32 %v4531, %v4855
  %v4920 = vadd.f32 %v4532, %v4856
  %v4921 = vadd.f32 %v4533, %v4857
  %v4922 = vadd.f32 %v4534, %v4858
  %v4923 = vadd.f32 %v4535, %v4859
  %v4924 = vadd.f32 %v4536, %v4860
  %v4925 = vadd.f32 %v4537, %v4861
  %v4926 = vadd.f32 %v4538, %v4862
  %v4927 = vadd.f32 %v4539, %v4863
  %v4928 = vadd.f32 %v4540, %v4864
  %v4929 = vadd.f32 %v4541, %v4865
  %v4930 = vadd.f32 %v4542, %v4866
  %v4931 = vadd.f32 %v4543, %v4867
  %v4932 = vadd.f32 %v4544, %v4868
  %v4933 = vadd.f32 %v4545, %v4869
  %v4934 = vadd.f32 %v4546, %v4870
  %v4935 = vadd.f32 %v4547, %v4871
  %v4936 = vadd.f32 %v4548, %v4872
  %v4937 = vadd.f32 %v4549, %v4873
  %v4938 = vadd.f32 %v4550, %v4874
  %v4939 = vadd.f32 %v4551, %v4875
  %v4940 = vadd.f32 %v4552, %v4876
  %v4941 = vadd.f32 %v4553, %v4877
  %v4942 = vadd.f32 %v4554, %v4878
  %v4943 = vadd.f32 %v4555, %v4879
  %v4944 = vadd.f32 %v4556, %v4880
  %v4945 = vadd.f32 %v4557, %v4881
  %v4946 = vadd.f32 %v4558, %v4882
  %v4947 = vadd.f32 %v4559, %v4883
  %v4948 = vadd.f32 %v4560, %v4884
  %v4949 = vadd.f32 %v4561, %v4885
  %v4950 = vld [vmem:[%s10] sm:$0x1]
  %v4952 = vlaneseq
  %v4953 = vshrl.u32 %v4952, 7
  %v4954 = vsub.s32 0, %v4953
  %v4955 = vrot.slane %v4950, %v4954
  %v4957 = vadd.f32 %v4886, %v4955
  %v4958 = vadd.f32 %v4887, %v4955
  %v4959 = vadd.f32 %v4888, %v4955
  %v4960 = vadd.f32 %v4889, %v4955
  %v4961 = vadd.f32 %v4890, %v4955
  %v4962 = vadd.f32 %v4891, %v4955
  %v4963 = vadd.f32 %v4892, %v4955
  %v4964 = vadd.f32 %v4893, %v4955
  %v4965 = vadd.f32 %v4894, %v4955
  %v4966 = vadd.f32 %v4895, %v4955
  %v4967 = vadd.f32 %v4896, %v4955
  %v4968 = vadd.f32 %v4897, %v4955
  %v4969 = vadd.f32 %v4898, %v4955
  %v4970 = vadd.f32 %v4899, %v4955
  %v4971 = vadd.f32 %v4900, %v4955
  %v4972 = vadd.f32 %v4901, %v4955
  %v4973 = vadd.f32 %v4902, %v4955
  %v4974 = vadd.f32 %v4903, %v4955
  %v4975 = vadd.f32 %v4904, %v4955
  %v4976 = vadd.f32 %v4905, %v4955
  %v4977 = vadd.f32 %v4906, %v4955
  %v4978 = vadd.f32 %v4907, %v4955
  %v4979 = vadd.f32 %v4908, %v4955
  %v4980 = vadd.f32 %v4909, %v4955
  %v4981 = vadd.f32 %v4910, %v4955
  %v4982 = vadd.f32 %v4911, %v4955
  %v4983 = vadd.f32 %v4912, %v4955
  %v4984 = vadd.f32 %v4913, %v4955
  %v4985 = vadd.f32 %v4914, %v4955
  %v4986 = vadd.f32 %v4915, %v4955
  %v4987 = vadd.f32 %v4916, %v4955
  %v4988 = vadd.f32 %v4917, %v4955
  %v4989 = vadd.f32 %v4918, %v4955
  %v4990 = vadd.f32 %v4919, %v4955
  %v4991 = vadd.f32 %v4920, %v4955
  %v4992 = vadd.f32 %v4921, %v4955
  %v4993 = vadd.f32 %v4922, %v4955
  %v4994 = vadd.f32 %v4923, %v4955
  %v4995 = vadd.f32 %v4924, %v4955
  %v4996 = vadd.f32 %v4925, %v4955
  %v4997 = vadd.f32 %v4926, %v4955
  %v4998 = vadd.f32 %v4927, %v4955
  %v4999 = vadd.f32 %v4928, %v4955
  %v5000 = vadd.f32 %v4929, %v4955
  %v5001 = vadd.f32 %v4930, %v4955
  %v5002 = vadd.f32 %v4931, %v4955
  %v5003 = vadd.f32 %v4932, %v4955
  %v5004 = vadd.f32 %v4933, %v4955
  %v5005 = vadd.f32 %v4934, %v4955
  %v5006 = vadd.f32 %v4935, %v4955
  %v5007 = vadd.f32 %v4936, %v4955
  %v5008 = vadd.f32 %v4937, %v4955
  %v5009 = vadd.f32 %v4938, %v4955
  %v5010 = vadd.f32 %v4939, %v4955
  %v5011 = vadd.f32 %v4940, %v4955
  %v5012 = vadd.f32 %v4941, %v4955
  %v5013 = vadd.f32 %v4942, %v4955
  %v5014 = vadd.f32 %v4943, %v4955
  %v5015 = vadd.f32 %v4944, %v4955
  %v5016 = vadd.f32 %v4945, %v4955
  %v5017 = vadd.f32 %v4946, %v4955
  %v5018 = vadd.f32 %v4947, %v4955
  %v5019 = vadd.f32 %v4948, %v4955
  %v5020 = vadd.f32 %v4949, %v4955
  %v5021 = vlaneseq
  %v5022 = vshrl.u32 %v5021, 7
  %v5023 = vsub.s32 0, %v5022
  %v5024 = vrot.slane %v3147, %v5023
  %v5025 = vlaneseq
  %v5026 = vshrl.u32 %v5025, 7
  %v5027 = vsub.s32 0, %v5026
  %v5028 = vrot.slane %v3150, %v5027
  %v5029 = vlaneseq
  %v5030 = vshrl.u32 %v5029, 7
  %v5031 = vsub.s32 0, %v5030
  %v5032 = vrot.slane %v3155, %v5031
  %v5033 = vlaneseq
  %v5034 = vshrl.u32 %v5033, 7
  %v5035 = vsub.s32 0, %v5034
  %v5036 = vrot.slane %v3158, %v5035
  %v5037 = vlaneseq
  %v5038 = vshrl.u32 %v5037, 7
  %v5039 = vsub.s32 0, %v5038
  %v5040 = vrot.slane %v3163, %v5039
  %v5041 = vlaneseq
  %v5042 = vshrl.u32 %v5041, 7
  %v5043 = vsub.s32 0, %v5042
  %v5044 = vrot.slane %v3166, %v5043
  %v5045 = vlaneseq
  %v5046 = vshrl.u32 %v5045, 7
  %v5047 = vsub.s32 0, %v5046
  %v5048 = vrot.slane %v3171, %v5047
  %v5049 = vlaneseq
  %v5050 = vshrl.u32 %v5049, 7
  %v5051 = vsub.s32 0, %v5050
  %v5052 = vrot.slane %v3174, %v5051
  %v5053 = vlaneseq
  %v5054 = vshrl.u32 %v5053, 7
  %v5055 = vsub.s32 0, %v5054
  %v5056 = vrot.slane %v3179, %v5055
  %v5057 = vlaneseq
  %v5058 = vshrl.u32 %v5057, 7
  %v5059 = vsub.s32 0, %v5058
  %v5060 = vrot.slane %v3182, %v5059
  %v5061 = vlaneseq
  %v5062 = vshrl.u32 %v5061, 7
  %v5063 = vsub.s32 0, %v5062
  %v5064 = vrot.slane %v3187, %v5063
  %v5065 = vlaneseq
  %v5066 = vshrl.u32 %v5065, 7
  %v5067 = vsub.s32 0, %v5066
  %v5068 = vrot.slane %v3190, %v5067
  %v5069 = vlaneseq
  %v5070 = vshrl.u32 %v5069, 7
  %v5071 = vsub.s32 0, %v5070
  %v5072 = vrot.slane %v3195, %v5071
  %v5073 = vlaneseq
  %v5074 = vshrl.u32 %v5073, 7
  %v5075 = vsub.s32 0, %v5074
  %v5076 = vrot.slane %v3198, %v5075
  %v5077 = vlaneseq
  %v5078 = vshrl.u32 %v5077, 7
  %v5079 = vsub.s32 0, %v5078
  %v5080 = vrot.slane %v3203, %v5079
  %v5081 = vlaneseq
  %v5082 = vshrl.u32 %v5081, 7
  %v5083 = vsub.s32 0, %v5082
  %v5084 = vrot.slane %v3206, %v5083
  %v5085 = vlaneseq
  %v5086 = vshrl.u32 %v5085, 7
  %v5087 = vsub.s32 0, %v5086
  %v5088 = vrot.slane %v3211, %v5087
  %v5089 = vlaneseq
  %v5090 = vshrl.u32 %v5089, 7
  %v5091 = vsub.s32 0, %v5090
  %v5092 = vrot.slane %v3214, %v5091
  %v5093 = vlaneseq
  %v5094 = vshrl.u32 %v5093, 7
  %v5095 = vsub.s32 0, %v5094
  %v5096 = vrot.slane %v3219, %v5095
  %v5097 = vlaneseq
  %v5098 = vshrl.u32 %v5097, 7
  %v5099 = vsub.s32 0, %v5098
  %v5100 = vrot.slane %v3222, %v5099
  %v5101 = vlaneseq
  %v5102 = vshrl.u32 %v5101, 7
  %v5103 = vsub.s32 0, %v5102
  %v5104 = vrot.slane %v3227, %v5103
  %v5105 = vlaneseq
  %v5106 = vshrl.u32 %v5105, 7
  %v5107 = vsub.s32 0, %v5106
  %v5108 = vrot.slane %v3230, %v5107
  %v5109 = vlaneseq
  %v5110 = vshrl.u32 %v5109, 7
  %v5111 = vsub.s32 0, %v5110
  %v5112 = vrot.slane %v3235, %v5111
  %v5113 = vlaneseq
  %v5114 = vshrl.u32 %v5113, 7
  %v5115 = vsub.s32 0, %v5114
  %v5116 = vrot.slane %v3238, %v5115
  %v5117 = vlaneseq
  %v5118 = vshrl.u32 %v5117, 7
  %v5119 = vsub.s32 0, %v5118
  %v5120 = vrot.slane %v3243, %v5119
  %v5121 = vlaneseq
  %v5122 = vshrl.u32 %v5121, 7
  %v5123 = vsub.s32 0, %v5122
  %v5124 = vrot.slane %v3246, %v5123
  %v5125 = vlaneseq
  %v5126 = vshrl.u32 %v5125, 7
  %v5127 = vsub.s32 0, %v5126
  %v5128 = vrot.slane %v3251, %v5127
  %v5129 = vlaneseq
  %v5130 = vshrl.u32 %v5129, 7
  %v5131 = vsub.s32 0, %v5130
  %v5132 = vrot.slane %v3254, %v5131
  %v5133 = vlaneseq
  %v5134 = vshrl.u32 %v5133, 7
  %v5135 = vsub.s32 0, %v5134
  %v5136 = vrot.slane %v3259, %v5135
  %v5137 = vlaneseq
  %v5138 = vshrl.u32 %v5137, 7
  %v5139 = vsub.s32 0, %v5138
  %v5140 = vrot.slane %v3262, %v5139
  %v5141 = vlaneseq
  %v5142 = vshrl.u32 %v5141, 7
  %v5143 = vsub.s32 0, %v5142
  %v5144 = vrot.slane %v3267, %v5143
  %v5145 = vlaneseq
  %v5146 = vshrl.u32 %v5145, 7
  %v5147 = vsub.s32 0, %v5146
  %v5148 = vrot.slane %v3270, %v5147
  %v5149 = vlaneseq
  %v5150 = vshrl.u32 %v5149, 7
  %v5151 = vsub.s32 0, %v5150
  %v5152 = vrot.slane %v3275, %v5151
  %v5153 = vlaneseq
  %v5154 = vshrl.u32 %v5153, 7
  %v5155 = vsub.s32 0, %v5154
  %v5156 = vrot.slane %v3278, %v5155
  %v5157 = vlaneseq
  %v5158 = vshrl.u32 %v5157, 7
  %v5159 = vsub.s32 0, %v5158
  %v5160 = vrot.slane %v3283, %v5159
  %v5161 = vlaneseq
  %v5162 = vshrl.u32 %v5161, 7
  %v5163 = vsub.s32 0, %v5162
  %v5164 = vrot.slane %v3286, %v5163
  %v5165 = vlaneseq
  %v5166 = vshrl.u32 %v5165, 7
  %v5167 = vsub.s32 0, %v5166
  %v5168 = vrot.slane %v3291, %v5167
  %v5169 = vlaneseq
  %v5170 = vshrl.u32 %v5169, 7
  %v5171 = vsub.s32 0, %v5170
  %v5172 = vrot.slane %v3294, %v5171
  %v5173 = vlaneseq
  %v5174 = vshrl.u32 %v5173, 7
  %v5175 = vsub.s32 0, %v5174
  %v5176 = vrot.slane %v3299, %v5175
  %v5177 = vlaneseq
  %v5178 = vshrl.u32 %v5177, 7
  %v5179 = vsub.s32 0, %v5178
  %v5180 = vrot.slane %v3302, %v5179
  %v5181 = vlaneseq
  %v5182 = vshrl.u32 %v5181, 7
  %v5183 = vsub.s32 0, %v5182
  %v5184 = vrot.slane %v3307, %v5183
  %v5185 = vlaneseq
  %v5186 = vshrl.u32 %v5185, 7
  %v5187 = vsub.s32 0, %v5186
  %v5188 = vrot.slane %v3310, %v5187
  %v5189 = vlaneseq
  %v5190 = vshrl.u32 %v5189, 7
  %v5191 = vsub.s32 0, %v5190
  %v5192 = vrot.slane %v3315, %v5191
  %v5193 = vlaneseq
  %v5194 = vshrl.u32 %v5193, 7
  %v5195 = vsub.s32 0, %v5194
  %v5196 = vrot.slane %v3318, %v5195
  %v5197 = vlaneseq
  %v5198 = vshrl.u32 %v5197, 7
  %v5199 = vsub.s32 0, %v5198
  %v5200 = vrot.slane %v3323, %v5199
  %v5201 = vlaneseq
  %v5202 = vshrl.u32 %v5201, 7
  %v5203 = vsub.s32 0, %v5202
  %v5204 = vrot.slane %v3326, %v5203
  %v5205 = vlaneseq
  %v5206 = vshrl.u32 %v5205, 7
  %v5207 = vsub.s32 0, %v5206
  %v5208 = vrot.slane %v3331, %v5207
  %v5209 = vlaneseq
  %v5210 = vshrl.u32 %v5209, 7
  %v5211 = vsub.s32 0, %v5210
  %v5212 = vrot.slane %v3334, %v5211
  %v5213 = vlaneseq
  %v5214 = vshrl.u32 %v5213, 7
  %v5215 = vsub.s32 0, %v5214
  %v5216 = vrot.slane %v3339, %v5215
  %v5217 = vlaneseq
  %v5218 = vshrl.u32 %v5217, 7
  %v5219 = vsub.s32 0, %v5218
  %v5220 = vrot.slane %v3342, %v5219
  %v5221 = vlaneseq
  %v5222 = vshrl.u32 %v5221, 7
  %v5223 = vsub.s32 0, %v5222
  %v5224 = vrot.slane %v3347, %v5223
  %v5225 = vlaneseq
  %v5226 = vshrl.u32 %v5225, 7
  %v5227 = vsub.s32 0, %v5226
  %v5228 = vrot.slane %v3350, %v5227
  %v5229 = vlaneseq
  %v5230 = vshrl.u32 %v5229, 7
  %v5231 = vsub.s32 0, %v5230
  %v5232 = vrot.slane %v3355, %v5231
  %v5233 = vlaneseq
  %v5234 = vshrl.u32 %v5233, 7
  %v5235 = vsub.s32 0, %v5234
  %v5236 = vrot.slane %v3358, %v5235
  %v5237 = vlaneseq
  %v5238 = vshrl.u32 %v5237, 7
  %v5239 = vsub.s32 0, %v5238
  %v5240 = vrot.slane %v3363, %v5239
  %v5241 = vlaneseq
  %v5242 = vshrl.u32 %v5241, 7
  %v5243 = vsub.s32 0, %v5242
  %v5244 = vrot.slane %v3366, %v5243
  %v5245 = vlaneseq
  %v5246 = vshrl.u32 %v5245, 7
  %v5247 = vsub.s32 0, %v5246
  %v5248 = vrot.slane %v3371, %v5247
  %v5249 = vlaneseq
  %v5250 = vshrl.u32 %v5249, 7
  %v5251 = vsub.s32 0, %v5250
  %v5252 = vrot.slane %v3374, %v5251
  %v5253 = vlaneseq
  %v5254 = vshrl.u32 %v5253, 7
  %v5255 = vsub.s32 0, %v5254
  %v5256 = vrot.slane %v3379, %v5255
  %v5257 = vlaneseq
  %v5258 = vshrl.u32 %v5257, 7
  %v5259 = vsub.s32 0, %v5258
  %v5260 = vrot.slane %v3382, %v5259
  %v5261 = vlaneseq
  %v5262 = vshrl.u32 %v5261, 7
  %v5263 = vsub.s32 0, %v5262
  %v5264 = vrot.slane %v3387, %v5263
  %v5265 = vlaneseq
  %v5266 = vshrl.u32 %v5265, 7
  %v5267 = vsub.s32 0, %v5266
  %v5268 = vrot.slane %v3390, %v5267
  %v5269 = vlaneseq
  %v5270 = vshrl.u32 %v5269, 7
  %v5271 = vsub.s32 0, %v5270
  %v5272 = vrot.slane %v3395, %v5271
  %v5273 = vlaneseq
  %v5274 = vshrl.u32 %v5273, 7
  %v5275 = vsub.s32 0, %v5274
  %v5276 = vrot.slane %v3398, %v5275
  %5341 = vrot.lane.b32.xlu0 %v3401, 96
  %v5342 = vpop.permute.xlu0 %5341
  %5343 = vrot.lane.b32.xlu0 %v3402, 96
  %v5344 = vpop.permute.xlu0 %5343
  %5345 = vrot.lane.b32.xlu0 %v3403, 96
  %v5346 = vpop.permute.xlu0 %5345
  %5347 = vrot.lane.b32.xlu0 %v3404, 96
  %v5348 = vpop.permute.xlu0 %5347
  %5349 = vrot.lane.b32.xlu0 %v3405, 96
  %v5350 = vpop.permute.xlu0 %5349
  %5351 = vrot.lane.b32.xlu0 %v3406, 96
  %v5352 = vpop.permute.xlu0 %5351
  %5353 = vrot.lane.b32.xlu0 %v3407, 96
  %v5354 = vpop.permute.xlu0 %5353
  %5355 = vrot.lane.b32.xlu0 %v3408, 96
  %v5356 = vpop.permute.xlu0 %5355
  %5357 = vrot.lane.b32.xlu0 %v3409, 96
  %v5358 = vpop.permute.xlu0 %5357
  %5359 = vrot.lane.b32.xlu0 %v3410, 96
  %v5360 = vpop.permute.xlu0 %5359
  %5361 = vrot.lane.b32.xlu0 %v3411, 96
  %v5362 = vpop.permute.xlu0 %5361
  %5363 = vrot.lane.b32.xlu0 %v3412, 96
  %v5364 = vpop.permute.xlu0 %5363
  %5365 = vrot.lane.b32.xlu0 %v3413, 96
  %v5366 = vpop.permute.xlu0 %5365
  %5367 = vrot.lane.b32.xlu0 %v3414, 96
  %v5368 = vpop.permute.xlu0 %5367
  %5369 = vrot.lane.b32.xlu0 %v3415, 96
  %v5370 = vpop.permute.xlu0 %5369
  %5371 = vrot.lane.b32.xlu0 %v3416, 96
  %v5372 = vpop.permute.xlu0 %5371
  %5373 = vrot.lane.b32.xlu0 %v3417, 96
  %v5374 = vpop.permute.xlu0 %5373
  %5375 = vrot.lane.b32.xlu0 %v3418, 96
  %v5376 = vpop.permute.xlu0 %5375
  %5377 = vrot.lane.b32.xlu0 %v3419, 96
  %v5378 = vpop.permute.xlu0 %5377
  %5379 = vrot.lane.b32.xlu0 %v3420, 96
  %v5380 = vpop.permute.xlu0 %5379
  %5381 = vrot.lane.b32.xlu0 %v3421, 96
  %v5382 = vpop.permute.xlu0 %5381
  %5383 = vrot.lane.b32.xlu0 %v3422, 96
  %v5384 = vpop.permute.xlu0 %5383
  %5385 = vrot.lane.b32.xlu0 %v3423, 96
  %v5386 = vpop.permute.xlu0 %5385
  %5387 = vrot.lane.b32.xlu0 %v3424, 96
  %v5388 = vpop.permute.xlu0 %5387
  %5389 = vrot.lane.b32.xlu0 %v3425, 96
  %v5390 = vpop.permute.xlu0 %5389
  %5391 = vrot.lane.b32.xlu0 %v3426, 96
  %v5392 = vpop.permute.xlu0 %5391
  %5393 = vrot.lane.b32.xlu0 %v3427, 96
  %v5394 = vpop.permute.xlu0 %5393
  %5395 = vrot.lane.b32.xlu0 %v3428, 96
  %v5396 = vpop.permute.xlu0 %5395
  %5397 = vrot.lane.b32.xlu0 %v3429, 96
  %v5398 = vpop.permute.xlu0 %5397
  %5399 = vrot.lane.b32.xlu0 %v3430, 96
  %v5400 = vpop.permute.xlu0 %5399
  %5401 = vrot.lane.b32.xlu0 %v3431, 96
  %v5402 = vpop.permute.xlu0 %5401
  %5403 = vrot.lane.b32.xlu0 %v3432, 96
  %v5404 = vpop.permute.xlu0 %5403
  %5405 = vrot.lane.b32.xlu0 %v3433, 96
  %v5406 = vpop.permute.xlu0 %5405
  %5407 = vrot.lane.b32.xlu0 %v3434, 96
  %v5408 = vpop.permute.xlu0 %5407
  %5409 = vrot.lane.b32.xlu0 %v3435, 96
  %v5410 = vpop.permute.xlu0 %5409
  %5411 = vrot.lane.b32.xlu0 %v3436, 96
  %v5412 = vpop.permute.xlu0 %5411
  %5413 = vrot.lane.b32.xlu0 %v3437, 96
  %v5414 = vpop.permute.xlu0 %5413
  %5415 = vrot.lane.b32.xlu0 %v3438, 96
  %v5416 = vpop.permute.xlu0 %5415
  %5417 = vrot.lane.b32.xlu0 %v3439, 96
  %v5418 = vpop.permute.xlu0 %5417
  %5419 = vrot.lane.b32.xlu0 %v3440, 96
  %v5420 = vpop.permute.xlu0 %5419
  %5421 = vrot.lane.b32.xlu0 %v3441, 96
  %v5422 = vpop.permute.xlu0 %5421
  %5423 = vrot.lane.b32.xlu0 %v3442, 96
  %v5424 = vpop.permute.xlu0 %5423
  %5425 = vrot.lane.b32.xlu0 %v3443, 96
  %v5426 = vpop.permute.xlu0 %5425
  %5427 = vrot.lane.b32.xlu0 %v3444, 96
  %v5428 = vpop.permute.xlu0 %5427
  %5429 = vrot.lane.b32.xlu0 %v3445, 96
  %v5430 = vpop.permute.xlu0 %5429
  %5431 = vrot.lane.b32.xlu0 %v3446, 96
  %v5432 = vpop.permute.xlu0 %5431
  %5433 = vrot.lane.b32.xlu0 %v3447, 96
  %v5434 = vpop.permute.xlu0 %5433
  %5435 = vrot.lane.b32.xlu0 %v3448, 96
  %v5436 = vpop.permute.xlu0 %5435
  %5437 = vrot.lane.b32.xlu0 %v3449, 96
  %v5438 = vpop.permute.xlu0 %5437
  %5439 = vrot.lane.b32.xlu0 %v3450, 96
  %v5440 = vpop.permute.xlu0 %5439
  %5441 = vrot.lane.b32.xlu0 %v3451, 96
  %v5442 = vpop.permute.xlu0 %5441
  %5443 = vrot.lane.b32.xlu0 %v3452, 96
  %v5444 = vpop.permute.xlu0 %5443
  %5445 = vrot.lane.b32.xlu0 %v3453, 96
  %v5446 = vpop.permute.xlu0 %5445
  %5447 = vrot.lane.b32.xlu0 %v3454, 96
  %v5448 = vpop.permute.xlu0 %5447
  %5449 = vrot.lane.b32.xlu0 %v3455, 96
  %v5450 = vpop.permute.xlu0 %5449
  %5451 = vrot.lane.b32.xlu0 %v3456, 96
  %v5452 = vpop.permute.xlu0 %5451
  %5453 = vrot.lane.b32.xlu0 %v3457, 96
  %v5454 = vpop.permute.xlu0 %5453
  %5455 = vrot.lane.b32.xlu0 %v3458, 96
  %v5456 = vpop.permute.xlu0 %5455
  %5457 = vrot.lane.b32.xlu0 %v3459, 96
  %v5458 = vpop.permute.xlu0 %5457
  %5459 = vrot.lane.b32.xlu0 %v3460, 96
  %v5460 = vpop.permute.xlu0 %5459
  %5461 = vrot.lane.b32.xlu0 %v3461, 96
  %v5462 = vpop.permute.xlu0 %5461
  %5463 = vrot.lane.b32.xlu0 %v3462, 96
  %v5464 = vpop.permute.xlu0 %5463
  %5465 = vrot.lane.b32.xlu0 %v3463, 96
  %v5466 = vpop.permute.xlu0 %5465
  %5467 = vrot.lane.b32.xlu0 %v3464, 96
  %v5468 = vpop.permute.xlu0 %5467
  %v5533 = vmul.f32 %v5024, %v5342
  %v5534 = vmul.f32 %v5028, %v5344
  %v5535 = vmul.f32 %v5032, %v5346
  %v5536 = vmul.f32 %v5036, %v5348
  %v5537 = vmul.f32 %v5040, %v5350
  %v5538 = vmul.f32 %v5044, %v5352
  %v5539 = vmul.f32 %v5048, %v5354
  %v5540 = vmul.f32 %v5052, %v5356
  %v5541 = vmul.f32 %v5056, %v5358
  %v5542 = vmul.f32 %v5060, %v5360
  %v5543 = vmul.f32 %v5064, %v5362
  %v5544 = vmul.f32 %v5068, %v5364
  %v5545 = vmul.f32 %v5072, %v5366
  %v5546 = vmul.f32 %v5076, %v5368
  %v5547 = vmul.f32 %v5080, %v5370
  %v5548 = vmul.f32 %v5084, %v5372
  %v5549 = vmul.f32 %v5088, %v5374
  %v5550 = vmul.f32 %v5092, %v5376
  %v5551 = vmul.f32 %v5096, %v5378
  %v5552 = vmul.f32 %v5100, %v5380
  %v5553 = vmul.f32 %v5104, %v5382
  %v5554 = vmul.f32 %v5108, %v5384
  %v5555 = vmul.f32 %v5112, %v5386
  %v5556 = vmul.f32 %v5116, %v5388
  %v5557 = vmul.f32 %v5120, %v5390
  %v5558 = vmul.f32 %v5124, %v5392
  %v5559 = vmul.f32 %v5128, %v5394
  %v5560 = vmul.f32 %v5132, %v5396
  %v5561 = vmul.f32 %v5136, %v5398
  %v5562 = vmul.f32 %v5140, %v5400
  %v5563 = vmul.f32 %v5144, %v5402
  %v5564 = vmul.f32 %v5148, %v5404
  %v5565 = vmul.f32 %v5152, %v5406
  %v5566 = vmul.f32 %v5156, %v5408
  %v5567 = vmul.f32 %v5160, %v5410
  %v5568 = vmul.f32 %v5164, %v5412
  %v5569 = vmul.f32 %v5168, %v5414
  %v5570 = vmul.f32 %v5172, %v5416
  %v5571 = vmul.f32 %v5176, %v5418
  %v5572 = vmul.f32 %v5180, %v5420
  %v5573 = vmul.f32 %v5184, %v5422
  %v5574 = vmul.f32 %v5188, %v5424
  %v5575 = vmul.f32 %v5192, %v5426
  %v5576 = vmul.f32 %v5196, %v5428
  %v5577 = vmul.f32 %v5200, %v5430
  %v5578 = vmul.f32 %v5204, %v5432
  %v5579 = vmul.f32 %v5208, %v5434
  %v5580 = vmul.f32 %v5212, %v5436
  %v5581 = vmul.f32 %v5216, %v5438
  %v5582 = vmul.f32 %v5220, %v5440
  %v5583 = vmul.f32 %v5224, %v5442
  %v5584 = vmul.f32 %v5228, %v5444
  %v5585 = vmul.f32 %v5232, %v5446
  %v5586 = vmul.f32 %v5236, %v5448
  %v5587 = vmul.f32 %v5240, %v5450
  %v5588 = vmul.f32 %v5244, %v5452
  %v5589 = vmul.f32 %v5248, %v5454
  %v5590 = vmul.f32 %v5252, %v5456
  %v5591 = vmul.f32 %v5256, %v5458
  %v5592 = vmul.f32 %v5260, %v5460
  %v5593 = vmul.f32 %v5264, %v5462
  %v5594 = vmul.f32 %v5268, %v5464
  %v5595 = vmul.f32 %v5272, %v5466
  %v5596 = vmul.f32 %v5276, %v5468
  %5661 = vrot.lane.b32.xlu0 %v2585, 32
  %v5662 = vpop.permute.xlu0 %5661
  %5663 = vrot.lane.b32.xlu0 %v2588, 32
  %v5664 = vpop.permute.xlu0 %5663
  %5665 = vrot.lane.b32.xlu0 %v2593, 32
  %v5666 = vpop.permute.xlu0 %5665
  %5667 = vrot.lane.b32.xlu0 %v2596, 32
  %v5668 = vpop.permute.xlu0 %5667
  %5669 = vrot.lane.b32.xlu0 %v2601, 32
  %v5670 = vpop.permute.xlu0 %5669
  %5671 = vrot.lane.b32.xlu0 %v2604, 32
  %v5672 = vpop.permute.xlu0 %5671
  %5673 = vrot.lane.b32.xlu0 %v2609, 32
  %v5674 = vpop.permute.xlu0 %5673
  %5675 = vrot.lane.b32.xlu0 %v2612, 32
  %v5676 = vpop.permute.xlu0 %5675
  %5677 = vrot.lane.b32.xlu0 %v2617, 32
  %v5678 = vpop.permute.xlu0 %5677
  %5679 = vrot.lane.b32.xlu0 %v2620, 32
  %v5680 = vpop.permute.xlu0 %5679
  %5681 = vrot.lane.b32.xlu0 %v2625, 32
  %v5682 = vpop.permute.xlu0 %5681
  %5683 = vrot.lane.b32.xlu0 %v2628, 32
  %v5684 = vpop.permute.xlu0 %5683
  %5685 = vrot.lane.b32.xlu0 %v2633, 32
  %v5686 = vpop.permute.xlu0 %5685
  %5687 = vrot.lane.b32.xlu0 %v2636, 32
  %v5688 = vpop.permute.xlu0 %5687
  %5689 = vrot.lane.b32.xlu0 %v2641, 32
  %v5690 = vpop.permute.xlu0 %5689
  %5691 = vrot.lane.b32.xlu0 %v2644, 32
  %v5692 = vpop.permute.xlu0 %5691
  %5693 = vrot.lane.b32.xlu0 %v2649, 32
  %v5694 = vpop.permute.xlu0 %5693
  %5695 = vrot.lane.b32.xlu0 %v2652, 32
  %v5696 = vpop.permute.xlu0 %5695
  %5697 = vrot.lane.b32.xlu0 %v2657, 32
  %v5698 = vpop.permute.xlu0 %5697
  %5699 = vrot.lane.b32.xlu0 %v2660, 32
  %v5700 = vpop.permute.xlu0 %5699
  %5701 = vrot.lane.b32.xlu0 %v2665, 32
  %v5702 = vpop.permute.xlu0 %5701
  %5703 = vrot.lane.b32.xlu0 %v2668, 32
  %v5704 = vpop.permute.xlu0 %5703
  %5705 = vrot.lane.b32.xlu0 %v2673, 32
  %v5706 = vpop.permute.xlu0 %5705
  %5707 = vrot.lane.b32.xlu0 %v2676, 32
  %v5708 = vpop.permute.xlu0 %5707
  %5709 = vrot.lane.b32.xlu0 %v2681, 32
  %v5710 = vpop.permute.xlu0 %5709
  %5711 = vrot.lane.b32.xlu0 %v2684, 32
  %v5712 = vpop.permute.xlu0 %5711
  %5713 = vrot.lane.b32.xlu0 %v2689, 32
  %v5714 = vpop.permute.xlu0 %5713
  %5715 = vrot.lane.b32.xlu0 %v2692, 32
  %v5716 = vpop.permute.xlu0 %5715
  %5717 = vrot.lane.b32.xlu0 %v2697, 32
  %v5718 = vpop.permute.xlu0 %5717
  %5719 = vrot.lane.b32.xlu0 %v2700, 32
  %v5720 = vpop.permute.xlu0 %5719
  %5721 = vrot.lane.b32.xlu0 %v2705, 32
  %v5722 = vpop.permute.xlu0 %5721
  %5723 = vrot.lane.b32.xlu0 %v2708, 32
  %v5724 = vpop.permute.xlu0 %5723
  %5725 = vrot.lane.b32.xlu0 %v2713, 32
  %v5726 = vpop.permute.xlu0 %5725
  %5727 = vrot.lane.b32.xlu0 %v2716, 32
  %v5728 = vpop.permute.xlu0 %5727
  %5729 = vrot.lane.b32.xlu0 %v2721, 32
  %v5730 = vpop.permute.xlu0 %5729
  %5731 = vrot.lane.b32.xlu0 %v2724, 32
  %v5732 = vpop.permute.xlu0 %5731
  %5733 = vrot.lane.b32.xlu0 %v2729, 32
  %v5734 = vpop.permute.xlu0 %5733
  %5735 = vrot.lane.b32.xlu0 %v2732, 32
  %v5736 = vpop.permute.xlu0 %5735
  %5737 = vrot.lane.b32.xlu0 %v2737, 32
  %v5738 = vpop.permute.xlu0 %5737
  %5739 = vrot.lane.b32.xlu0 %v2740, 32
  %v5740 = vpop.permute.xlu0 %5739
  %5741 = vrot.lane.b32.xlu0 %v2745, 32
  %v5742 = vpop.permute.xlu0 %5741
  %5743 = vrot.lane.b32.xlu0 %v2748, 32
  %v5744 = vpop.permute.xlu0 %5743
  %5745 = vrot.lane.b32.xlu0 %v2753, 32
  %v5746 = vpop.permute.xlu0 %5745
  %5747 = vrot.lane.b32.xlu0 %v2756, 32
  %v5748 = vpop.permute.xlu0 %5747
  %5749 = vrot.lane.b32.xlu0 %v2761, 32
  %v5750 = vpop.permute.xlu0 %5749
  %5751 = vrot.lane.b32.xlu0 %v2764, 32
  %v5752 = vpop.permute.xlu0 %5751
  %5753 = vrot.lane.b32.xlu0 %v2769, 32
  %v5754 = vpop.permute.xlu0 %5753
  %5755 = vrot.lane.b32.xlu0 %v2772, 32
  %v5756 = vpop.permute.xlu0 %5755
  %5757 = vrot.lane.b32.xlu0 %v2777, 32
  %v5758 = vpop.permute.xlu0 %5757
  %5759 = vrot.lane.b32.xlu0 %v2780, 32
  %v5760 = vpop.permute.xlu0 %5759
  %5761 = vrot.lane.b32.xlu0 %v2785, 32
  %v5762 = vpop.permute.xlu0 %5761
  %5763 = vrot.lane.b32.xlu0 %v2788, 32
  %v5764 = vpop.permute.xlu0 %5763
  %5765 = vrot.lane.b32.xlu0 %v2793, 32
  %v5766 = vpop.permute.xlu0 %5765
  %5767 = vrot.lane.b32.xlu0 %v2796, 32
  %v5768 = vpop.permute.xlu0 %5767
  %5769 = vrot.lane.b32.xlu0 %v2801, 32
  %v5770 = vpop.permute.xlu0 %5769
  %5771 = vrot.lane.b32.xlu0 %v2804, 32
  %v5772 = vpop.permute.xlu0 %5771
  %5773 = vrot.lane.b32.xlu0 %v2809, 32
  %v5774 = vpop.permute.xlu0 %5773
  %5775 = vrot.lane.b32.xlu0 %v2812, 32
  %v5776 = vpop.permute.xlu0 %5775
  %5777 = vrot.lane.b32.xlu0 %v2817, 32
  %v5778 = vpop.permute.xlu0 %5777
  %5779 = vrot.lane.b32.xlu0 %v2820, 32
  %v5780 = vpop.permute.xlu0 %5779
  %5781 = vrot.lane.b32.xlu0 %v2825, 32
  %v5782 = vpop.permute.xlu0 %5781
  %5783 = vrot.lane.b32.xlu0 %v2828, 32
  %v5784 = vpop.permute.xlu0 %5783
  %5785 = vrot.lane.b32.xlu0 %v2833, 32
  %v5786 = vpop.permute.xlu0 %5785
  %5787 = vrot.lane.b32.xlu0 %v2836, 32
  %v5788 = vpop.permute.xlu0 %5787
  %v5853 = vmul.f32 %v5024, %v5662
  %v5854 = vmul.f32 %v5028, %v5664
  %v5855 = vmul.f32 %v5032, %v5666
  %v5856 = vmul.f32 %v5036, %v5668
  %v5857 = vmul.f32 %v5040, %v5670
  %v5858 = vmul.f32 %v5044, %v5672
  %v5859 = vmul.f32 %v5048, %v5674
  %v5860 = vmul.f32 %v5052, %v5676
  %v5861 = vmul.f32 %v5056, %v5678
  %v5862 = vmul.f32 %v5060, %v5680
  %v5863 = vmul.f32 %v5064, %v5682
  %v5864 = vmul.f32 %v5068, %v5684
  %v5865 = vmul.f32 %v5072, %v5686
  %v5866 = vmul.f32 %v5076, %v5688
  %v5867 = vmul.f32 %v5080, %v5690
  %v5868 = vmul.f32 %v5084, %v5692
  %v5869 = vmul.f32 %v5088, %v5694
  %v5870 = vmul.f32 %v5092, %v5696
  %v5871 = vmul.f32 %v5096, %v5698
  %v5872 = vmul.f32 %v5100, %v5700
  %v5873 = vmul.f32 %v5104, %v5702
  %v5874 = vmul.f32 %v5108, %v5704
  %v5875 = vmul.f32 %v5112, %v5706
  %v5876 = vmul.f32 %v5116, %v5708
  %v5877 = vmul.f32 %v5120, %v5710
  %v5878 = vmul.f32 %v5124, %v5712
  %v5879 = vmul.f32 %v5128, %v5714
  %v5880 = vmul.f32 %v5132, %v5716
  %v5881 = vmul.f32 %v5136, %v5718
  %v5882 = vmul.f32 %v5140, %v5720
  %v5883 = vmul.f32 %v5144, %v5722
  %v5884 = vmul.f32 %v5148, %v5724
  %v5885 = vmul.f32 %v5152, %v5726
  %v5886 = vmul.f32 %v5156, %v5728
  %v5887 = vmul.f32 %v5160, %v5730
  %v5888 = vmul.f32 %v5164, %v5732
  %v5889 = vmul.f32 %v5168, %v5734
  %v5890 = vmul.f32 %v5172, %v5736
  %v5891 = vmul.f32 %v5176, %v5738
  %v5892 = vmul.f32 %v5180, %v5740
  %v5893 = vmul.f32 %v5184, %v5742
  %v5894 = vmul.f32 %v5188, %v5744
  %v5895 = vmul.f32 %v5192, %v5746
  %v5896 = vmul.f32 %v5196, %v5748
  %v5897 = vmul.f32 %v5200, %v5750
  %v5898 = vmul.f32 %v5204, %v5752
  %v5899 = vmul.f32 %v5208, %v5754
  %v5900 = vmul.f32 %v5212, %v5756
  %v5901 = vmul.f32 %v5216, %v5758
  %v5902 = vmul.f32 %v5220, %v5760
  %v5903 = vmul.f32 %v5224, %v5762
  %v5904 = vmul.f32 %v5228, %v5764
  %v5905 = vmul.f32 %v5232, %v5766
  %v5906 = vmul.f32 %v5236, %v5768
  %v5907 = vmul.f32 %v5240, %v5770
  %v5908 = vmul.f32 %v5244, %v5772
  %v5909 = vmul.f32 %v5248, %v5774
  %v5910 = vmul.f32 %v5252, %v5776
  %v5911 = vmul.f32 %v5256, %v5778
  %v5912 = vmul.f32 %v5260, %v5780
  %v5913 = vmul.f32 %v5264, %v5782
  %v5914 = vmul.f32 %v5268, %v5784
  %v5915 = vmul.f32 %v5272, %v5786
  %v5916 = vmul.f32 %v5276, %v5788
  %5981 = vrot.lane.b32.xlu0 %v5853, 96
  %v5982 = vpop.permute.xlu0 %5981
  %5983 = vrot.lane.b32.xlu0 %v5854, 96
  %v5984 = vpop.permute.xlu0 %5983
  %5985 = vrot.lane.b32.xlu0 %v5855, 96
  %v5986 = vpop.permute.xlu0 %5985
  %5987 = vrot.lane.b32.xlu0 %v5856, 96
  %v5988 = vpop.permute.xlu0 %5987
  %5989 = vrot.lane.b32.xlu0 %v5857, 96
  %v5990 = vpop.permute.xlu0 %5989
  %5991 = vrot.lane.b32.xlu0 %v5858, 96
  %v5992 = vpop.permute.xlu0 %5991
  %5993 = vrot.lane.b32.xlu0 %v5859, 96
  %v5994 = vpop.permute.xlu0 %5993
  %5995 = vrot.lane.b32.xlu0 %v5860, 96
  %v5996 = vpop.permute.xlu0 %5995
  %5997 = vrot.lane.b32.xlu0 %v5861, 96
  %v5998 = vpop.permute.xlu0 %5997
  %5999 = vrot.lane.b32.xlu0 %v5862, 96
  %v6000 = vpop.permute.xlu0 %5999
  %6001 = vrot.lane.b32.xlu0 %v5863, 96
  %v6002 = vpop.permute.xlu0 %6001
  %6003 = vrot.lane.b32.xlu0 %v5864, 96
  %v6004 = vpop.permute.xlu0 %6003
  %6005 = vrot.lane.b32.xlu0 %v5865, 96
  %v6006 = vpop.permute.xlu0 %6005
  %6007 = vrot.lane.b32.xlu0 %v5866, 96
  %v6008 = vpop.permute.xlu0 %6007
  %6009 = vrot.lane.b32.xlu0 %v5867, 96
  %v6010 = vpop.permute.xlu0 %6009
  %6011 = vrot.lane.b32.xlu0 %v5868, 96
  %v6012 = vpop.permute.xlu0 %6011
  %6013 = vrot.lane.b32.xlu0 %v5869, 96
  %v6014 = vpop.permute.xlu0 %6013
  %6015 = vrot.lane.b32.xlu0 %v5870, 96
  %v6016 = vpop.permute.xlu0 %6015
  %6017 = vrot.lane.b32.xlu0 %v5871, 96
  %v6018 = vpop.permute.xlu0 %6017
  %6019 = vrot.lane.b32.xlu0 %v5872, 96
  %v6020 = vpop.permute.xlu0 %6019
  %6021 = vrot.lane.b32.xlu0 %v5873, 96
  %v6022 = vpop.permute.xlu0 %6021
  %6023 = vrot.lane.b32.xlu0 %v5874, 96
  %v6024 = vpop.permute.xlu0 %6023
  %6025 = vrot.lane.b32.xlu0 %v5875, 96
  %v6026 = vpop.permute.xlu0 %6025
  %6027 = vrot.lane.b32.xlu0 %v5876, 96
  %v6028 = vpop.permute.xlu0 %6027
  %6029 = vrot.lane.b32.xlu0 %v5877, 96
  %v6030 = vpop.permute.xlu0 %6029
  %6031 = vrot.lane.b32.xlu0 %v5878, 96
  %v6032 = vpop.permute.xlu0 %6031
  %6033 = vrot.lane.b32.xlu0 %v5879, 96
  %v6034 = vpop.permute.xlu0 %6033
  %6035 = vrot.lane.b32.xlu0 %v5880, 96
  %v6036 = vpop.permute.xlu0 %6035
  %6037 = vrot.lane.b32.xlu0 %v5881, 96
  %v6038 = vpop.permute.xlu0 %6037
  %6039 = vrot.lane.b32.xlu0 %v5882, 96
  %v6040 = vpop.permute.xlu0 %6039
  %6041 = vrot.lane.b32.xlu0 %v5883, 96
  %v6042 = vpop.permute.xlu0 %6041
  %6043 = vrot.lane.b32.xlu0 %v5884, 96
  %v6044 = vpop.permute.xlu0 %6043
  %6045 = vrot.lane.b32.xlu0 %v5885, 96
  %v6046 = vpop.permute.xlu0 %6045
  %6047 = vrot.lane.b32.xlu0 %v5886, 96
  %v6048 = vpop.permute.xlu0 %6047
  %6049 = vrot.lane.b32.xlu0 %v5887, 96
  %v6050 = vpop.permute.xlu0 %6049
  %6051 = vrot.lane.b32.xlu0 %v5888, 96
  %v6052 = vpop.permute.xlu0 %6051
  %6053 = vrot.lane.b32.xlu0 %v5889, 96
  %v6054 = vpop.permute.xlu0 %6053
  %6055 = vrot.lane.b32.xlu0 %v5890, 96
  %v6056 = vpop.permute.xlu0 %6055
  %6057 = vrot.lane.b32.xlu0 %v5891, 96
  %v6058 = vpop.permute.xlu0 %6057
  %6059 = vrot.lane.b32.xlu0 %v5892, 96
  %v6060 = vpop.permute.xlu0 %6059
  %6061 = vrot.lane.b32.xlu0 %v5893, 96
  %v6062 = vpop.permute.xlu0 %6061
  %6063 = vrot.lane.b32.xlu0 %v5894, 96
  %v6064 = vpop.permute.xlu0 %6063
  %6065 = vrot.lane.b32.xlu0 %v5895, 96
  %v6066 = vpop.permute.xlu0 %6065
  %6067 = vrot.lane.b32.xlu0 %v5896, 96
  %v6068 = vpop.permute.xlu0 %6067
  %6069 = vrot.lane.b32.xlu0 %v5897, 96
  %v6070 = vpop.permute.xlu0 %6069
  %6071 = vrot.lane.b32.xlu0 %v5898, 96
  %v6072 = vpop.permute.xlu0 %6071
  %6073 = vrot.lane.b32.xlu0 %v5899, 96
  %v6074 = vpop.permute.xlu0 %6073
  %6075 = vrot.lane.b32.xlu0 %v5900, 96
  %v6076 = vpop.permute.xlu0 %6075
  %6077 = vrot.lane.b32.xlu0 %v5901, 96
  %v6078 = vpop.permute.xlu0 %6077
  %6079 = vrot.lane.b32.xlu0 %v5902, 96
  %v6080 = vpop.permute.xlu0 %6079
  %6081 = vrot.lane.b32.xlu0 %v5903, 96
  %v6082 = vpop.permute.xlu0 %6081
  %6083 = vrot.lane.b32.xlu0 %v5904, 96
  %v6084 = vpop.permute.xlu0 %6083
  %6085 = vrot.lane.b32.xlu0 %v5905, 96
  %v6086 = vpop.permute.xlu0 %6085
  %6087 = vrot.lane.b32.xlu0 %v5906, 96
  %v6088 = vpop.permute.xlu0 %6087
  %6089 = vrot.lane.b32.xlu0 %v5907, 96
  %v6090 = vpop.permute.xlu0 %6089
  %6091 = vrot.lane.b32.xlu0 %v5908, 96
  %v6092 = vpop.permute.xlu0 %6091
  %6093 = vrot.lane.b32.xlu0 %v5909, 96
  %v6094 = vpop.permute.xlu0 %6093
  %6095 = vrot.lane.b32.xlu0 %v5910, 96
  %v6096 = vpop.permute.xlu0 %6095
  %6097 = vrot.lane.b32.xlu0 %v5911, 96
  %v6098 = vpop.permute.xlu0 %6097
  %6099 = vrot.lane.b32.xlu0 %v5912, 96
  %v6100 = vpop.permute.xlu0 %6099
  %6101 = vrot.lane.b32.xlu0 %v5913, 96
  %v6102 = vpop.permute.xlu0 %6101
  %6103 = vrot.lane.b32.xlu0 %v5914, 96
  %v6104 = vpop.permute.xlu0 %6103
  %6105 = vrot.lane.b32.xlu0 %v5915, 96
  %v6106 = vpop.permute.xlu0 %6105
  %6107 = vrot.lane.b32.xlu0 %v5916, 96
  %v6108 = vpop.permute.xlu0 %6107
  %v6173 = vadd.f32 %v5533, %v5982
  %v6174 = vadd.f32 %v5534, %v5984
  %v6175 = vadd.f32 %v5535, %v5986
  %v6176 = vadd.f32 %v5536, %v5988
  %v6177 = vadd.f32 %v5537, %v5990
  %v6178 = vadd.f32 %v5538, %v5992
  %v6179 = vadd.f32 %v5539, %v5994
  %v6180 = vadd.f32 %v5540, %v5996
  %v6181 = vadd.f32 %v5541, %v5998
  %v6182 = vadd.f32 %v5542, %v6000
  %v6183 = vadd.f32 %v5543, %v6002
  %v6184 = vadd.f32 %v5544, %v6004
  %v6185 = vadd.f32 %v5545, %v6006
  %v6186 = vadd.f32 %v5546, %v6008
  %v6187 = vadd.f32 %v5547, %v6010
  %v6188 = vadd.f32 %v5548, %v6012
  %v6189 = vadd.f32 %v5549, %v6014
  %v6190 = vadd.f32 %v5550, %v6016
  %v6191 = vadd.f32 %v5551, %v6018
  %v6192 = vadd.f32 %v5552, %v6020
  %v6193 = vadd.f32 %v5553, %v6022
  %v6194 = vadd.f32 %v5554, %v6024
  %v6195 = vadd.f32 %v5555, %v6026
  %v6196 = vadd.f32 %v5556, %v6028
  %v6197 = vadd.f32 %v5557, %v6030
  %v6198 = vadd.f32 %v5558, %v6032
  %v6199 = vadd.f32 %v5559, %v6034
  %v6200 = vadd.f32 %v5560, %v6036
  %v6201 = vadd.f32 %v5561, %v6038
  %v6202 = vadd.f32 %v5562, %v6040
  %v6203 = vadd.f32 %v5563, %v6042
  %v6204 = vadd.f32 %v5564, %v6044
  %v6205 = vadd.f32 %v5565, %v6046
  %v6206 = vadd.f32 %v5566, %v6048
  %v6207 = vadd.f32 %v5567, %v6050
  %v6208 = vadd.f32 %v5568, %v6052
  %v6209 = vadd.f32 %v5569, %v6054
  %v6210 = vadd.f32 %v5570, %v6056
  %v6211 = vadd.f32 %v5571, %v6058
  %v6212 = vadd.f32 %v5572, %v6060
  %v6213 = vadd.f32 %v5573, %v6062
  %v6214 = vadd.f32 %v5574, %v6064
  %v6215 = vadd.f32 %v5575, %v6066
  %v6216 = vadd.f32 %v5576, %v6068
  %v6217 = vadd.f32 %v5577, %v6070
  %v6218 = vadd.f32 %v5578, %v6072
  %v6219 = vadd.f32 %v5579, %v6074
  %v6220 = vadd.f32 %v5580, %v6076
  %v6221 = vadd.f32 %v5581, %v6078
  %v6222 = vadd.f32 %v5582, %v6080
  %v6223 = vadd.f32 %v5583, %v6082
  %v6224 = vadd.f32 %v5584, %v6084
  %v6225 = vadd.f32 %v5585, %v6086
  %v6226 = vadd.f32 %v5586, %v6088
  %v6227 = vadd.f32 %v5587, %v6090
  %v6228 = vadd.f32 %v5588, %v6092
  %v6229 = vadd.f32 %v5589, %v6094
  %v6230 = vadd.f32 %v5590, %v6096
  %v6231 = vadd.f32 %v5591, %v6098
  %v6232 = vadd.f32 %v5592, %v6100
  %v6233 = vadd.f32 %v5593, %v6102
  %v6234 = vadd.f32 %v5594, %v6104
  %v6235 = vadd.f32 %v5595, %v6106
  %v6236 = vadd.f32 %v5596, %v6108
  %v6237 = vmul.f32 %v5024, %v4957
  %v6238 = vmul.f32 %v5028, %v4958
  %v6239 = vmul.f32 %v5032, %v4959
  %v6240 = vmul.f32 %v5036, %v4960
  %v6241 = vmul.f32 %v5040, %v4961
  %v6242 = vmul.f32 %v5044, %v4962
  %v6243 = vmul.f32 %v5048, %v4963
  %v6244 = vmul.f32 %v5052, %v4964
  %v6245 = vmul.f32 %v5056, %v4965
  %v6246 = vmul.f32 %v5060, %v4966
  %v6247 = vmul.f32 %v5064, %v4967
  %v6248 = vmul.f32 %v5068, %v4968
  %v6249 = vmul.f32 %v5072, %v4969
  %v6250 = vmul.f32 %v5076, %v4970
  %v6251 = vmul.f32 %v5080, %v4971
  %v6252 = vmul.f32 %v5084, %v4972
  %v6253 = vmul.f32 %v5088, %v4973
  %v6254 = vmul.f32 %v5092, %v4974
  %v6255 = vmul.f32 %v5096, %v4975
  %v6256 = vmul.f32 %v5100, %v4976
  %v6257 = vmul.f32 %v5104, %v4977
  %v6258 = vmul.f32 %v5108, %v4978
  %v6259 = vmul.f32 %v5112, %v4979
  %v6260 = vmul.f32 %v5116, %v4980
  %v6261 = vmul.f32 %v5120, %v4981
  %v6262 = vmul.f32 %v5124, %v4982
  %v6263 = vmul.f32 %v5128, %v4983
  %v6264 = vmul.f32 %v5132, %v4984
  %v6265 = vmul.f32 %v5136, %v4985
  %v6266 = vmul.f32 %v5140, %v4986
  %v6267 = vmul.f32 %v5144, %v4987
  %v6268 = vmul.f32 %v5148, %v4988
  %v6269 = vmul.f32 %v5152, %v4989
  %v6270 = vmul.f32 %v5156, %v4990
  %v6271 = vmul.f32 %v5160, %v4991
  %v6272 = vmul.f32 %v5164, %v4992
  %v6273 = vmul.f32 %v5168, %v4993
  %v6274 = vmul.f32 %v5172, %v4994
  %v6275 = vmul.f32 %v5176, %v4995
  %v6276 = vmul.f32 %v5180, %v4996
  %v6277 = vmul.f32 %v5184, %v4997
  %v6278 = vmul.f32 %v5188, %v4998
  %v6279 = vmul.f32 %v5192, %v4999
  %v6280 = vmul.f32 %v5196, %v5000
  %v6281 = vmul.f32 %v5200, %v5001
  %v6282 = vmul.f32 %v5204, %v5002
  %v6283 = vmul.f32 %v5208, %v5003
  %v6284 = vmul.f32 %v5212, %v5004
  %v6285 = vmul.f32 %v5216, %v5005
  %v6286 = vmul.f32 %v5220, %v5006
  %v6287 = vmul.f32 %v5224, %v5007
  %v6288 = vmul.f32 %v5228, %v5008
  %v6289 = vmul.f32 %v5232, %v5009
  %v6290 = vmul.f32 %v5236, %v5010
  %v6291 = vmul.f32 %v5240, %v5011
  %v6292 = vmul.f32 %v5244, %v5012
  %v6293 = vmul.f32 %v5248, %v5013
  %v6294 = vmul.f32 %v5252, %v5014
  %v6295 = vmul.f32 %v5256, %v5015
  %v6296 = vmul.f32 %v5260, %v5016
  %v6297 = vmul.f32 %v5264, %v5017
  %v6298 = vmul.f32 %v5268, %v5018
  %v6299 = vmul.f32 %v5272, %v5019
  %v6300 = vmul.f32 %v5276, %v5020
  %6365 = vrot.lane.b32.xlu0 %v6237, 32
  %v6366 = vpop.permute.xlu0 %6365
  %6367 = vrot.lane.b32.xlu0 %v6238, 32
  %v6368 = vpop.permute.xlu0 %6367
  %6369 = vrot.lane.b32.xlu0 %v6239, 32
  %v6370 = vpop.permute.xlu0 %6369
  %6371 = vrot.lane.b32.xlu0 %v6240, 32
  %v6372 = vpop.permute.xlu0 %6371
  %6373 = vrot.lane.b32.xlu0 %v6241, 32
  %v6374 = vpop.permute.xlu0 %6373
  %6375 = vrot.lane.b32.xlu0 %v6242, 32
  %v6376 = vpop.permute.xlu0 %6375
  %6377 = vrot.lane.b32.xlu0 %v6243, 32
  %v6378 = vpop.permute.xlu0 %6377
  %6379 = vrot.lane.b32.xlu0 %v6244, 32
  %v6380 = vpop.permute.xlu0 %6379
  %6381 = vrot.lane.b32.xlu0 %v6245, 32
  %v6382 = vpop.permute.xlu0 %6381
  %6383 = vrot.lane.b32.xlu0 %v6246, 32
  %v6384 = vpop.permute.xlu0 %6383
  %6385 = vrot.lane.b32.xlu0 %v6247, 32
  %v6386 = vpop.permute.xlu0 %6385
  %6387 = vrot.lane.b32.xlu0 %v6248, 32
  %v6388 = vpop.permute.xlu0 %6387
  %6389 = vrot.lane.b32.xlu0 %v6249, 32
  %v6390 = vpop.permute.xlu0 %6389
  %6391 = vrot.lane.b32.xlu0 %v6250, 32
  %v6392 = vpop.permute.xlu0 %6391
  %6393 = vrot.lane.b32.xlu0 %v6251, 32
  %v6394 = vpop.permute.xlu0 %6393
  %6395 = vrot.lane.b32.xlu0 %v6252, 32
  %v6396 = vpop.permute.xlu0 %6395
  %6397 = vrot.lane.b32.xlu0 %v6253, 32
  %v6398 = vpop.permute.xlu0 %6397
  %6399 = vrot.lane.b32.xlu0 %v6254, 32
  %v6400 = vpop.permute.xlu0 %6399
  %6401 = vrot.lane.b32.xlu0 %v6255, 32
  %v6402 = vpop.permute.xlu0 %6401
  %6403 = vrot.lane.b32.xlu0 %v6256, 32
  %v6404 = vpop.permute.xlu0 %6403
  %6405 = vrot.lane.b32.xlu0 %v6257, 32
  %v6406 = vpop.permute.xlu0 %6405
  %6407 = vrot.lane.b32.xlu0 %v6258, 32
  %v6408 = vpop.permute.xlu0 %6407
  %6409 = vrot.lane.b32.xlu0 %v6259, 32
  %v6410 = vpop.permute.xlu0 %6409
  %6411 = vrot.lane.b32.xlu0 %v6260, 32
  %v6412 = vpop.permute.xlu0 %6411
  %6413 = vrot.lane.b32.xlu0 %v6261, 32
  %v6414 = vpop.permute.xlu0 %6413
  %6415 = vrot.lane.b32.xlu0 %v6262, 32
  %v6416 = vpop.permute.xlu0 %6415
  %6417 = vrot.lane.b32.xlu0 %v6263, 32
  %v6418 = vpop.permute.xlu0 %6417
  %6419 = vrot.lane.b32.xlu0 %v6264, 32
  %v6420 = vpop.permute.xlu0 %6419
  %6421 = vrot.lane.b32.xlu0 %v6265, 32
  %v6422 = vpop.permute.xlu0 %6421
  %6423 = vrot.lane.b32.xlu0 %v6266, 32
  %v6424 = vpop.permute.xlu0 %6423
  %6425 = vrot.lane.b32.xlu0 %v6267, 32
  %v6426 = vpop.permute.xlu0 %6425
  %6427 = vrot.lane.b32.xlu0 %v6268, 32
  %v6428 = vpop.permute.xlu0 %6427
  %6429 = vrot.lane.b32.xlu0 %v6269, 32
  %v6430 = vpop.permute.xlu0 %6429
  %6431 = vrot.lane.b32.xlu0 %v6270, 32
  %v6432 = vpop.permute.xlu0 %6431
  %6433 = vrot.lane.b32.xlu0 %v6271, 32
  %v6434 = vpop.permute.xlu0 %6433
  %6435 = vrot.lane.b32.xlu0 %v6272, 32
  %v6436 = vpop.permute.xlu0 %6435
  %6437 = vrot.lane.b32.xlu0 %v6273, 32
  %v6438 = vpop.permute.xlu0 %6437
  %6439 = vrot.lane.b32.xlu0 %v6274, 32
  %v6440 = vpop.permute.xlu0 %6439
  %6441 = vrot.lane.b32.xlu0 %v6275, 32
  %v6442 = vpop.permute.xlu0 %6441
  %6443 = vrot.lane.b32.xlu0 %v6276, 32
  %v6444 = vpop.permute.xlu0 %6443
  %6445 = vrot.lane.b32.xlu0 %v6277, 32
  %v6446 = vpop.permute.xlu0 %6445
  %6447 = vrot.lane.b32.xlu0 %v6278, 32
  %v6448 = vpop.permute.xlu0 %6447
  %6449 = vrot.lane.b32.xlu0 %v6279, 32
  %v6450 = vpop.permute.xlu0 %6449
  %6451 = vrot.lane.b32.xlu0 %v6280, 32
  %v6452 = vpop.permute.xlu0 %6451
  %6453 = vrot.lane.b32.xlu0 %v6281, 32
  %v6454 = vpop.permute.xlu0 %6453
  %6455 = vrot.lane.b32.xlu0 %v6282, 32
  %v6456 = vpop.permute.xlu0 %6455
  %6457 = vrot.lane.b32.xlu0 %v6283, 32
  %v6458 = vpop.permute.xlu0 %6457
  %6459 = vrot.lane.b32.xlu0 %v6284, 32
  %v6460 = vpop.permute.xlu0 %6459
  %6461 = vrot.lane.b32.xlu0 %v6285, 32
  %v6462 = vpop.permute.xlu0 %6461
  %6463 = vrot.lane.b32.xlu0 %v6286, 32
  %v6464 = vpop.permute.xlu0 %6463
  %6465 = vrot.lane.b32.xlu0 %v6287, 32
  %v6466 = vpop.permute.xlu0 %6465
  %6467 = vrot.lane.b32.xlu0 %v6288, 32
  %v6468 = vpop.permute.xlu0 %6467
  %6469 = vrot.lane.b32.xlu0 %v6289, 32
  %v6470 = vpop.permute.xlu0 %6469
  %6471 = vrot.lane.b32.xlu0 %v6290, 32
  %v6472 = vpop.permute.xlu0 %6471
  %6473 = vrot.lane.b32.xlu0 %v6291, 32
  %v6474 = vpop.permute.xlu0 %6473
  %6475 = vrot.lane.b32.xlu0 %v6292, 32
  %v6476 = vpop.permute.xlu0 %6475
  %6477 = vrot.lane.b32.xlu0 %v6293, 32
  %v6478 = vpop.permute.xlu0 %6477
  %6479 = vrot.lane.b32.xlu0 %v6294, 32
  %v6480 = vpop.permute.xlu0 %6479
  %6481 = vrot.lane.b32.xlu0 %v6295, 32
  %v6482 = vpop.permute.xlu0 %6481
  %6483 = vrot.lane.b32.xlu0 %v6296, 32
  %v6484 = vpop.permute.xlu0 %6483
  %6485 = vrot.lane.b32.xlu0 %v6297, 32
  %v6486 = vpop.permute.xlu0 %6485
  %6487 = vrot.lane.b32.xlu0 %v6298, 32
  %v6488 = vpop.permute.xlu0 %6487
  %6489 = vrot.lane.b32.xlu0 %v6299, 32
  %v6490 = vpop.permute.xlu0 %6489
  %6491 = vrot.lane.b32.xlu0 %v6300, 32
  %v6492 = vpop.permute.xlu0 %6491
  %v6557 = vsel %vm3015, %v6173, %v6366
  %v6558 = vsel %vm3015, %v6174, %v6368
  %v6559 = vsel %vm3015, %v6175, %v6370
  %v6560 = vsel %vm3015, %v6176, %v6372
  %v6561 = vsel %vm3015, %v6177, %v6374
  %v6562 = vsel %vm3015, %v6178, %v6376
  %v6563 = vsel %vm3015, %v6179, %v6378
  %v6564 = vsel %vm3015, %v6180, %v6380
  %v6565 = vsel %vm3015, %v6181, %v6382
  %v6566 = vsel %vm3015, %v6182, %v6384
  %v6567 = vsel %vm3015, %v6183, %v6386
  %v6568 = vsel %vm3015, %v6184, %v6388
  %v6569 = vsel %vm3015, %v6185, %v6390
  %v6570 = vsel %vm3015, %v6186, %v6392
  %v6571 = vsel %vm3015, %v6187, %v6394
  %v6572 = vsel %vm3015, %v6188, %v6396
  %v6573 = vsel %vm3015, %v6189, %v6398
  %v6574 = vsel %vm3015, %v6190, %v6400
  %v6575 = vsel %vm3015, %v6191, %v6402
  %v6576 = vsel %vm3015, %v6192, %v6404
  %v6577 = vsel %vm3015, %v6193, %v6406
  %v6578 = vsel %vm3015, %v6194, %v6408
  %v6579 = vsel %vm3015, %v6195, %v6410
  %v6580 = vsel %vm3015, %v6196, %v6412
  %v6581 = vsel %vm3015, %v6197, %v6414
  %v6582 = vsel %vm3015, %v6198, %v6416
  %v6583 = vsel %vm3015, %v6199, %v6418
  %v6584 = vsel %vm3015, %v6200, %v6420
  %v6585 = vsel %vm3015, %v6201, %v6422
  %v6586 = vsel %vm3015, %v6202, %v6424
  %v6587 = vsel %vm3015, %v6203, %v6426
  %v6588 = vsel %vm3015, %v6204, %v6428
  %v6589 = vsel %vm3015, %v6205, %v6430
  %v6590 = vsel %vm3015, %v6206, %v6432
  %v6591 = vsel %vm3015, %v6207, %v6434
  %v6592 = vsel %vm3015, %v6208, %v6436
  %v6593 = vsel %vm3015, %v6209, %v6438
  %v6594 = vsel %vm3015, %v6210, %v6440
  %v6595 = vsel %vm3015, %v6211, %v6442
  %v6596 = vsel %vm3015, %v6212, %v6444
  %v6597 = vsel %vm3015, %v6213, %v6446
  %v6598 = vsel %vm3015, %v6214, %v6448
  %v6599 = vsel %vm3015, %v6215, %v6450
  %v6600 = vsel %vm3015, %v6216, %v6452
  %v6601 = vsel %vm3015, %v6217, %v6454
  %v6602 = vsel %vm3015, %v6218, %v6456
  %v6603 = vsel %vm3015, %v6219, %v6458
  %v6604 = vsel %vm3015, %v6220, %v6460
  %v6605 = vsel %vm3015, %v6221, %v6462
  %v6606 = vsel %vm3015, %v6222, %v6464
  %v6607 = vsel %vm3015, %v6223, %v6466
  %v6608 = vsel %vm3015, %v6224, %v6468
  %v6609 = vsel %vm3015, %v6225, %v6470
  %v6610 = vsel %vm3015, %v6226, %v6472
  %v6611 = vsel %vm3015, %v6227, %v6474
  %v6612 = vsel %vm3015, %v6228, %v6476
  %v6613 = vsel %vm3015, %v6229, %v6478
  %v6614 = vsel %vm3015, %v6230, %v6480
  %v6615 = vsel %vm3015, %v6231, %v6482
  %v6616 = vsel %vm3015, %v6232, %v6484
  %v6617 = vsel %vm3015, %v6233, %v6486
  %v6618 = vsel %vm3015, %v6234, %v6488
  %v6619 = vsel %vm3015, %v6235, %v6490
  %v6620 = vsel %vm3015, %v6236, %v6492
  %v6621 = vpack.c.bf16 %v6557, %v6557
  %v6622 = vpack.c.bf16 %v6558, %v6558
  %v6623 = vpack.c.bf16 %v6559, %v6559
  %v6624 = vpack.c.bf16 %v6560, %v6560
  %v6625 = vpack.c.bf16 %v6561, %v6561
  %v6626 = vpack.c.bf16 %v6562, %v6562
  %v6627 = vpack.c.bf16 %v6563, %v6563
  %v6628 = vpack.c.bf16 %v6564, %v6564
  %v6629 = vpack.c.bf16 %v6565, %v6565
  %v6630 = vpack.c.bf16 %v6566, %v6566
  %v6631 = vpack.c.bf16 %v6567, %v6567
  %v6632 = vpack.c.bf16 %v6568, %v6568
  %v6633 = vpack.c.bf16 %v6569, %v6569
  %v6634 = vpack.c.bf16 %v6570, %v6570
  %v6635 = vpack.c.bf16 %v6571, %v6571
  %v6636 = vpack.c.bf16 %v6572, %v6572
  %v6637 = vpack.c.bf16 %v6573, %v6573
  %v6638 = vpack.c.bf16 %v6574, %v6574
  %v6639 = vpack.c.bf16 %v6575, %v6575
  %v6640 = vpack.c.bf16 %v6576, %v6576
  %v6641 = vpack.c.bf16 %v6577, %v6577
  %v6642 = vpack.c.bf16 %v6578, %v6578
  %v6643 = vpack.c.bf16 %v6579, %v6579
  %v6644 = vpack.c.bf16 %v6580, %v6580
  %v6645 = vpack.c.bf16 %v6581, %v6581
  %v6646 = vpack.c.bf16 %v6582, %v6582
  %v6647 = vpack.c.bf16 %v6583, %v6583
  %v6648 = vpack.c.bf16 %v6584, %v6584
  %v6649 = vpack.c.bf16 %v6585, %v6585
  %v6650 = vpack.c.bf16 %v6586, %v6586
  %v6651 = vpack.c.bf16 %v6587, %v6587
  %v6652 = vpack.c.bf16 %v6588, %v6588
  %v6653 = vpack.c.bf16 %v6589, %v6589
  %v6654 = vpack.c.bf16 %v6590, %v6590
  %v6655 = vpack.c.bf16 %v6591, %v6591
  %v6656 = vpack.c.bf16 %v6592, %v6592
  %v6657 = vpack.c.bf16 %v6593, %v6593
  %v6658 = vpack.c.bf16 %v6594, %v6594
  %v6659 = vpack.c.bf16 %v6595, %v6595
  %v6660 = vpack.c.bf16 %v6596, %v6596
  %v6661 = vpack.c.bf16 %v6597, %v6597
  %v6662 = vpack.c.bf16 %v6598, %v6598
  %v6663 = vpack.c.bf16 %v6599, %v6599
  %v6664 = vpack.c.bf16 %v6600, %v6600
  %v6665 = vpack.c.bf16 %v6601, %v6601
  %v6666 = vpack.c.bf16 %v6602, %v6602
  %v6667 = vpack.c.bf16 %v6603, %v6603
  %v6668 = vpack.c.bf16 %v6604, %v6604
  %v6669 = vpack.c.bf16 %v6605, %v6605
  %v6670 = vpack.c.bf16 %v6606, %v6606
  %v6671 = vpack.c.bf16 %v6607, %v6607
  %v6672 = vpack.c.bf16 %v6608, %v6608
  %v6673 = vpack.c.bf16 %v6609, %v6609
  %v6674 = vpack.c.bf16 %v6610, %v6610
  %v6675 = vpack.c.bf16 %v6611, %v6611
  %v6676 = vpack.c.bf16 %v6612, %v6612
  %v6677 = vpack.c.bf16 %v6613, %v6613
  %v6678 = vpack.c.bf16 %v6614, %v6614
  %v6679 = vpack.c.bf16 %v6615, %v6615
  %v6680 = vpack.c.bf16 %v6616, %v6616
  %v6681 = vpack.c.bf16 %v6617, %v6617
  %v6682 = vpack.c.bf16 %v6618, %v6618
  %v6683 = vpack.c.bf16 %v6619, %v6619
  %v6684 = vpack.c.bf16 %v6620, %v6620
  %v6685 = vld [vmem:[%s11] sm:$0xf]
  %v6686 = vld [vmem:[%s11 + $0x4] sm:$0xf]
  %v6687 = vld [vmem:[%s11 + $0x8] sm:$0xf]
  %v6688 = vld [vmem:[%s11 + $0xc] sm:$0xf]
  %v6689 = vld [vmem:[%s11 + $0x10] sm:$0xf]
  %v6690 = vld [vmem:[%s11 + $0x14] sm:$0xf]
  %v6691 = vld [vmem:[%s11 + $0x18] sm:$0xf]
  %v6692 = vld [vmem:[%s11 + $0x1c] sm:$0xf]
  %v6757 = vunpack.c.l.b16 %v6621
  %v6758 = vunpack.c.l.b16 %v6622
  %v6759 = vunpack.c.l.b16 %v6623
  %v6760 = vunpack.c.l.b16 %v6624
  %v6761 = vunpack.c.l.b16 %v6625
  %v6762 = vunpack.c.l.b16 %v6626
  %v6763 = vunpack.c.l.b16 %v6627
  %v6764 = vunpack.c.l.b16 %v6628
  %v6765 = vunpack.c.l.b16 %v6629
  %v6766 = vunpack.c.l.b16 %v6630
  %v6767 = vunpack.c.l.b16 %v6631
  %v6768 = vunpack.c.l.b16 %v6632
  %v6769 = vunpack.c.l.b16 %v6633
  %v6770 = vunpack.c.l.b16 %v6634
  %v6771 = vunpack.c.l.b16 %v6635
  %v6772 = vunpack.c.l.b16 %v6636
  %v6773 = vunpack.c.l.b16 %v6637
  %v6774 = vunpack.c.l.b16 %v6638
  %v6775 = vunpack.c.l.b16 %v6639
  %v6776 = vunpack.c.l.b16 %v6640
  %v6777 = vunpack.c.l.b16 %v6641
  %v6778 = vunpack.c.l.b16 %v6642
  %v6779 = vunpack.c.l.b16 %v6643
  %v6780 = vunpack.c.l.b16 %v6644
  %v6781 = vunpack.c.l.b16 %v6645
  %v6782 = vunpack.c.l.b16 %v6646
  %v6783 = vunpack.c.l.b16 %v6647
  %v6784 = vunpack.c.l.b16 %v6648
  %v6785 = vunpack.c.l.b16 %v6649
  %v6786 = vunpack.c.l.b16 %v6650
  %v6787 = vunpack.c.l.b16 %v6651
  %v6788 = vunpack.c.l.b16 %v6652
  %v6789 = vunpack.c.l.b16 %v6653
  %v6790 = vunpack.c.l.b16 %v6654
  %v6791 = vunpack.c.l.b16 %v6655
  %v6792 = vunpack.c.l.b16 %v6656
  %v6793 = vunpack.c.l.b16 %v6657
  %v6794 = vunpack.c.l.b16 %v6658
  %v6795 = vunpack.c.l.b16 %v6659
  %v6796 = vunpack.c.l.b16 %v6660
  %v6797 = vunpack.c.l.b16 %v6661
  %v6798 = vunpack.c.l.b16 %v6662
  %v6799 = vunpack.c.l.b16 %v6663
  %v6800 = vunpack.c.l.b16 %v6664
  %v6801 = vunpack.c.l.b16 %v6665
  %v6802 = vunpack.c.l.b16 %v6666
  %v6803 = vunpack.c.l.b16 %v6667
  %v6804 = vunpack.c.l.b16 %v6668
  %v6805 = vunpack.c.l.b16 %v6669
  %v6806 = vunpack.c.l.b16 %v6670
  %v6807 = vunpack.c.l.b16 %v6671
  %v6808 = vunpack.c.l.b16 %v6672
  %v6809 = vunpack.c.l.b16 %v6673
  %v6810 = vunpack.c.l.b16 %v6674
  %v6811 = vunpack.c.l.b16 %v6675
  %v6812 = vunpack.c.l.b16 %v6676
  %v6813 = vunpack.c.l.b16 %v6677
  %v6814 = vunpack.c.l.b16 %v6678
  %v6815 = vunpack.c.l.b16 %v6679
  %v6816 = vunpack.c.l.b16 %v6680
  %v6817 = vunpack.c.l.b16 %v6681
  %v6818 = vunpack.c.l.b16 %v6682
  %v6819 = vunpack.c.l.b16 %v6683
  %v6820 = vunpack.c.l.b16 %v6684
  %v6821 = vpack.c.b16 %v6758, %v6757
  %v6822 = vpack.c.b16 %v6760, %v6759
  %v6823 = vpack.c.b16 %v6762, %v6761
  %v6824 = vpack.c.b16 %v6764, %v6763
  %v6825 = vpack.c.b16 %v6766, %v6765
  %v6826 = vpack.c.b16 %v6768, %v6767
  %v6827 = vpack.c.b16 %v6770, %v6769
  %v6828 = vpack.c.b16 %v6772, %v6771
  %v6829 = vpack.c.b16 %v6774, %v6773
  %v6830 = vpack.c.b16 %v6776, %v6775
  %v6831 = vpack.c.b16 %v6778, %v6777
  %v6832 = vpack.c.b16 %v6780, %v6779
  %v6833 = vpack.c.b16 %v6782, %v6781
  %v6834 = vpack.c.b16 %v6784, %v6783
  %v6835 = vpack.c.b16 %v6786, %v6785
  %v6836 = vpack.c.b16 %v6788, %v6787
  %v6837 = vpack.c.b16 %v6790, %v6789
  %v6838 = vpack.c.b16 %v6792, %v6791
  %v6839 = vpack.c.b16 %v6794, %v6793
  %v6840 = vpack.c.b16 %v6796, %v6795
  %v6841 = vpack.c.b16 %v6798, %v6797
  %v6842 = vpack.c.b16 %v6800, %v6799
  %v6843 = vpack.c.b16 %v6802, %v6801
  %v6844 = vpack.c.b16 %v6804, %v6803
  %v6845 = vpack.c.b16 %v6806, %v6805
  %v6846 = vpack.c.b16 %v6808, %v6807
  %v6847 = vpack.c.b16 %v6810, %v6809
  %v6848 = vpack.c.b16 %v6812, %v6811
  %v6849 = vpack.c.b16 %v6814, %v6813
  %v6850 = vpack.c.b16 %v6816, %v6815
  %v6851 = vpack.c.b16 %v6818, %v6817
  %v6852 = vpack.c.b16 %v6820, %v6819
  %v6861 = vunpack.c.l.b16 %v6685
  %v6862 = vunpack.c.l.b16 %v6686
  %v6863 = vunpack.c.l.b16 %v6687
  %v6864 = vunpack.c.l.b16 %v6688
  %v6865 = vunpack.c.l.b16 %v6689
  %v6866 = vunpack.c.l.b16 %v6690
  %v6867 = vunpack.c.l.b16 %v6691
  %v6868 = vunpack.c.l.b16 %v6692
  %v6869 = vpack.c.b16 %v6862, %v6861
  %v6870 = vpack.c.b16 %v6864, %v6863
  %v6871 = vpack.c.b16 %v6866, %v6865
  %v6872 = vpack.c.b16 %v6868, %v6867
  %vm6877 = vcmask 523264
  %v6879 = vsel %vm6877, %v6821, 0
  %v6882 = vsel %vm6877, %v6822, 0
  %v6885 = vsel %vm6877, %v6823, 0
  %v6888 = vsel %vm6877, %v6824, 0
  %v6891 = vsel %vm6877, %v6825, 0
  %v6894 = vsel %vm6877, %v6826, 0
  %v6897 = vsel %vm6877, %v6827, 0
  %v6900 = vsel %vm6877, %v6828, 0
  %v6903 = vsel %vm6877, %v6829, 0
  %v6906 = vsel %vm6877, %v6830, 0
  %v6909 = vsel %vm6877, %v6831, 0
  %v6912 = vsel %vm6877, %v6832, 0
  %v6915 = vsel %vm6877, %v6833, 0
  %v6918 = vsel %vm6877, %v6834, 0
  %v6921 = vsel %vm6877, %v6835, 0
  %v6924 = vsel %vm6877, %v6836, 0
  %v6927 = vsel %vm6877, %v6837, 0
  %v6930 = vsel %vm6877, %v6838, 0
  %v6933 = vsel %vm6877, %v6839, 0
  %v6936 = vsel %vm6877, %v6840, 0
  %v6939 = vsel %vm6877, %v6841, 0
  %v6942 = vsel %vm6877, %v6842, 0
  %v6945 = vsel %vm6877, %v6843, 0
  %v6948 = vsel %vm6877, %v6844, 0
  %v6951 = vsel %vm6877, %v6845, 0
  %v6954 = vsel %vm6877, %v6846, 0
  %v6957 = vsel %vm6877, %v6847, 0
  %v6960 = vsel %vm6877, %v6848, 0
  %v6963 = vsel %vm6877, %v6849, 0
  %v6966 = vsel %vm6877, %v6850, 0
  %v6969 = vsel %vm6877, %v6851, 0
  %v6972 = vsel %vm6877, %v6852, 0
  %6974 = vmatprep.subr.bf16.mxu0 0
  %6975 = vmatpush1.bf16.msra.mxu0 0
  %6976 = vmatprep.subr.bf16.mxu0 0
  %6977 = vmatpush1.bf16.msra.mxu0 0
  %6978 = vmatprep.subr.bf16.mxu0 0
  %6979 = vmatpush1.bf16.msra.mxu0 0
  %6980 = vmatprep.subr.bf16.mxu0 0
  %6981 = vmatpush1.bf16.msra.mxu0 0
  %6982 = vmatprep.subr.bf16.mxu0 0
  %6983 = vmatpush1.bf16.msra.mxu0 %v6872
  %6984 = vmatprep.subr.bf16.mxu0 0
  %6985 = vmatpush1.bf16.msra.mxu0 %v6871
  %6986 = vmatprep.subr.bf16.mxu0 0
  %6987 = vmatpush1.bf16.msra.mxu0 %v6870
  %6988 = vmatprep.subr.bf16.mxu0 0
  %6989 = vmatpush1.bf16.msra.mxu0 %v6869
  %6990 = vmatprep.subr.bf16.mxu0 0
  %6991 = vmatpush2.bf16.msra.mxu0 0
  %6992 = vmatprep.subr.bf16.mxu0 0
  %6993 = vmatpush2.bf16.msra.mxu0 0
  %6994 = vmatprep.subr.bf16.mxu0 0
  %6995 = vmatpush2.bf16.msra.mxu0 0
  %6996 = vmatprep.subr.bf16.mxu0 0
  %6997 = vmatpush2.bf16.msra.mxu0 0
  %6998 = vmatprep.subr.bf16.mxu0 0
  %6999 = vmatpush2.bf16.msra.mxu0 0
  %7000 = vmatprep.subr.bf16.mxu0 0
  %7001 = vmatpush2.bf16.msra.mxu0 0
  %7002 = vmatprep.subr.bf16.mxu0 0
  %7003 = vmatpush2.bf16.msra.mxu0 0
  %7004 = vmatprep.subr.bf16.mxu0 0
  %7005 = vmatpush2.bf16.msra.mxu0 0
  %7006 = vmatprep.mubr.bf16.mxu0 0
  %7007 = vmatmul.mubr.bf16.gmra.mxu0 %v6879
  %v7008 = vpop.f32.mrf.mxu0
  %v7009 = vadd.f32 0.0, %v7008
  %v7010 = vpop.f32.mrf.mxu0
  %v7011 = vpop.f32.mrf.mxu0
  %v7012 = vadd.f32 0.0, %v7011
  %v7013 = vpop.f32.mrf.mxu0
  %7014 = vmatprep.mubr.bf16.mxu0 0
  %7015 = vmatmul.mubr.bf16.gmra.mxu0 %v6882
  %v7016 = vpop.f32.mrf.mxu0
  %v7017 = vadd.f32 0.0, %v7016
  %v7018 = vpop.f32.mrf.mxu0
  %v7019 = vpop.f32.mrf.mxu0
  %v7020 = vadd.f32 0.0, %v7019
  %v7021 = vpop.f32.mrf.mxu0
  %7022 = vmatprep.mubr.bf16.mxu0 0
  %7023 = vmatmul.mubr.bf16.gmra.mxu0 %v6885
  %v7024 = vpop.f32.mrf.mxu0
  %v7025 = vadd.f32 0.0, %v7024
  %v7026 = vpop.f32.mrf.mxu0
  %v7027 = vpop.f32.mrf.mxu0
  %v7028 = vadd.f32 0.0, %v7027
  %v7029 = vpop.f32.mrf.mxu0
  %7030 = vmatprep.mubr.bf16.mxu0 0
  %7031 = vmatmul.mubr.bf16.gmra.mxu0 %v6888
  %v7032 = vpop.f32.mrf.mxu0
  %v7033 = vadd.f32 0.0, %v7032
  %v7034 = vpop.f32.mrf.mxu0
  %v7035 = vpop.f32.mrf.mxu0
  %v7036 = vadd.f32 0.0, %v7035
  %v7037 = vpop.f32.mrf.mxu0
  %7038 = vmatprep.mubr.bf16.mxu0 0
  %7039 = vmatmul.mubr.bf16.gmra.mxu0 %v6891
  %v7040 = vpop.f32.mrf.mxu0
  %v7041 = vadd.f32 0.0, %v7040
  %v7042 = vpop.f32.mrf.mxu0
  %v7043 = vpop.f32.mrf.mxu0
  %v7044 = vadd.f32 0.0, %v7043
  %v7045 = vpop.f32.mrf.mxu0
  %7046 = vmatprep.mubr.bf16.mxu0 0
  %7047 = vmatmul.mubr.bf16.gmra.mxu0 %v6894
  %v7048 = vpop.f32.mrf.mxu0
  %v7049 = vadd.f32 0.0, %v7048
  %v7050 = vpop.f32.mrf.mxu0
  %v7051 = vpop.f32.mrf.mxu0
  %v7052 = vadd.f32 0.0, %v7051
  %v7053 = vpop.f32.mrf.mxu0
  %7054 = vmatprep.mubr.bf16.mxu0 0
  %7055 = vmatmul.mubr.bf16.gmra.mxu0 %v6897
  %v7056 = vpop.f32.mrf.mxu0
  %v7057 = vadd.f32 0.0, %v7056
  %v7058 = vpop.f32.mrf.mxu0
  %v7059 = vpop.f32.mrf.mxu0
  %v7060 = vadd.f32 0.0, %v7059
  %v7061 = vpop.f32.mrf.mxu0
  %7062 = vmatprep.mubr.bf16.mxu0 0
  %7063 = vmatmul.mubr.bf16.gmra.mxu0 %v6900
  %v7064 = vpop.f32.mrf.mxu0
  %v7065 = vadd.f32 0.0, %v7064
  %v7066 = vpop.f32.mrf.mxu0
  %v7067 = vpop.f32.mrf.mxu0
  %v7068 = vadd.f32 0.0, %v7067
  %v7069 = vpop.f32.mrf.mxu0
  %7070 = vmatprep.mubr.bf16.mxu0 0
  %7071 = vmatmul.mubr.bf16.gmra.mxu0 %v6903
  %v7072 = vpop.f32.mrf.mxu0
  %v7073 = vadd.f32 0.0, %v7072
  %v7074 = vpop.f32.mrf.mxu0
  %v7075 = vpop.f32.mrf.mxu0
  %v7076 = vadd.f32 0.0, %v7075
  %v7077 = vpop.f32.mrf.mxu0
  %7078 = vmatprep.mubr.bf16.mxu0 0
  %7079 = vmatmul.mubr.bf16.gmra.mxu0 %v6906
  %v7080 = vpop.f32.mrf.mxu0
  %v7081 = vadd.f32 0.0, %v7080
  %v7082 = vpop.f32.mrf.mxu0
  %v7083 = vpop.f32.mrf.mxu0
  %v7084 = vadd.f32 0.0, %v7083
  %v7085 = vpop.f32.mrf.mxu0
  %7086 = vmatprep.mubr.bf16.mxu0 0
  %7087 = vmatmul.mubr.bf16.gmra.mxu0 %v6909
  %v7088 = vpop.f32.mrf.mxu0
  %v7089 = vadd.f32 0.0, %v7088
  %v7090 = vpop.f32.mrf.mxu0
  %v7091 = vpop.f32.mrf.mxu0
  %v7092 = vadd.f32 0.0, %v7091
  %v7093 = vpop.f32.mrf.mxu0
  %7094 = vmatprep.mubr.bf16.mxu0 0
  %7095 = vmatmul.mubr.bf16.gmra.mxu0 %v6912
  %v7096 = vpop.f32.mrf.mxu0
  %v7097 = vadd.f32 0.0, %v7096
  %v7098 = vpop.f32.mrf.mxu0
  %v7099 = vpop.f32.mrf.mxu0
  %v7100 = vadd.f32 0.0, %v7099
  %v7101 = vpop.f32.mrf.mxu0
  %7102 = vmatprep.mubr.bf16.mxu0 0
  %7103 = vmatmul.mubr.bf16.gmra.mxu0 %v6915
  %v7104 = vpop.f32.mrf.mxu0
  %v7105 = vadd.f32 0.0, %v7104
  %v7106 = vpop.f32.mrf.mxu0
  %v7107 = vpop.f32.mrf.mxu0
  %v7108 = vadd.f32 0.0, %v7107
  %v7109 = vpop.f32.mrf.mxu0
  %7110 = vmatprep.mubr.bf16.mxu0 0
  %7111 = vmatmul.mubr.bf16.gmra.mxu0 %v6918
  %v7112 = vpop.f32.mrf.mxu0
  %v7113 = vadd.f32 0.0, %v7112
  %v7114 = vpop.f32.mrf.mxu0
  %v7115 = vpop.f32.mrf.mxu0
  %v7116 = vadd.f32 0.0, %v7115
  %v7117 = vpop.f32.mrf.mxu0
  %7118 = vmatprep.mubr.bf16.mxu0 0
  %7119 = vmatmul.mubr.bf16.gmra.mxu0 %v6921
  %v7120 = vpop.f32.mrf.mxu0
  %v7121 = vadd.f32 0.0, %v7120
  %v7122 = vpop.f32.mrf.mxu0
  %v7123 = vpop.f32.mrf.mxu0
  %v7124 = vadd.f32 0.0, %v7123
  %v7125 = vpop.f32.mrf.mxu0
  %7126 = vmatprep.mubr.bf16.mxu0 0
  %7127 = vmatmul.mubr.bf16.gmra.mxu0 %v6924
  %v7128 = vpop.f32.mrf.mxu0
  %v7129 = vadd.f32 0.0, %v7128
  %v7130 = vpop.f32.mrf.mxu0
  %v7131 = vpop.f32.mrf.mxu0
  %v7132 = vadd.f32 0.0, %v7131
  %v7133 = vpop.f32.mrf.mxu0
  %7134 = vmatprep.mubr.bf16.mxu0 0
  %7135 = vmatmul.mubr.bf16.gmra.mxu0 %v6927
  %v7136 = vpop.f32.mrf.mxu0
  %v7137 = vadd.f32 0.0, %v7136
  %v7138 = vpop.f32.mrf.mxu0
  %v7139 = vpop.f32.mrf.mxu0
  %v7140 = vadd.f32 0.0, %v7139
  %v7141 = vpop.f32.mrf.mxu0
  %7142 = vmatprep.mubr.bf16.mxu0 0
  %7143 = vmatmul.mubr.bf16.gmra.mxu0 %v6930
  %v7144 = vpop.f32.mrf.mxu0
  %v7145 = vadd.f32 0.0, %v7144
  %v7146 = vpop.f32.mrf.mxu0
  %v7147 = vpop.f32.mrf.mxu0
  %v7148 = vadd.f32 0.0, %v7147
  %v7149 = vpop.f32.mrf.mxu0
  %7150 = vmatprep.mubr.bf16.mxu0 0
  %7151 = vmatmul.mubr.bf16.gmra.mxu0 %v6933
  %v7152 = vpop.f32.mrf.mxu0
  %v7153 = vadd.f32 0.0, %v7152
  %v7154 = vpop.f32.mrf.mxu0
  %v7155 = vpop.f32.mrf.mxu0
  %v7156 = vadd.f32 0.0, %v7155
  %v7157 = vpop.f32.mrf.mxu0
  %7158 = vmatprep.mubr.bf16.mxu0 0
  %7159 = vmatmul.mubr.bf16.gmra.mxu0 %v6936
  %v7160 = vpop.f32.mrf.mxu0
  %v7161 = vadd.f32 0.0, %v7160
  %v7162 = vpop.f32.mrf.mxu0
  %v7163 = vpop.f32.mrf.mxu0
  %v7164 = vadd.f32 0.0, %v7163
  %v7165 = vpop.f32.mrf.mxu0
  %7166 = vmatprep.mubr.bf16.mxu0 0
  %7167 = vmatmul.mubr.bf16.gmra.mxu0 %v6939
  %v7168 = vpop.f32.mrf.mxu0
  %v7169 = vadd.f32 0.0, %v7168
  %v7170 = vpop.f32.mrf.mxu0
  %v7171 = vpop.f32.mrf.mxu0
  %v7172 = vadd.f32 0.0, %v7171
  %v7173 = vpop.f32.mrf.mxu0
  %7174 = vmatprep.mubr.bf16.mxu0 0
  %7175 = vmatmul.mubr.bf16.gmra.mxu0 %v6942
  %v7176 = vpop.f32.mrf.mxu0
  %v7177 = vadd.f32 0.0, %v7176
  %v7178 = vpop.f32.mrf.mxu0
  %v7179 = vpop.f32.mrf.mxu0
  %v7180 = vadd.f32 0.0, %v7179
  %v7181 = vpop.f32.mrf.mxu0
  %7182 = vmatprep.mubr.bf16.mxu0 0
  %7183 = vmatmul.mubr.bf16.gmra.mxu0 %v6945
  %v7184 = vpop.f32.mrf.mxu0
  %v7185 = vadd.f32 0.0, %v7184
  %v7186 = vpop.f32.mrf.mxu0
  %v7187 = vpop.f32.mrf.mxu0
  %v7188 = vadd.f32 0.0, %v7187
  %v7189 = vpop.f32.mrf.mxu0
  %7190 = vmatprep.mubr.bf16.mxu0 0
  %7191 = vmatmul.mubr.bf16.gmra.mxu0 %v6948
  %v7192 = vpop.f32.mrf.mxu0
  %v7193 = vadd.f32 0.0, %v7192
  %v7194 = vpop.f32.mrf.mxu0
  %v7195 = vpop.f32.mrf.mxu0
  %v7196 = vadd.f32 0.0, %v7195
  %v7197 = vpop.f32.mrf.mxu0
  %7198 = vmatprep.mubr.bf16.mxu0 0
  %7199 = vmatmul.mubr.bf16.gmra.mxu0 %v6951
  %v7200 = vpop.f32.mrf.mxu0
  %v7201 = vadd.f32 0.0, %v7200
  %v7202 = vpop.f32.mrf.mxu0
  %v7203 = vpop.f32.mrf.mxu0
  %v7204 = vadd.f32 0.0, %v7203
  %v7205 = vpop.f32.mrf.mxu0
  %7206 = vmatprep.mubr.bf16.mxu0 0
  %7207 = vmatmul.mubr.bf16.gmra.mxu0 %v6954
  %v7208 = vpop.f32.mrf.mxu0
  %v7209 = vadd.f32 0.0, %v7208
  %v7210 = vpop.f32.mrf.mxu0
  %v7211 = vpop.f32.mrf.mxu0
  %v7212 = vadd.f32 0.0, %v7211
  %v7213 = vpop.f32.mrf.mxu0
  %7214 = vmatprep.mubr.bf16.mxu0 0
  %7215 = vmatmul.mubr.bf16.gmra.mxu0 %v6957
  %v7216 = vpop.f32.mrf.mxu0
  %v7217 = vadd.f32 0.0, %v7216
  %v7218 = vpop.f32.mrf.mxu0
  %v7219 = vpop.f32.mrf.mxu0
  %v7220 = vadd.f32 0.0, %v7219
  %v7221 = vpop.f32.mrf.mxu0
  %7222 = vmatprep.mubr.bf16.mxu0 0
  %7223 = vmatmul.mubr.bf16.gmra.mxu0 %v6960
  %v7224 = vpop.f32.mrf.mxu0
  %v7225 = vadd.f32 0.0, %v7224
  %v7226 = vpop.f32.mrf.mxu0
  %v7227 = vpop.f32.mrf.mxu0
  %v7228 = vadd.f32 0.0, %v7227
  %v7229 = vpop.f32.mrf.mxu0
  %7230 = vmatprep.mubr.bf16.mxu0 0
  %7231 = vmatmul.mubr.bf16.gmra.mxu0 %v6963
  %v7232 = vpop.f32.mrf.mxu0
  %v7233 = vadd.f32 0.0, %v7232
  %v7234 = vpop.f32.mrf.mxu0
  %v7235 = vpop.f32.mrf.mxu0
  %v7236 = vadd.f32 0.0, %v7235
  %v7237 = vpop.f32.mrf.mxu0
  %7238 = vmatprep.mubr.bf16.mxu0 0
  %7239 = vmatmul.mubr.bf16.gmra.mxu0 %v6966
  %v7240 = vpop.f32.mrf.mxu0
  %v7241 = vadd.f32 0.0, %v7240
  %v7242 = vpop.f32.mrf.mxu0
  %v7243 = vpop.f32.mrf.mxu0
  %v7244 = vadd.f32 0.0, %v7243
  %v7245 = vpop.f32.mrf.mxu0
  %7246 = vmatprep.mubr.bf16.mxu0 0
  %7247 = vmatmul.mubr.bf16.gmra.mxu0 %v6969
  %v7248 = vpop.f32.mrf.mxu0
  %v7249 = vadd.f32 0.0, %v7248
  %v7250 = vpop.f32.mrf.mxu0
  %v7251 = vpop.f32.mrf.mxu0
  %v7252 = vadd.f32 0.0, %v7251
  %v7253 = vpop.f32.mrf.mxu0
  %7254 = vmatprep.mubr.bf16.mxu0 0
  %7255 = vmatmul.mubr.bf16.gmra.mxu0 %v6972
  %v7256 = vpop.f32.mrf.mxu0
  %v7257 = vadd.f32 0.0, %v7256
  %v7258 = vpop.f32.mrf.mxu0
  %v7259 = vpop.f32.mrf.mxu0
  %v7260 = vadd.f32 0.0, %v7259
  %v7261 = vpop.f32.mrf.mxu0
  %7262 = vdwg.mxu0
  %v7263 = vmul.f32 %v7009, 0.35355338
  %v7264 = vmul.f32 %v7012, 0.35355338
  %v7265 = vmul.f32 %v7017, 0.35355338
  %v7266 = vmul.f32 %v7020, 0.35355338
  %v7267 = vmul.f32 %v7025, 0.35355338
  %v7268 = vmul.f32 %v7028, 0.35355338
  %v7269 = vmul.f32 %v7033, 0.35355338
  %v7270 = vmul.f32 %v7036, 0.35355338
  %v7271 = vmul.f32 %v7041, 0.35355338
  %v7272 = vmul.f32 %v7044, 0.35355338
  %v7273 = vmul.f32 %v7049, 0.35355338
  %v7274 = vmul.f32 %v7052, 0.35355338
  %v7275 = vmul.f32 %v7057, 0.35355338
  %v7276 = vmul.f32 %v7060, 0.35355338
  %v7277 = vmul.f32 %v7065, 0.35355338
  %v7278 = vmul.f32 %v7068, 0.35355338
  %v7279 = vmul.f32 %v7073, 0.35355338
  %v7280 = vmul.f32 %v7076, 0.35355338
  %v7281 = vmul.f32 %v7081, 0.35355338
  %v7282 = vmul.f32 %v7084, 0.35355338
  %v7283 = vmul.f32 %v7089, 0.35355338
  %v7284 = vmul.f32 %v7092, 0.35355338
  %v7285 = vmul.f32 %v7097, 0.35355338
  %v7286 = vmul.f32 %v7100, 0.35355338
  %v7287 = vmul.f32 %v7105, 0.35355338
  %v7288 = vmul.f32 %v7108, 0.35355338
  %v7289 = vmul.f32 %v7113, 0.35355338
  %v7290 = vmul.f32 %v7116, 0.35355338
  %v7291 = vmul.f32 %v7121, 0.35355338
  %v7292 = vmul.f32 %v7124, 0.35355338
  %v7293 = vmul.f32 %v7129, 0.35355338
  %v7294 = vmul.f32 %v7132, 0.35355338
  %v7295 = vmul.f32 %v7137, 0.35355338
  %v7296 = vmul.f32 %v7140, 0.35355338
  %v7297 = vmul.f32 %v7145, 0.35355338
  %v7298 = vmul.f32 %v7148, 0.35355338
  %v7299 = vmul.f32 %v7153, 0.35355338
  %v7300 = vmul.f32 %v7156, 0.35355338
  %v7301 = vmul.f32 %v7161, 0.35355338
  %v7302 = vmul.f32 %v7164, 0.35355338
  %v7303 = vmul.f32 %v7169, 0.35355338
  %v7304 = vmul.f32 %v7172, 0.35355338
  %v7305 = vmul.f32 %v7177, 0.35355338
  %v7306 = vmul.f32 %v7180, 0.35355338
  %v7307 = vmul.f32 %v7185, 0.35355338
  %v7308 = vmul.f32 %v7188, 0.35355338
  %v7309 = vmul.f32 %v7193, 0.35355338
  %v7310 = vmul.f32 %v7196, 0.35355338
  %v7311 = vmul.f32 %v7201, 0.35355338
  %v7312 = vmul.f32 %v7204, 0.35355338
  %v7313 = vmul.f32 %v7209, 0.35355338
  %v7314 = vmul.f32 %v7212, 0.35355338
  %v7315 = vmul.f32 %v7217, 0.35355338
  %v7316 = vmul.f32 %v7220, 0.35355338
  %v7317 = vmul.f32 %v7225, 0.35355338
  %v7318 = vmul.f32 %v7228, 0.35355338
  %v7319 = vmul.f32 %v7233, 0.35355338
  %v7320 = vmul.f32 %v7236, 0.35355338
  %v7321 = vmul.f32 %v7241, 0.35355338
  %v7322 = vmul.f32 %v7244, 0.35355338
  %v7323 = vmul.f32 %v7249, 0.35355338
  %v7324 = vmul.f32 %v7252, 0.35355338
  %v7325 = vmul.f32 %v7257, 0.35355338
  %v7326 = vmul.f32 %v7260, 0.35355338
  %vm7327 = vcmask 31744
  %v7328 = vsel %vm7327, %v7263, -inf
  %v7329 = vrot.slane %v7328, 4
  %v7330 = vmax.f32 %v7328, %v7329
  %v7331 = vrot.slane %v7330, 2
  %v7332 = vmax.f32 %v7330, %v7331
  %v7333 = vrot.slane %v7332, 1
  %v7334 = vmax.f32 %v7332, %v7333
  %v7335 = vsel %vm7327, %v7264, -inf
  %v7336 = vrot.slane %v7335, 4
  %v7337 = vmax.f32 %v7335, %v7336
  %v7338 = vrot.slane %v7337, 2
  %v7339 = vmax.f32 %v7337, %v7338
  %v7340 = vrot.slane %v7339, 1
  %v7341 = vmax.f32 %v7339, %v7340
  %v7342 = vsel %vm7327, %v7265, -inf
  %v7343 = vrot.slane %v7342, 4
  %v7344 = vmax.f32 %v7342, %v7343
  %v7345 = vrot.slane %v7344, 2
  %v7346 = vmax.f32 %v7344, %v7345
  %v7347 = vrot.slane %v7346, 1
  %v7348 = vmax.f32 %v7346, %v7347
  %v7349 = vsel %vm7327, %v7266, -inf
  %v7350 = vrot.slane %v7349, 4
  %v7351 = vmax.f32 %v7349, %v7350
  %v7352 = vrot.slane %v7351, 2
  %v7353 = vmax.f32 %v7351, %v7352
  %v7354 = vrot.slane %v7353, 1
  %v7355 = vmax.f32 %v7353, %v7354
  %v7356 = vsel %vm7327, %v7267, -inf
  %v7357 = vrot.slane %v7356, 4
  %v7358 = vmax.f32 %v7356, %v7357
  %v7359 = vrot.slane %v7358, 2
  %v7360 = vmax.f32 %v7358, %v7359
  %v7361 = vrot.slane %v7360, 1
  %v7362 = vmax.f32 %v7360, %v7361
  %v7363 = vsel %vm7327, %v7268, -inf
  %v7364 = vrot.slane %v7363, 4
  %v7365 = vmax.f32 %v7363, %v7364
  %v7366 = vrot.slane %v7365, 2
  %v7367 = vmax.f32 %v7365, %v7366
  %v7368 = vrot.slane %v7367, 1
  %v7369 = vmax.f32 %v7367, %v7368
  %v7370 = vsel %vm7327, %v7269, -inf
  %v7371 = vrot.slane %v7370, 4
  %v7372 = vmax.f32 %v7370, %v7371
  %v7373 = vrot.slane %v7372, 2
  %v7374 = vmax.f32 %v7372, %v7373
  %v7375 = vrot.slane %v7374, 1
  %v7376 = vmax.f32 %v7374, %v7375
  %v7377 = vsel %vm7327, %v7270, -inf
  %v7378 = vrot.slane %v7377, 4
  %v7379 = vmax.f32 %v7377, %v7378
  %v7380 = vrot.slane %v7379, 2
  %v7381 = vmax.f32 %v7379, %v7380
  %v7382 = vrot.slane %v7381, 1
  %v7383 = vmax.f32 %v7381, %v7382
  %v7384 = vsel %vm7327, %v7271, -inf
  %v7385 = vrot.slane %v7384, 4
  %v7386 = vmax.f32 %v7384, %v7385
  %v7387 = vrot.slane %v7386, 2
  %v7388 = vmax.f32 %v7386, %v7387
  %v7389 = vrot.slane %v7388, 1
  %v7390 = vmax.f32 %v7388, %v7389
  %v7391 = vsel %vm7327, %v7272, -inf
  %v7392 = vrot.slane %v7391, 4
  %v7393 = vmax.f32 %v7391, %v7392
  %v7394 = vrot.slane %v7393, 2
  %v7395 = vmax.f32 %v7393, %v7394
  %v7396 = vrot.slane %v7395, 1
  %v7397 = vmax.f32 %v7395, %v7396
  %v7398 = vsel %vm7327, %v7273, -inf
  %v7399 = vrot.slane %v7398, 4
  %v7400 = vmax.f32 %v7398, %v7399
  %v7401 = vrot.slane %v7400, 2
  %v7402 = vmax.f32 %v7400, %v7401
  %v7403 = vrot.slane %v7402, 1
  %v7404 = vmax.f32 %v7402, %v7403
  %v7405 = vsel %vm7327, %v7274, -inf
  %v7406 = vrot.slane %v7405, 4
  %v7407 = vmax.f32 %v7405, %v7406
  %v7408 = vrot.slane %v7407, 2
  %v7409 = vmax.f32 %v7407, %v7408
  %v7410 = vrot.slane %v7409, 1
  %v7411 = vmax.f32 %v7409, %v7410
  %v7412 = vsel %vm7327, %v7275, -inf
  %v7413 = vrot.slane %v7412, 4
  %v7414 = vmax.f32 %v7412, %v7413
  %v7415 = vrot.slane %v7414, 2
  %v7416 = vmax.f32 %v7414, %v7415
  %v7417 = vrot.slane %v7416, 1
  %v7418 = vmax.f32 %v7416, %v7417
  %v7419 = vsel %vm7327, %v7276, -inf
  %v7420 = vrot.slane %v7419, 4
  %v7421 = vmax.f32 %v7419, %v7420
  %v7422 = vrot.slane %v7421, 2
  %v7423 = vmax.f32 %v7421, %v7422
  %v7424 = vrot.slane %v7423, 1
  %v7425 = vmax.f32 %v7423, %v7424
  %v7426 = vsel %vm7327, %v7277, -inf
  %v7427 = vrot.slane %v7426, 4
  %v7428 = vmax.f32 %v7426, %v7427
  %v7429 = vrot.slane %v7428, 2
  %v7430 = vmax.f32 %v7428, %v7429
  %v7431 = vrot.slane %v7430, 1
  %v7432 = vmax.f32 %v7430, %v7431
  %v7433 = vsel %vm7327, %v7278, -inf
  %v7434 = vrot.slane %v7433, 4
  %v7435 = vmax.f32 %v7433, %v7434
  %v7436 = vrot.slane %v7435, 2
  %v7437 = vmax.f32 %v7435, %v7436
  %v7438 = vrot.slane %v7437, 1
  %v7439 = vmax.f32 %v7437, %v7438
  %v7440 = vsel %vm7327, %v7279, -inf
  %v7441 = vrot.slane %v7440, 4
  %v7442 = vmax.f32 %v7440, %v7441
  %v7443 = vrot.slane %v7442, 2
  %v7444 = vmax.f32 %v7442, %v7443
  %v7445 = vrot.slane %v7444, 1
  %v7446 = vmax.f32 %v7444, %v7445
  %v7447 = vsel %vm7327, %v7280, -inf
  %v7448 = vrot.slane %v7447, 4
  %v7449 = vmax.f32 %v7447, %v7448
  %v7450 = vrot.slane %v7449, 2
  %v7451 = vmax.f32 %v7449, %v7450
  %v7452 = vrot.slane %v7451, 1
  %v7453 = vmax.f32 %v7451, %v7452
  %v7454 = vsel %vm7327, %v7281, -inf
  %v7455 = vrot.slane %v7454, 4
  %v7456 = vmax.f32 %v7454, %v7455
  %v7457 = vrot.slane %v7456, 2
  %v7458 = vmax.f32 %v7456, %v7457
  %v7459 = vrot.slane %v7458, 1
  %v7460 = vmax.f32 %v7458, %v7459
  %v7461 = vsel %vm7327, %v7282, -inf
  %v7462 = vrot.slane %v7461, 4
  %v7463 = vmax.f32 %v7461, %v7462
  %v7464 = vrot.slane %v7463, 2
  %v7465 = vmax.f32 %v7463, %v7464
  %v7466 = vrot.slane %v7465, 1
  %v7467 = vmax.f32 %v7465, %v7466
  %v7468 = vsel %vm7327, %v7283, -inf
  %v7469 = vrot.slane %v7468, 4
  %v7470 = vmax.f32 %v7468, %v7469
  %v7471 = vrot.slane %v7470, 2
  %v7472 = vmax.f32 %v7470, %v7471
  %v7473 = vrot.slane %v7472, 1
  %v7474 = vmax.f32 %v7472, %v7473
  %v7475 = vsel %vm7327, %v7284, -inf
  %v7476 = vrot.slane %v7475, 4
  %v7477 = vmax.f32 %v7475, %v7476
  %v7478 = vrot.slane %v7477, 2
  %v7479 = vmax.f32 %v7477, %v7478
  %v7480 = vrot.slane %v7479, 1
  %v7481 = vmax.f32 %v7479, %v7480
  %v7482 = vsel %vm7327, %v7285, -inf
  %v7483 = vrot.slane %v7482, 4
  %v7484 = vmax.f32 %v7482, %v7483
  %v7485 = vrot.slane %v7484, 2
  %v7486 = vmax.f32 %v7484, %v7485
  %v7487 = vrot.slane %v7486, 1
  %v7488 = vmax.f32 %v7486, %v7487
  %v7489 = vsel %vm7327, %v7286, -inf
  %v7490 = vrot.slane %v7489, 4
  %v7491 = vmax.f32 %v7489, %v7490
  %v7492 = vrot.slane %v7491, 2
  %v7493 = vmax.f32 %v7491, %v7492
  %v7494 = vrot.slane %v7493, 1
  %v7495 = vmax.f32 %v7493, %v7494
  %v7496 = vsel %vm7327, %v7287, -inf
  %v7497 = vrot.slane %v7496, 4
  %v7498 = vmax.f32 %v7496, %v7497
  %v7499 = vrot.slane %v7498, 2
  %v7500 = vmax.f32 %v7498, %v7499
  %v7501 = vrot.slane %v7500, 1
  %v7502 = vmax.f32 %v7500, %v7501
  %v7503 = vsel %vm7327, %v7288, -inf
  %v7504 = vrot.slane %v7503, 4
  %v7505 = vmax.f32 %v7503, %v7504
  %v7506 = vrot.slane %v7505, 2
  %v7507 = vmax.f32 %v7505, %v7506
  %v7508 = vrot.slane %v7507, 1
  %v7509 = vmax.f32 %v7507, %v7508
  %v7510 = vsel %vm7327, %v7289, -inf
  %v7511 = vrot.slane %v7510, 4
  %v7512 = vmax.f32 %v7510, %v7511
  %v7513 = vrot.slane %v7512, 2
  %v7514 = vmax.f32 %v7512, %v7513
  %v7515 = vrot.slane %v7514, 1
  %v7516 = vmax.f32 %v7514, %v7515
  %v7517 = vsel %vm7327, %v7290, -inf
  %v7518 = vrot.slane %v7517, 4
  %v7519 = vmax.f32 %v7517, %v7518
  %v7520 = vrot.slane %v7519, 2
  %v7521 = vmax.f32 %v7519, %v7520
  %v7522 = vrot.slane %v7521, 1
  %v7523 = vmax.f32 %v7521, %v7522
  %v7524 = vsel %vm7327, %v7291, -inf
  %v7525 = vrot.slane %v7524, 4
  %v7526 = vmax.f32 %v7524, %v7525
  %v7527 = vrot.slane %v7526, 2
  %v7528 = vmax.f32 %v7526, %v7527
  %v7529 = vrot.slane %v7528, 1
  %v7530 = vmax.f32 %v7528, %v7529
  %v7531 = vsel %vm7327, %v7292, -inf
  %v7532 = vrot.slane %v7531, 4
  %v7533 = vmax.f32 %v7531, %v7532
  %v7534 = vrot.slane %v7533, 2
  %v7535 = vmax.f32 %v7533, %v7534
  %v7536 = vrot.slane %v7535, 1
  %v7537 = vmax.f32 %v7535, %v7536
  %v7538 = vsel %vm7327, %v7293, -inf
  %v7539 = vrot.slane %v7538, 4
  %v7540 = vmax.f32 %v7538, %v7539
  %v7541 = vrot.slane %v7540, 2
  %v7542 = vmax.f32 %v7540, %v7541
  %v7543 = vrot.slane %v7542, 1
  %v7544 = vmax.f32 %v7542, %v7543
  %v7545 = vsel %vm7327, %v7294, -inf
  %v7546 = vrot.slane %v7545, 4
  %v7547 = vmax.f32 %v7545, %v7546
  %v7548 = vrot.slane %v7547, 2
  %v7549 = vmax.f32 %v7547, %v7548
  %v7550 = vrot.slane %v7549, 1
  %v7551 = vmax.f32 %v7549, %v7550
  %v7552 = vsel %vm7327, %v7295, -inf
  %v7553 = vrot.slane %v7552, 4
  %v7554 = vmax.f32 %v7552, %v7553
  %v7555 = vrot.slane %v7554, 2
  %v7556 = vmax.f32 %v7554, %v7555
  %v7557 = vrot.slane %v7556, 1
  %v7558 = vmax.f32 %v7556, %v7557
  %v7559 = vsel %vm7327, %v7296, -inf
  %v7560 = vrot.slane %v7559, 4
  %v7561 = vmax.f32 %v7559, %v7560
  %v7562 = vrot.slane %v7561, 2
  %v7563 = vmax.f32 %v7561, %v7562
  %v7564 = vrot.slane %v7563, 1
  %v7565 = vmax.f32 %v7563, %v7564
  %v7566 = vsel %vm7327, %v7297, -inf
  %v7567 = vrot.slane %v7566, 4
  %v7568 = vmax.f32 %v7566, %v7567
  %v7569 = vrot.slane %v7568, 2
  %v7570 = vmax.f32 %v7568, %v7569
  %v7571 = vrot.slane %v7570, 1
  %v7572 = vmax.f32 %v7570, %v7571
  %v7573 = vsel %vm7327, %v7298, -inf
  %v7574 = vrot.slane %v7573, 4
  %v7575 = vmax.f32 %v7573, %v7574
  %v7576 = vrot.slane %v7575, 2
  %v7577 = vmax.f32 %v7575, %v7576
  %v7578 = vrot.slane %v7577, 1
  %v7579 = vmax.f32 %v7577, %v7578
  %v7580 = vsel %vm7327, %v7299, -inf
  %v7581 = vrot.slane %v7580, 4
  %v7582 = vmax.f32 %v7580, %v7581
  %v7583 = vrot.slane %v7582, 2
  %v7584 = vmax.f32 %v7582, %v7583
  %v7585 = vrot.slane %v7584, 1
  %v7586 = vmax.f32 %v7584, %v7585
  %v7587 = vsel %vm7327, %v7300, -inf
  %v7588 = vrot.slane %v7587, 4
  %v7589 = vmax.f32 %v7587, %v7588
  %v7590 = vrot.slane %v7589, 2
  %v7591 = vmax.f32 %v7589, %v7590
  %v7592 = vrot.slane %v7591, 1
  %v7593 = vmax.f32 %v7591, %v7592
  %v7594 = vsel %vm7327, %v7301, -inf
  %v7595 = vrot.slane %v7594, 4
  %v7596 = vmax.f32 %v7594, %v7595
  %v7597 = vrot.slane %v7596, 2
  %v7598 = vmax.f32 %v7596, %v7597
  %v7599 = vrot.slane %v7598, 1
  %v7600 = vmax.f32 %v7598, %v7599
  %v7601 = vsel %vm7327, %v7302, -inf
  %v7602 = vrot.slane %v7601, 4
  %v7603 = vmax.f32 %v7601, %v7602
  %v7604 = vrot.slane %v7603, 2
  %v7605 = vmax.f32 %v7603, %v7604
  %v7606 = vrot.slane %v7605, 1
  %v7607 = vmax.f32 %v7605, %v7606
  %v7608 = vsel %vm7327, %v7303, -inf
  %v7609 = vrot.slane %v7608, 4
  %v7610 = vmax.f32 %v7608, %v7609
  %v7611 = vrot.slane %v7610, 2
  %v7612 = vmax.f32 %v7610, %v7611
  %v7613 = vrot.slane %v7612, 1
  %v7614 = vmax.f32 %v7612, %v7613
  %v7615 = vsel %vm7327, %v7304, -inf
  %v7616 = vrot.slane %v7615, 4
  %v7617 = vmax.f32 %v7615, %v7616
  %v7618 = vrot.slane %v7617, 2
  %v7619 = vmax.f32 %v7617, %v7618
  %v7620 = vrot.slane %v7619, 1
  %v7621 = vmax.f32 %v7619, %v7620
  %v7622 = vsel %vm7327, %v7305, -inf
  %v7623 = vrot.slane %v7622, 4
  %v7624 = vmax.f32 %v7622, %v7623
  %v7625 = vrot.slane %v7624, 2
  %v7626 = vmax.f32 %v7624, %v7625
  %v7627 = vrot.slane %v7626, 1
  %v7628 = vmax.f32 %v7626, %v7627
  %v7629 = vsel %vm7327, %v7306, -inf
  %v7630 = vrot.slane %v7629, 4
  %v7631 = vmax.f32 %v7629, %v7630
  %v7632 = vrot.slane %v7631, 2
  %v7633 = vmax.f32 %v7631, %v7632
  %v7634 = vrot.slane %v7633, 1
  %v7635 = vmax.f32 %v7633, %v7634
  %v7636 = vsel %vm7327, %v7307, -inf
  %v7637 = vrot.slane %v7636, 4
  %v7638 = vmax.f32 %v7636, %v7637
  %v7639 = vrot.slane %v7638, 2
  %v7640 = vmax.f32 %v7638, %v7639
  %v7641 = vrot.slane %v7640, 1
  %v7642 = vmax.f32 %v7640, %v7641
  %v7643 = vsel %vm7327, %v7308, -inf
  %v7644 = vrot.slane %v7643, 4
  %v7645 = vmax.f32 %v7643, %v7644
  %v7646 = vrot.slane %v7645, 2
  %v7647 = vmax.f32 %v7645, %v7646
  %v7648 = vrot.slane %v7647, 1
  %v7649 = vmax.f32 %v7647, %v7648
  %v7650 = vsel %vm7327, %v7309, -inf
  %v7651 = vrot.slane %v7650, 4
  %v7652 = vmax.f32 %v7650, %v7651
  %v7653 = vrot.slane %v7652, 2
  %v7654 = vmax.f32 %v7652, %v7653
  %v7655 = vrot.slane %v7654, 1
  %v7656 = vmax.f32 %v7654, %v7655
  %v7657 = vsel %vm7327, %v7310, -inf
  %v7658 = vrot.slane %v7657, 4
  %v7659 = vmax.f32 %v7657, %v7658
  %v7660 = vrot.slane %v7659, 2
  %v7661 = vmax.f32 %v7659, %v7660
  %v7662 = vrot.slane %v7661, 1
  %v7663 = vmax.f32 %v7661, %v7662
  %v7664 = vsel %vm7327, %v7311, -inf
  %v7665 = vrot.slane %v7664, 4
  %v7666 = vmax.f32 %v7664, %v7665
  %v7667 = vrot.slane %v7666, 2
  %v7668 = vmax.f32 %v7666, %v7667
  %v7669 = vrot.slane %v7668, 1
  %v7670 = vmax.f32 %v7668, %v7669
  %v7671 = vsel %vm7327, %v7312, -inf
  %v7672 = vrot.slane %v7671, 4
  %v7673 = vmax.f32 %v7671, %v7672
  %v7674 = vrot.slane %v7673, 2
  %v7675 = vmax.f32 %v7673, %v7674
  %v7676 = vrot.slane %v7675, 1
  %v7677 = vmax.f32 %v7675, %v7676
  %v7678 = vsel %vm7327, %v7313, -inf
  %v7679 = vrot.slane %v7678, 4
  %v7680 = vmax.f32 %v7678, %v7679
  %v7681 = vrot.slane %v7680, 2
  %v7682 = vmax.f32 %v7680, %v7681
  %v7683 = vrot.slane %v7682, 1
  %v7684 = vmax.f32 %v7682, %v7683
  %v7685 = vsel %vm7327, %v7314, -inf
  %v7686 = vrot.slane %v7685, 4
  %v7687 = vmax.f32 %v7685, %v7686
  %v7688 = vrot.slane %v7687, 2
  %v7689 = vmax.f32 %v7687, %v7688
  %v7690 = vrot.slane %v7689, 1
  %v7691 = vmax.f32 %v7689, %v7690
  %v7692 = vsel %vm7327, %v7315, -inf
  %v7693 = vrot.slane %v7692, 4
  %v7694 = vmax.f32 %v7692, %v7693
  %v7695 = vrot.slane %v7694, 2
  %v7696 = vmax.f32 %v7694, %v7695
  %v7697 = vrot.slane %v7696, 1
  %v7698 = vmax.f32 %v7696, %v7697
  %v7699 = vsel %vm7327, %v7316, -inf
  %v7700 = vrot.slane %v7699, 4
  %v7701 = vmax.f32 %v7699, %v7700
  %v7702 = vrot.slane %v7701, 2
  %v7703 = vmax.f32 %v7701, %v7702
  %v7704 = vrot.slane %v7703, 1
  %v7705 = vmax.f32 %v7703, %v7704
  %v7706 = vsel %vm7327, %v7317, -inf
  %v7707 = vrot.slane %v7706, 4
  %v7708 = vmax.f32 %v7706, %v7707
  %v7709 = vrot.slane %v7708, 2
  %v7710 = vmax.f32 %v7708, %v7709
  %v7711 = vrot.slane %v7710, 1
  %v7712 = vmax.f32 %v7710, %v7711
  %v7713 = vsel %vm7327, %v7318, -inf
  %v7714 = vrot.slane %v7713, 4
  %v7715 = vmax.f32 %v7713, %v7714
  %v7716 = vrot.slane %v7715, 2
  %v7717 = vmax.f32 %v7715, %v7716
  %v7718 = vrot.slane %v7717, 1
  %v7719 = vmax.f32 %v7717, %v7718
  %v7720 = vsel %vm7327, %v7319, -inf
  %v7721 = vrot.slane %v7720, 4
  %v7722 = vmax.f32 %v7720, %v7721
  %v7723 = vrot.slane %v7722, 2
  %v7724 = vmax.f32 %v7722, %v7723
  %v7725 = vrot.slane %v7724, 1
  %v7726 = vmax.f32 %v7724, %v7725
  %v7727 = vsel %vm7327, %v7320, -inf
  %v7728 = vrot.slane %v7727, 4
  %v7729 = vmax.f32 %v7727, %v7728
  %v7730 = vrot.slane %v7729, 2
  %v7731 = vmax.f32 %v7729, %v7730
  %v7732 = vrot.slane %v7731, 1
  %v7733 = vmax.f32 %v7731, %v7732
  %v7734 = vsel %vm7327, %v7321, -inf
  %v7735 = vrot.slane %v7734, 4
  %v7736 = vmax.f32 %v7734, %v7735
  %v7737 = vrot.slane %v7736, 2
  %v7738 = vmax.f32 %v7736, %v7737
  %v7739 = vrot.slane %v7738, 1
  %v7740 = vmax.f32 %v7738, %v7739
  %v7741 = vsel %vm7327, %v7322, -inf
  %v7742 = vrot.slane %v7741, 4
  %v7743 = vmax.f32 %v7741, %v7742
  %v7744 = vrot.slane %v7743, 2
  %v7745 = vmax.f32 %v7743, %v7744
  %v7746 = vrot.slane %v7745, 1
  %v7747 = vmax.f32 %v7745, %v7746
  %v7748 = vsel %vm7327, %v7323, -inf
  %v7749 = vrot.slane %v7748, 4
  %v7750 = vmax.f32 %v7748, %v7749
  %v7751 = vrot.slane %v7750, 2
  %v7752 = vmax.f32 %v7750, %v7751
  %v7753 = vrot.slane %v7752, 1
  %v7754 = vmax.f32 %v7752, %v7753
  %v7755 = vsel %vm7327, %v7324, -inf
  %v7756 = vrot.slane %v7755, 4
  %v7757 = vmax.f32 %v7755, %v7756
  %v7758 = vrot.slane %v7757, 2
  %v7759 = vmax.f32 %v7757, %v7758
  %v7760 = vrot.slane %v7759, 1
  %v7761 = vmax.f32 %v7759, %v7760
  %v7762 = vsel %vm7327, %v7325, -inf
  %v7763 = vrot.slane %v7762, 4
  %v7764 = vmax.f32 %v7762, %v7763
  %v7765 = vrot.slane %v7764, 2
  %v7766 = vmax.f32 %v7764, %v7765
  %v7767 = vrot.slane %v7766, 1
  %v7768 = vmax.f32 %v7766, %v7767
  %v7769 = vsel %vm7327, %v7326, -inf
  %v7770 = vrot.slane %v7769, 4
  %v7771 = vmax.f32 %v7769, %v7770
  %v7772 = vrot.slane %v7771, 2
  %v7773 = vmax.f32 %v7771, %v7772
  %v7774 = vrot.slane %v7773, 1
  %v7775 = vmax.f32 %v7773, %v7774
  %v7776 = vsub.f32 %v7263, %v7334
  %v7777 = vsub.f32 %v7264, %v7341
  %v7778 = vsub.f32 %v7265, %v7348
  %v7779 = vsub.f32 %v7266, %v7355
  %v7780 = vsub.f32 %v7267, %v7362
  %v7781 = vsub.f32 %v7268, %v7369
  %v7782 = vsub.f32 %v7269, %v7376
  %v7783 = vsub.f32 %v7270, %v7383
  %v7784 = vsub.f32 %v7271, %v7390
  %v7785 = vsub.f32 %v7272, %v7397
  %v7786 = vsub.f32 %v7273, %v7404
  %v7787 = vsub.f32 %v7274, %v7411
  %v7788 = vsub.f32 %v7275, %v7418
  %v7789 = vsub.f32 %v7276, %v7425
  %v7790 = vsub.f32 %v7277, %v7432
  %v7791 = vsub.f32 %v7278, %v7439
  %v7792 = vsub.f32 %v7279, %v7446
  %v7793 = vsub.f32 %v7280, %v7453
  %v7794 = vsub.f32 %v7281, %v7460
  %v7795 = vsub.f32 %v7282, %v7467
  %v7796 = vsub.f32 %v7283, %v7474
  %v7797 = vsub.f32 %v7284, %v7481
  %v7798 = vsub.f32 %v7285, %v7488
  %v7799 = vsub.f32 %v7286, %v7495
  %v7800 = vsub.f32 %v7287, %v7502
  %v7801 = vsub.f32 %v7288, %v7509
  %v7802 = vsub.f32 %v7289, %v7516
  %v7803 = vsub.f32 %v7290, %v7523
  %v7804 = vsub.f32 %v7291, %v7530
  %v7805 = vsub.f32 %v7292, %v7537
  %v7806 = vsub.f32 %v7293, %v7544
  %v7807 = vsub.f32 %v7294, %v7551
  %v7808 = vsub.f32 %v7295, %v7558
  %v7809 = vsub.f32 %v7296, %v7565
  %v7810 = vsub.f32 %v7297, %v7572
  %v7811 = vsub.f32 %v7298, %v7579
  %v7812 = vsub.f32 %v7299, %v7586
  %v7813 = vsub.f32 %v7300, %v7593
  %v7814 = vsub.f32 %v7301, %v7600
  %v7815 = vsub.f32 %v7302, %v7607
  %v7816 = vsub.f32 %v7303, %v7614
  %v7817 = vsub.f32 %v7304, %v7621
  %v7818 = vsub.f32 %v7305, %v7628
  %v7819 = vsub.f32 %v7306, %v7635
  %v7820 = vsub.f32 %v7307, %v7642
  %v7821 = vsub.f32 %v7308, %v7649
  %v7822 = vsub.f32 %v7309, %v7656
  %v7823 = vsub.f32 %v7310, %v7663
  %v7824 = vsub.f32 %v7311, %v7670
  %v7825 = vsub.f32 %v7312, %v7677
  %v7826 = vsub.f32 %v7313, %v7684
  %v7827 = vsub.f32 %v7314, %v7691
  %v7828 = vsub.f32 %v7315, %v7698
  %v7829 = vsub.f32 %v7316, %v7705
  %v7830 = vsub.f32 %v7317, %v7712
  %v7831 = vsub.f32 %v7318, %v7719
  %v7832 = vsub.f32 %v7319, %v7726
  %v7833 = vsub.f32 %v7320, %v7733
  %v7834 = vsub.f32 %v7321, %v7740
  %v7835 = vsub.f32 %v7322, %v7747
  %v7836 = vsub.f32 %v7323, %v7754
  %v7837 = vsub.f32 %v7324, %v7761
  %v7838 = vsub.f32 %v7325, %v7768
  %v7839 = vsub.f32 %v7326, %v7775
  %v7840 = vmul.f32 %v7776, 1.442695
  %v7841 = vpow.pop %v7840
  %v7842 = vmul.f32 %v7777, 1.442695
  %v7843 = vpow.pop %v7842
  %v7844 = vmul.f32 %v7778, 1.442695
  %v7845 = vpow.pop %v7844
  %v7846 = vmul.f32 %v7779, 1.442695
  %v7847 = vpow.pop %v7846
  %v7848 = vmul.f32 %v7780, 1.442695
  %v7849 = vpow.pop %v7848
  %v7850 = vmul.f32 %v7781, 1.442695
  %v7851 = vpow.pop %v7850
  %v7852 = vmul.f32 %v7782, 1.442695
  %v7853 = vpow.pop %v7852
  %v7854 = vmul.f32 %v7783, 1.442695
  %v7855 = vpow.pop %v7854
  %v7856 = vmul.f32 %v7784, 1.442695
  %v7857 = vpow.pop %v7856
  %v7858 = vmul.f32 %v7785, 1.442695
  %v7859 = vpow.pop %v7858
  %v7860 = vmul.f32 %v7786, 1.442695
  %v7861 = vpow.pop %v7860
  %v7862 = vmul.f32 %v7787, 1.442695
  %v7863 = vpow.pop %v7862
  %v7864 = vmul.f32 %v7788, 1.442695
  %v7865 = vpow.pop %v7864
  %v7866 = vmul.f32 %v7789, 1.442695
  %v7867 = vpow.pop %v7866
  %v7868 = vmul.f32 %v7790, 1.442695
  %v7869 = vpow.pop %v7868
  %v7870 = vmul.f32 %v7791, 1.442695
  %v7871 = vpow.pop %v7870
  %v7872 = vmul.f32 %v7792, 1.442695
  %v7873 = vpow.pop %v7872
  %v7874 = vmul.f32 %v7793, 1.442695
  %v7875 = vpow.pop %v7874
  %v7876 = vmul.f32 %v7794, 1.442695
  %v7877 = vpow.pop %v7876
  %v7878 = vmul.f32 %v7795, 1.442695
  %v7879 = vpow.pop %v7878
  %v7880 = vmul.f32 %v7796, 1.442695
  %v7881 = vpow.pop %v7880
  %v7882 = vmul.f32 %v7797, 1.442695
  %v7883 = vpow.pop %v7882
  %v7884 = vmul.f32 %v7798, 1.442695
  %v7885 = vpow.pop %v7884
  %v7886 = vmul.f32 %v7799, 1.442695
  %v7887 = vpow.pop %v7886
  %v7888 = vmul.f32 %v7800, 1.442695
  %v7889 = vpow.pop %v7888
  %v7890 = vmul.f32 %v7801, 1.442695
  %v7891 = vpow.pop %v7890
  %v7892 = vmul.f32 %v7802, 1.442695
  %v7893 = vpow.pop %v7892
  %v7894 = vmul.f32 %v7803, 1.442695
  %v7895 = vpow.pop %v7894
  %v7896 = vmul.f32 %v7804, 1.442695
  %v7897 = vpow.pop %v7896
  %v7898 = vmul.f32 %v7805, 1.442695
  %v7899 = vpow.pop %v7898
  %v7900 = vmul.f32 %v7806, 1.442695
  %v7901 = vpow.pop %v7900
  %v7902 = vmul.f32 %v7807, 1.442695
  %v7903 = vpow.pop %v7902
  %v7904 = vmul.f32 %v7808, 1.442695
  %v7905 = vpow.pop %v7904
  %v7906 = vmul.f32 %v7809, 1.442695
  %v7907 = vpow.pop %v7906
  %v7908 = vmul.f32 %v7810, 1.442695
  %v7909 = vpow.pop %v7908
  %v7910 = vmul.f32 %v7811, 1.442695
  %v7911 = vpow.pop %v7910
  %v7912 = vmul.f32 %v7812, 1.442695
  %v7913 = vpow.pop %v7912
  %v7914 = vmul.f32 %v7813, 1.442695
  %v7915 = vpow.pop %v7914
  %v7916 = vmul.f32 %v7814, 1.442695
  %v7917 = vpow.pop %v7916
  %v7918 = vmul.f32 %v7815, 1.442695
  %v7919 = vpow.pop %v7918
  %v7920 = vmul.f32 %v7816, 1.442695
  %v7921 = vpow.pop %v7920
  %v7922 = vmul.f32 %v7817, 1.442695
  %v7923 = vpow.pop %v7922
  %v7924 = vmul.f32 %v7818, 1.442695
  %v7925 = vpow.pop %v7924
  %v7926 = vmul.f32 %v7819, 1.442695
  %v7927 = vpow.pop %v7926
  %v7928 = vmul.f32 %v7820, 1.442695
  %v7929 = vpow.pop %v7928
  %v7930 = vmul.f32 %v7821, 1.442695
  %v7931 = vpow.pop %v7930
  %v7932 = vmul.f32 %v7822, 1.442695
  %v7933 = vpow.pop %v7932
  %v7934 = vmul.f32 %v7823, 1.442695
  %v7935 = vpow.pop %v7934
  %v7936 = vmul.f32 %v7824, 1.442695
  %v7937 = vpow.pop %v7936
  %v7938 = vmul.f32 %v7825, 1.442695
  %v7939 = vpow.pop %v7938
  %v7940 = vmul.f32 %v7826, 1.442695
  %v7941 = vpow.pop %v7940
  %v7942 = vmul.f32 %v7827, 1.442695
  %v7943 = vpow.pop %v7942
  %v7944 = vmul.f32 %v7828, 1.442695
  %v7945 = vpow.pop %v7944
  %v7946 = vmul.f32 %v7829, 1.442695
  %v7947 = vpow.pop %v7946
  %v7948 = vmul.f32 %v7830, 1.442695
  %v7949 = vpow.pop %v7948
  %v7950 = vmul.f32 %v7831, 1.442695
  %v7951 = vpow.pop %v7950
  %v7952 = vmul.f32 %v7832, 1.442695
  %v7953 = vpow.pop %v7952
  %v7954 = vmul.f32 %v7833, 1.442695
  %v7955 = vpow.pop %v7954
  %v7956 = vmul.f32 %v7834, 1.442695
  %v7957 = vpow.pop %v7956
  %v7958 = vmul.f32 %v7835, 1.442695
  %v7959 = vpow.pop %v7958
  %v7960 = vmul.f32 %v7836, 1.442695
  %v7961 = vpow.pop %v7960
  %v7962 = vmul.f32 %v7837, 1.442695
  %v7963 = vpow.pop %v7962
  %v7964 = vmul.f32 %v7838, 1.442695
  %v7965 = vpow.pop %v7964
  %v7966 = vmul.f32 %v7839, 1.442695
  %v7967 = vpow.pop %v7966
  %v7968 = vsel %vm7327, %v7841, 0.0
  %v7969 = vrot.slane %v7968, 4
  %v7970 = vadd.f32 %v7968, %v7969
  %v7971 = vrot.slane %v7970, 2
  %v7972 = vadd.f32 %v7970, %v7971
  %v7973 = vrot.slane %v7972, 1
  %v7974 = vadd.f32 %v7972, %v7973
  %v7975 = vsel %vm7327, %v7843, 0.0
  %v7976 = vrot.slane %v7975, 4
  %v7977 = vadd.f32 %v7975, %v7976
  %v7978 = vrot.slane %v7977, 2
  %v7979 = vadd.f32 %v7977, %v7978
  %v7980 = vrot.slane %v7979, 1
  %v7981 = vadd.f32 %v7979, %v7980
  %v7982 = vsel %vm7327, %v7845, 0.0
  %v7983 = vrot.slane %v7982, 4
  %v7984 = vadd.f32 %v7982, %v7983
  %v7985 = vrot.slane %v7984, 2
  %v7986 = vadd.f32 %v7984, %v7985
  %v7987 = vrot.slane %v7986, 1
  %v7988 = vadd.f32 %v7986, %v7987
  %v7989 = vsel %vm7327, %v7847, 0.0
  %v7990 = vrot.slane %v7989, 4
  %v7991 = vadd.f32 %v7989, %v7990
  %v7992 = vrot.slane %v7991, 2
  %v7993 = vadd.f32 %v7991, %v7992
  %v7994 = vrot.slane %v7993, 1
  %v7995 = vadd.f32 %v7993, %v7994
  %v7996 = vsel %vm7327, %v7849, 0.0
  %v7997 = vrot.slane %v7996, 4
  %v7998 = vadd.f32 %v7996, %v7997
  %v7999 = vrot.slane %v7998, 2
  %v8000 = vadd.f32 %v7998, %v7999
  %v8001 = vrot.slane %v8000, 1
  %v8002 = vadd.f32 %v8000, %v8001
  %v8003 = vsel %vm7327, %v7851, 0.0
  %v8004 = vrot.slane %v8003, 4
  %v8005 = vadd.f32 %v8003, %v8004
  %v8006 = vrot.slane %v8005, 2
  %v8007 = vadd.f32 %v8005, %v8006
  %v8008 = vrot.slane %v8007, 1
  %v8009 = vadd.f32 %v8007, %v8008
  %v8010 = vsel %vm7327, %v7853, 0.0
  %v8011 = vrot.slane %v8010, 4
  %v8012 = vadd.f32 %v8010, %v8011
  %v8013 = vrot.slane %v8012, 2
  %v8014 = vadd.f32 %v8012, %v8013
  %v8015 = vrot.slane %v8014, 1
  %v8016 = vadd.f32 %v8014, %v8015
  %v8017 = vsel %vm7327, %v7855, 0.0
  %v8018 = vrot.slane %v8017, 4
  %v8019 = vadd.f32 %v8017, %v8018
  %v8020 = vrot.slane %v8019, 2
  %v8021 = vadd.f32 %v8019, %v8020
  %v8022 = vrot.slane %v8021, 1
  %v8023 = vadd.f32 %v8021, %v8022
  %v8024 = vsel %vm7327, %v7857, 0.0
  %v8025 = vrot.slane %v8024, 4
  %v8026 = vadd.f32 %v8024, %v8025
  %v8027 = vrot.slane %v8026, 2
  %v8028 = vadd.f32 %v8026, %v8027
  %v8029 = vrot.slane %v8028, 1
  %v8030 = vadd.f32 %v8028, %v8029
  %v8031 = vsel %vm7327, %v7859, 0.0
  %v8032 = vrot.slane %v8031, 4
  %v8033 = vadd.f32 %v8031, %v8032
  %v8034 = vrot.slane %v8033, 2
  %v8035 = vadd.f32 %v8033, %v8034
  %v8036 = vrot.slane %v8035, 1
  %v8037 = vadd.f32 %v8035, %v8036
  %v8038 = vsel %vm7327, %v7861, 0.0
  %v8039 = vrot.slane %v8038, 4
  %v8040 = vadd.f32 %v8038, %v8039
  %v8041 = vrot.slane %v8040, 2
  %v8042 = vadd.f32 %v8040, %v8041
  %v8043 = vrot.slane %v8042, 1
  %v8044 = vadd.f32 %v8042, %v8043
  %v8045 = vsel %vm7327, %v7863, 0.0
  %v8046 = vrot.slane %v8045, 4
  %v8047 = vadd.f32 %v8045, %v8046
  %v8048 = vrot.slane %v8047, 2
  %v8049 = vadd.f32 %v8047, %v8048
  %v8050 = vrot.slane %v8049, 1
  %v8051 = vadd.f32 %v8049, %v8050
  %v8052 = vsel %vm7327, %v7865, 0.0
  %v8053 = vrot.slane %v8052, 4
  %v8054 = vadd.f32 %v8052, %v8053
  %v8055 = vrot.slane %v8054, 2
  %v8056 = vadd.f32 %v8054, %v8055
  %v8057 = vrot.slane %v8056, 1
  %v8058 = vadd.f32 %v8056, %v8057
  %v8059 = vsel %vm7327, %v7867, 0.0
  %v8060 = vrot.slane %v8059, 4
  %v8061 = vadd.f32 %v8059, %v8060
  %v8062 = vrot.slane %v8061, 2
  %v8063 = vadd.f32 %v8061, %v8062
  %v8064 = vrot.slane %v8063, 1
  %v8065 = vadd.f32 %v8063, %v8064
  %v8066 = vsel %vm7327, %v7869, 0.0
  %v8067 = vrot.slane %v8066, 4
  %v8068 = vadd.f32 %v8066, %v8067
  %v8069 = vrot.slane %v8068, 2
  %v8070 = vadd.f32 %v8068, %v8069
  %v8071 = vrot.slane %v8070, 1
  %v8072 = vadd.f32 %v8070, %v8071
  %v8073 = vsel %vm7327, %v7871, 0.0
  %v8074 = vrot.slane %v8073, 4
  %v8075 = vadd.f32 %v8073, %v8074
  %v8076 = vrot.slane %v8075, 2
  %v8077 = vadd.f32 %v8075, %v8076
  %v8078 = vrot.slane %v8077, 1
  %v8079 = vadd.f32 %v8077, %v8078
  %v8080 = vsel %vm7327, %v7873, 0.0
  %v8081 = vrot.slane %v8080, 4
  %v8082 = vadd.f32 %v8080, %v8081
  %v8083 = vrot.slane %v8082, 2
  %v8084 = vadd.f32 %v8082, %v8083
  %v8085 = vrot.slane %v8084, 1
  %v8086 = vadd.f32 %v8084, %v8085
  %v8087 = vsel %vm7327, %v7875, 0.0
  %v8088 = vrot.slane %v8087, 4
  %v8089 = vadd.f32 %v8087, %v8088
  %v8090 = vrot.slane %v8089, 2
  %v8091 = vadd.f32 %v8089, %v8090
  %v8092 = vrot.slane %v8091, 1
  %v8093 = vadd.f32 %v8091, %v8092
  %v8094 = vsel %vm7327, %v7877, 0.0
  %v8095 = vrot.slane %v8094, 4
  %v8096 = vadd.f32 %v8094, %v8095
  %v8097 = vrot.slane %v8096, 2
  %v8098 = vadd.f32 %v8096, %v8097
  %v8099 = vrot.slane %v8098, 1
  %v8100 = vadd.f32 %v8098, %v8099
  %v8101 = vsel %vm7327, %v7879, 0.0
  %v8102 = vrot.slane %v8101, 4
  %v8103 = vadd.f32 %v8101, %v8102
  %v8104 = vrot.slane %v8103, 2
  %v8105 = vadd.f32 %v8103, %v8104
  %v8106 = vrot.slane %v8105, 1
  %v8107 = vadd.f32 %v8105, %v8106
  %v8108 = vsel %vm7327, %v7881, 0.0
  %v8109 = vrot.slane %v8108, 4
  %v8110 = vadd.f32 %v8108, %v8109
  %v8111 = vrot.slane %v8110, 2
  %v8112 = vadd.f32 %v8110, %v8111
  %v8113 = vrot.slane %v8112, 1
  %v8114 = vadd.f32 %v8112, %v8113
  %v8115 = vsel %vm7327, %v7883, 0.0
  %v8116 = vrot.slane %v8115, 4
  %v8117 = vadd.f32 %v8115, %v8116
  %v8118 = vrot.slane %v8117, 2
  %v8119 = vadd.f32 %v8117, %v8118
  %v8120 = vrot.slane %v8119, 1
  %v8121 = vadd.f32 %v8119, %v8120
  %v8122 = vsel %vm7327, %v7885, 0.0
  %v8123 = vrot.slane %v8122, 4
  %v8124 = vadd.f32 %v8122, %v8123
  %v8125 = vrot.slane %v8124, 2
  %v8126 = vadd.f32 %v8124, %v8125
  %v8127 = vrot.slane %v8126, 1
  %v8128 = vadd.f32 %v8126, %v8127
  %v8129 = vsel %vm7327, %v7887, 0.0
  %v8130 = vrot.slane %v8129, 4
  %v8131 = vadd.f32 %v8129, %v8130
  %v8132 = vrot.slane %v8131, 2
  %v8133 = vadd.f32 %v8131, %v8132
  %v8134 = vrot.slane %v8133, 1
  %v8135 = vadd.f32 %v8133, %v8134
  %v8136 = vsel %vm7327, %v7889, 0.0
  %v8137 = vrot.slane %v8136, 4
  %v8138 = vadd.f32 %v8136, %v8137
  %v8139 = vrot.slane %v8138, 2
  %v8140 = vadd.f32 %v8138, %v8139
  %v8141 = vrot.slane %v8140, 1
  %v8142 = vadd.f32 %v8140, %v8141
  %v8143 = vsel %vm7327, %v7891, 0.0
  %v8144 = vrot.slane %v8143, 4
  %v8145 = vadd.f32 %v8143, %v8144
  %v8146 = vrot.slane %v8145, 2
  %v8147 = vadd.f32 %v8145, %v8146
  %v8148 = vrot.slane %v8147, 1
  %v8149 = vadd.f32 %v8147, %v8148
  %v8150 = vsel %vm7327, %v7893, 0.0
  %v8151 = vrot.slane %v8150, 4
  %v8152 = vadd.f32 %v8150, %v8151
  %v8153 = vrot.slane %v8152, 2
  %v8154 = vadd.f32 %v8152, %v8153
  %v8155 = vrot.slane %v8154, 1
  %v8156 = vadd.f32 %v8154, %v8155
  %v8157 = vsel %vm7327, %v7895, 0.0
  %v8158 = vrot.slane %v8157, 4
  %v8159 = vadd.f32 %v8157, %v8158
  %v8160 = vrot.slane %v8159, 2
  %v8161 = vadd.f32 %v8159, %v8160
  %v8162 = vrot.slane %v8161, 1
  %v8163 = vadd.f32 %v8161, %v8162
  %v8164 = vsel %vm7327, %v7897, 0.0
  %v8165 = vrot.slane %v8164, 4
  %v8166 = vadd.f32 %v8164, %v8165
  %v8167 = vrot.slane %v8166, 2
  %v8168 = vadd.f32 %v8166, %v8167
  %v8169 = vrot.slane %v8168, 1
  %v8170 = vadd.f32 %v8168, %v8169
  %v8171 = vsel %vm7327, %v7899, 0.0
  %v8172 = vrot.slane %v8171, 4
  %v8173 = vadd.f32 %v8171, %v8172
  %v8174 = vrot.slane %v8173, 2
  %v8175 = vadd.f32 %v8173, %v8174
  %v8176 = vrot.slane %v8175, 1
  %v8177 = vadd.f32 %v8175, %v8176
  %v8178 = vsel %vm7327, %v7901, 0.0
  %v8179 = vrot.slane %v8178, 4
  %v8180 = vadd.f32 %v8178, %v8179
  %v8181 = vrot.slane %v8180, 2
  %v8182 = vadd.f32 %v8180, %v8181
  %v8183 = vrot.slane %v8182, 1
  %v8184 = vadd.f32 %v8182, %v8183
  %v8185 = vsel %vm7327, %v7903, 0.0
  %v8186 = vrot.slane %v8185, 4
  %v8187 = vadd.f32 %v8185, %v8186
  %v8188 = vrot.slane %v8187, 2
  %v8189 = vadd.f32 %v8187, %v8188
  %v8190 = vrot.slane %v8189, 1
  %v8191 = vadd.f32 %v8189, %v8190
  %v8192 = vsel %vm7327, %v7905, 0.0
  %v8193 = vrot.slane %v8192, 4
  %v8194 = vadd.f32 %v8192, %v8193
  %v8195 = vrot.slane %v8194, 2
  %v8196 = vadd.f32 %v8194, %v8195
  %v8197 = vrot.slane %v8196, 1
  %v8198 = vadd.f32 %v8196, %v8197
  %v8199 = vsel %vm7327, %v7907, 0.0
  %v8200 = vrot.slane %v8199, 4
  %v8201 = vadd.f32 %v8199, %v8200
  %v8202 = vrot.slane %v8201, 2
  %v8203 = vadd.f32 %v8201, %v8202
  %v8204 = vrot.slane %v8203, 1
  %v8205 = vadd.f32 %v8203, %v8204
  %v8206 = vsel %vm7327, %v7909, 0.0
  %v8207 = vrot.slane %v8206, 4
  %v8208 = vadd.f32 %v8206, %v8207
  %v8209 = vrot.slane %v8208, 2
  %v8210 = vadd.f32 %v8208, %v8209
  %v8211 = vrot.slane %v8210, 1
  %v8212 = vadd.f32 %v8210, %v8211
  %v8213 = vsel %vm7327, %v7911, 0.0
  %v8214 = vrot.slane %v8213, 4
  %v8215 = vadd.f32 %v8213, %v8214
  %v8216 = vrot.slane %v8215, 2
  %v8217 = vadd.f32 %v8215, %v8216
  %v8218 = vrot.slane %v8217, 1
  %v8219 = vadd.f32 %v8217, %v8218
  %v8220 = vsel %vm7327, %v7913, 0.0
  %v8221 = vrot.slane %v8220, 4
  %v8222 = vadd.f32 %v8220, %v8221
  %v8223 = vrot.slane %v8222, 2
  %v8224 = vadd.f32 %v8222, %v8223
  %v8225 = vrot.slane %v8224, 1
  %v8226 = vadd.f32 %v8224, %v8225
  %v8227 = vsel %vm7327, %v7915, 0.0
  %v8228 = vrot.slane %v8227, 4
  %v8229 = vadd.f32 %v8227, %v8228
  %v8230 = vrot.slane %v8229, 2
  %v8231 = vadd.f32 %v8229, %v8230
  %v8232 = vrot.slane %v8231, 1
  %v8233 = vadd.f32 %v8231, %v8232
  %v8234 = vsel %vm7327, %v7917, 0.0
  %v8235 = vrot.slane %v8234, 4
  %v8236 = vadd.f32 %v8234, %v8235
  %v8237 = vrot.slane %v8236, 2
  %v8238 = vadd.f32 %v8236, %v8237
  %v8239 = vrot.slane %v8238, 1
  %v8240 = vadd.f32 %v8238, %v8239
  %v8241 = vsel %vm7327, %v7919, 0.0
  %v8242 = vrot.slane %v8241, 4
  %v8243 = vadd.f32 %v8241, %v8242
  %v8244 = vrot.slane %v8243, 2
  %v8245 = vadd.f32 %v8243, %v8244
  %v8246 = vrot.slane %v8245, 1
  %v8247 = vadd.f32 %v8245, %v8246
  %v8248 = vsel %vm7327, %v7921, 0.0
  %v8249 = vrot.slane %v8248, 4
  %v8250 = vadd.f32 %v8248, %v8249
  %v8251 = vrot.slane %v8250, 2
  %v8252 = vadd.f32 %v8250, %v8251
  %v8253 = vrot.slane %v8252, 1
  %v8254 = vadd.f32 %v8252, %v8253
  %v8255 = vsel %vm7327, %v7923, 0.0
  %v8256 = vrot.slane %v8255, 4
  %v8257 = vadd.f32 %v8255, %v8256
  %v8258 = vrot.slane %v8257, 2
  %v8259 = vadd.f32 %v8257, %v8258
  %v8260 = vrot.slane %v8259, 1
  %v8261 = vadd.f32 %v8259, %v8260
  %v8262 = vsel %vm7327, %v7925, 0.0
  %v8263 = vrot.slane %v8262, 4
  %v8264 = vadd.f32 %v8262, %v8263
  %v8265 = vrot.slane %v8264, 2
  %v8266 = vadd.f32 %v8264, %v8265
  %v8267 = vrot.slane %v8266, 1
  %v8268 = vadd.f32 %v8266, %v8267
  %v8269 = vsel %vm7327, %v7927, 0.0
  %v8270 = vrot.slane %v8269, 4
  %v8271 = vadd.f32 %v8269, %v8270
  %v8272 = vrot.slane %v8271, 2
  %v8273 = vadd.f32 %v8271, %v8272
  %v8274 = vrot.slane %v8273, 1
  %v8275 = vadd.f32 %v8273, %v8274
  %v8276 = vsel %vm7327, %v7929, 0.0
  %v8277 = vrot.slane %v8276, 4
  %v8278 = vadd.f32 %v8276, %v8277
  %v8279 = vrot.slane %v8278, 2
  %v8280 = vadd.f32 %v8278, %v8279
  %v8281 = vrot.slane %v8280, 1
  %v8282 = vadd.f32 %v8280, %v8281
  %v8283 = vsel %vm7327, %v7931, 0.0
  %v8284 = vrot.slane %v8283, 4
  %v8285 = vadd.f32 %v8283, %v8284
  %v8286 = vrot.slane %v8285, 2
  %v8287 = vadd.f32 %v8285, %v8286
  %v8288 = vrot.slane %v8287, 1
  %v8289 = vadd.f32 %v8287, %v8288
  %v8290 = vsel %vm7327, %v7933, 0.0
  %v8291 = vrot.slane %v8290, 4
  %v8292 = vadd.f32 %v8290, %v8291
  %v8293 = vrot.slane %v8292, 2
  %v8294 = vadd.f32 %v8292, %v8293
  %v8295 = vrot.slane %v8294, 1
  %v8296 = vadd.f32 %v8294, %v8295
  %v8297 = vsel %vm7327, %v7935, 0.0
  %v8298 = vrot.slane %v8297, 4
  %v8299 = vadd.f32 %v8297, %v8298
  %v8300 = vrot.slane %v8299, 2
  %v8301 = vadd.f32 %v8299, %v8300
  %v8302 = vrot.slane %v8301, 1
  %v8303 = vadd.f32 %v8301, %v8302
  %v8304 = vsel %vm7327, %v7937, 0.0
  %v8305 = vrot.slane %v8304, 4
  %v8306 = vadd.f32 %v8304, %v8305
  %v8307 = vrot.slane %v8306, 2
  %v8308 = vadd.f32 %v8306, %v8307
  %v8309 = vrot.slane %v8308, 1
  %v8310 = vadd.f32 %v8308, %v8309
  %v8311 = vsel %vm7327, %v7939, 0.0
  %v8312 = vrot.slane %v8311, 4
  %v8313 = vadd.f32 %v8311, %v8312
  %v8314 = vrot.slane %v8313, 2
  %v8315 = vadd.f32 %v8313, %v8314
  %v8316 = vrot.slane %v8315, 1
  %v8317 = vadd.f32 %v8315, %v8316
  %v8318 = vsel %vm7327, %v7941, 0.0
  %v8319 = vrot.slane %v8318, 4
  %v8320 = vadd.f32 %v8318, %v8319
  %v8321 = vrot.slane %v8320, 2
  %v8322 = vadd.f32 %v8320, %v8321
  %v8323 = vrot.slane %v8322, 1
  %v8324 = vadd.f32 %v8322, %v8323
  %v8325 = vsel %vm7327, %v7943, 0.0
  %v8326 = vrot.slane %v8325, 4
  %v8327 = vadd.f32 %v8325, %v8326
  %v8328 = vrot.slane %v8327, 2
  %v8329 = vadd.f32 %v8327, %v8328
  %v8330 = vrot.slane %v8329, 1
  %v8331 = vadd.f32 %v8329, %v8330
  %v8332 = vsel %vm7327, %v7945, 0.0
  %v8333 = vrot.slane %v8332, 4
  %v8334 = vadd.f32 %v8332, %v8333
  %v8335 = vrot.slane %v8334, 2
  %v8336 = vadd.f32 %v8334, %v8335
  %v8337 = vrot.slane %v8336, 1
  %v8338 = vadd.f32 %v8336, %v8337
  %v8339 = vsel %vm7327, %v7947, 0.0
  %v8340 = vrot.slane %v8339, 4
  %v8341 = vadd.f32 %v8339, %v8340
  %v8342 = vrot.slane %v8341, 2
  %v8343 = vadd.f32 %v8341, %v8342
  %v8344 = vrot.slane %v8343, 1
  %v8345 = vadd.f32 %v8343, %v8344
  %v8346 = vsel %vm7327, %v7949, 0.0
  %v8347 = vrot.slane %v8346, 4
  %v8348 = vadd.f32 %v8346, %v8347
  %v8349 = vrot.slane %v8348, 2
  %v8350 = vadd.f32 %v8348, %v8349
  %v8351 = vrot.slane %v8350, 1
  %v8352 = vadd.f32 %v8350, %v8351
  %v8353 = vsel %vm7327, %v7951, 0.0
  %v8354 = vrot.slane %v8353, 4
  %v8355 = vadd.f32 %v8353, %v8354
  %v8356 = vrot.slane %v8355, 2
  %v8357 = vadd.f32 %v8355, %v8356
  %v8358 = vrot.slane %v8357, 1
  %v8359 = vadd.f32 %v8357, %v8358
  %v8360 = vsel %vm7327, %v7953, 0.0
  %v8361 = vrot.slane %v8360, 4
  %v8362 = vadd.f32 %v8360, %v8361
  %v8363 = vrot.slane %v8362, 2
  %v8364 = vadd.f32 %v8362, %v8363
  %v8365 = vrot.slane %v8364, 1
  %v8366 = vadd.f32 %v8364, %v8365
  %v8367 = vsel %vm7327, %v7955, 0.0
  %v8368 = vrot.slane %v8367, 4
  %v8369 = vadd.f32 %v8367, %v8368
  %v8370 = vrot.slane %v8369, 2
  %v8371 = vadd.f32 %v8369, %v8370
  %v8372 = vrot.slane %v8371, 1
  %v8373 = vadd.f32 %v8371, %v8372
  %v8374 = vsel %vm7327, %v7957, 0.0
  %v8375 = vrot.slane %v8374, 4
  %v8376 = vadd.f32 %v8374, %v8375
  %v8377 = vrot.slane %v8376, 2
  %v8378 = vadd.f32 %v8376, %v8377
  %v8379 = vrot.slane %v8378, 1
  %v8380 = vadd.f32 %v8378, %v8379
  %v8381 = vsel %vm7327, %v7959, 0.0
  %v8382 = vrot.slane %v8381, 4
  %v8383 = vadd.f32 %v8381, %v8382
  %v8384 = vrot.slane %v8383, 2
  %v8385 = vadd.f32 %v8383, %v8384
  %v8386 = vrot.slane %v8385, 1
  %v8387 = vadd.f32 %v8385, %v8386
  %v8388 = vsel %vm7327, %v7961, 0.0
  %v8389 = vrot.slane %v8388, 4
  %v8390 = vadd.f32 %v8388, %v8389
  %v8391 = vrot.slane %v8390, 2
  %v8392 = vadd.f32 %v8390, %v8391
  %v8393 = vrot.slane %v8392, 1
  %v8394 = vadd.f32 %v8392, %v8393
  %v8395 = vsel %vm7327, %v7963, 0.0
  %v8396 = vrot.slane %v8395, 4
  %v8397 = vadd.f32 %v8395, %v8396
  %v8398 = vrot.slane %v8397, 2
  %v8399 = vadd.f32 %v8397, %v8398
  %v8400 = vrot.slane %v8399, 1
  %v8401 = vadd.f32 %v8399, %v8400
  %v8402 = vsel %vm7327, %v7965, 0.0
  %v8403 = vrot.slane %v8402, 4
  %v8404 = vadd.f32 %v8402, %v8403
  %v8405 = vrot.slane %v8404, 2
  %v8406 = vadd.f32 %v8404, %v8405
  %v8407 = vrot.slane %v8406, 1
  %v8408 = vadd.f32 %v8406, %v8407
  %v8409 = vsel %vm7327, %v7967, 0.0
  %v8410 = vrot.slane %v8409, 4
  %v8411 = vadd.f32 %v8409, %v8410
  %v8412 = vrot.slane %v8411, 2
  %v8413 = vadd.f32 %v8411, %v8412
  %v8414 = vrot.slane %v8413, 1
  %v8415 = vadd.f32 %v8413, %v8414
  %v8416 = vrcp.pop %v7974
  %v8417 = vrcp.pop %v7981
  %v8418 = vrcp.pop %v7988
  %v8419 = vrcp.pop %v7995
  %v8420 = vrcp.pop %v8002
  %v8421 = vrcp.pop %v8009
  %v8422 = vrcp.pop %v8016
  %v8423 = vrcp.pop %v8023
  %v8424 = vrcp.pop %v8030
  %v8425 = vrcp.pop %v8037
  %v8426 = vrcp.pop %v8044
  %v8427 = vrcp.pop %v8051
  %v8428 = vrcp.pop %v8058
  %v8429 = vrcp.pop %v8065
  %v8430 = vrcp.pop %v8072
  %v8431 = vrcp.pop %v8079
  %v8432 = vrcp.pop %v8086
  %v8433 = vrcp.pop %v8093
  %v8434 = vrcp.pop %v8100
  %v8435 = vrcp.pop %v8107
  %v8436 = vrcp.pop %v8114
  %v8437 = vrcp.pop %v8121
  %v8438 = vrcp.pop %v8128
  %v8439 = vrcp.pop %v8135
  %v8440 = vrcp.pop %v8142
  %v8441 = vrcp.pop %v8149
  %v8442 = vrcp.pop %v8156
  %v8443 = vrcp.pop %v8163
  %v8444 = vrcp.pop %v8170
  %v8445 = vrcp.pop %v8177
  %v8446 = vrcp.pop %v8184
  %v8447 = vrcp.pop %v8191
  %v8448 = vrcp.pop %v8198
  %v8449 = vrcp.pop %v8205
  %v8450 = vrcp.pop %v8212
  %v8451 = vrcp.pop %v8219
  %v8452 = vrcp.pop %v8226
  %v8453 = vrcp.pop %v8233
  %v8454 = vrcp.pop %v8240
  %v8455 = vrcp.pop %v8247
  %v8456 = vrcp.pop %v8254
  %v8457 = vrcp.pop %v8261
  %v8458 = vrcp.pop %v8268
  %v8459 = vrcp.pop %v8275
  %v8460 = vrcp.pop %v8282
  %v8461 = vrcp.pop %v8289
  %v8462 = vrcp.pop %v8296
  %v8463 = vrcp.pop %v8303
  %v8464 = vrcp.pop %v8310
  %v8465 = vrcp.pop %v8317
  %v8466 = vrcp.pop %v8324
  %v8467 = vrcp.pop %v8331
  %v8468 = vrcp.pop %v8338
  %v8469 = vrcp.pop %v8345
  %v8470 = vrcp.pop %v8352
  %v8471 = vrcp.pop %v8359
  %v8472 = vrcp.pop %v8366
  %v8473 = vrcp.pop %v8373
  %v8474 = vrcp.pop %v8380
  %v8475 = vrcp.pop %v8387
  %v8476 = vrcp.pop %v8394
  %v8477 = vrcp.pop %v8401
  %v8478 = vrcp.pop %v8408
  %v8479 = vrcp.pop %v8415
  %v8480 = vmul.f32 %v7841, %v8416
  %v8481 = vmul.f32 %v7843, %v8417
  %v8482 = vmul.f32 %v7845, %v8418
  %v8483 = vmul.f32 %v7847, %v8419
  %v8484 = vmul.f32 %v7849, %v8420
  %v8485 = vmul.f32 %v7851, %v8421
  %v8486 = vmul.f32 %v7853, %v8422
  %v8487 = vmul.f32 %v7855, %v8423
  %v8488 = vmul.f32 %v7857, %v8424
  %v8489 = vmul.f32 %v7859, %v8425
  %v8490 = vmul.f32 %v7861, %v8426
  %v8491 = vmul.f32 %v7863, %v8427
  %v8492 = vmul.f32 %v7865, %v8428
  %v8493 = vmul.f32 %v7867, %v8429
  %v8494 = vmul.f32 %v7869, %v8430
  %v8495 = vmul.f32 %v7871, %v8431
  %v8496 = vmul.f32 %v7873, %v8432
  %v8497 = vmul.f32 %v7875, %v8433
  %v8498 = vmul.f32 %v7877, %v8434
  %v8499 = vmul.f32 %v7879, %v8435
  %v8500 = vmul.f32 %v7881, %v8436
  %v8501 = vmul.f32 %v7883, %v8437
  %v8502 = vmul.f32 %v7885, %v8438
  %v8503 = vmul.f32 %v7887, %v8439
  %v8504 = vmul.f32 %v7889, %v8440
  %v8505 = vmul.f32 %v7891, %v8441
  %v8506 = vmul.f32 %v7893, %v8442
  %v8507 = vmul.f32 %v7895, %v8443
  %v8508 = vmul.f32 %v7897, %v8444
  %v8509 = vmul.f32 %v7899, %v8445
  %v8510 = vmul.f32 %v7901, %v8446
  %v8511 = vmul.f32 %v7903, %v8447
  %v8512 = vmul.f32 %v7905, %v8448
  %v8513 = vmul.f32 %v7907, %v8449
  %v8514 = vmul.f32 %v7909, %v8450
  %v8515 = vmul.f32 %v7911, %v8451
  %v8516 = vmul.f32 %v7913, %v8452
  %v8517 = vmul.f32 %v7915, %v8453
  %v8518 = vmul.f32 %v7917, %v8454
  %v8519 = vmul.f32 %v7919, %v8455
  %v8520 = vmul.f32 %v7921, %v8456
  %v8521 = vmul.f32 %v7923, %v8457
  %v8522 = vmul.f32 %v7925, %v8458
  %v8523 = vmul.f32 %v7927, %v8459
  %v8524 = vmul.f32 %v7929, %v8460
  %v8525 = vmul.f32 %v7931, %v8461
  %v8526 = vmul.f32 %v7933, %v8462
  %v8527 = vmul.f32 %v7935, %v8463
  %v8528 = vmul.f32 %v7937, %v8464
  %v8529 = vmul.f32 %v7939, %v8465
  %v8530 = vmul.f32 %v7941, %v8466
  %v8531 = vmul.f32 %v7943, %v8467
  %v8532 = vmul.f32 %v7945, %v8468
  %v8533 = vmul.f32 %v7947, %v8469
  %v8534 = vmul.f32 %v7949, %v8470
  %v8535 = vmul.f32 %v7951, %v8471
  %v8536 = vmul.f32 %v7953, %v8472
  %v8537 = vmul.f32 %v7955, %v8473
  %v8538 = vmul.f32 %v7957, %v8474
  %v8539 = vmul.f32 %v7959, %v8475
  %v8540 = vmul.f32 %v7961, %v8476
  %v8541 = vmul.f32 %v7963, %v8477
  %v8542 = vmul.f32 %v7965, %v8478
  %v8543 = vmul.f32 %v7967, %v8479
  %8608 = vrot.lane.b32.xlu0 %v7009, 124
  %v8609 = vpop.permute.xlu0 %8608
  %8610 = vrot.lane.b32.xlu0 %v7012, 124
  %v8611 = vpop.permute.xlu0 %8610
  %8612 = vrot.lane.b32.xlu0 %v7017, 124
  %v8613 = vpop.permute.xlu0 %8612
  %8614 = vrot.lane.b32.xlu0 %v7020, 124
  %v8615 = vpop.permute.xlu0 %8614
  %8616 = vrot.lane.b32.xlu0 %v7025, 124
  %v8617 = vpop.permute.xlu0 %8616
  %8618 = vrot.lane.b32.xlu0 %v7028, 124
  %v8619 = vpop.permute.xlu0 %8618
  %8620 = vrot.lane.b32.xlu0 %v7033, 124
  %v8621 = vpop.permute.xlu0 %8620
  %8622 = vrot.lane.b32.xlu0 %v7036, 124
  %v8623 = vpop.permute.xlu0 %8622
  %8624 = vrot.lane.b32.xlu0 %v7041, 124
  %v8625 = vpop.permute.xlu0 %8624
  %8626 = vrot.lane.b32.xlu0 %v7044, 124
  %v8627 = vpop.permute.xlu0 %8626
  %8628 = vrot.lane.b32.xlu0 %v7049, 124
  %v8629 = vpop.permute.xlu0 %8628
  %8630 = vrot.lane.b32.xlu0 %v7052, 124
  %v8631 = vpop.permute.xlu0 %8630
  %8632 = vrot.lane.b32.xlu0 %v7057, 124
  %v8633 = vpop.permute.xlu0 %8632
  %8634 = vrot.lane.b32.xlu0 %v7060, 124
  %v8635 = vpop.permute.xlu0 %8634
  %8636 = vrot.lane.b32.xlu0 %v7065, 124
  %v8637 = vpop.permute.xlu0 %8636
  %8638 = vrot.lane.b32.xlu0 %v7068, 124
  %v8639 = vpop.permute.xlu0 %8638
  %8640 = vrot.lane.b32.xlu0 %v7073, 124
  %v8641 = vpop.permute.xlu0 %8640
  %8642 = vrot.lane.b32.xlu0 %v7076, 124
  %v8643 = vpop.permute.xlu0 %8642
  %8644 = vrot.lane.b32.xlu0 %v7081, 124
  %v8645 = vpop.permute.xlu0 %8644
  %8646 = vrot.lane.b32.xlu0 %v7084, 124
  %v8647 = vpop.permute.xlu0 %8646
  %8648 = vrot.lane.b32.xlu0 %v7089, 124
  %v8649 = vpop.permute.xlu0 %8648
  %8650 = vrot.lane.b32.xlu0 %v7092, 124
  %v8651 = vpop.permute.xlu0 %8650
  %8652 = vrot.lane.b32.xlu0 %v7097, 124
  %v8653 = vpop.permute.xlu0 %8652
  %8654 = vrot.lane.b32.xlu0 %v7100, 124
  %v8655 = vpop.permute.xlu0 %8654
  %8656 = vrot.lane.b32.xlu0 %v7105, 124
  %v8657 = vpop.permute.xlu0 %8656
  %8658 = vrot.lane.b32.xlu0 %v7108, 124
  %v8659 = vpop.permute.xlu0 %8658
  %8660 = vrot.lane.b32.xlu0 %v7113, 124
  %v8661 = vpop.permute.xlu0 %8660
  %8662 = vrot.lane.b32.xlu0 %v7116, 124
  %v8663 = vpop.permute.xlu0 %8662
  %8664 = vrot.lane.b32.xlu0 %v7121, 124
  %v8665 = vpop.permute.xlu0 %8664
  %8666 = vrot.lane.b32.xlu0 %v7124, 124
  %v8667 = vpop.permute.xlu0 %8666
  %8668 = vrot.lane.b32.xlu0 %v7129, 124
  %v8669 = vpop.permute.xlu0 %8668
  %8670 = vrot.lane.b32.xlu0 %v7132, 124
  %v8671 = vpop.permute.xlu0 %8670
  %8672 = vrot.lane.b32.xlu0 %v7137, 124
  %v8673 = vpop.permute.xlu0 %8672
  %8674 = vrot.lane.b32.xlu0 %v7140, 124
  %v8675 = vpop.permute.xlu0 %8674
  %8676 = vrot.lane.b32.xlu0 %v7145, 124
  %v8677 = vpop.permute.xlu0 %8676
  %8678 = vrot.lane.b32.xlu0 %v7148, 124
  %v8679 = vpop.permute.xlu0 %8678
  %8680 = vrot.lane.b32.xlu0 %v7153, 124
  %v8681 = vpop.permute.xlu0 %8680
  %8682 = vrot.lane.b32.xlu0 %v7156, 124
  %v8683 = vpop.permute.xlu0 %8682
  %8684 = vrot.lane.b32.xlu0 %v7161, 124
  %v8685 = vpop.permute.xlu0 %8684
  %8686 = vrot.lane.b32.xlu0 %v7164, 124
  %v8687 = vpop.permute.xlu0 %8686
  %8688 = vrot.lane.b32.xlu0 %v7169, 124
  %v8689 = vpop.permute.xlu0 %8688
  %8690 = vrot.lane.b32.xlu0 %v7172, 124
  %v8691 = vpop.permute.xlu0 %8690
  %8692 = vrot.lane.b32.xlu0 %v7177, 124
  %v8693 = vpop.permute.xlu0 %8692
  %8694 = vrot.lane.b32.xlu0 %v7180, 124
  %v8695 = vpop.permute.xlu0 %8694
  %8696 = vrot.lane.b32.xlu0 %v7185, 124
  %v8697 = vpop.permute.xlu0 %8696
  %8698 = vrot.lane.b32.xlu0 %v7188, 124
  %v8699 = vpop.permute.xlu0 %8698
  %8700 = vrot.lane.b32.xlu0 %v7193, 124
  %v8701 = vpop.permute.xlu0 %8700
  %8702 = vrot.lane.b32.xlu0 %v7196, 124
  %v8703 = vpop.permute.xlu0 %8702
  %8704 = vrot.lane.b32.xlu0 %v7201, 124
  %v8705 = vpop.permute.xlu0 %8704
  %8706 = vrot.lane.b32.xlu0 %v7204, 124
  %v8707 = vpop.permute.xlu0 %8706
  %8708 = vrot.lane.b32.xlu0 %v7209, 124
  %v8709 = vpop.permute.xlu0 %8708
  %8710 = vrot.lane.b32.xlu0 %v7212, 124
  %v8711 = vpop.permute.xlu0 %8710
  %8712 = vrot.lane.b32.xlu0 %v7217, 124
  %v8713 = vpop.permute.xlu0 %8712
  %8714 = vrot.lane.b32.xlu0 %v7220, 124
  %v8715 = vpop.permute.xlu0 %8714
  %8716 = vrot.lane.b32.xlu0 %v7225, 124
  %v8717 = vpop.permute.xlu0 %8716
  %8718 = vrot.lane.b32.xlu0 %v7228, 124
  %v8719 = vpop.permute.xlu0 %8718
  %8720 = vrot.lane.b32.xlu0 %v7233, 124
  %v8721 = vpop.permute.xlu0 %8720
  %8722 = vrot.lane.b32.xlu0 %v7236, 124
  %v8723 = vpop.permute.xlu0 %8722
  %8724 = vrot.lane.b32.xlu0 %v7241, 124
  %v8725 = vpop.permute.xlu0 %8724
  %8726 = vrot.lane.b32.xlu0 %v7244, 124
  %v8727 = vpop.permute.xlu0 %8726
  %8728 = vrot.lane.b32.xlu0 %v7249, 124
  %v8729 = vpop.permute.xlu0 %8728
  %8730 = vrot.lane.b32.xlu0 %v7252, 124
  %v8731 = vpop.permute.xlu0 %8730
  %8732 = vrot.lane.b32.xlu0 %v7257, 124
  %v8733 = vpop.permute.xlu0 %8732
  %8734 = vrot.lane.b32.xlu0 %v7260, 124
  %v8735 = vpop.permute.xlu0 %8734
  %v8800 = vadd.f32 %v8480, %v8609
  %v8801 = vadd.f32 %v8481, %v8611
  %v8802 = vadd.f32 %v8482, %v8613
  %v8803 = vadd.f32 %v8483, %v8615
  %v8804 = vadd.f32 %v8484, %v8617
  %v8805 = vadd.f32 %v8485, %v8619
  %v8806 = vadd.f32 %v8486, %v8621
  %v8807 = vadd.f32 %v8487, %v8623
  %v8808 = vadd.f32 %v8488, %v8625
  %v8809 = vadd.f32 %v8489, %v8627
  %v8810 = vadd.f32 %v8490, %v8629
  %v8811 = vadd.f32 %v8491, %v8631
  %v8812 = vadd.f32 %v8492, %v8633
  %v8813 = vadd.f32 %v8493, %v8635
  %v8814 = vadd.f32 %v8494, %v8637
  %v8815 = vadd.f32 %v8495, %v8639
  %v8816 = vadd.f32 %v8496, %v8641
  %v8817 = vadd.f32 %v8497, %v8643
  %v8818 = vadd.f32 %v8498, %v8645
  %v8819 = vadd.f32 %v8499, %v8647
  %v8820 = vadd.f32 %v8500, %v8649
  %v8821 = vadd.f32 %v8501, %v8651
  %v8822 = vadd.f32 %v8502, %v8653
  %v8823 = vadd.f32 %v8503, %v8655
  %v8824 = vadd.f32 %v8504, %v8657
  %v8825 = vadd.f32 %v8505, %v8659
  %v8826 = vadd.f32 %v8506, %v8661
  %v8827 = vadd.f32 %v8507, %v8663
  %v8828 = vadd.f32 %v8508, %v8665
  %v8829 = vadd.f32 %v8509, %v8667
  %v8830 = vadd.f32 %v8510, %v8669
  %v8831 = vadd.f32 %v8511, %v8671
  %v8832 = vadd.f32 %v8512, %v8673
  %v8833 = vadd.f32 %v8513, %v8675
  %v8834 = vadd.f32 %v8514, %v8677
  %v8835 = vadd.f32 %v8515, %v8679
  %v8836 = vadd.f32 %v8516, %v8681
  %v8837 = vadd.f32 %v8517, %v8683
  %v8838 = vadd.f32 %v8518, %v8685
  %v8839 = vadd.f32 %v8519, %v8687
  %v8840 = vadd.f32 %v8520, %v8689
  %v8841 = vadd.f32 %v8521, %v8691
  %v8842 = vadd.f32 %v8522, %v8693
  %v8843 = vadd.f32 %v8523, %v8695
  %v8844 = vadd.f32 %v8524, %v8697
  %v8845 = vadd.f32 %v8525, %v8699
  %v8846 = vadd.f32 %v8526, %v8701
  %v8847 = vadd.f32 %v8527, %v8703
  %v8848 = vadd.f32 %v8528, %v8705
  %v8849 = vadd.f32 %v8529, %v8707
  %v8850 = vadd.f32 %v8530, %v8709
  %v8851 = vadd.f32 %v8531, %v8711
  %v8852 = vadd.f32 %v8532, %v8713
  %v8853 = vadd.f32 %v8533, %v8715
  %v8854 = vadd.f32 %v8534, %v8717
  %v8855 = vadd.f32 %v8535, %v8719
  %v8856 = vadd.f32 %v8536, %v8721
  %v8857 = vadd.f32 %v8537, %v8723
  %v8858 = vadd.f32 %v8538, %v8725
  %v8859 = vadd.f32 %v8539, %v8727
  %v8860 = vadd.f32 %v8540, %v8729
  %v8861 = vadd.f32 %v8541, %v8731
  %v8862 = vadd.f32 %v8542, %v8733
  %v8863 = vadd.f32 %v8543, %v8735
  %v8864 = vmul.f32 %v8800, 0.5
  %v8865 = vmul.f32 %v8801, 0.5
  %v8866 = vmul.f32 %v8802, 0.5
  %v8867 = vmul.f32 %v8803, 0.5
  %v8868 = vmul.f32 %v8804, 0.5
  %v8869 = vmul.f32 %v8805, 0.5
  %v8870 = vmul.f32 %v8806, 0.5
  %v8871 = vmul.f32 %v8807, 0.5
  %v8872 = vmul.f32 %v8808, 0.5
  %v8873 = vmul.f32 %v8809, 0.5
  %v8874 = vmul.f32 %v8810, 0.5
  %v8875 = vmul.f32 %v8811, 0.5
  %v8876 = vmul.f32 %v8812, 0.5
  %v8877 = vmul.f32 %v8813, 0.5
  %v8878 = vmul.f32 %v8814, 0.5
  %v8879 = vmul.f32 %v8815, 0.5
  %v8880 = vmul.f32 %v8816, 0.5
  %v8881 = vmul.f32 %v8817, 0.5
  %v8882 = vmul.f32 %v8818, 0.5
  %v8883 = vmul.f32 %v8819, 0.5
  %v8884 = vmul.f32 %v8820, 0.5
  %v8885 = vmul.f32 %v8821, 0.5
  %v8886 = vmul.f32 %v8822, 0.5
  %v8887 = vmul.f32 %v8823, 0.5
  %v8888 = vmul.f32 %v8824, 0.5
  %v8889 = vmul.f32 %v8825, 0.5
  %v8890 = vmul.f32 %v8826, 0.5
  %v8891 = vmul.f32 %v8827, 0.5
  %v8892 = vmul.f32 %v8828, 0.5
  %v8893 = vmul.f32 %v8829, 0.5
  %v8894 = vmul.f32 %v8830, 0.5
  %v8895 = vmul.f32 %v8831, 0.5
  %v8896 = vmul.f32 %v8832, 0.5
  %v8897 = vmul.f32 %v8833, 0.5
  %v8898 = vmul.f32 %v8834, 0.5
  %v8899 = vmul.f32 %v8835, 0.5
  %v8900 = vmul.f32 %v8836, 0.5
  %v8901 = vmul.f32 %v8837, 0.5
  %v8902 = vmul.f32 %v8838, 0.5
  %v8903 = vmul.f32 %v8839, 0.5
  %v8904 = vmul.f32 %v8840, 0.5
  %v8905 = vmul.f32 %v8841, 0.5
  %v8906 = vmul.f32 %v8842, 0.5
  %v8907 = vmul.f32 %v8843, 0.5
  %v8908 = vmul.f32 %v8844, 0.5
  %v8909 = vmul.f32 %v8845, 0.5
  %v8910 = vmul.f32 %v8846, 0.5
  %v8911 = vmul.f32 %v8847, 0.5
  %v8912 = vmul.f32 %v8848, 0.5
  %v8913 = vmul.f32 %v8849, 0.5
  %v8914 = vmul.f32 %v8850, 0.5
  %v8915 = vmul.f32 %v8851, 0.5
  %v8916 = vmul.f32 %v8852, 0.5
  %v8917 = vmul.f32 %v8853, 0.5
  %v8918 = vmul.f32 %v8854, 0.5
  %v8919 = vmul.f32 %v8855, 0.5
  %v8920 = vmul.f32 %v8856, 0.5
  %v8921 = vmul.f32 %v8857, 0.5
  %v8922 = vmul.f32 %v8858, 0.5
  %v8923 = vmul.f32 %v8859, 0.5
  %v8924 = vmul.f32 %v8860, 0.5
  %v8925 = vmul.f32 %v8861, 0.5
  %v8926 = vmul.f32 %v8862, 0.5
  %v8927 = vmul.f32 %v8863, 0.5
  %8929 = vset.pattern.permute.xlu0 0
  %8930 = vperm.xlu0 %8929, %v8864
  %v8931 = vpop.permute.xlu0 %8930
  %8934 = vset.pattern.permute.xlu0 0
  %8935 = vperm.xlu0 %8934, %v8865
  %v8936 = vpop.permute.xlu0 %8935
  %8939 = vset.pattern.permute.xlu0 0
  %8940 = vperm.xlu0 %8939, %v8866
  %v8941 = vpop.permute.xlu0 %8940
  %8944 = vset.pattern.permute.xlu0 0
  %8945 = vperm.xlu0 %8944, %v8867
  %v8946 = vpop.permute.xlu0 %8945
  %8949 = vset.pattern.permute.xlu0 0
  %8950 = vperm.xlu0 %8949, %v8868
  %v8951 = vpop.permute.xlu0 %8950
  %8954 = vset.pattern.permute.xlu0 0
  %8955 = vperm.xlu0 %8954, %v8869
  %v8956 = vpop.permute.xlu0 %8955
  %8959 = vset.pattern.permute.xlu0 0
  %8960 = vperm.xlu0 %8959, %v8870
  %v8961 = vpop.permute.xlu0 %8960
  %8964 = vset.pattern.permute.xlu0 0
  %8965 = vperm.xlu0 %8964, %v8871
  %v8966 = vpop.permute.xlu0 %8965
  %8969 = vset.pattern.permute.xlu0 0
  %8970 = vperm.xlu0 %8969, %v8872
  %v8971 = vpop.permute.xlu0 %8970
  %8974 = vset.pattern.permute.xlu0 0
  %8975 = vperm.xlu0 %8974, %v8873
  %v8976 = vpop.permute.xlu0 %8975
  %8979 = vset.pattern.permute.xlu0 0
  %8980 = vperm.xlu0 %8979, %v8874
  %v8981 = vpop.permute.xlu0 %8980
  %8984 = vset.pattern.permute.xlu0 0
  %8985 = vperm.xlu0 %8984, %v8875
  %v8986 = vpop.permute.xlu0 %8985
  %8989 = vset.pattern.permute.xlu0 0
  %8990 = vperm.xlu0 %8989, %v8876
  %v8991 = vpop.permute.xlu0 %8990
  %8994 = vset.pattern.permute.xlu0 0
  %8995 = vperm.xlu0 %8994, %v8877
  %v8996 = vpop.permute.xlu0 %8995
  %8999 = vset.pattern.permute.xlu0 0
  %9000 = vperm.xlu0 %8999, %v8878
  %v9001 = vpop.permute.xlu0 %9000
  %9004 = vset.pattern.permute.xlu0 0
  %9005 = vperm.xlu0 %9004, %v8879
  %v9006 = vpop.permute.xlu0 %9005
  %9009 = vset.pattern.permute.xlu0 0
  %9010 = vperm.xlu0 %9009, %v8880
  %v9011 = vpop.permute.xlu0 %9010
  %9014 = vset.pattern.permute.xlu0 0
  %9015 = vperm.xlu0 %9014, %v8881
  %v9016 = vpop.permute.xlu0 %9015
  %9019 = vset.pattern.permute.xlu0 0
  %9020 = vperm.xlu0 %9019, %v8882
  %v9021 = vpop.permute.xlu0 %9020
  %9024 = vset.pattern.permute.xlu0 0
  %9025 = vperm.xlu0 %9024, %v8883
  %v9026 = vpop.permute.xlu0 %9025
  %9029 = vset.pattern.permute.xlu0 0
  %9030 = vperm.xlu0 %9029, %v8884
  %v9031 = vpop.permute.xlu0 %9030
  %9034 = vset.pattern.permute.xlu0 0
  %9035 = vperm.xlu0 %9034, %v8885
  %v9036 = vpop.permute.xlu0 %9035
  %9039 = vset.pattern.permute.xlu0 0
  %9040 = vperm.xlu0 %9039, %v8886
  %v9041 = vpop.permute.xlu0 %9040
  %9044 = vset.pattern.permute.xlu0 0
  %9045 = vperm.xlu0 %9044, %v8887
  %v9046 = vpop.permute.xlu0 %9045
  %9049 = vset.pattern.permute.xlu0 0
  %9050 = vperm.xlu0 %9049, %v8888
  %v9051 = vpop.permute.xlu0 %9050
  %9054 = vset.pattern.permute.xlu0 0
  %9055 = vperm.xlu0 %9054, %v8889
  %v9056 = vpop.permute.xlu0 %9055
  %9059 = vset.pattern.permute.xlu0 0
  %9060 = vperm.xlu0 %9059, %v8890
  %v9061 = vpop.permute.xlu0 %9060
  %9064 = vset.pattern.permute.xlu0 0
  %9065 = vperm.xlu0 %9064, %v8891
  %v9066 = vpop.permute.xlu0 %9065
  %9069 = vset.pattern.permute.xlu0 0
  %9070 = vperm.xlu0 %9069, %v8892
  %v9071 = vpop.permute.xlu0 %9070
  %9074 = vset.pattern.permute.xlu0 0
  %9075 = vperm.xlu0 %9074, %v8893
  %v9076 = vpop.permute.xlu0 %9075
  %9079 = vset.pattern.permute.xlu0 0
  %9080 = vperm.xlu0 %9079, %v8894
  %v9081 = vpop.permute.xlu0 %9080
  %9084 = vset.pattern.permute.xlu0 0
  %9085 = vperm.xlu0 %9084, %v8895
  %v9086 = vpop.permute.xlu0 %9085
  %9089 = vset.pattern.permute.xlu0 0
  %9090 = vperm.xlu0 %9089, %v8896
  %v9091 = vpop.permute.xlu0 %9090
  %9094 = vset.pattern.permute.xlu0 0
  %9095 = vperm.xlu0 %9094, %v8897
  %v9096 = vpop.permute.xlu0 %9095
  %9099 = vset.pattern.permute.xlu0 0
  %9100 = vperm.xlu0 %9099, %v8898
  %v9101 = vpop.permute.xlu0 %9100
  %9104 = vset.pattern.permute.xlu0 0
  %9105 = vperm.xlu0 %9104, %v8899
  %v9106 = vpop.permute.xlu0 %9105
  %9109 = vset.pattern.permute.xlu0 0
  %9110 = vperm.xlu0 %9109, %v8900
  %v9111 = vpop.permute.xlu0 %9110
  %9114 = vset.pattern.permute.xlu0 0
  %9115 = vperm.xlu0 %9114, %v8901
  %v9116 = vpop.permute.xlu0 %9115
  %9119 = vset.pattern.permute.xlu0 0
  %9120 = vperm.xlu0 %9119, %v8902
  %v9121 = vpop.permute.xlu0 %9120
  %9124 = vset.pattern.permute.xlu0 0
  %9125 = vperm.xlu0 %9124, %v8903
  %v9126 = vpop.permute.xlu0 %9125
  %9129 = vset.pattern.permute.xlu0 0
  %9130 = vperm.xlu0 %9129, %v8904
  %v9131 = vpop.permute.xlu0 %9130
  %9134 = vset.pattern.permute.xlu0 0
  %9135 = vperm.xlu0 %9134, %v8905
  %v9136 = vpop.permute.xlu0 %9135
  %9139 = vset.pattern.permute.xlu0 0
  %9140 = vperm.xlu0 %9139, %v8906
  %v9141 = vpop.permute.xlu0 %9140
  %9144 = vset.pattern.permute.xlu0 0
  %9145 = vperm.xlu0 %9144, %v8907
  %v9146 = vpop.permute.xlu0 %9145
  %9149 = vset.pattern.permute.xlu0 0
  %9150 = vperm.xlu0 %9149, %v8908
  %v9151 = vpop.permute.xlu0 %9150
  %9154 = vset.pattern.permute.xlu0 0
  %9155 = vperm.xlu0 %9154, %v8909
  %v9156 = vpop.permute.xlu0 %9155
  %9159 = vset.pattern.permute.xlu0 0
  %9160 = vperm.xlu0 %9159, %v8910
  %v9161 = vpop.permute.xlu0 %9160
  %9164 = vset.pattern.permute.xlu0 0
  %9165 = vperm.xlu0 %9164, %v8911
  %v9166 = vpop.permute.xlu0 %9165
  %9169 = vset.pattern.permute.xlu0 0
  %9170 = vperm.xlu0 %9169, %v8912
  %v9171 = vpop.permute.xlu0 %9170
  %9174 = vset.pattern.permute.xlu0 0
  %9175 = vperm.xlu0 %9174, %v8913
  %v9176 = vpop.permute.xlu0 %9175
  %9179 = vset.pattern.permute.xlu0 0
  %9180 = vperm.xlu0 %9179, %v8914
  %v9181 = vpop.permute.xlu0 %9180
  %9184 = vset.pattern.permute.xlu0 0
  %9185 = vperm.xlu0 %9184, %v8915
  %v9186 = vpop.permute.xlu0 %9185
  %9189 = vset.pattern.permute.xlu0 0
  %9190 = vperm.xlu0 %9189, %v8916
  %v9191 = vpop.permute.xlu0 %9190
  %9194 = vset.pattern.permute.xlu0 0
  %9195 = vperm.xlu0 %9194, %v8917
  %v9196 = vpop.permute.xlu0 %9195
  %9199 = vset.pattern.permute.xlu0 0
  %9200 = vperm.xlu0 %9199, %v8918
  %v9201 = vpop.permute.xlu0 %9200
  %9204 = vset.pattern.permute.xlu0 0
  %9205 = vperm.xlu0 %9204, %v8919
  %v9206 = vpop.permute.xlu0 %9205
  %9209 = vset.pattern.permute.xlu0 0
  %9210 = vperm.xlu0 %9209, %v8920
  %v9211 = vpop.permute.xlu0 %9210
  %9214 = vset.pattern.permute.xlu0 0
  %9215 = vperm.xlu0 %9214, %v8921
  %v9216 = vpop.permute.xlu0 %9215
  %9219 = vset.pattern.permute.xlu0 0
  %9220 = vperm.xlu0 %9219, %v8922
  %v9221 = vpop.permute.xlu0 %9220
  %9224 = vset.pattern.permute.xlu0 0
  %9225 = vperm.xlu0 %9224, %v8923
  %v9226 = vpop.permute.xlu0 %9225
  %9229 = vset.pattern.permute.xlu0 0
  %9230 = vperm.xlu0 %9229, %v8924
  %v9231 = vpop.permute.xlu0 %9230
  %9234 = vset.pattern.permute.xlu0 0
  %9235 = vperm.xlu0 %9234, %v8925
  %v9236 = vpop.permute.xlu0 %9235
  %9239 = vset.pattern.permute.xlu0 0
  %9240 = vperm.xlu0 %9239, %v8926
  %v9241 = vpop.permute.xlu0 %9240
  %9244 = vset.pattern.permute.xlu0 0
  %9245 = vperm.xlu0 %9244, %v8927
  %v9246 = vpop.permute.xlu0 %9245
  %9248 = vset.pattern.permute.xlu0 1
  %9249 = vperm.xlu0 %9248, %v8864
  %v9250 = vpop.permute.xlu0 %9249
  %9252 = vset.pattern.permute.xlu0 1
  %9253 = vperm.xlu0 %9252, %v8865
  %v9254 = vpop.permute.xlu0 %9253
  %9256 = vset.pattern.permute.xlu0 1
  %9257 = vperm.xlu0 %9256, %v8866
  %v9258 = vpop.permute.xlu0 %9257
  %9260 = vset.pattern.permute.xlu0 1
  %9261 = vperm.xlu0 %9260, %v8867
  %v9262 = vpop.permute.xlu0 %9261
  %9264 = vset.pattern.permute.xlu0 1
  %9265 = vperm.xlu0 %9264, %v8868
  %v9266 = vpop.permute.xlu0 %9265
  %9268 = vset.pattern.permute.xlu0 1
  %9269 = vperm.xlu0 %9268, %v8869
  %v9270 = vpop.permute.xlu0 %9269
  %9272 = vset.pattern.permute.xlu0 1
  %9273 = vperm.xlu0 %9272, %v8870
  %v9274 = vpop.permute.xlu0 %9273
  %9276 = vset.pattern.permute.xlu0 1
  %9277 = vperm.xlu0 %9276, %v8871
  %v9278 = vpop.permute.xlu0 %9277
  %9280 = vset.pattern.permute.xlu0 1
  %9281 = vperm.xlu0 %9280, %v8872
  %v9282 = vpop.permute.xlu0 %9281
  %9284 = vset.pattern.permute.xlu0 1
  %9285 = vperm.xlu0 %9284, %v8873
  %v9286 = vpop.permute.xlu0 %9285
  %9288 = vset.pattern.permute.xlu0 1
  %9289 = vperm.xlu0 %9288, %v8874
  %v9290 = vpop.permute.xlu0 %9289
  %9292 = vset.pattern.permute.xlu0 1
  %9293 = vperm.xlu0 %9292, %v8875
  %v9294 = vpop.permute.xlu0 %9293
  %9296 = vset.pattern.permute.xlu0 1
  %9297 = vperm.xlu0 %9296, %v8876
  %v9298 = vpop.permute.xlu0 %9297
  %9300 = vset.pattern.permute.xlu0 1
  %9301 = vperm.xlu0 %9300, %v8877
  %v9302 = vpop.permute.xlu0 %9301
  %9304 = vset.pattern.permute.xlu0 1
  %9305 = vperm.xlu0 %9304, %v8878
  %v9306 = vpop.permute.xlu0 %9305
  %9308 = vset.pattern.permute.xlu0 1
  %9309 = vperm.xlu0 %9308, %v8879
  %v9310 = vpop.permute.xlu0 %9309
  %9312 = vset.pattern.permute.xlu0 1
  %9313 = vperm.xlu0 %9312, %v8880
  %v9314 = vpop.permute.xlu0 %9313
  %9316 = vset.pattern.permute.xlu0 1
  %9317 = vperm.xlu0 %9316, %v8881
  %v9318 = vpop.permute.xlu0 %9317
  %9320 = vset.pattern.permute.xlu0 1
  %9321 = vperm.xlu0 %9320, %v8882
  %v9322 = vpop.permute.xlu0 %9321
  %9324 = vset.pattern.permute.xlu0 1
  %9325 = vperm.xlu0 %9324, %v8883
  %v9326 = vpop.permute.xlu0 %9325
  %9328 = vset.pattern.permute.xlu0 1
  %9329 = vperm.xlu0 %9328, %v8884
  %v9330 = vpop.permute.xlu0 %9329
  %9332 = vset.pattern.permute.xlu0 1
  %9333 = vperm.xlu0 %9332, %v8885
  %v9334 = vpop.permute.xlu0 %9333
  %9336 = vset.pattern.permute.xlu0 1
  %9337 = vperm.xlu0 %9336, %v8886
  %v9338 = vpop.permute.xlu0 %9337
  %9340 = vset.pattern.permute.xlu0 1
  %9341 = vperm.xlu0 %9340, %v8887
  %v9342 = vpop.permute.xlu0 %9341
  %9344 = vset.pattern.permute.xlu0 1
  %9345 = vperm.xlu0 %9344, %v8888
  %v9346 = vpop.permute.xlu0 %9345
  %9348 = vset.pattern.permute.xlu0 1
  %9349 = vperm.xlu0 %9348, %v8889
  %v9350 = vpop.permute.xlu0 %9349
  %9352 = vset.pattern.permute.xlu0 1
  %9353 = vperm.xlu0 %9352, %v8890
  %v9354 = vpop.permute.xlu0 %9353
  %9356 = vset.pattern.permute.xlu0 1
  %9357 = vperm.xlu0 %9356, %v8891
  %v9358 = vpop.permute.xlu0 %9357
  %9360 = vset.pattern.permute.xlu0 1
  %9361 = vperm.xlu0 %9360, %v8892
  %v9362 = vpop.permute.xlu0 %9361
  %9364 = vset.pattern.permute.xlu0 1
  %9365 = vperm.xlu0 %9364, %v8893
  %v9366 = vpop.permute.xlu0 %9365
  %9368 = vset.pattern.permute.xlu0 1
  %9369 = vperm.xlu0 %9368, %v8894
  %v9370 = vpop.permute.xlu0 %9369
  %9372 = vset.pattern.permute.xlu0 1
  %9373 = vperm.xlu0 %9372, %v8895
  %v9374 = vpop.permute.xlu0 %9373
  %9376 = vset.pattern.permute.xlu0 1
  %9377 = vperm.xlu0 %9376, %v8896
  %v9378 = vpop.permute.xlu0 %9377
  %9380 = vset.pattern.permute.xlu0 1
  %9381 = vperm.xlu0 %9380, %v8897
  %v9382 = vpop.permute.xlu0 %9381
  %9384 = vset.pattern.permute.xlu0 1
  %9385 = vperm.xlu0 %9384, %v8898
  %v9386 = vpop.permute.xlu0 %9385
  %9388 = vset.pattern.permute.xlu0 1
  %9389 = vperm.xlu0 %9388, %v8899
  %v9390 = vpop.permute.xlu0 %9389
  %9392 = vset.pattern.permute.xlu0 1
  %9393 = vperm.xlu0 %9392, %v8900
  %v9394 = vpop.permute.xlu0 %9393
  %9396 = vset.pattern.permute.xlu0 1
  %9397 = vperm.xlu0 %9396, %v8901
  %v9398 = vpop.permute.xlu0 %9397
  %9400 = vset.pattern.permute.xlu0 1
  %9401 = vperm.xlu0 %9400, %v8902
  %v9402 = vpop.permute.xlu0 %9401
  %9404 = vset.pattern.permute.xlu0 1
  %9405 = vperm.xlu0 %9404, %v8903
  %v9406 = vpop.permute.xlu0 %9405
  %9408 = vset.pattern.permute.xlu0 1
  %9409 = vperm.xlu0 %9408, %v8904
  %v9410 = vpop.permute.xlu0 %9409
  %9412 = vset.pattern.permute.xlu0 1
  %9413 = vperm.xlu0 %9412, %v8905
  %v9414 = vpop.permute.xlu0 %9413
  %9416 = vset.pattern.permute.xlu0 1
  %9417 = vperm.xlu0 %9416, %v8906
  %v9418 = vpop.permute.xlu0 %9417
  %9420 = vset.pattern.permute.xlu0 1
  %9421 = vperm.xlu0 %9420, %v8907
  %v9422 = vpop.permute.xlu0 %9421
  %9424 = vset.pattern.permute.xlu0 1
  %9425 = vperm.xlu0 %9424, %v8908
  %v9426 = vpop.permute.xlu0 %9425
  %9428 = vset.pattern.permute.xlu0 1
  %9429 = vperm.xlu0 %9428, %v8909
  %v9430 = vpop.permute.xlu0 %9429
  %9432 = vset.pattern.permute.xlu0 1
  %9433 = vperm.xlu0 %9432, %v8910
  %v9434 = vpop.permute.xlu0 %9433
  %9436 = vset.pattern.permute.xlu0 1
  %9437 = vperm.xlu0 %9436, %v8911
  %v9438 = vpop.permute.xlu0 %9437
  %9440 = vset.pattern.permute.xlu0 1
  %9441 = vperm.xlu0 %9440, %v8912
  %v9442 = vpop.permute.xlu0 %9441
  %9444 = vset.pattern.permute.xlu0 1
  %9445 = vperm.xlu0 %9444, %v8913
  %v9446 = vpop.permute.xlu0 %9445
  %9448 = vset.pattern.permute.xlu0 1
  %9449 = vperm.xlu0 %9448, %v8914
  %v9450 = vpop.permute.xlu0 %9449
  %9452 = vset.pattern.permute.xlu0 1
  %9453 = vperm.xlu0 %9452, %v8915
  %v9454 = vpop.permute.xlu0 %9453
  %9456 = vset.pattern.permute.xlu0 1
  %9457 = vperm.xlu0 %9456, %v8916
  %v9458 = vpop.permute.xlu0 %9457
  %9460 = vset.pattern.permute.xlu0 1
  %9461 = vperm.xlu0 %9460, %v8917
  %v9462 = vpop.permute.xlu0 %9461
  %9464 = vset.pattern.permute.xlu0 1
  %9465 = vperm.xlu0 %9464, %v8918
  %v9466 = vpop.permute.xlu0 %9465
  %9468 = vset.pattern.permute.xlu0 1
  %9469 = vperm.xlu0 %9468, %v8919
  %v9470 = vpop.permute.xlu0 %9469
  %9472 = vset.pattern.permute.xlu0 1
  %9473 = vperm.xlu0 %9472, %v8920
  %v9474 = vpop.permute.xlu0 %9473
  %9476 = vset.pattern.permute.xlu0 1
  %9477 = vperm.xlu0 %9476, %v8921
  %v9478 = vpop.permute.xlu0 %9477
  %9480 = vset.pattern.permute.xlu0 1
  %9481 = vperm.xlu0 %9480, %v8922
  %v9482 = vpop.permute.xlu0 %9481
  %9484 = vset.pattern.permute.xlu0 1
  %9485 = vperm.xlu0 %9484, %v8923
  %v9486 = vpop.permute.xlu0 %9485
  %9488 = vset.pattern.permute.xlu0 1
  %9489 = vperm.xlu0 %9488, %v8924
  %v9490 = vpop.permute.xlu0 %9489
  %9492 = vset.pattern.permute.xlu0 1
  %9493 = vperm.xlu0 %9492, %v8925
  %v9494 = vpop.permute.xlu0 %9493
  %9496 = vset.pattern.permute.xlu0 1
  %9497 = vperm.xlu0 %9496, %v8926
  %v9498 = vpop.permute.xlu0 %9497
  %9500 = vset.pattern.permute.xlu0 1
  %9501 = vperm.xlu0 %9500, %v8927
  %v9502 = vpop.permute.xlu0 %9501
  %9504 = vset.pattern.permute.xlu0 2
  %9505 = vperm.xlu0 %9504, %v8864
  %v9506 = vpop.permute.xlu0 %9505
  %9508 = vset.pattern.permute.xlu0 2
  %9509 = vperm.xlu0 %9508, %v8865
  %v9510 = vpop.permute.xlu0 %9509
  %9512 = vset.pattern.permute.xlu0 2
  %9513 = vperm.xlu0 %9512, %v8866
  %v9514 = vpop.permute.xlu0 %9513
  %9516 = vset.pattern.permute.xlu0 2
  %9517 = vperm.xlu0 %9516, %v8867
  %v9518 = vpop.permute.xlu0 %9517
  %9520 = vset.pattern.permute.xlu0 2
  %9521 = vperm.xlu0 %9520, %v8868
  %v9522 = vpop.permute.xlu0 %9521
  %9524 = vset.pattern.permute.xlu0 2
  %9525 = vperm.xlu0 %9524, %v8869
  %v9526 = vpop.permute.xlu0 %9525
  %9528 = vset.pattern.permute.xlu0 2
  %9529 = vperm.xlu0 %9528, %v8870
  %v9530 = vpop.permute.xlu0 %9529
  %9532 = vset.pattern.permute.xlu0 2
  %9533 = vperm.xlu0 %9532, %v8871
  %v9534 = vpop.permute.xlu0 %9533
  %9536 = vset.pattern.permute.xlu0 2
  %9537 = vperm.xlu0 %9536, %v8872
  %v9538 = vpop.permute.xlu0 %9537
  %9540 = vset.pattern.permute.xlu0 2
  %9541 = vperm.xlu0 %9540, %v8873
  %v9542 = vpop.permute.xlu0 %9541
  %9544 = vset.pattern.permute.xlu0 2
  %9545 = vperm.xlu0 %9544, %v8874
  %v9546 = vpop.permute.xlu0 %9545
  %9548 = vset.pattern.permute.xlu0 2
  %9549 = vperm.xlu0 %9548, %v8875
  %v9550 = vpop.permute.xlu0 %9549
  %9552 = vset.pattern.permute.xlu0 2
  %9553 = vperm.xlu0 %9552, %v8876
  %v9554 = vpop.permute.xlu0 %9553
  %9556 = vset.pattern.permute.xlu0 2
  %9557 = vperm.xlu0 %9556, %v8877
  %v9558 = vpop.permute.xlu0 %9557
  %9560 = vset.pattern.permute.xlu0 2
  %9561 = vperm.xlu0 %9560, %v8878
  %v9562 = vpop.permute.xlu0 %9561
  %9564 = vset.pattern.permute.xlu0 2
  %9565 = vperm.xlu0 %9564, %v8879
  %v9566 = vpop.permute.xlu0 %9565
  %9568 = vset.pattern.permute.xlu0 2
  %9569 = vperm.xlu0 %9568, %v8880
  %v9570 = vpop.permute.xlu0 %9569
  %9572 = vset.pattern.permute.xlu0 2
  %9573 = vperm.xlu0 %9572, %v8881
  %v9574 = vpop.permute.xlu0 %9573
  %9576 = vset.pattern.permute.xlu0 2
  %9577 = vperm.xlu0 %9576, %v8882
  %v9578 = vpop.permute.xlu0 %9577
  %9580 = vset.pattern.permute.xlu0 2
  %9581 = vperm.xlu0 %9580, %v8883
  %v9582 = vpop.permute.xlu0 %9581
  %9584 = vset.pattern.permute.xlu0 2
  %9585 = vperm.xlu0 %9584, %v8884
  %v9586 = vpop.permute.xlu0 %9585
  %9588 = vset.pattern.permute.xlu0 2
  %9589 = vperm.xlu0 %9588, %v8885
  %v9590 = vpop.permute.xlu0 %9589
  %9592 = vset.pattern.permute.xlu0 2
  %9593 = vperm.xlu0 %9592, %v8886
  %v9594 = vpop.permute.xlu0 %9593
  %9596 = vset.pattern.permute.xlu0 2
  %9597 = vperm.xlu0 %9596, %v8887
  %v9598 = vpop.permute.xlu0 %9597
  %9600 = vset.pattern.permute.xlu0 2
  %9601 = vperm.xlu0 %9600, %v8888
  %v9602 = vpop.permute.xlu0 %9601
  %9604 = vset.pattern.permute.xlu0 2
  %9605 = vperm.xlu0 %9604, %v8889
  %v9606 = vpop.permute.xlu0 %9605
  %9608 = vset.pattern.permute.xlu0 2
  %9609 = vperm.xlu0 %9608, %v8890
  %v9610 = vpop.permute.xlu0 %9609
  %9612 = vset.pattern.permute.xlu0 2
  %9613 = vperm.xlu0 %9612, %v8891
  %v9614 = vpop.permute.xlu0 %9613
  %9616 = vset.pattern.permute.xlu0 2
  %9617 = vperm.xlu0 %9616, %v8892
  %v9618 = vpop.permute.xlu0 %9617
  %9620 = vset.pattern.permute.xlu0 2
  %9621 = vperm.xlu0 %9620, %v8893
  %v9622 = vpop.permute.xlu0 %9621
  %9624 = vset.pattern.permute.xlu0 2
  %9625 = vperm.xlu0 %9624, %v8894
  %v9626 = vpop.permute.xlu0 %9625
  %9628 = vset.pattern.permute.xlu0 2
  %9629 = vperm.xlu0 %9628, %v8895
  %v9630 = vpop.permute.xlu0 %9629
  %9632 = vset.pattern.permute.xlu0 2
  %9633 = vperm.xlu0 %9632, %v8896
  %v9634 = vpop.permute.xlu0 %9633
  %9636 = vset.pattern.permute.xlu0 2
  %9637 = vperm.xlu0 %9636, %v8897
  %v9638 = vpop.permute.xlu0 %9637
  %9640 = vset.pattern.permute.xlu0 2
  %9641 = vperm.xlu0 %9640, %v8898
  %v9642 = vpop.permute.xlu0 %9641
  %9644 = vset.pattern.permute.xlu0 2
  %9645 = vperm.xlu0 %9644, %v8899
  %v9646 = vpop.permute.xlu0 %9645
  %9648 = vset.pattern.permute.xlu0 2
  %9649 = vperm.xlu0 %9648, %v8900
  %v9650 = vpop.permute.xlu0 %9649
  %9652 = vset.pattern.permute.xlu0 2
  %9653 = vperm.xlu0 %9652, %v8901
  %v9654 = vpop.permute.xlu0 %9653
  %9656 = vset.pattern.permute.xlu0 2
  %9657 = vperm.xlu0 %9656, %v8902
  %v9658 = vpop.permute.xlu0 %9657
  %9660 = vset.pattern.permute.xlu0 2
  %9661 = vperm.xlu0 %9660, %v8903
  %v9662 = vpop.permute.xlu0 %9661
  %9664 = vset.pattern.permute.xlu0 2
  %9665 = vperm.xlu0 %9664, %v8904
  %v9666 = vpop.permute.xlu0 %9665
  %9668 = vset.pattern.permute.xlu0 2
  %9669 = vperm.xlu0 %9668, %v8905
  %v9670 = vpop.permute.xlu0 %9669
  %9672 = vset.pattern.permute.xlu0 2
  %9673 = vperm.xlu0 %9672, %v8906
  %v9674 = vpop.permute.xlu0 %9673
  %9676 = vset.pattern.permute.xlu0 2
  %9677 = vperm.xlu0 %9676, %v8907
  %v9678 = vpop.permute.xlu0 %9677
  %9680 = vset.pattern.permute.xlu0 2
  %9681 = vperm.xlu0 %9680, %v8908
  %v9682 = vpop.permute.xlu0 %9681
  %9684 = vset.pattern.permute.xlu0 2
  %9685 = vperm.xlu0 %9684, %v8909
  %v9686 = vpop.permute.xlu0 %9685
  %9688 = vset.pattern.permute.xlu0 2
  %9689 = vperm.xlu0 %9688, %v8910
  %v9690 = vpop.permute.xlu0 %9689
  %9692 = vset.pattern.permute.xlu0 2
  %9693 = vperm.xlu0 %9692, %v8911
  %v9694 = vpop.permute.xlu0 %9693
  %9696 = vset.pattern.permute.xlu0 2
  %9697 = vperm.xlu0 %9696, %v8912
  %v9698 = vpop.permute.xlu0 %9697
  %9700 = vset.pattern.permute.xlu0 2
  %9701 = vperm.xlu0 %9700, %v8913
  %v9702 = vpop.permute.xlu0 %9701
  %9704 = vset.pattern.permute.xlu0 2
  %9705 = vperm.xlu0 %9704, %v8914
  %v9706 = vpop.permute.xlu0 %9705
  %9708 = vset.pattern.permute.xlu0 2
  %9709 = vperm.xlu0 %9708, %v8915
  %v9710 = vpop.permute.xlu0 %9709
  %9712 = vset.pattern.permute.xlu0 2
  %9713 = vperm.xlu0 %9712, %v8916
  %v9714 = vpop.permute.xlu0 %9713
  %9716 = vset.pattern.permute.xlu0 2
  %9717 = vperm.xlu0 %9716, %v8917
  %v9718 = vpop.permute.xlu0 %9717
  %9720 = vset.pattern.permute.xlu0 2
  %9721 = vperm.xlu0 %9720, %v8918
  %v9722 = vpop.permute.xlu0 %9721
  %9724 = vset.pattern.permute.xlu0 2
  %9725 = vperm.xlu0 %9724, %v8919
  %v9726 = vpop.permute.xlu0 %9725
  %9728 = vset.pattern.permute.xlu0 2
  %9729 = vperm.xlu0 %9728, %v8920
  %v9730 = vpop.permute.xlu0 %9729
  %9732 = vset.pattern.permute.xlu0 2
  %9733 = vperm.xlu0 %9732, %v8921
  %v9734 = vpop.permute.xlu0 %9733
  %9736 = vset.pattern.permute.xlu0 2
  %9737 = vperm.xlu0 %9736, %v8922
  %v9738 = vpop.permute.xlu0 %9737
  %9740 = vset.pattern.permute.xlu0 2
  %9741 = vperm.xlu0 %9740, %v8923
  %v9742 = vpop.permute.xlu0 %9741
  %9744 = vset.pattern.permute.xlu0 2
  %9745 = vperm.xlu0 %9744, %v8924
  %v9746 = vpop.permute.xlu0 %9745
  %9748 = vset.pattern.permute.xlu0 2
  %9749 = vperm.xlu0 %9748, %v8925
  %v9750 = vpop.permute.xlu0 %9749
  %9752 = vset.pattern.permute.xlu0 2
  %9753 = vperm.xlu0 %9752, %v8926
  %v9754 = vpop.permute.xlu0 %9753
  %9756 = vset.pattern.permute.xlu0 2
  %9757 = vperm.xlu0 %9756, %v8927
  %v9758 = vpop.permute.xlu0 %9757
  %9760 = vset.pattern.permute.xlu0 3
  %9761 = vperm.xlu0 %9760, %v8864
  %v9762 = vpop.permute.xlu0 %9761
  %9764 = vset.pattern.permute.xlu0 3
  %9765 = vperm.xlu0 %9764, %v8865
  %v9766 = vpop.permute.xlu0 %9765
  %9768 = vset.pattern.permute.xlu0 3
  %9769 = vperm.xlu0 %9768, %v8866
  %v9770 = vpop.permute.xlu0 %9769
  %9772 = vset.pattern.permute.xlu0 3
  %9773 = vperm.xlu0 %9772, %v8867
  %v9774 = vpop.permute.xlu0 %9773
  %9776 = vset.pattern.permute.xlu0 3
  %9777 = vperm.xlu0 %9776, %v8868
  %v9778 = vpop.permute.xlu0 %9777
  %9780 = vset.pattern.permute.xlu0 3
  %9781 = vperm.xlu0 %9780, %v8869
  %v9782 = vpop.permute.xlu0 %9781
  %9784 = vset.pattern.permute.xlu0 3
  %9785 = vperm.xlu0 %9784, %v8870
  %v9786 = vpop.permute.xlu0 %9785
  %9788 = vset.pattern.permute.xlu0 3
  %9789 = vperm.xlu0 %9788, %v8871
  %v9790 = vpop.permute.xlu0 %9789
  %9792 = vset.pattern.permute.xlu0 3
  %9793 = vperm.xlu0 %9792, %v8872
  %v9794 = vpop.permute.xlu0 %9793
  %9796 = vset.pattern.permute.xlu0 3
  %9797 = vperm.xlu0 %9796, %v8873
  %v9798 = vpop.permute.xlu0 %9797
  %9800 = vset.pattern.permute.xlu0 3
  %9801 = vperm.xlu0 %9800, %v8874
  %v9802 = vpop.permute.xlu0 %9801
  %9804 = vset.pattern.permute.xlu0 3
  %9805 = vperm.xlu0 %9804, %v8875
  %v9806 = vpop.permute.xlu0 %9805
  %9808 = vset.pattern.permute.xlu0 3
  %9809 = vperm.xlu0 %9808, %v8876
  %v9810 = vpop.permute.xlu0 %9809
  %9812 = vset.pattern.permute.xlu0 3
  %9813 = vperm.xlu0 %9812, %v8877
  %v9814 = vpop.permute.xlu0 %9813
  %9816 = vset.pattern.permute.xlu0 3
  %9817 = vperm.xlu0 %9816, %v8878
  %v9818 = vpop.permute.xlu0 %9817
  %9820 = vset.pattern.permute.xlu0 3
  %9821 = vperm.xlu0 %9820, %v8879
  %v9822 = vpop.permute.xlu0 %9821
  %9824 = vset.pattern.permute.xlu0 3
  %9825 = vperm.xlu0 %9824, %v8880
  %v9826 = vpop.permute.xlu0 %9825
  %9828 = vset.pattern.permute.xlu0 3
  %9829 = vperm.xlu0 %9828, %v8881
  %v9830 = vpop.permute.xlu0 %9829
  %9832 = vset.pattern.permute.xlu0 3
  %9833 = vperm.xlu0 %9832, %v8882
  %v9834 = vpop.permute.xlu0 %9833
  %9836 = vset.pattern.permute.xlu0 3
  %9837 = vperm.xlu0 %9836, %v8883
  %v9838 = vpop.permute.xlu0 %9837
  %9840 = vset.pattern.permute.xlu0 3
  %9841 = vperm.xlu0 %9840, %v8884
  %v9842 = vpop.permute.xlu0 %9841
  %9844 = vset.pattern.permute.xlu0 3
  %9845 = vperm.xlu0 %9844, %v8885
  %v9846 = vpop.permute.xlu0 %9845
  %9848 = vset.pattern.permute.xlu0 3
  %9849 = vperm.xlu0 %9848, %v8886
  %v9850 = vpop.permute.xlu0 %9849
  %9852 = vset.pattern.permute.xlu0 3
  %9853 = vperm.xlu0 %9852, %v8887
  %v9854 = vpop.permute.xlu0 %9853
  %9856 = vset.pattern.permute.xlu0 3
  %9857 = vperm.xlu0 %9856, %v8888
  %v9858 = vpop.permute.xlu0 %9857
  %9860 = vset.pattern.permute.xlu0 3
  %9861 = vperm.xlu0 %9860, %v8889
  %v9862 = vpop.permute.xlu0 %9861
  %9864 = vset.pattern.permute.xlu0 3
  %9865 = vperm.xlu0 %9864, %v8890
  %v9866 = vpop.permute.xlu0 %9865
  %9868 = vset.pattern.permute.xlu0 3
  %9869 = vperm.xlu0 %9868, %v8891
  %v9870 = vpop.permute.xlu0 %9869
  %9872 = vset.pattern.permute.xlu0 3
  %9873 = vperm.xlu0 %9872, %v8892
  %v9874 = vpop.permute.xlu0 %9873
  %9876 = vset.pattern.permute.xlu0 3
  %9877 = vperm.xlu0 %9876, %v8893
  %v9878 = vpop.permute.xlu0 %9877
  %9880 = vset.pattern.permute.xlu0 3
  %9881 = vperm.xlu0 %9880, %v8894
  %v9882 = vpop.permute.xlu0 %9881
  %9884 = vset.pattern.permute.xlu0 3
  %9885 = vperm.xlu0 %9884, %v8895
  %v9886 = vpop.permute.xlu0 %9885
  %9888 = vset.pattern.permute.xlu0 3
  %9889 = vperm.xlu0 %9888, %v8896
  %v9890 = vpop.permute.xlu0 %9889
  %9892 = vset.pattern.permute.xlu0 3
  %9893 = vperm.xlu0 %9892, %v8897
  %v9894 = vpop.permute.xlu0 %9893
  %9896 = vset.pattern.permute.xlu0 3
  %9897 = vperm.xlu0 %9896, %v8898
  %v9898 = vpop.permute.xlu0 %9897
  %9900 = vset.pattern.permute.xlu0 3
  %9901 = vperm.xlu0 %9900, %v8899
  %v9902 = vpop.permute.xlu0 %9901
  %9904 = vset.pattern.permute.xlu0 3
  %9905 = vperm.xlu0 %9904, %v8900
  %v9906 = vpop.permute.xlu0 %9905
  %9908 = vset.pattern.permute.xlu0 3
  %9909 = vperm.xlu0 %9908, %v8901
  %v9910 = vpop.permute.xlu0 %9909
  %9912 = vset.pattern.permute.xlu0 3
  %9913 = vperm.xlu0 %9912, %v8902
  %v9914 = vpop.permute.xlu0 %9913
  %9916 = vset.pattern.permute.xlu0 3
  %9917 = vperm.xlu0 %9916, %v8903
  %v9918 = vpop.permute.xlu0 %9917
  %9920 = vset.pattern.permute.xlu0 3
  %9921 = vperm.xlu0 %9920, %v8904
  %v9922 = vpop.permute.xlu0 %9921
  %9924 = vset.pattern.permute.xlu0 3
  %9925 = vperm.xlu0 %9924, %v8905
  %v9926 = vpop.permute.xlu0 %9925
  %9928 = vset.pattern.permute.xlu0 3
  %9929 = vperm.xlu0 %9928, %v8906
  %v9930 = vpop.permute.xlu0 %9929
  %9932 = vset.pattern.permute.xlu0 3
  %9933 = vperm.xlu0 %9932, %v8907
  %v9934 = vpop.permute.xlu0 %9933
  %9936 = vset.pattern.permute.xlu0 3
  %9937 = vperm.xlu0 %9936, %v8908
  %v9938 = vpop.permute.xlu0 %9937
  %9940 = vset.pattern.permute.xlu0 3
  %9941 = vperm.xlu0 %9940, %v8909
  %v9942 = vpop.permute.xlu0 %9941
  %9944 = vset.pattern.permute.xlu0 3
  %9945 = vperm.xlu0 %9944, %v8910
  %v9946 = vpop.permute.xlu0 %9945
  %9948 = vset.pattern.permute.xlu0 3
  %9949 = vperm.xlu0 %9948, %v8911
  %v9950 = vpop.permute.xlu0 %9949
  %9952 = vset.pattern.permute.xlu0 3
  %9953 = vperm.xlu0 %9952, %v8912
  %v9954 = vpop.permute.xlu0 %9953
  %9956 = vset.pattern.permute.xlu0 3
  %9957 = vperm.xlu0 %9956, %v8913
  %v9958 = vpop.permute.xlu0 %9957
  %9960 = vset.pattern.permute.xlu0 3
  %9961 = vperm.xlu0 %9960, %v8914
  %v9962 = vpop.permute.xlu0 %9961
  %9964 = vset.pattern.permute.xlu0 3
  %9965 = vperm.xlu0 %9964, %v8915
  %v9966 = vpop.permute.xlu0 %9965
  %9968 = vset.pattern.permute.xlu0 3
  %9969 = vperm.xlu0 %9968, %v8916
  %v9970 = vpop.permute.xlu0 %9969
  %9972 = vset.pattern.permute.xlu0 3
  %9973 = vperm.xlu0 %9972, %v8917
  %v9974 = vpop.permute.xlu0 %9973
  %9976 = vset.pattern.permute.xlu0 3
  %9977 = vperm.xlu0 %9976, %v8918
  %v9978 = vpop.permute.xlu0 %9977
  %9980 = vset.pattern.permute.xlu0 3
  %9981 = vperm.xlu0 %9980, %v8919
  %v9982 = vpop.permute.xlu0 %9981
  %9984 = vset.pattern.permute.xlu0 3
  %9985 = vperm.xlu0 %9984, %v8920
  %v9986 = vpop.permute.xlu0 %9985
  %9988 = vset.pattern.permute.xlu0 3
  %9989 = vperm.xlu0 %9988, %v8921
  %v9990 = vpop.permute.xlu0 %9989
  %9992 = vset.pattern.permute.xlu0 3
  %9993 = vperm.xlu0 %9992, %v8922
  %v9994 = vpop.permute.xlu0 %9993
  %9996 = vset.pattern.permute.xlu0 3
  %9997 = vperm.xlu0 %9996, %v8923
  %v9998 = vpop.permute.xlu0 %9997
  %10000 = vset.pattern.permute.xlu0 3
  %10001 = vperm.xlu0 %10000, %v8924
  %v10002 = vpop.permute.xlu0 %10001
  %10004 = vset.pattern.permute.xlu0 3
  %10005 = vperm.xlu0 %10004, %v8925
  %v10006 = vpop.permute.xlu0 %10005
  %10008 = vset.pattern.permute.xlu0 3
  %10009 = vperm.xlu0 %10008, %v8926
  %v10010 = vpop.permute.xlu0 %10009
  %10012 = vset.pattern.permute.xlu0 3
  %10013 = vperm.xlu0 %10012, %v8927
  %v10014 = vpop.permute.xlu0 %10013
  %vm10016 = vcmask 64512
  %v10017 = vsel %vm10016, %v8931, %v9250
  %v10018 = vsel %vm10016, %v8936, %v9254
  %v10019 = vsel %vm10016, %v8941, %v9258
  %v10020 = vsel %vm10016, %v8946, %v9262
  %v10021 = vsel %vm10016, %v8951, %v9266
  %v10022 = vsel %vm10016, %v8956, %v9270
  %v10023 = vsel %vm10016, %v8961, %v9274
  %v10024 = vsel %vm10016, %v8966, %v9278
  %v10025 = vsel %vm10016, %v8971, %v9282
  %v10026 = vsel %vm10016, %v8976, %v9286
  %v10027 = vsel %vm10016, %v8981, %v9290
  %v10028 = vsel %vm10016, %v8986, %v9294
  %v10029 = vsel %vm10016, %v8991, %v9298
  %v10030 = vsel %vm10016, %v8996, %v9302
  %v10031 = vsel %vm10016, %v9001, %v9306
  %v10032 = vsel %vm10016, %v9006, %v9310
  %v10033 = vsel %vm10016, %v9011, %v9314
  %v10034 = vsel %vm10016, %v9016, %v9318
  %v10035 = vsel %vm10016, %v9021, %v9322
  %v10036 = vsel %vm10016, %v9026, %v9326
  %v10037 = vsel %vm10016, %v9031, %v9330
  %v10038 = vsel %vm10016, %v9036, %v9334
  %v10039 = vsel %vm10016, %v9041, %v9338
  %v10040 = vsel %vm10016, %v9046, %v9342
  %v10041 = vsel %vm10016, %v9051, %v9346
  %v10042 = vsel %vm10016, %v9056, %v9350
  %v10043 = vsel %vm10016, %v9061, %v9354
  %v10044 = vsel %vm10016, %v9066, %v9358
  %v10045 = vsel %vm10016, %v9071, %v9362
  %v10046 = vsel %vm10016, %v9076, %v9366
  %v10047 = vsel %vm10016, %v9081, %v9370
  %v10048 = vsel %vm10016, %v9086, %v9374
  %v10049 = vsel %vm10016, %v9091, %v9378
  %v10050 = vsel %vm10016, %v9096, %v9382
  %v10051 = vsel %vm10016, %v9101, %v9386
  %v10052 = vsel %vm10016, %v9106, %v9390
  %v10053 = vsel %vm10016, %v9111, %v9394
  %v10054 = vsel %vm10016, %v9116, %v9398
  %v10055 = vsel %vm10016, %v9121, %v9402
  %v10056 = vsel %vm10016, %v9126, %v9406
  %v10057 = vsel %vm10016, %v9131, %v9410
  %v10058 = vsel %vm10016, %v9136, %v9414
  %v10059 = vsel %vm10016, %v9141, %v9418
  %v10060 = vsel %vm10016, %v9146, %v9422
  %v10061 = vsel %vm10016, %v9151, %v9426
  %v10062 = vsel %vm10016, %v9156, %v9430
  %v10063 = vsel %vm10016, %v9161, %v9434
  %v10064 = vsel %vm10016, %v9166, %v9438
  %v10065 = vsel %vm10016, %v9171, %v9442
  %v10066 = vsel %vm10016, %v9176, %v9446
  %v10067 = vsel %vm10016, %v9181, %v9450
  %v10068 = vsel %vm10016, %v9186, %v9454
  %v10069 = vsel %vm10016, %v9191, %v9458
  %v10070 = vsel %vm10016, %v9196, %v9462
  %v10071 = vsel %vm10016, %v9201, %v9466
  %v10072 = vsel %vm10016, %v9206, %v9470
  %v10073 = vsel %vm10016, %v9211, %v9474
  %v10074 = vsel %vm10016, %v9216, %v9478
  %v10075 = vsel %vm10016, %v9221, %v9482
  %v10076 = vsel %vm10016, %v9226, %v9486
  %v10077 = vsel %vm10016, %v9231, %v9490
  %v10078 = vsel %vm10016, %v9236, %v9494
  %v10079 = vsel %vm10016, %v9241, %v9498
  %v10080 = vsel %vm10016, %v9246, %v9502
  %vm10081 = vcmask 130048
  %v10082 = vsel %vm10081, %v10017, %v9506
  %v10083 = vsel %vm10081, %v10018, %v9510
  %v10084 = vsel %vm10081, %v10019, %v9514
  %v10085 = vsel %vm10081, %v10020, %v9518
  %v10086 = vsel %vm10081, %v10021, %v9522
  %v10087 = vsel %vm10081, %v10022, %v9526
  %v10088 = vsel %vm10081, %v10023, %v9530
  %v10089 = vsel %vm10081, %v10024, %v9534
  %v10090 = vsel %vm10081, %v10025, %v9538
  %v10091 = vsel %vm10081, %v10026, %v9542
  %v10092 = vsel %vm10081, %v10027, %v9546
  %v10093 = vsel %vm10081, %v10028, %v9550
  %v10094 = vsel %vm10081, %v10029, %v9554
  %v10095 = vsel %vm10081, %v10030, %v9558
  %v10096 = vsel %vm10081, %v10031, %v9562
  %v10097 = vsel %vm10081, %v10032, %v9566
  %v10098 = vsel %vm10081, %v10033, %v9570
  %v10099 = vsel %vm10081, %v10034, %v9574
  %v10100 = vsel %vm10081, %v10035, %v9578
  %v10101 = vsel %vm10081, %v10036, %v9582
  %v10102 = vsel %vm10081, %v10037, %v9586
  %v10103 = vsel %vm10081, %v10038, %v9590
  %v10104 = vsel %vm10081, %v10039, %v9594
  %v10105 = vsel %vm10081, %v10040, %v9598
  %v10106 = vsel %vm10081, %v10041, %v9602
  %v10107 = vsel %vm10081, %v10042, %v9606
  %v10108 = vsel %vm10081, %v10043, %v9610
  %v10109 = vsel %vm10081, %v10044, %v9614
  %v10110 = vsel %vm10081, %v10045, %v9618
  %v10111 = vsel %vm10081, %v10046, %v9622
  %v10112 = vsel %vm10081, %v10047, %v9626
  %v10113 = vsel %vm10081, %v10048, %v9630
  %v10114 = vsel %vm10081, %v10049, %v9634
  %v10115 = vsel %vm10081, %v10050, %v9638
  %v10116 = vsel %vm10081, %v10051, %v9642
  %v10117 = vsel %vm10081, %v10052, %v9646
  %v10118 = vsel %vm10081, %v10053, %v9650
  %v10119 = vsel %vm10081, %v10054, %v9654
  %v10120 = vsel %vm10081, %v10055, %v9658
  %v10121 = vsel %vm10081, %v10056, %v9662
  %v10122 = vsel %vm10081, %v10057, %v9666
  %v10123 = vsel %vm10081, %v10058, %v9670
  %v10124 = vsel %vm10081, %v10059, %v9674
  %v10125 = vsel %vm10081, %v10060, %v9678
  %v10126 = vsel %vm10081, %v10061, %v9682
  %v10127 = vsel %vm10081, %v10062, %v9686
  %v10128 = vsel %vm10081, %v10063, %v9690
  %v10129 = vsel %vm10081, %v10064, %v9694
  %v10130 = vsel %vm10081, %v10065, %v9698
  %v10131 = vsel %vm10081, %v10066, %v9702
  %v10132 = vsel %vm10081, %v10067, %v9706
  %v10133 = vsel %vm10081, %v10068, %v9710
  %v10134 = vsel %vm10081, %v10069, %v9714
  %v10135 = vsel %vm10081, %v10070, %v9718
  %v10136 = vsel %vm10081, %v10071, %v9722
  %v10137 = vsel %vm10081, %v10072, %v9726
  %v10138 = vsel %vm10081, %v10073, %v9730
  %v10139 = vsel %vm10081, %v10074, %v9734
  %v10140 = vsel %vm10081, %v10075, %v9738
  %v10141 = vsel %vm10081, %v10076, %v9742
  %v10142 = vsel %vm10081, %v10077, %v9746
  %v10143 = vsel %vm10081, %v10078, %v9750
  %v10144 = vsel %vm10081, %v10079, %v9754
  %v10145 = vsel %vm10081, %v10080, %v9758
  %v10146 = vsel %vm200, %v10082, %v9762
  %v10147 = vsel %vm200, %v10083, %v9766
  %v10148 = vsel %vm200, %v10084, %v9770
  %v10149 = vsel %vm200, %v10085, %v9774
  %v10150 = vsel %vm200, %v10086, %v9778
  %v10151 = vsel %vm200, %v10087, %v9782
  %v10152 = vsel %vm200, %v10088, %v9786
  %v10153 = vsel %vm200, %v10089, %v9790
  %v10154 = vsel %vm200, %v10090, %v9794
  %v10155 = vsel %vm200, %v10091, %v9798
  %v10156 = vsel %vm200, %v10092, %v9802
  %v10157 = vsel %vm200, %v10093, %v9806
  %v10158 = vsel %vm200, %v10094, %v9810
  %v10159 = vsel %vm200, %v10095, %v9814
  %v10160 = vsel %vm200, %v10096, %v9818
  %v10161 = vsel %vm200, %v10097, %v9822
  %v10162 = vsel %vm200, %v10098, %v9826
  %v10163 = vsel %vm200, %v10099, %v9830
  %v10164 = vsel %vm200, %v10100, %v9834
  %v10165 = vsel %vm200, %v10101, %v9838
  %v10166 = vsel %vm200, %v10102, %v9842
  %v10167 = vsel %vm200, %v10103, %v9846
  %v10168 = vsel %vm200, %v10104, %v9850
  %v10169 = vsel %vm200, %v10105, %v9854
  %v10170 = vsel %vm200, %v10106, %v9858
  %v10171 = vsel %vm200, %v10107, %v9862
  %v10172 = vsel %vm200, %v10108, %v9866
  %v10173 = vsel %vm200, %v10109, %v9870
  %v10174 = vsel %vm200, %v10110, %v9874
  %v10175 = vsel %vm200, %v10111, %v9878
  %v10176 = vsel %vm200, %v10112, %v9882
  %v10177 = vsel %vm200, %v10113, %v9886
  %v10178 = vsel %vm200, %v10114, %v9890
  %v10179 = vsel %vm200, %v10115, %v9894
  %v10180 = vsel %vm200, %v10116, %v9898
  %v10181 = vsel %vm200, %v10117, %v9902
  %v10182 = vsel %vm200, %v10118, %v9906
  %v10183 = vsel %vm200, %v10119, %v9910
  %v10184 = vsel %vm200, %v10120, %v9914
  %v10185 = vsel %vm200, %v10121, %v9918
  %v10186 = vsel %vm200, %v10122, %v9922
  %v10187 = vsel %vm200, %v10123, %v9926
  %v10188 = vsel %vm200, %v10124, %v9930
  %v10189 = vsel %vm200, %v10125, %v9934
  %v10190 = vsel %vm200, %v10126, %v9938
  %v10191 = vsel %vm200, %v10127, %v9942
  %v10192 = vsel %vm200, %v10128, %v9946
  %v10193 = vsel %vm200, %v10129, %v9950
  %v10194 = vsel %vm200, %v10130, %v9954
  %v10195 = vsel %vm200, %v10131, %v9958
  %v10196 = vsel %vm200, %v10132, %v9962
  %v10197 = vsel %vm200, %v10133, %v9966
  %v10198 = vsel %vm200, %v10134, %v9970
  %v10199 = vsel %vm200, %v10135, %v9974
  %v10200 = vsel %vm200, %v10136, %v9978
  %v10201 = vsel %vm200, %v10137, %v9982
  %v10202 = vsel %vm200, %v10138, %v9986
  %v10203 = vsel %vm200, %v10139, %v9990
  %v10204 = vsel %vm200, %v10140, %v9994
  %v10205 = vsel %vm200, %v10141, %v9998
  %v10206 = vsel %vm200, %v10142, %v10002
  %v10207 = vsel %vm200, %v10143, %v10006
  %v10208 = vsel %vm200, %v10144, %v10010
  %v10209 = vsel %vm200, %v10145, %v10014
  %10210 = vrot.lane.b32.xlu0 %v3401, 64
  %v10211 = vpop.permute.xlu0 %10210
  %10212 = vrot.lane.b32.xlu0 %v3402, 64
  %v10213 = vpop.permute.xlu0 %10212
  %10214 = vrot.lane.b32.xlu0 %v3403, 64
  %v10215 = vpop.permute.xlu0 %10214
  %10216 = vrot.lane.b32.xlu0 %v3404, 64
  %v10217 = vpop.permute.xlu0 %10216
  %10218 = vrot.lane.b32.xlu0 %v3405, 64
  %v10219 = vpop.permute.xlu0 %10218
  %10220 = vrot.lane.b32.xlu0 %v3406, 64
  %v10221 = vpop.permute.xlu0 %10220
  %10222 = vrot.lane.b32.xlu0 %v3407, 64
  %v10223 = vpop.permute.xlu0 %10222
  %10224 = vrot.lane.b32.xlu0 %v3408, 64
  %v10225 = vpop.permute.xlu0 %10224
  %10226 = vrot.lane.b32.xlu0 %v3409, 64
  %v10227 = vpop.permute.xlu0 %10226
  %10228 = vrot.lane.b32.xlu0 %v3410, 64
  %v10229 = vpop.permute.xlu0 %10228
  %10230 = vrot.lane.b32.xlu0 %v3411, 64
  %v10231 = vpop.permute.xlu0 %10230
  %10232 = vrot.lane.b32.xlu0 %v3412, 64
  %v10233 = vpop.permute.xlu0 %10232
  %10234 = vrot.lane.b32.xlu0 %v3413, 64
  %v10235 = vpop.permute.xlu0 %10234
  %10236 = vrot.lane.b32.xlu0 %v3414, 64
  %v10237 = vpop.permute.xlu0 %10236
  %10238 = vrot.lane.b32.xlu0 %v3415, 64
  %v10239 = vpop.permute.xlu0 %10238
  %10240 = vrot.lane.b32.xlu0 %v3416, 64
  %v10241 = vpop.permute.xlu0 %10240
  %10242 = vrot.lane.b32.xlu0 %v3417, 64
  %v10243 = vpop.permute.xlu0 %10242
  %10244 = vrot.lane.b32.xlu0 %v3418, 64
  %v10245 = vpop.permute.xlu0 %10244
  %10246 = vrot.lane.b32.xlu0 %v3419, 64
  %v10247 = vpop.permute.xlu0 %10246
  %10248 = vrot.lane.b32.xlu0 %v3420, 64
  %v10249 = vpop.permute.xlu0 %10248
  %10250 = vrot.lane.b32.xlu0 %v3421, 64
  %v10251 = vpop.permute.xlu0 %10250
  %10252 = vrot.lane.b32.xlu0 %v3422, 64
  %v10253 = vpop.permute.xlu0 %10252
  %10254 = vrot.lane.b32.xlu0 %v3423, 64
  %v10255 = vpop.permute.xlu0 %10254
  %10256 = vrot.lane.b32.xlu0 %v3424, 64
  %v10257 = vpop.permute.xlu0 %10256
  %10258 = vrot.lane.b32.xlu0 %v3425, 64
  %v10259 = vpop.permute.xlu0 %10258
  %10260 = vrot.lane.b32.xlu0 %v3426, 64
  %v10261 = vpop.permute.xlu0 %10260
  %10262 = vrot.lane.b32.xlu0 %v3427, 64
  %v10263 = vpop.permute.xlu0 %10262
  %10264 = vrot.lane.b32.xlu0 %v3428, 64
  %v10265 = vpop.permute.xlu0 %10264
  %10266 = vrot.lane.b32.xlu0 %v3429, 64
  %v10267 = vpop.permute.xlu0 %10266
  %10268 = vrot.lane.b32.xlu0 %v3430, 64
  %v10269 = vpop.permute.xlu0 %10268
  %10270 = vrot.lane.b32.xlu0 %v3431, 64
  %v10271 = vpop.permute.xlu0 %10270
  %10272 = vrot.lane.b32.xlu0 %v3432, 64
  %v10273 = vpop.permute.xlu0 %10272
  %10274 = vrot.lane.b32.xlu0 %v3433, 64
  %v10275 = vpop.permute.xlu0 %10274
  %10276 = vrot.lane.b32.xlu0 %v3434, 64
  %v10277 = vpop.permute.xlu0 %10276
  %10278 = vrot.lane.b32.xlu0 %v3435, 64
  %v10279 = vpop.permute.xlu0 %10278
  %10280 = vrot.lane.b32.xlu0 %v3436, 64
  %v10281 = vpop.permute.xlu0 %10280
  %10282 = vrot.lane.b32.xlu0 %v3437, 64
  %v10283 = vpop.permute.xlu0 %10282
  %10284 = vrot.lane.b32.xlu0 %v3438, 64
  %v10285 = vpop.permute.xlu0 %10284
  %10286 = vrot.lane.b32.xlu0 %v3439, 64
  %v10287 = vpop.permute.xlu0 %10286
  %10288 = vrot.lane.b32.xlu0 %v3440, 64
  %v10289 = vpop.permute.xlu0 %10288
  %10290 = vrot.lane.b32.xlu0 %v3441, 64
  %v10291 = vpop.permute.xlu0 %10290
  %10292 = vrot.lane.b32.xlu0 %v3442, 64
  %v10293 = vpop.permute.xlu0 %10292
  %10294 = vrot.lane.b32.xlu0 %v3443, 64
  %v10295 = vpop.permute.xlu0 %10294
  %10296 = vrot.lane.b32.xlu0 %v3444, 64
  %v10297 = vpop.permute.xlu0 %10296
  %10298 = vrot.lane.b32.xlu0 %v3445, 64
  %v10299 = vpop.permute.xlu0 %10298
  %10300 = vrot.lane.b32.xlu0 %v3446, 64
  %v10301 = vpop.permute.xlu0 %10300
  %10302 = vrot.lane.b32.xlu0 %v3447, 64
  %v10303 = vpop.permute.xlu0 %10302
  %10304 = vrot.lane.b32.xlu0 %v3448, 64
  %v10305 = vpop.permute.xlu0 %10304
  %10306 = vrot.lane.b32.xlu0 %v3449, 64
  %v10307 = vpop.permute.xlu0 %10306
  %10308 = vrot.lane.b32.xlu0 %v3450, 64
  %v10309 = vpop.permute.xlu0 %10308
  %10310 = vrot.lane.b32.xlu0 %v3451, 64
  %v10311 = vpop.permute.xlu0 %10310
  %10312 = vrot.lane.b32.xlu0 %v3452, 64
  %v10313 = vpop.permute.xlu0 %10312
  %10314 = vrot.lane.b32.xlu0 %v3453, 64
  %v10315 = vpop.permute.xlu0 %10314
  %10316 = vrot.lane.b32.xlu0 %v3454, 64
  %v10317 = vpop.permute.xlu0 %10316
  %10318 = vrot.lane.b32.xlu0 %v3455, 64
  %v10319 = vpop.permute.xlu0 %10318
  %10320 = vrot.lane.b32.xlu0 %v3456, 64
  %v10321 = vpop.permute.xlu0 %10320
  %10322 = vrot.lane.b32.xlu0 %v3457, 64
  %v10323 = vpop.permute.xlu0 %10322
  %10324 = vrot.lane.b32.xlu0 %v3458, 64
  %v10325 = vpop.permute.xlu0 %10324
  %10326 = vrot.lane.b32.xlu0 %v3459, 64
  %v10327 = vpop.permute.xlu0 %10326
  %10328 = vrot.lane.b32.xlu0 %v3460, 64
  %v10329 = vpop.permute.xlu0 %10328
  %10330 = vrot.lane.b32.xlu0 %v3461, 64
  %v10331 = vpop.permute.xlu0 %10330
  %10332 = vrot.lane.b32.xlu0 %v3462, 64
  %v10333 = vpop.permute.xlu0 %10332
  %10334 = vrot.lane.b32.xlu0 %v3463, 64
  %v10335 = vpop.permute.xlu0 %10334
  %10336 = vrot.lane.b32.xlu0 %v3464, 64
  %v10337 = vpop.permute.xlu0 %10336
  %v10402 = vmul.f32 %v10146, %v10211
  %v10403 = vmul.f32 %v10147, %v10213
  %v10404 = vmul.f32 %v10148, %v10215
  %v10405 = vmul.f32 %v10149, %v10217
  %v10406 = vmul.f32 %v10150, %v10219
  %v10407 = vmul.f32 %v10151, %v10221
  %v10408 = vmul.f32 %v10152, %v10223
  %v10409 = vmul.f32 %v10153, %v10225
  %v10410 = vmul.f32 %v10154, %v10227
  %v10411 = vmul.f32 %v10155, %v10229
  %v10412 = vmul.f32 %v10156, %v10231
  %v10413 = vmul.f32 %v10157, %v10233
  %v10414 = vmul.f32 %v10158, %v10235
  %v10415 = vmul.f32 %v10159, %v10237
  %v10416 = vmul.f32 %v10160, %v10239
  %v10417 = vmul.f32 %v10161, %v10241
  %v10418 = vmul.f32 %v10162, %v10243
  %v10419 = vmul.f32 %v10163, %v10245
  %v10420 = vmul.f32 %v10164, %v10247
  %v10421 = vmul.f32 %v10165, %v10249
  %v10422 = vmul.f32 %v10166, %v10251
  %v10423 = vmul.f32 %v10167, %v10253
  %v10424 = vmul.f32 %v10168, %v10255
  %v10425 = vmul.f32 %v10169, %v10257
  %v10426 = vmul.f32 %v10170, %v10259
  %v10427 = vmul.f32 %v10171, %v10261
  %v10428 = vmul.f32 %v10172, %v10263
  %v10429 = vmul.f32 %v10173, %v10265
  %v10430 = vmul.f32 %v10174, %v10267
  %v10431 = vmul.f32 %v10175, %v10269
  %v10432 = vmul.f32 %v10176, %v10271
  %v10433 = vmul.f32 %v10177, %v10273
  %v10434 = vmul.f32 %v10178, %v10275
  %v10435 = vmul.f32 %v10179, %v10277
  %v10436 = vmul.f32 %v10180, %v10279
  %v10437 = vmul.f32 %v10181, %v10281
  %v10438 = vmul.f32 %v10182, %v10283
  %v10439 = vmul.f32 %v10183, %v10285
  %v10440 = vmul.f32 %v10184, %v10287
  %v10441 = vmul.f32 %v10185, %v10289
  %v10442 = vmul.f32 %v10186, %v10291
  %v10443 = vmul.f32 %v10187, %v10293
  %v10444 = vmul.f32 %v10188, %v10295
  %v10445 = vmul.f32 %v10189, %v10297
  %v10446 = vmul.f32 %v10190, %v10299
  %v10447 = vmul.f32 %v10191, %v10301
  %v10448 = vmul.f32 %v10192, %v10303
  %v10449 = vmul.f32 %v10193, %v10305
  %v10450 = vmul.f32 %v10194, %v10307
  %v10451 = vmul.f32 %v10195, %v10309
  %v10452 = vmul.f32 %v10196, %v10311
  %v10453 = vmul.f32 %v10197, %v10313
  %v10454 = vmul.f32 %v10198, %v10315
  %v10455 = vmul.f32 %v10199, %v10317
  %v10456 = vmul.f32 %v10200, %v10319
  %v10457 = vmul.f32 %v10201, %v10321
  %v10458 = vmul.f32 %v10202, %v10323
  %v10459 = vmul.f32 %v10203, %v10325
  %v10460 = vmul.f32 %v10204, %v10327
  %v10461 = vmul.f32 %v10205, %v10329
  %v10462 = vmul.f32 %v10206, %v10331
  %v10463 = vmul.f32 %v10207, %v10333
  %v10464 = vmul.f32 %v10208, %v10335
  %v10465 = vmul.f32 %v10209, %v10337
  %v10466 = vsel %vm3015, %v10402, 0.0
  %v10467 = vrot.slane %v10466, 4
  %v10468 = vadd.f32 %v10466, %v10467
  %v10469 = vrot.slane %v10468, 2
  %v10470 = vadd.f32 %v10468, %v10469
  %v10471 = vrot.slane %v10470, 1
  %v10472 = vadd.f32 %v10470, %v10471
  %v10473 = vsel %vm3015, %v10403, 0.0
  %v10474 = vrot.slane %v10473, 4
  %v10475 = vadd.f32 %v10473, %v10474
  %v10476 = vrot.slane %v10475, 2
  %v10477 = vadd.f32 %v10475, %v10476
  %v10478 = vrot.slane %v10477, 1
  %v10479 = vadd.f32 %v10477, %v10478
  %v10480 = vsel %vm3015, %v10404, 0.0
  %v10481 = vrot.slane %v10480, 4
  %v10482 = vadd.f32 %v10480, %v10481
  %v10483 = vrot.slane %v10482, 2
  %v10484 = vadd.f32 %v10482, %v10483
  %v10485 = vrot.slane %v10484, 1
  %v10486 = vadd.f32 %v10484, %v10485
  %v10487 = vsel %vm3015, %v10405, 0.0
  %v10488 = vrot.slane %v10487, 4
  %v10489 = vadd.f32 %v10487, %v10488
  %v10490 = vrot.slane %v10489, 2
  %v10491 = vadd.f32 %v10489, %v10490
  %v10492 = vrot.slane %v10491, 1
  %v10493 = vadd.f32 %v10491, %v10492
  %v10494 = vsel %vm3015, %v10406, 0.0
  %v10495 = vrot.slane %v10494, 4
  %v10496 = vadd.f32 %v10494, %v10495
  %v10497 = vrot.slane %v10496, 2
  %v10498 = vadd.f32 %v10496, %v10497
  %v10499 = vrot.slane %v10498, 1
  %v10500 = vadd.f32 %v10498, %v10499
  %v10501 = vsel %vm3015, %v10407, 0.0
  %v10502 = vrot.slane %v10501, 4
  %v10503 = vadd.f32 %v10501, %v10502
  %v10504 = vrot.slane %v10503, 2
  %v10505 = vadd.f32 %v10503, %v10504
  %v10506 = vrot.slane %v10505, 1
  %v10507 = vadd.f32 %v10505, %v10506
  %v10508 = vsel %vm3015, %v10408, 0.0
  %v10509 = vrot.slane %v10508, 4
  %v10510 = vadd.f32 %v10508, %v10509
  %v10511 = vrot.slane %v10510, 2
  %v10512 = vadd.f32 %v10510, %v10511
  %v10513 = vrot.slane %v10512, 1
  %v10514 = vadd.f32 %v10512, %v10513
  %v10515 = vsel %vm3015, %v10409, 0.0
  %v10516 = vrot.slane %v10515, 4
  %v10517 = vadd.f32 %v10515, %v10516
  %v10518 = vrot.slane %v10517, 2
  %v10519 = vadd.f32 %v10517, %v10518
  %v10520 = vrot.slane %v10519, 1
  %v10521 = vadd.f32 %v10519, %v10520
  %v10522 = vsel %vm3015, %v10410, 0.0
  %v10523 = vrot.slane %v10522, 4
  %v10524 = vadd.f32 %v10522, %v10523
  %v10525 = vrot.slane %v10524, 2
  %v10526 = vadd.f32 %v10524, %v10525
  %v10527 = vrot.slane %v10526, 1
  %v10528 = vadd.f32 %v10526, %v10527
  %v10529 = vsel %vm3015, %v10411, 0.0
  %v10530 = vrot.slane %v10529, 4
  %v10531 = vadd.f32 %v10529, %v10530
  %v10532 = vrot.slane %v10531, 2
  %v10533 = vadd.f32 %v10531, %v10532
  %v10534 = vrot.slane %v10533, 1
  %v10535 = vadd.f32 %v10533, %v10534
  %v10536 = vsel %vm3015, %v10412, 0.0
  %v10537 = vrot.slane %v10536, 4
  %v10538 = vadd.f32 %v10536, %v10537
  %v10539 = vrot.slane %v10538, 2
  %v10540 = vadd.f32 %v10538, %v10539
  %v10541 = vrot.slane %v10540, 1
  %v10542 = vadd.f32 %v10540, %v10541
  %v10543 = vsel %vm3015, %v10413, 0.0
  %v10544 = vrot.slane %v10543, 4
  %v10545 = vadd.f32 %v10543, %v10544
  %v10546 = vrot.slane %v10545, 2
  %v10547 = vadd.f32 %v10545, %v10546
  %v10548 = vrot.slane %v10547, 1
  %v10549 = vadd.f32 %v10547, %v10548
  %v10550 = vsel %vm3015, %v10414, 0.0
  %v10551 = vrot.slane %v10550, 4
  %v10552 = vadd.f32 %v10550, %v10551
  %v10553 = vrot.slane %v10552, 2
  %v10554 = vadd.f32 %v10552, %v10553
  %v10555 = vrot.slane %v10554, 1
  %v10556 = vadd.f32 %v10554, %v10555
  %v10557 = vsel %vm3015, %v10415, 0.0
  %v10558 = vrot.slane %v10557, 4
  %v10559 = vadd.f32 %v10557, %v10558
  %v10560 = vrot.slane %v10559, 2
  %v10561 = vadd.f32 %v10559, %v10560
  %v10562 = vrot.slane %v10561, 1
  %v10563 = vadd.f32 %v10561, %v10562
  %v10564 = vsel %vm3015, %v10416, 0.0
  %v10565 = vrot.slane %v10564, 4
  %v10566 = vadd.f32 %v10564, %v10565
  %v10567 = vrot.slane %v10566, 2
  %v10568 = vadd.f32 %v10566, %v10567
  %v10569 = vrot.slane %v10568, 1
  %v10570 = vadd.f32 %v10568, %v10569
  %v10571 = vsel %vm3015, %v10417, 0.0
  %v10572 = vrot.slane %v10571, 4
  %v10573 = vadd.f32 %v10571, %v10572
  %v10574 = vrot.slane %v10573, 2
  %v10575 = vadd.f32 %v10573, %v10574
  %v10576 = vrot.slane %v10575, 1
  %v10577 = vadd.f32 %v10575, %v10576
  %v10578 = vsel %vm3015, %v10418, 0.0
  %v10579 = vrot.slane %v10578, 4
  %v10580 = vadd.f32 %v10578, %v10579
  %v10581 = vrot.slane %v10580, 2
  %v10582 = vadd.f32 %v10580, %v10581
  %v10583 = vrot.slane %v10582, 1
  %v10584 = vadd.f32 %v10582, %v10583
  %v10585 = vsel %vm3015, %v10419, 0.0
  %v10586 = vrot.slane %v10585, 4
  %v10587 = vadd.f32 %v10585, %v10586
  %v10588 = vrot.slane %v10587, 2
  %v10589 = vadd.f32 %v10587, %v10588
  %v10590 = vrot.slane %v10589, 1
  %v10591 = vadd.f32 %v10589, %v10590
  %v10592 = vsel %vm3015, %v10420, 0.0
  %v10593 = vrot.slane %v10592, 4
  %v10594 = vadd.f32 %v10592, %v10593
  %v10595 = vrot.slane %v10594, 2
  %v10596 = vadd.f32 %v10594, %v10595
  %v10597 = vrot.slane %v10596, 1
  %v10598 = vadd.f32 %v10596, %v10597
  %v10599 = vsel %vm3015, %v10421, 0.0
  %v10600 = vrot.slane %v10599, 4
  %v10601 = vadd.f32 %v10599, %v10600
  %v10602 = vrot.slane %v10601, 2
  %v10603 = vadd.f32 %v10601, %v10602
  %v10604 = vrot.slane %v10603, 1
  %v10605 = vadd.f32 %v10603, %v10604
  %v10606 = vsel %vm3015, %v10422, 0.0
  %v10607 = vrot.slane %v10606, 4
  %v10608 = vadd.f32 %v10606, %v10607
  %v10609 = vrot.slane %v10608, 2
  %v10610 = vadd.f32 %v10608, %v10609
  %v10611 = vrot.slane %v10610, 1
  %v10612 = vadd.f32 %v10610, %v10611
  %v10613 = vsel %vm3015, %v10423, 0.0
  %v10614 = vrot.slane %v10613, 4
  %v10615 = vadd.f32 %v10613, %v10614
  %v10616 = vrot.slane %v10615, 2
  %v10617 = vadd.f32 %v10615, %v10616
  %v10618 = vrot.slane %v10617, 1
  %v10619 = vadd.f32 %v10617, %v10618
  %v10620 = vsel %vm3015, %v10424, 0.0
  %v10621 = vrot.slane %v10620, 4
  %v10622 = vadd.f32 %v10620, %v10621
  %v10623 = vrot.slane %v10622, 2
  %v10624 = vadd.f32 %v10622, %v10623
  %v10625 = vrot.slane %v10624, 1
  %v10626 = vadd.f32 %v10624, %v10625
  %v10627 = vsel %vm3015, %v10425, 0.0
  %v10628 = vrot.slane %v10627, 4
  %v10629 = vadd.f32 %v10627, %v10628
  %v10630 = vrot.slane %v10629, 2
  %v10631 = vadd.f32 %v10629, %v10630
  %v10632 = vrot.slane %v10631, 1
  %v10633 = vadd.f32 %v10631, %v10632
  %v10634 = vsel %vm3015, %v10426, 0.0
  %v10635 = vrot.slane %v10634, 4
  %v10636 = vadd.f32 %v10634, %v10635
  %v10637 = vrot.slane %v10636, 2
  %v10638 = vadd.f32 %v10636, %v10637
  %v10639 = vrot.slane %v10638, 1
  %v10640 = vadd.f32 %v10638, %v10639
  %v10641 = vsel %vm3015, %v10427, 0.0
  %v10642 = vrot.slane %v10641, 4
  %v10643 = vadd.f32 %v10641, %v10642
  %v10644 = vrot.slane %v10643, 2
  %v10645 = vadd.f32 %v10643, %v10644
  %v10646 = vrot.slane %v10645, 1
  %v10647 = vadd.f32 %v10645, %v10646
  %v10648 = vsel %vm3015, %v10428, 0.0
  %v10649 = vrot.slane %v10648, 4
  %v10650 = vadd.f32 %v10648, %v10649
  %v10651 = vrot.slane %v10650, 2
  %v10652 = vadd.f32 %v10650, %v10651
  %v10653 = vrot.slane %v10652, 1
  %v10654 = vadd.f32 %v10652, %v10653
  %v10655 = vsel %vm3015, %v10429, 0.0
  %v10656 = vrot.slane %v10655, 4
  %v10657 = vadd.f32 %v10655, %v10656
  %v10658 = vrot.slane %v10657, 2
  %v10659 = vadd.f32 %v10657, %v10658
  %v10660 = vrot.slane %v10659, 1
  %v10661 = vadd.f32 %v10659, %v10660
  %v10662 = vsel %vm3015, %v10430, 0.0
  %v10663 = vrot.slane %v10662, 4
  %v10664 = vadd.f32 %v10662, %v10663
  %v10665 = vrot.slane %v10664, 2
  %v10666 = vadd.f32 %v10664, %v10665
  %v10667 = vrot.slane %v10666, 1
  %v10668 = vadd.f32 %v10666, %v10667
  %v10669 = vsel %vm3015, %v10431, 0.0
  %v10670 = vrot.slane %v10669, 4
  %v10671 = vadd.f32 %v10669, %v10670
  %v10672 = vrot.slane %v10671, 2
  %v10673 = vadd.f32 %v10671, %v10672
  %v10674 = vrot.slane %v10673, 1
  %v10675 = vadd.f32 %v10673, %v10674
  %v10676 = vsel %vm3015, %v10432, 0.0
  %v10677 = vrot.slane %v10676, 4
  %v10678 = vadd.f32 %v10676, %v10677
  %v10679 = vrot.slane %v10678, 2
  %v10680 = vadd.f32 %v10678, %v10679
  %v10681 = vrot.slane %v10680, 1
  %v10682 = vadd.f32 %v10680, %v10681
  %v10683 = vsel %vm3015, %v10433, 0.0
  %v10684 = vrot.slane %v10683, 4
  %v10685 = vadd.f32 %v10683, %v10684
  %v10686 = vrot.slane %v10685, 2
  %v10687 = vadd.f32 %v10685, %v10686
  %v10688 = vrot.slane %v10687, 1
  %v10689 = vadd.f32 %v10687, %v10688
  %v10690 = vsel %vm3015, %v10434, 0.0
  %v10691 = vrot.slane %v10690, 4
  %v10692 = vadd.f32 %v10690, %v10691
  %v10693 = vrot.slane %v10692, 2
  %v10694 = vadd.f32 %v10692, %v10693
  %v10695 = vrot.slane %v10694, 1
  %v10696 = vadd.f32 %v10694, %v10695
  %v10697 = vsel %vm3015, %v10435, 0.0
  %v10698 = vrot.slane %v10697, 4
  %v10699 = vadd.f32 %v10697, %v10698
  %v10700 = vrot.slane %v10699, 2
  %v10701 = vadd.f32 %v10699, %v10700
  %v10702 = vrot.slane %v10701, 1
  %v10703 = vadd.f32 %v10701, %v10702
  %v10704 = vsel %vm3015, %v10436, 0.0
  %v10705 = vrot.slane %v10704, 4
  %v10706 = vadd.f32 %v10704, %v10705
  %v10707 = vrot.slane %v10706, 2
  %v10708 = vadd.f32 %v10706, %v10707
  %v10709 = vrot.slane %v10708, 1
  %v10710 = vadd.f32 %v10708, %v10709
  %v10711 = vsel %vm3015, %v10437, 0.0
  %v10712 = vrot.slane %v10711, 4
  %v10713 = vadd.f32 %v10711, %v10712
  %v10714 = vrot.slane %v10713, 2
  %v10715 = vadd.f32 %v10713, %v10714
  %v10716 = vrot.slane %v10715, 1
  %v10717 = vadd.f32 %v10715, %v10716
  %v10718 = vsel %vm3015, %v10438, 0.0
  %v10719 = vrot.slane %v10718, 4
  %v10720 = vadd.f32 %v10718, %v10719
  %v10721 = vrot.slane %v10720, 2
  %v10722 = vadd.f32 %v10720, %v10721
  %v10723 = vrot.slane %v10722, 1
  %v10724 = vadd.f32 %v10722, %v10723
  %v10725 = vsel %vm3015, %v10439, 0.0
  %v10726 = vrot.slane %v10725, 4
  %v10727 = vadd.f32 %v10725, %v10726
  %v10728 = vrot.slane %v10727, 2
  %v10729 = vadd.f32 %v10727, %v10728
  %v10730 = vrot.slane %v10729, 1
  %v10731 = vadd.f32 %v10729, %v10730
  %v10732 = vsel %vm3015, %v10440, 0.0
  %v10733 = vrot.slane %v10732, 4
  %v10734 = vadd.f32 %v10732, %v10733
  %v10735 = vrot.slane %v10734, 2
  %v10736 = vadd.f32 %v10734, %v10735
  %v10737 = vrot.slane %v10736, 1
  %v10738 = vadd.f32 %v10736, %v10737
  %v10739 = vsel %vm3015, %v10441, 0.0
  %v10740 = vrot.slane %v10739, 4
  %v10741 = vadd.f32 %v10739, %v10740
  %v10742 = vrot.slane %v10741, 2
  %v10743 = vadd.f32 %v10741, %v10742
  %v10744 = vrot.slane %v10743, 1
  %v10745 = vadd.f32 %v10743, %v10744
  %v10746 = vsel %vm3015, %v10442, 0.0
  %v10747 = vrot.slane %v10746, 4
  %v10748 = vadd.f32 %v10746, %v10747
  %v10749 = vrot.slane %v10748, 2
  %v10750 = vadd.f32 %v10748, %v10749
  %v10751 = vrot.slane %v10750, 1
  %v10752 = vadd.f32 %v10750, %v10751
  %v10753 = vsel %vm3015, %v10443, 0.0
  %v10754 = vrot.slane %v10753, 4
  %v10755 = vadd.f32 %v10753, %v10754
  %v10756 = vrot.slane %v10755, 2
  %v10757 = vadd.f32 %v10755, %v10756
  %v10758 = vrot.slane %v10757, 1
  %v10759 = vadd.f32 %v10757, %v10758
  %v10760 = vsel %vm3015, %v10444, 0.0
  %v10761 = vrot.slane %v10760, 4
  %v10762 = vadd.f32 %v10760, %v10761
  %v10763 = vrot.slane %v10762, 2
  %v10764 = vadd.f32 %v10762, %v10763
  %v10765 = vrot.slane %v10764, 1
  %v10766 = vadd.f32 %v10764, %v10765
  %v10767 = vsel %vm3015, %v10445, 0.0
  %v10768 = vrot.slane %v10767, 4
  %v10769 = vadd.f32 %v10767, %v10768
  %v10770 = vrot.slane %v10769, 2
  %v10771 = vadd.f32 %v10769, %v10770
  %v10772 = vrot.slane %v10771, 1
  %v10773 = vadd.f32 %v10771, %v10772
  %v10774 = vsel %vm3015, %v10446, 0.0
  %v10775 = vrot.slane %v10774, 4
  %v10776 = vadd.f32 %v10774, %v10775
  %v10777 = vrot.slane %v10776, 2
  %v10778 = vadd.f32 %v10776, %v10777
  %v10779 = vrot.slane %v10778, 1
  %v10780 = vadd.f32 %v10778, %v10779
  %v10781 = vsel %vm3015, %v10447, 0.0
  %v10782 = vrot.slane %v10781, 4
  %v10783 = vadd.f32 %v10781, %v10782
  %v10784 = vrot.slane %v10783, 2
  %v10785 = vadd.f32 %v10783, %v10784
  %v10786 = vrot.slane %v10785, 1
  %v10787 = vadd.f32 %v10785, %v10786
  %v10788 = vsel %vm3015, %v10448, 0.0
  %v10789 = vrot.slane %v10788, 4
  %v10790 = vadd.f32 %v10788, %v10789
  %v10791 = vrot.slane %v10790, 2
  %v10792 = vadd.f32 %v10790, %v10791
  %v10793 = vrot.slane %v10792, 1
  %v10794 = vadd.f32 %v10792, %v10793
  %v10795 = vsel %vm3015, %v10449, 0.0
  %v10796 = vrot.slane %v10795, 4
  %v10797 = vadd.f32 %v10795, %v10796
  %v10798 = vrot.slane %v10797, 2
  %v10799 = vadd.f32 %v10797, %v10798
  %v10800 = vrot.slane %v10799, 1
  %v10801 = vadd.f32 %v10799, %v10800
  %v10802 = vsel %vm3015, %v10450, 0.0
  %v10803 = vrot.slane %v10802, 4
  %v10804 = vadd.f32 %v10802, %v10803
  %v10805 = vrot.slane %v10804, 2
  %v10806 = vadd.f32 %v10804, %v10805
  %v10807 = vrot.slane %v10806, 1
  %v10808 = vadd.f32 %v10806, %v10807
  %v10809 = vsel %vm3015, %v10451, 0.0
  %v10810 = vrot.slane %v10809, 4
  %v10811 = vadd.f32 %v10809, %v10810
  %v10812 = vrot.slane %v10811, 2
  %v10813 = vadd.f32 %v10811, %v10812
  %v10814 = vrot.slane %v10813, 1
  %v10815 = vadd.f32 %v10813, %v10814
  %v10816 = vsel %vm3015, %v10452, 0.0
  %v10817 = vrot.slane %v10816, 4
  %v10818 = vadd.f32 %v10816, %v10817
  %v10819 = vrot.slane %v10818, 2
  %v10820 = vadd.f32 %v10818, %v10819
  %v10821 = vrot.slane %v10820, 1
  %v10822 = vadd.f32 %v10820, %v10821
  %v10823 = vsel %vm3015, %v10453, 0.0
  %v10824 = vrot.slane %v10823, 4
  %v10825 = vadd.f32 %v10823, %v10824
  %v10826 = vrot.slane %v10825, 2
  %v10827 = vadd.f32 %v10825, %v10826
  %v10828 = vrot.slane %v10827, 1
  %v10829 = vadd.f32 %v10827, %v10828
  %v10830 = vsel %vm3015, %v10454, 0.0
  %v10831 = vrot.slane %v10830, 4
  %v10832 = vadd.f32 %v10830, %v10831
  %v10833 = vrot.slane %v10832, 2
  %v10834 = vadd.f32 %v10832, %v10833
  %v10835 = vrot.slane %v10834, 1
  %v10836 = vadd.f32 %v10834, %v10835
  %v10837 = vsel %vm3015, %v10455, 0.0
  %v10838 = vrot.slane %v10837, 4
  %v10839 = vadd.f32 %v10837, %v10838
  %v10840 = vrot.slane %v10839, 2
  %v10841 = vadd.f32 %v10839, %v10840
  %v10842 = vrot.slane %v10841, 1
  %v10843 = vadd.f32 %v10841, %v10842
  %v10844 = vsel %vm3015, %v10456, 0.0
  %v10845 = vrot.slane %v10844, 4
  %v10846 = vadd.f32 %v10844, %v10845
  %v10847 = vrot.slane %v10846, 2
  %v10848 = vadd.f32 %v10846, %v10847
  %v10849 = vrot.slane %v10848, 1
  %v10850 = vadd.f32 %v10848, %v10849
  %v10851 = vsel %vm3015, %v10457, 0.0
  %v10852 = vrot.slane %v10851, 4
  %v10853 = vadd.f32 %v10851, %v10852
  %v10854 = vrot.slane %v10853, 2
  %v10855 = vadd.f32 %v10853, %v10854
  %v10856 = vrot.slane %v10855, 1
  %v10857 = vadd.f32 %v10855, %v10856
  %v10858 = vsel %vm3015, %v10458, 0.0
  %v10859 = vrot.slane %v10858, 4
  %v10860 = vadd.f32 %v10858, %v10859
  %v10861 = vrot.slane %v10860, 2
  %v10862 = vadd.f32 %v10860, %v10861
  %v10863 = vrot.slane %v10862, 1
  %v10864 = vadd.f32 %v10862, %v10863
  %v10865 = vsel %vm3015, %v10459, 0.0
  %v10866 = vrot.slane %v10865, 4
  %v10867 = vadd.f32 %v10865, %v10866
  %v10868 = vrot.slane %v10867, 2
  %v10869 = vadd.f32 %v10867, %v10868
  %v10870 = vrot.slane %v10869, 1
  %v10871 = vadd.f32 %v10869, %v10870
  %v10872 = vsel %vm3015, %v10460, 0.0
  %v10873 = vrot.slane %v10872, 4
  %v10874 = vadd.f32 %v10872, %v10873
  %v10875 = vrot.slane %v10874, 2
  %v10876 = vadd.f32 %v10874, %v10875
  %v10877 = vrot.slane %v10876, 1
  %v10878 = vadd.f32 %v10876, %v10877
  %v10879 = vsel %vm3015, %v10461, 0.0
  %v10880 = vrot.slane %v10879, 4
  %v10881 = vadd.f32 %v10879, %v10880
  %v10882 = vrot.slane %v10881, 2
  %v10883 = vadd.f32 %v10881, %v10882
  %v10884 = vrot.slane %v10883, 1
  %v10885 = vadd.f32 %v10883, %v10884
  %v10886 = vsel %vm3015, %v10462, 0.0
  %v10887 = vrot.slane %v10886, 4
  %v10888 = vadd.f32 %v10886, %v10887
  %v10889 = vrot.slane %v10888, 2
  %v10890 = vadd.f32 %v10888, %v10889
  %v10891 = vrot.slane %v10890, 1
  %v10892 = vadd.f32 %v10890, %v10891
  %v10893 = vsel %vm3015, %v10463, 0.0
  %v10894 = vrot.slane %v10893, 4
  %v10895 = vadd.f32 %v10893, %v10894
  %v10896 = vrot.slane %v10895, 2
  %v10897 = vadd.f32 %v10895, %v10896
  %v10898 = vrot.slane %v10897, 1
  %v10899 = vadd.f32 %v10897, %v10898
  %v10900 = vsel %vm3015, %v10464, 0.0
  %v10901 = vrot.slane %v10900, 4
  %v10902 = vadd.f32 %v10900, %v10901
  %v10903 = vrot.slane %v10902, 2
  %v10904 = vadd.f32 %v10902, %v10903
  %v10905 = vrot.slane %v10904, 1
  %v10906 = vadd.f32 %v10904, %v10905
  %v10907 = vsel %vm3015, %v10465, 0.0
  %v10908 = vrot.slane %v10907, 4
  %v10909 = vadd.f32 %v10907, %v10908
  %v10910 = vrot.slane %v10909, 2
  %v10911 = vadd.f32 %v10909, %v10910
  %v10912 = vrot.slane %v10911, 1
  %v10913 = vadd.f32 %v10911, %v10912
  %v10914 = vpack.c.bf16 %v10472, %v10472
  %v10915 = vpack.c.bf16 %v10479, %v10479
  %v10916 = vpack.c.bf16 %v10486, %v10486
  %v10917 = vpack.c.bf16 %v10493, %v10493
  %v10918 = vpack.c.bf16 %v10500, %v10500
  %v10919 = vpack.c.bf16 %v10507, %v10507
  %v10920 = vpack.c.bf16 %v10514, %v10514
  %v10921 = vpack.c.bf16 %v10521, %v10521
  %v10922 = vpack.c.bf16 %v10528, %v10528
  %v10923 = vpack.c.bf16 %v10535, %v10535
  %v10924 = vpack.c.bf16 %v10542, %v10542
  %v10925 = vpack.c.bf16 %v10549, %v10549
  %v10926 = vpack.c.bf16 %v10556, %v10556
  %v10927 = vpack.c.bf16 %v10563, %v10563
  %v10928 = vpack.c.bf16 %v10570, %v10570
  %v10929 = vpack.c.bf16 %v10577, %v10577
  %v10930 = vpack.c.bf16 %v10584, %v10584
  %v10931 = vpack.c.bf16 %v10591, %v10591
  %v10932 = vpack.c.bf16 %v10598, %v10598
  %v10933 = vpack.c.bf16 %v10605, %v10605
  %v10934 = vpack.c.bf16 %v10612, %v10612
  %v10935 = vpack.c.bf16 %v10619, %v10619
  %v10936 = vpack.c.bf16 %v10626, %v10626
  %v10937 = vpack.c.bf16 %v10633, %v10633
  %v10938 = vpack.c.bf16 %v10640, %v10640
  %v10939 = vpack.c.bf16 %v10647, %v10647
  %v10940 = vpack.c.bf16 %v10654, %v10654
  %v10941 = vpack.c.bf16 %v10661, %v10661
  %v10942 = vpack.c.bf16 %v10668, %v10668
  %v10943 = vpack.c.bf16 %v10675, %v10675
  %v10944 = vpack.c.bf16 %v10682, %v10682
  %v10945 = vpack.c.bf16 %v10689, %v10689
  %v10946 = vpack.c.bf16 %v10696, %v10696
  %v10947 = vpack.c.bf16 %v10703, %v10703
  %v10948 = vpack.c.bf16 %v10710, %v10710
  %v10949 = vpack.c.bf16 %v10717, %v10717
  %v10950 = vpack.c.bf16 %v10724, %v10724
  %v10951 = vpack.c.bf16 %v10731, %v10731
  %v10952 = vpack.c.bf16 %v10738, %v10738
  %v10953 = vpack.c.bf16 %v10745, %v10745
  %v10954 = vpack.c.bf16 %v10752, %v10752
  %v10955 = vpack.c.bf16 %v10759, %v10759
  %v10956 = vpack.c.bf16 %v10766, %v10766
  %v10957 = vpack.c.bf16 %v10773, %v10773
  %v10958 = vpack.c.bf16 %v10780, %v10780
  %v10959 = vpack.c.bf16 %v10787, %v10787
  %v10960 = vpack.c.bf16 %v10794, %v10794
  %v10961 = vpack.c.bf16 %v10801, %v10801
  %v10962 = vpack.c.bf16 %v10808, %v10808
  %v10963 = vpack.c.bf16 %v10815, %v10815
  %v10964 = vpack.c.bf16 %v10822, %v10822
  %v10965 = vpack.c.bf16 %v10829, %v10829
  %v10966 = vpack.c.bf16 %v10836, %v10836
  %v10967 = vpack.c.bf16 %v10843, %v10843
  %v10968 = vpack.c.bf16 %v10850, %v10850
  %v10969 = vpack.c.bf16 %v10857, %v10857
  %v10970 = vpack.c.bf16 %v10864, %v10864
  %v10971 = vpack.c.bf16 %v10871, %v10871
  %v10972 = vpack.c.bf16 %v10878, %v10878
  %v10973 = vpack.c.bf16 %v10885, %v10885
  %v10974 = vpack.c.bf16 %v10892, %v10892
  %v10975 = vpack.c.bf16 %v10899, %v10899
  %v10976 = vpack.c.bf16 %v10906, %v10906
  %v10977 = vpack.c.bf16 %v10913, %v10913
  %v10978 = vld [vmem:[%s12] sm:$0xf]
  %v10979 = vld [vmem:[%s12 + $0x4] sm:$0xf]
  %v10980 = vld [vmem:[%s12 + $0x8] sm:$0xf]
  %v10981 = vld [vmem:[%s12 + $0xc] sm:$0xf]
  %v10982 = vld [vmem:[%s13] sm:$0x1]
  %v10984 = vlaneseq
  %v10985 = vshrl.u32 %v10984, 7
  %v10986 = vsub.s32 0, %v10985
  %v10987 = vrot.slane %v10982, %v10986
  %v11053 = vunpack.c.l.b16 %v10914
  %v11054 = vunpack.c.l.b16 %v10915
  %v11055 = vunpack.c.l.b16 %v10916
  %v11056 = vunpack.c.l.b16 %v10917
  %v11057 = vunpack.c.l.b16 %v10918
  %v11058 = vunpack.c.l.b16 %v10919
  %v11059 = vunpack.c.l.b16 %v10920
  %v11060 = vunpack.c.l.b16 %v10921
  %v11061 = vunpack.c.l.b16 %v10922
  %v11062 = vunpack.c.l.b16 %v10923
  %v11063 = vunpack.c.l.b16 %v10924
  %v11064 = vunpack.c.l.b16 %v10925
  %v11065 = vunpack.c.l.b16 %v10926
  %v11066 = vunpack.c.l.b16 %v10927
  %v11067 = vunpack.c.l.b16 %v10928
  %v11068 = vunpack.c.l.b16 %v10929
  %v11069 = vunpack.c.l.b16 %v10930
  %v11070 = vunpack.c.l.b16 %v10931
  %v11071 = vunpack.c.l.b16 %v10932
  %v11072 = vunpack.c.l.b16 %v10933
  %v11073 = vunpack.c.l.b16 %v10934
  %v11074 = vunpack.c.l.b16 %v10935
  %v11075 = vunpack.c.l.b16 %v10936
  %v11076 = vunpack.c.l.b16 %v10937
  %v11077 = vunpack.c.l.b16 %v10938
  %v11078 = vunpack.c.l.b16 %v10939
  %v11079 = vunpack.c.l.b16 %v10940
  %v11080 = vunpack.c.l.b16 %v10941
  %v11081 = vunpack.c.l.b16 %v10942
  %v11082 = vunpack.c.l.b16 %v10943
  %v11083 = vunpack.c.l.b16 %v10944
  %v11084 = vunpack.c.l.b16 %v10945
  %v11085 = vunpack.c.l.b16 %v10946
  %v11086 = vunpack.c.l.b16 %v10947
  %v11087 = vunpack.c.l.b16 %v10948
  %v11088 = vunpack.c.l.b16 %v10949
  %v11089 = vunpack.c.l.b16 %v10950
  %v11090 = vunpack.c.l.b16 %v10951
  %v11091 = vunpack.c.l.b16 %v10952
  %v11092 = vunpack.c.l.b16 %v10953
  %v11093 = vunpack.c.l.b16 %v10954
  %v11094 = vunpack.c.l.b16 %v10955
  %v11095 = vunpack.c.l.b16 %v10956
  %v11096 = vunpack.c.l.b16 %v10957
  %v11097 = vunpack.c.l.b16 %v10958
  %v11098 = vunpack.c.l.b16 %v10959
  %v11099 = vunpack.c.l.b16 %v10960
  %v11100 = vunpack.c.l.b16 %v10961
  %v11101 = vunpack.c.l.b16 %v10962
  %v11102 = vunpack.c.l.b16 %v10963
  %v11103 = vunpack.c.l.b16 %v10964
  %v11104 = vunpack.c.l.b16 %v10965
  %v11105 = vunpack.c.l.b16 %v10966
  %v11106 = vunpack.c.l.b16 %v10967
  %v11107 = vunpack.c.l.b16 %v10968
  %v11108 = vunpack.c.l.b16 %v10969
  %v11109 = vunpack.c.l.b16 %v10970
  %v11110 = vunpack.c.l.b16 %v10971
  %v11111 = vunpack.c.l.b16 %v10972
  %v11112 = vunpack.c.l.b16 %v10973
  %v11113 = vunpack.c.l.b16 %v10974
  %v11114 = vunpack.c.l.b16 %v10975
  %v11115 = vunpack.c.l.b16 %v10976
  %v11116 = vunpack.c.l.b16 %v10977
  %vm11117 = vcmask 1041409
  %v11118 = vsel %vm11117, %v11054, %v11053
  %vm11119 = vcmask 1042434
  %v11120 = vsel %vm11119, %v11055, %v11118
  %vm11121 = vcmask 1043459
  %v11122 = vsel %vm11121, %v11056, %v11120
  %vm11123 = vcmask 1044484
  %v11124 = vsel %vm11123, %v11057, %v11122
  %vm11125 = vcmask 1045509
  %v11126 = vsel %vm11125, %v11058, %v11124
  %vm11127 = vcmask 1046534
  %v11128 = vsel %vm11127, %v11059, %v11126
  %vm11129 = vcmask 1047559
  %v11130 = vsel %vm11129, %v11060, %v11128
  %v11131 = vsel %vm11117, %v11062, %v11061
  %v11132 = vsel %vm11119, %v11063, %v11131
  %v11133 = vsel %vm11121, %v11064, %v11132
  %v11134 = vsel %vm11123, %v11065, %v11133
  %v11135 = vsel %vm11125, %v11066, %v11134
  %v11136 = vsel %vm11127, %v11067, %v11135
  %v11137 = vsel %vm11129, %v11068, %v11136
  %v11138 = vsel %vm11117, %v11070, %v11069
  %v11139 = vsel %vm11119, %v11071, %v11138
  %v11140 = vsel %vm11121, %v11072, %v11139
  %v11141 = vsel %vm11123, %v11073, %v11140
  %v11142 = vsel %vm11125, %v11074, %v11141
  %v11143 = vsel %vm11127, %v11075, %v11142
  %v11144 = vsel %vm11129, %v11076, %v11143
  %v11145 = vsel %vm11117, %v11078, %v11077
  %v11146 = vsel %vm11119, %v11079, %v11145
  %v11147 = vsel %vm11121, %v11080, %v11146
  %v11148 = vsel %vm11123, %v11081, %v11147
  %v11149 = vsel %vm11125, %v11082, %v11148
  %v11150 = vsel %vm11127, %v11083, %v11149
  %v11151 = vsel %vm11129, %v11084, %v11150
  %v11152 = vsel %vm11117, %v11086, %v11085
  %v11153 = vsel %vm11119, %v11087, %v11152
  %v11154 = vsel %vm11121, %v11088, %v11153
  %v11155 = vsel %vm11123, %v11089, %v11154
  %v11156 = vsel %vm11125, %v11090, %v11155
  %v11157 = vsel %vm11127, %v11091, %v11156
  %v11158 = vsel %vm11129, %v11092, %v11157
  %v11159 = vsel %vm11117, %v11094, %v11093
  %v11160 = vsel %vm11119, %v11095, %v11159
  %v11161 = vsel %vm11121, %v11096, %v11160
  %v11162 = vsel %vm11123, %v11097, %v11161
  %v11163 = vsel %vm11125, %v11098, %v11162
  %v11164 = vsel %vm11127, %v11099, %v11163
  %v11165 = vsel %vm11129, %v11100, %v11164
  %v11166 = vsel %vm11117, %v11102, %v11101
  %v11167 = vsel %vm11119, %v11103, %v11166
  %v11168 = vsel %vm11121, %v11104, %v11167
  %v11169 = vsel %vm11123, %v11105, %v11168
  %v11170 = vsel %vm11125, %v11106, %v11169
  %v11171 = vsel %vm11127, %v11107, %v11170
  %v11172 = vsel %vm11129, %v11108, %v11171
  %v11173 = vsel %vm11117, %v11110, %v11109
  %v11174 = vsel %vm11119, %v11111, %v11173
  %v11175 = vsel %vm11121, %v11112, %v11174
  %v11176 = vsel %vm11123, %v11113, %v11175
  %v11177 = vsel %vm11125, %v11114, %v11176
  %v11178 = vsel %vm11127, %v11115, %v11177
  %v11179 = vsel %vm11129, %v11116, %v11178
  %v11180 = vpack.c.b16 %v11137, %v11130
  %v11181 = vpack.c.b16 %v11151, %v11144
  %v11182 = vpack.c.b16 %v11165, %v11158
  %v11183 = vpack.c.b16 %v11179, %v11172
  %v11188 = vunpack.c.l.b16 %v10978
  %v11189 = vunpack.c.l.b16 %v10979
  %v11190 = vunpack.c.l.b16 %v10980
  %v11191 = vunpack.c.l.b16 %v10981
  %v11192 = vpack.c.b16 %v11189, %v11188
  %v11193 = vpack.c.b16 %v11191, %v11190
  %v11197 = vsel %vm3015, %v11180, 0
  %v11200 = vsel %vm3015, %v11181, 0
  %v11203 = vsel %vm3015, %v11182, 0
  %v11206 = vsel %vm3015, %v11183, 0
  %11208 = vmatprep.subr.bf16.mxu0 0
  %11209 = vmatpush1.bf16.msra.mxu0 0
  %11210 = vmatprep.subr.bf16.mxu0 0
  %11211 = vmatpush1.bf16.msra.mxu0 0
  %11212 = vmatprep.subr.bf16.mxu0 0
  %11213 = vmatpush1.bf16.msra.mxu0 0
  %11214 = vmatprep.subr.bf16.mxu0 0
  %11215 = vmatpush1.bf16.msra.mxu0 0
  %11216 = vmatprep.subr.bf16.mxu0 0
  %11217 = vmatpush1.bf16.msra.mxu0 0
  %11218 = vmatprep.subr.bf16.mxu0 0
  %11219 = vmatpush1.bf16.msra.mxu0 0
  %11220 = vmatprep.subr.bf16.mxu0 0
  %11221 = vmatpush1.bf16.msra.mxu0 %v11193
  %11222 = vmatprep.subr.bf16.mxu0 0
  %11223 = vmatpush1.bf16.msra.mxu0 %v11192
  %11224 = vmatprep.subr.bf16.mxu0 0
  %11225 = vmatpush2.bf16.msra.mxu0 0
  %11226 = vmatprep.subr.bf16.mxu0 0
  %11227 = vmatpush2.bf16.msra.mxu0 0
  %11228 = vmatprep.subr.bf16.mxu0 0
  %11229 = vmatpush2.bf16.msra.mxu0 0
  %11230 = vmatprep.subr.bf16.mxu0 0
  %11231 = vmatpush2.bf16.msra.mxu0 0
  %11232 = vmatprep.subr.bf16.mxu0 0
  %11233 = vmatpush2.bf16.msra.mxu0 0
  %11234 = vmatprep.subr.bf16.mxu0 0
  %11235 = vmatpush2.bf16.msra.mxu0 0
  %11236 = vmatprep.subr.bf16.mxu0 0
  %11237 = vmatpush2.bf16.msra.mxu0 0
  %11238 = vmatprep.subr.bf16.mxu0 0
  %11239 = vmatpush2.bf16.msra.mxu0 0
  %11240 = vmatprep.mubr.bf16.mxu0 0
  %11241 = vmatmul.mubr.bf16.gmra.mxu0 %v11197
  %v11242 = vpop.f32.mrf.mxu0
  %v11243 = vadd.f32 %v10987, %v11242
  %v11244 = vpop.f32.mrf.mxu0
  %v11245 = vpop.f32.mrf.mxu0
  %v11246 = vadd.f32 %v10987, %v11245
  %v11247 = vpop.f32.mrf.mxu0
  %11248 = vmatprep.mubr.bf16.mxu0 0
  %11249 = vmatmul.mubr.bf16.gmra.mxu0 %v11200
  %v11250 = vpop.f32.mrf.mxu0
  %v11251 = vadd.f32 %v10987, %v11250
  %v11252 = vpop.f32.mrf.mxu0
  %v11253 = vpop.f32.mrf.mxu0
  %v11254 = vadd.f32 %v10987, %v11253
  %v11255 = vpop.f32.mrf.mxu0
  %11256 = vmatprep.mubr.bf16.mxu0 0
  %11257 = vmatmul.mubr.bf16.gmra.mxu0 %v11203
  %v11258 = vpop.f32.mrf.mxu0
  %v11259 = vadd.f32 %v10987, %v11258
  %v11260 = vpop.f32.mrf.mxu0
  %v11261 = vpop.f32.mrf.mxu0
  %v11262 = vadd.f32 %v10987, %v11261
  %v11263 = vpop.f32.mrf.mxu0
  %11264 = vmatprep.mubr.bf16.mxu0 0
  %11265 = vmatmul.mubr.bf16.gmra.mxu0 %v11206
  %v11266 = vpop.f32.mrf.mxu0
  %v11267 = vadd.f32 %v10987, %v11266
  %v11268 = vpop.f32.mrf.mxu0
  %v11269 = vpop.f32.mrf.mxu0
  %v11270 = vadd.f32 %v10987, %v11269
  %v11271 = vpop.f32.mrf.mxu0
  %11272 = vdwg.mxu0
  %11273 = vst.msk [vmem:[%s14] sm:$0xff] %vm3015, %v11243
  %11274 = vst.msk [vmem:[%s14 + $0x8] sm:$0xff] %vm3015, %v11246
  %11275 = vst.msk [vmem:[%s14 + $0x10] sm:$0xff] %vm3015, %v11251
  %11276 = vst.msk [vmem:[%s14 + $0x18] sm:$0xff] %vm3015, %v11254
  %11277 = vst.msk [vmem:[%s14 + $0x20] sm:$0xff] %vm3015, %v11259
  %11278 = vst.msk [vmem:[%s14 + $0x28] sm:$0xff] %vm3015, %v11262
  %11279 = vst.msk [vmem:[%s14 + $0x30] sm:$0xff] %vm3015, %v11267
  %11280 = vst.msk [vmem:[%s14 + $0x38] sm:$0xff] %vm3015, %v11270
  // Predicated region
  $region58: #{lgp_forward.1} parent=0 // pred_check
    _
  $region59: #{lgp_forward.1} parent=0 // pred_check_branch
    %11282 = sbr.rel (0) target = $region61
  $region60: #{lgp_forward.1} parent=0 // pred_region
    _
  $region61: #{lgp_forward.1} parent=0 // pred_fallthru
    _
  // Predicated region
  $region62: #{lgp_forward.1} parent=0 // pred_check
    _
  $region63: #{lgp_forward.1} parent=0 // pred_check_branch
    %11284 = sbr.rel (0) target = $region65
  $region64: #{lgp_forward.1} parent=0 // pred_region
    _
  $region65: #{lgp_forward.1} parent=0 // pred_fallthru
    _

</llo_original>
